<compile_context>
chip_gen: v7x
topology: tpu7x:2x2x1
jax: 0.10.0
libtpu: 0.0.40
codegen_flags: <defaults>
</compile_context>

<pallas_src>
import functools

import numpy as np

import jax
import jax.numpy as jnp
from jax.experimental import pallas as pl
from jax.experimental.pallas import tpu as pltpu

F32 = jnp.float32

# Matmul operand dtype (accumulation is always f32 via preferred_element_type).
# bfloat16 is the recommended setting on v5e/v6e/v7x; use jnp.float32 for
# bit-parity validation against the PyTorch reference.
MATMUL_DTYPE = jnp.bfloat16

# Lane halo of the tap-staging slab: must be a multiple of 128 (keeps the
# centre store lane aligned) and >= 2*W + 2 (the 5x5 conv's largest shift).
LANE_PAD = 128

PARAM_ORDER = ('w_xn', 'b_xn', 'c11b_w', 'c2a', 'c21', 'c2c_w', 'nvec',
               'w345', 'b345', 'kba_wkb', 'kba_srep', 'pvec')


def _mm(a, b):
    return jnp.dot(a.astype(MATMUL_DTYPE), b.astype(MATMUL_DTYPE),
                   preferred_element_type=F32)


def _layer_norm_cfirst(x, w, b, eps):
    """LayerNorm over the channel (sublane) axis of a (C, HW) tile."""
    mu = jnp.mean(x, axis=0, keepdims=True)
    xc = x - mu
    var = jnp.mean(xc * xc, axis=0, keepdims=True)
    return xc * jax.lax.rsqrt(var + eps) * w + b


# ----------------------------------------------------------------------------
# Fused KBBlock_s kernel: one grid step == one image, layout (C, HW).
# ----------------------------------------------------------------------------
def _kbblock_kernel(x_ref, w_xn_ref, b_xn_ref, c11b_w_ref, c2a_ref, c21_ref,
                    c2c_w_ref, nvec_ref, w345_ref, b345_ref,
                    kba_wkb_ref, kba_srep_ref, pvec_ref, cmask_ref,
                    o_ref,
                    slab_ref, stack5_ref, ustack_ref,
                    *, C, W, HW, nset, k, eps):
    KK = k * k
    r3 = k // 2

    X = x_ref[0]                                         # (C, HW) f32

    # Halo margins supply the vertical zero padding for every spatial tap.
    # Re-zeroed every grid step (4 vregs) so megacore grid splitting is safe.
    slab_ref[:, :LANE_PAD] = jnp.zeros((C, LANE_PAD), F32)
    slab_ref[:, LANE_PAD + HW:] = jnp.zeros((C, LANE_PAD), F32)

    def stage(v):
        slab_ref[:, LANE_PAD:LANE_PAD + HW] = v          # lane-aligned store

    def tap(dy, dx):
        # out[:, p] = staged[:, p + dy*W + dx], zero outside the image.
        s = dy * W + dx
        v = slab_ref[:, LANE_PAD + s:LANE_PAD + s + HW]
        if dx != 0:                                      # horizontal boundary
            v = v * cmask_ref[dx + 2:dx + 3, :]
        return v

    def dw3x3(wpack_ref):
        acc = wpack_ref[:, KK:KK + 1]                    # bias, (C, 1)
        for kk in range(KK):
            dy, dx = kk // k - r3, kk % k - r3
            acc = acc + tap(dy, dx) * wpack_ref[:, kk:kk + 1]
        return acc

    # ------------------------------------------------ norm1
    xn = _layer_norm_cfirst(X, pvec_ref[:, 0:1], pvec_ref[:, 1:2], eps)

    # ------------------------------------------------ fused 1x1 heads on xn
    # rows: [0:C] conv11[0], [C:2C] conv1, [2C:3C] sca, [3C:3C+nset] conv211
    T = _mm(w_xn_ref[...], xn) + b_xn_ref[...]
    t11 = T[0:C]
    u0 = T[C:2 * C]
    sca = jnp.mean(T[2 * C:3 * C], axis=1, keepdims=True)   # pool after 1x1
    att_lin = T[3 * C:3 * C + nset]

    # ------------------------------------------------ x1 = 5x5 grouped conv
    stage(t11)
    for t5 in range(25):
        dy, dx = t5 // 5 - 2, t5 % 5 - 2
        stack5_ref[t5 * C:(t5 + 1) * C, :] = tap(dy, dx).astype(stack5_ref.dtype)
    x1 = _mm(c11b_w_ref[...], stack5_ref[...]) + pvec_ref[:, 7:8]

    # ------------------------------------------------ att branch
    stage(xn)
    d = dw3x3(c2a_ref)                                   # 3x3 depthwise
    dg = d[0:C // 2] * d[C // 2:C]                       # SimpleGate
    att = (_mm(c2c_w_ref[...], dg) + nvec_ref[:, 1:2]) * nvec_ref[:, 0:1] \
        + att_lin                                        # (nset, HW)

    # ------------------------------------------------ uf = conv21(conv1(xn))
    stage(u0)
    uf = dw3x3(c21_ref)

    # ------------------------------------------------ KBA(uf, att)
    stage(uf)
    for kk in range(KK):
        dy, dx = kk // k - r3, kk % k - r3
        ustack_ref[kk * C:(kk + 1) * C, :] = tap(dy, dx).astype(ustack_ref.dtype)
    AB = _mm(kba_wkb_ref[...], att)                      # (KK*cg*C + C, HW)
    urep = _mm(kba_srep_ref[...], ustack_ref[...])       # (KK*cg*C, HW)
    nrep = urep.shape[0]
    kba = AB[nrep:nrep + C]                              # bias term (C, HW)
    for blk in range(nrep // C):
        kba = kba + AB[blk * C:(blk + 1) * C] * urep[blk * C:(blk + 1) * C]

    # ------------------------------------------------ combine + conv3 + res
    z = (kba * pvec_ref[:, 4:5] + uf) * x1 * sca
    y = X + (_mm(w345_ref[0:C, :], z) + b345_ref[0:C]) * pvec_ref[:, 5:6]

    # ------------------------------------------------ FFN branch
    xn2 = _layer_norm_cfirst(y, pvec_ref[:, 2:3], pvec_ref[:, 3:4], eps)
    h = _mm(w345_ref[C:3 * C, :], xn2) + b345_ref[C:3 * C]
    hg = h[0:C] * h[C:2 * C]                             # SimpleGate
    out = y + (_mm(w345_ref[3 * C:4 * C, :], hg) + b345_ref[3 * C:4 * C]) \
        * pvec_ref[:, 6:7]

    o_ref[0] = out


def _bcast_spec(arr):
    nd = arr.ndim
    return pl.BlockSpec(arr.shape, lambda n, _nd=nd: (0,) * _nd)


def kbblock_forward(inp_nchw, params, *, nset=32, k=3, gc=4, eps=1e-6):
    """KBBlock_s forward.  inp_nchw: (N, C, H, W) float32 -> (N, C, H, W)."""
    N, C, H, W = inp_nchw.shape
    HW = H * W
    KK = k * k
    assert C % gc == 0 and C % 4 == 0 and C % 8 == 0
    assert min(C, 32) == C            # depthwise path of conv2 (interc == C)
    assert HW % 128 == 0              # lane-dense (C, HW) working layout
    assert 2 * W + 2 <= LANE_PAD      # 5x5 halo fits inside the lane margin
    # TODO(synk): for large H*W, band-tile each image over a second grid axis
    # (halo rows per band, sca via a separate reduction pass) to fit v7x's
    # 64 MiB VMEM instead of keeping whole images resident.

    x = inp_nchw.astype(F32).reshape(N, C, HW)

    # Horizontal-boundary masks, one (1, HW) row per dx in {-2..2}.
    cols = np.arange(HW) % W
    cmask = np.stack(
        [((cols + dx >= 0) & (cols + dx <= W - 1)).astype(np.float32)
         for dx in range(-2, 3)], axis=0)                          # (5, HW)
    cmask = jnp.asarray(cmask)

    plist = [jnp.asarray(params[name]) for name in PARAM_ORDER]
    in_arrays = [x] + plist + [cmask]
    in_specs = ([pl.BlockSpec((1, C, HW), lambda n: (n, 0, 0))]
                + [_bcast_spec(a) for a in plist]
                + [_bcast_spec(cmask)])

    kernel = functools.partial(
        _kbblock_kernel, C=C, W=W, HW=HW, nset=nset, k=k, eps=eps)

    out = pl.pallas_call(
        kernel,
        out_shape=jax.ShapeDtypeStruct((N, C, HW), F32),
        grid=(N,),
        in_specs=in_specs,
        out_specs=pl.BlockSpec((1, C, HW), lambda n: (n, 0, 0)),
        scratch_shapes=[
            pltpu.VMEM((C, HW + 2 * LANE_PAD), F32),     # tap halo slab
            pltpu.VMEM((25 * C, HW), MATMUL_DTYPE),      # 5x5 tap stack
            pltpu.VMEM((KK * C, HW), MATMUL_DTYPE),      # KBA unfold stack
        ],
        compiler_params=pltpu.CompilerParams(
            dimension_semantics=("parallel",),
            vmem_limit_bytes=48 * 1024 * 1024),
    )(*in_arrays)
    return out.reshape(N, C, H, W)


# ----------------------------------------------------------------------------
# Synthetic parameters in the kernel's preprocessed layouts (comments give the
# mapping from the PyTorch KBBlock_s parameter shapes).
# ----------------------------------------------------------------------------
def init_params(key, c=16, nset=32, k=3, gc=4):
    g = c // gc                  # number of KBA groups
    cg = c // g                  # channels per KBA group
    KK = k * k
    interc = min(c, 32)
    assert interc == c

    keys = jax.random.split(key, 32)
    kit = iter(keys)

    def rnd(shape, s=0.1):
        return np.asarray(jax.random.normal(next(kit), shape, F32)) * s

    def conv1x1(cin, cout):
        # torch Conv2d(cin, cout, 1): weight (cout, cin, 1, 1), bias (cout,)
        return rnd((cout, cin)), rnd((cout,))

    w_c11a, b_c11a = conv1x1(c, c)              # conv11[0]
    w_c1, b_c1 = conv1x1(c, c)                  # conv1
    w_sca, b_sca = conv1x1(c, c)                # sca[1]
    w_c211, b_c211 = conv1x1(c, nset)           # conv211
    w_c2c, b_c2c = conv1x1(interc // 2, nset)   # conv2[2]
    w_c3, b_c3 = conv1x1(c, c)                  # conv3
    w_c4, b_c4 = conv1x1(c, 2 * c)              # conv4
    w_c5, b_c5 = conv1x1(c, c)                  # conv5

    def dwpack(ch):
        # torch Conv2d(ch, ch, k, groups=ch): weight (ch, 1, k, k), bias (ch,)
        wt = rnd((ch, 1, k, k))
        bt = rnd((ch,))
        return np.concatenate([wt.reshape(ch, KK), bt[:, None]], axis=1)

    c21_pack = dwpack(c)                        # conv21
    c2a_pack = dwpack(interc)                   # conv2[0]

    # conv11[1]: Conv2d(c, c, 5, padding=2, groups=c//4),
    # torch weight (c, 4, 5, 5), bias (c,) -> one (C, 25C) block matrix with
    # the 25 taps stacked along the contraction axis.
    groups5 = c // 4
    in_g = c // groups5
    out_g = c // groups5
    wt5 = rnd((c, in_g, 5, 5))
    bt5 = rnd((c,))
    w5 = np.zeros((c, 25 * c), np.float32)
    for t5 in range(25):
        ki, kj = t5 // 5, t5 % 5
        for co in range(c):
            ci0 = (co // out_g) * in_g
            w5[co, t5 * c + ci0:t5 * c + ci0 + in_g] = wt5[co, :, ki, kj]

    # KBA bank: torch selfw (1, nset, c*cg*KK), selfb (1, nset, c).
    # Row kk*cg*c + cl*c + co of kba_wkb[:KK*cg*c] holds
    #   selfw[:, co*cg*KK + cl*KK + kk];
    # kba_srep replicates the unfold stack (row kk*c + ci) to the same layout.
    selfw = rnd((nset, c * cg * KK))
    selfb = rnd((nset, c))
    wk = np.zeros((KK * cg * c, nset), np.float32)
    srep = np.zeros((KK * cg * c, KK * c), np.float32)
    for kk in range(KK):
        for cl in range(cg):
            for co in range(c):
                r = kk * cg * c + cl * c + co
                wk[r, :] = selfw[:, co * cg * KK + cl * KK + kk]
                srep[r, kk * c + (co // cg) * cg + cl] = 1.0

    p = {}
    # Fused 1x1 heads on xn: rows [conv11[0] | conv1 | sca | conv211].
    p['w_xn'] = np.concatenate([w_c11a, w_c1, w_sca, w_c211], axis=0)
    p['b_xn'] = np.concatenate([b_c11a, b_c1, b_sca, b_c211])[:, None]
    p['c11b_w'] = w5
    p['c2a'] = c2a_pack                          # (c, KK+1): dw weights | bias
    p['c21'] = c21_pack
    p['c2c_w'] = w_c2c                           # (nset, interc//2)
    # per-nset vectors: [attgamma | conv2[2] bias]   (attgamma init = 0.01)
    p['nvec'] = np.stack([np.full((nset,), 0.01, np.float32), b_c2c], axis=1)
    # conv3 / conv4 / conv5 packed along the output-row axis.
    p['w345'] = np.concatenate([w_c3, w_c4, w_c5], axis=0)
    p['b345'] = np.concatenate([b_c3, b_c4, b_c5])[:, None]
    p['kba_wkb'] = np.concatenate([wk, selfb.T], axis=0)
    p['kba_srep'] = srep
    # per-channel vectors:
    # [ln1_w, ln1_b, ln2_w, ln2_b, ga1, beta, gamma, conv11[1] bias]
    p['pvec'] = np.stack([
        np.ones((c,), np.float32), np.zeros((c,), np.float32),
        np.ones((c,), np.float32), np.zeros((c,), np.float32),
        np.full((c,), 0.01, np.float32), np.full((c,), 0.01, np.float32),
        np.full((c,), 0.01, np.float32), bt5], axis=1)
    return {name: jnp.asarray(v) for name, v in p.items()}


if __name__ == "__main__":
    key = jax.random.PRNGKey(0)
    k_in, k_par = jax.random.split(key)
    N, C, H, W = 2, 16, 16, 16                 # c=16, gc=4 -> g=4, nset=32, k=3
    inp = jax.random.normal(k_in, (N, C, H, W), F32)
    params = init_params(k_par, c=C, nset=32, k=3, gc=4)

    fwd = jax.jit(functools.partial(kbblock_forward, nset=32, k=3, gc=4))
    out = jax.block_until_ready(fwd(inp, params))
    assert out.shape == (N, C, H, W)
    assert bool(jnp.all(jnp.isfinite(out)))
    print("KERNEL_OK")
</pallas_src>

<mosaic_0001>
module attributes {stable_mosaic.version = 11 : i64} {
  func.func @_kbblock_kernel(%arg0: i32, %arg1: memref<1x16x256xf32, #tpu.memory_space<vmem>>, %arg2: memref<80x16xf32, #tpu.memory_space<vmem>>, %arg3: memref<80x1xf32, #tpu.memory_space<vmem>>, %arg4: memref<16x400xf32, #tpu.memory_space<vmem>>, %arg5: memref<16x10xf32, #tpu.memory_space<vmem>>, %arg6: memref<16x10xf32, #tpu.memory_space<vmem>>, %arg7: memref<32x8xf32, #tpu.memory_space<vmem>>, %arg8: memref<32x2xf32, #tpu.memory_space<vmem>>, %arg9: memref<64x16xf32, #tpu.memory_space<vmem>>, %arg10: memref<64x1xf32, #tpu.memory_space<vmem>>, %arg11: memref<592x32xf32, #tpu.memory_space<vmem>>, %arg12: memref<576x144xf32, #tpu.memory_space<vmem>>, %arg13: memref<16x8xf32, #tpu.memory_space<vmem>>, %arg14: memref<5x256xf32, #tpu.memory_space<vmem>>, %arg15: memref<1x16x256xf32, #tpu.memory_space<vmem>>, %arg16: memref<16x512xf32, #tpu.memory_space<vmem>>, %arg17: memref<400x256xbf16, #tpu.memory_space<vmem>>, %arg18: memref<144x256xbf16, #tpu.memory_space<vmem>>) attributes {dimension_semantics = [#tpu.dimension_semantics<parallel>], iteration_bounds = array<i64: 2>, scalar_prefetch = 0 : i64, scratch_operands = 3 : i64, tpu.core_type = #tpu.core_type<tc>, window_params = [{transform_indices = @transform_0, window_bounds = array<i64: 1, 16, 256>}, {pipeline_mode = #tpu.pipeline_mode<synchronous>, transform_indices = @transform_1, window_bounds = array<i64: 80, 16>}, {pipeline_mode = #tpu.pipeline_mode<synchronous>, transform_indices = @transform_2, window_bounds = array<i64: 80, 1>}, {pipeline_mode = #tpu.pipeline_mode<synchronous>, transform_indices = @transform_3, window_bounds = array<i64: 16, 400>}, {pipeline_mode = #tpu.pipeline_mode<synchronous>, transform_indices = @transform_4, window_bounds = array<i64: 16, 10>}, {pipeline_mode = #tpu.pipeline_mode<synchronous>, transform_indices = @transform_5, window_bounds = array<i64: 16, 10>}, {pipeline_mode = #tpu.pipeline_mode<synchronous>, transform_indices = @transform_6, window_bounds = array<i64: 32, 8>}, {pipeline_mode = #tpu.pipeline_mode<synchronous>, transform_indices = @transform_7, window_bounds = array<i64: 32, 2>}, {pipeline_mode = #tpu.pipeline_mode<synchronous>, transform_indices = @transform_8, window_bounds = array<i64: 64, 16>}, {pipeline_mode = #tpu.pipeline_mode<synchronous>, transform_indices = @transform_9, window_bounds = array<i64: 64, 1>}, {pipeline_mode = #tpu.pipeline_mode<synchronous>, transform_indices = @transform_10, window_bounds = array<i64: 592, 32>}, {pipeline_mode = #tpu.pipeline_mode<synchronous>, transform_indices = @transform_11, window_bounds = array<i64: 576, 144>}, {pipeline_mode = #tpu.pipeline_mode<synchronous>, transform_indices = @transform_12, window_bounds = array<i64: 16, 8>}, {pipeline_mode = #tpu.pipeline_mode<synchronous>, transform_indices = @transform_13, window_bounds = array<i64: 5, 256>}, {transform_indices = @transform_14, window_bounds = array<i64: 1, 16, 256>}]} {
    %c0 = arith.constant 0 : index
    %c0_0 = arith.constant 0 : index
    %c0_1 = arith.constant 0 : index
    %0 = vector.load %arg1[%c0, %c0_0, %c0_1] : memref<1x16x256xf32, #tpu.memory_space<vmem>>, vector<1x16x256xf32>
    %1 = vector.shape_cast %0 : vector<1x16x256xf32> to vector<16x256xf32>
    %cst = arith.constant 0.000000e+00 : f32
    %2 = vector.broadcast %cst : f32 to vector<16x128xf32>
    %c0_2 = arith.constant 0 : index
    %c0_3 = arith.constant 0 : index
    %3 = vector.load %arg16[%c0_2, %c0_3] : memref<16x512xf32, #tpu.memory_space<vmem>>, vector<16x128xf32>
    tpu.vector_store %arg16[%c0_2, %c0_3], %2 {strides = array<i32>} : memref<16x512xf32, #tpu.memory_space<vmem>>, vector<16x128xf32>,
    %cst_4 = arith.constant 0.000000e+00 : f32
    %4 = vector.broadcast %cst_4 : f32 to vector<16x128xf32>
    %c0_5 = arith.constant 0 : index
    %c384 = arith.constant 384 : index
    %5 = vector.load %arg16[%c0_5, %c384] : memref<16x512xf32, #tpu.memory_space<vmem>>, vector<16x128xf32>
    tpu.vector_store %arg16[%c0_5, %c384], %4 {strides = array<i32>} : memref<16x512xf32, #tpu.memory_space<vmem>>, vector<16x128xf32>,
    %c0_6 = arith.constant 0 : index
    %c0_7 = arith.constant 0 : index
    %6 = vector.load %arg13[%c0_6, %c0_7] : memref<16x8xf32, #tpu.memory_space<vmem>>, vector<16x1xf32>
    %c0_8 = arith.constant 0 : index
    %c1 = arith.constant 1 : index
    %7 = vector.load %arg13[%c0_8, %c1] : memref<16x8xf32, #tpu.memory_space<vmem>>, vector<16x1xf32>
    %cst_9 = arith.constant dense<0.000000e+00> : vector<256xf32>
    %8 = vector.multi_reduction <add>, %1, %cst_9 [0] : vector<16x256xf32> to vector<256xf32>
    %9 = vector.shape_cast %8 : vector<256xf32> to vector<1x256xf32>
    %cst_10 = arith.constant 1.600000e+01 : f32
    %10 = vector.broadcast %cst_10 : f32 to vector<1x256xf32>
    %11 = arith.divf %9, %10 : vector<1x256xf32>
    %12 = vector.broadcast %11 : vector<1x256xf32> to vector<16x256xf32>
    %13 = arith.subf %1, %12 : vector<16x256xf32>
    %14 = arith.mulf %13, %13 : vector<16x256xf32>
    %cst_11 = arith.constant dense<0.000000e+00> : vector<256xf32>
    %15 = vector.multi_reduction <add>, %14, %cst_11 [0] : vector<16x256xf32> to vector<256xf32>
    %16 = vector.shape_cast %15 : vector<256xf32> to vector<1x256xf32>
    %cst_12 = arith.constant 1.600000e+01 : f32
    %17 = vector.broadcast %cst_12 : f32 to vector<1x256xf32>
    %18 = arith.divf %16, %17 : vector<1x256xf32>
    %cst_13 = arith.constant 9.99999997E-7 : f32
    %19 = vector.broadcast %cst_13 : f32 to vector<1x256xf32>
    %20 = arith.addf %18, %19 : vector<1x256xf32>
    %21 = math.rsqrt %20 : vector<1x256xf32>
    %22 = vector.broadcast %21 : vector<1x256xf32> to vector<16x256xf32>
    %23 = arith.mulf %13, %22 : vector<16x256xf32>
    %24 = vector.broadcast %6 : vector<16x1xf32> to vector<16x256xf32>
    %25 = arith.mulf %23, %24 : vector<16x256xf32>
    %26 = vector.broadcast %7 : vector<16x1xf32> to vector<16x256xf32>
    %27 = arith.addf %25, %26 : vector<16x256xf32>
    %c0_14 = arith.constant 0 : index
    %c0_15 = arith.constant 0 : index
    %28 = vector.load %arg2[%c0_14, %c0_15] : memref<80x16xf32, #tpu.memory_space<vmem>>, vector<80x16xf32>
    %29 = arith.truncf %28 : vector<80x16xf32> to vector<80x16xbf16>
    %30 = arith.truncf %27 : vector<16x256xf32> to vector<16x256xbf16>
    %cst_16 = arith.constant dense<0.000000e+00> : vector<80x256xf32>
    %31 = tpu.matmul %29, %30, %cst_16 {dimension_numbers = #tpu.dot_dimension_numbers<[1], [0], [0], [1], [0, 0, 1, 1], [], []>} : vector<80x16xbf16>, vector<16x256xbf16>, vector<80x256xf32> -> vector<80x256xf32>
    %c0_17 = arith.constant 0 : index
    %c0_18 = arith.constant 0 : index
    %32 = vector.load %arg3[%c0_17, %c0_18] : memref<80x1xf32, #tpu.memory_space<vmem>>, vector<80x1xf32>
    %33 = vector.broadcast %32 : vector<80x1xf32> to vector<80x256xf32>
    %34 = arith.addf %31, %33 : vector<80x256xf32>
    %35 = vector.extract_strided_slice %34 {offsets = [0, 0], sizes = [16, 256], strides = [1, 1]} : vector<80x256xf32> to vector<16x256xf32>
    %36 = vector.extract_strided_slice %34 {offsets = [16, 0], sizes = [16, 256], strides = [1, 1]} : vector<80x256xf32> to vector<16x256xf32>
    %37 = vector.extract_strided_slice %34 {offsets = [32, 0], sizes = [16, 256], strides = [1, 1]} : vector<80x256xf32> to vector<16x256xf32>
    %cst_19 = arith.constant dense<0.000000e+00> : vector<16xf32>
    %38 = vector.multi_reduction <add>, %37, %cst_19 [1] : vector<16x256xf32> to vector<16xf32>
    %39 = vector.shape_cast %38 : vector<16xf32> to vector<16x1xf32>
    %cst_20 = arith.constant 2.560000e+02 : f32
    %40 = vector.broadcast %cst_20 : f32 to vector<16x1xf32>
    %41 = arith.divf %39, %40 : vector<16x1xf32>
    %42 = vector.extract_strided_slice %34 {offsets = [48, 0], sizes = [32, 256], strides = [1, 1]} : vector<80x256xf32> to vector<32x256xf32>
    %c0_21 = arith.constant 0 : index
    %c128 = arith.constant 128 : index
    %43 = vector.load %arg16[%c0_21, %c128] : memref<16x512xf32, #tpu.memory_space<vmem>>, vector<16x256xf32>
    tpu.vector_store %arg16[%c0_21, %c128], %35 {strides = array<i32>} : memref<16x512xf32, #tpu.memory_space<vmem>>, vector<16x256xf32>,
    %c0_22 = arith.constant 0 : index
    %c94 = arith.constant 94 : index
    %44 = vector.load %arg16[%c0_22, %c94] : memref<16x512xf32, #tpu.memory_space<vmem>>, vector<16x256xf32>
    %c0_23 = arith.constant 0 : index
    %c0_24 = arith.constant 0 : index
    %45 = vector.load %arg14[%c0_23, %c0_24] : memref<5x256xf32, #tpu.memory_space<vmem>>, vector<1x256xf32>
    %46 = vector.broadcast %45 : vector<1x256xf32> to vector<16x256xf32>
    %47 = arith.mulf %44, %46 : vector<16x256xf32>
    %48 = arith.truncf %47 : vector<16x256xf32> to vector<16x256xbf16>
    %c0_25 = arith.constant 0 : index
    %c0_26 = arith.constant 0 : index
    %49 = vector.load %arg17[%c0_25, %c0_26] : memref<400x256xbf16, #tpu.memory_space<vmem>>, vector<16x256xbf16>
    tpu.vector_store %arg17[%c0_25, %c0_26], %48 {strides = array<i32>} : memref<400x256xbf16, #tpu.memory_space<vmem>>, vector<16x256xbf16>,
    %c0_27 = arith.constant 0 : index
    %c95 = arith.constant 95 : index
    %50 = vector.load %arg16[%c0_27, %c95] : memref<16x512xf32, #tpu.memory_space<vmem>>, vector<16x256xf32>
    %c1_28 = arith.constant 1 : index
    %c0_29 = arith.constant 0 : index
    %51 = vector.load %arg14[%c1_28, %c0_29] : memref<5x256xf32, #tpu.memory_space<vmem>>, vector<1x256xf32>
    %52 = vector.broadcast %51 : vector<1x256xf32> to vector<16x256xf32>
    %53 = arith.mulf %50, %52 : vector<16x256xf32>
    %54 = arith.truncf %53 : vector<16x256xf32> to vector<16x256xbf16>
    %c16 = arith.constant 16 : index
    %c0_30 = arith.constant 0 : index
    %55 = vector.load %arg17[%c16, %c0_30] : memref<400x256xbf16, #tpu.memory_space<vmem>>, vector<16x256xbf16>
    tpu.vector_store %arg17[%c16, %c0_30], %54 {strides = array<i32>} : memref<400x256xbf16, #tpu.memory_space<vmem>>, vector<16x256xbf16>,
    %c0_31 = arith.constant 0 : index
    %c96 = arith.constant 96 : index
    %56 = vector.load %arg16[%c0_31, %c96] : memref<16x512xf32, #tpu.memory_space<vmem>>, vector<16x256xf32>
    %57 = arith.truncf %56 : vector<16x256xf32> to vector<16x256xbf16>
    %c32 = arith.constant 32 : index
    %c0_32 = arith.constant 0 : index
    %58 = vector.load %arg17[%c32, %c0_32] : memref<400x256xbf16, #tpu.memory_space<vmem>>, vector<16x256xbf16>
    tpu.vector_store %arg17[%c32, %c0_32], %57 {strides = array<i32>} : memref<400x256xbf16, #tpu.memory_space<vmem>>, vector<16x256xbf16>,
    %c0_33 = arith.constant 0 : index
    %c97 = arith.constant 97 : index
    %59 = vector.load %arg16[%c0_33, %c97] : memref<16x512xf32, #tpu.memory_space<vmem>>, vector<16x256xf32>
    %c3 = arith.constant 3 : index
    %c0_34 = arith.constant 0 : index
    %60 = vector.load %arg14[%c3, %c0_34] : memref<5x256xf32, #tpu.memory_space<vmem>>, vector<1x256xf32>
    %61 = vector.broadcast %60 : vector<1x256xf32> to vector<16x256xf32>
    %62 = arith.mulf %59, %61 : vector<16x256xf32>
    %63 = arith.truncf %62 : vector<16x256xf32> to vector<16x256xbf16>
    %c48 = arith.constant 48 : index
    %c0_35 = arith.constant 0 : index
    %64 = vector.load %arg17[%c48, %c0_35] : memref<400x256xbf16, #tpu.memory_space<vmem>>, vector<16x256xbf16>
    tpu.vector_store %arg17[%c48, %c0_35], %63 {strides = array<i32>} : memref<400x256xbf16, #tpu.memory_space<vmem>>, vector<16x256xbf16>,
    %c0_36 = arith.constant 0 : index
    %c98 = arith.constant 98 : index
    %65 = vector.load %arg16[%c0_36, %c98] : memref<16x512xf32, #tpu.memory_space<vmem>>, vector<16x256xf32>
    %c4 = arith.constant 4 : index
    %c0_37 = arith.constant 0 : index
    %66 = vector.load %arg14[%c4, %c0_37] : memref<5x256xf32, #tpu.memory_space<vmem>>, vector<1x256xf32>
    %67 = vector.broadcast %66 : vector<1x256xf32> to vector<16x256xf32>
    %68 = arith.mulf %65, %67 : vector<16x256xf32>
    %69 = arith.truncf %68 : vector<16x256xf32> to vector<16x256xbf16>
    %c64 = arith.constant 64 : index
    %c0_38 = arith.constant 0 : index
    %70 = vector.load %arg17[%c64, %c0_38] : memref<400x256xbf16, #tpu.memory_space<vmem>>, vector<16x256xbf16>
    tpu.vector_store %arg17[%c64, %c0_38], %69 {strides = array<i32>} : memref<400x256xbf16, #tpu.memory_space<vmem>>, vector<16x256xbf16>,
    %c0_39 = arith.constant 0 : index
    %c110 = arith.constant 110 : index
    %71 = vector.load %arg16[%c0_39, %c110] : memref<16x512xf32, #tpu.memory_space<vmem>>, vector<16x256xf32>
    %c0_40 = arith.constant 0 : index
    %c0_41 = arith.constant 0 : index
    %72 = vector.load %arg14[%c0_40, %c0_41] : memref<5x256xf32, #tpu.memory_space<vmem>>, vector<1x256xf32>
    %73 = vector.broadcast %72 : vector<1x256xf32> to vector<16x256xf32>
    %74 = arith.mulf %71, %73 : vector<16x256xf32>
    %75 = arith.truncf %74 : vector<16x256xf32> to vector<16x256xbf16>
    %c80 = arith.constant 80 : index
    %c0_42 = arith.constant 0 : index
    %76 = vector.load %arg17[%c80, %c0_42] : memref<400x256xbf16, #tpu.memory_space<vmem>>, vector<16x256xbf16>
    tpu.vector_store %arg17[%c80, %c0_42], %75 {strides = array<i32>} : memref<400x256xbf16, #tpu.memory_space<vmem>>, vector<16x256xbf16>,
    %c0_43 = arith.constant 0 : index
    %c111 = arith.constant 111 : index
    %77 = vector.load %arg16[%c0_43, %c111] : memref<16x512xf32, #tpu.memory_space<vmem>>, vector<16x256xf32>
    %c1_44 = arith.constant 1 : index
    %c0_45 = arith.constant 0 : index
    %78 = vector.load %arg14[%c1_44, %c0_45] : memref<5x256xf32, #tpu.memory_space<vmem>>, vector<1x256xf32>
    %79 = vector.broadcast %78 : vector<1x256xf32> to vector<16x256xf32>
    %80 = arith.mulf %77, %79 : vector<16x256xf32>
    %81 = arith.truncf %80 : vector<16x256xf32> to vector<16x256xbf16>
    %c96_46 = arith.constant 96 : index
    %c0_47 = arith.constant 0 : index
    %82 = vector.load %arg17[%c96_46, %c0_47] : memref<400x256xbf16, #tpu.memory_space<vmem>>, vector<16x256xbf16>
    tpu.vector_store %arg17[%c96_46, %c0_47], %81 {strides = array<i32>} : memref<400x256xbf16, #tpu.memory_space<vmem>>, vector<16x256xbf16>,
    %c0_48 = arith.constant 0 : index
    %c112 = arith.constant 112 : index
    %83 = vector.load %arg16[%c0_48, %c112] : memref<16x512xf32, #tpu.memory_space<vmem>>, vector<16x256xf32>
    %84 = arith.truncf %83 : vector<16x256xf32> to vector<16x256xbf16>
    %c112_49 = arith.constant 112 : index
    %c0_50 = arith.constant 0 : index
    %85 = vector.load %arg17[%c112_49, %c0_50] : memref<400x256xbf16, #tpu.memory_space<vmem>>, vector<16x256xbf16>
    tpu.vector_store %arg17[%c112_49, %c0_50], %84 {strides = array<i32>} : memref<400x256xbf16, #tpu.memory_space<vmem>>, vector<16x256xbf16>,
    %c0_51 = arith.constant 0 : index
    %c113 = arith.constant 113 : index
    %86 = vector.load %arg16[%c0_51, %c113] : memref<16x512xf32, #tpu.memory_space<vmem>>, vector<16x256xf32>
    %c3_52 = arith.constant 3 : index
    %c0_53 = arith.constant 0 : index
    %87 = vector.load %arg14[%c3_52, %c0_53] : memref<5x256xf32, #tpu.memory_space<vmem>>, vector<1x256xf32>
    %88 = vector.broadcast %87 : vector<1x256xf32> to vector<16x256xf32>
    %89 = arith.mulf %86, %88 : vector<16x256xf32>
    %90 = arith.truncf %89 : vector<16x256xf32> to vector<16x256xbf16>
    %c128_54 = arith.constant 128 : index
    %c0_55 = arith.constant 0 : index
    %91 = vector.load %arg17[%c128_54, %c0_55] : memref<400x256xbf16, #tpu.memory_space<vmem>>, vector<16x256xbf16>
    tpu.vector_store %arg17[%c128_54, %c0_55], %90 {strides = array<i32>} : memref<400x256xbf16, #tpu.memory_space<vmem>>, vector<16x256xbf16>,
    %c0_56 = arith.constant 0 : index
    %c114 = arith.constant 114 : index
    %92 = vector.load %arg16[%c0_56, %c114] : memref<16x512xf32, #tpu.memory_space<vmem>>, vector<16x256xf32>
    %c4_57 = arith.constant 4 : index
    %c0_58 = arith.constant 0 : index
    %93 = vector.load %arg14[%c4_57, %c0_58] : memref<5x256xf32, #tpu.memory_space<vmem>>, vector<1x256xf32>
    %94 = vector.broadcast %93 : vector<1x256xf32> to vector<16x256xf32>
    %95 = arith.mulf %92, %94 : vector<16x256xf32>
    %96 = arith.truncf %95 : vector<16x256xf32> to vector<16x256xbf16>
    %c144 = arith.constant 144 : index
    %c0_59 = arith.constant 0 : index
    %97 = vector.load %arg17[%c144, %c0_59] : memref<400x256xbf16, #tpu.memory_space<vmem>>, vector<16x256xbf16>
    tpu.vector_store %arg17[%c144, %c0_59], %96 {strides = array<i32>} : memref<400x256xbf16, #tpu.memory_space<vmem>>, vector<16x256xbf16>,
    %c0_60 = arith.constant 0 : index
    %c126 = arith.constant 126 : index
    %98 = vector.load %arg16[%c0_60, %c126] : memref<16x512xf32, #tpu.memory_space<vmem>>, vector<16x256xf32>
    %c0_61 = arith.constant 0 : index
    %c0_62 = arith.constant 0 : index
    %99 = vector.load %arg14[%c0_61, %c0_62] : memref<5x256xf32, #tpu.memory_space<vmem>>, vector<1x256xf32>
    %100 = vector.broadcast %99 : vector<1x256xf32> to vector<16x256xf32>
    %101 = arith.mulf %98, %100 : vector<16x256xf32>
    %102 = arith.truncf %101 : vector<16x256xf32> to vector<16x256xbf16>
    %c160 = arith.constant 160 : index
    %c0_63 = arith.constant 0 : index
    %103 = vector.load %arg17[%c160, %c0_63] : memref<400x256xbf16, #tpu.memory_space<vmem>>, vector<16x256xbf16>
    tpu.vector_store %arg17[%c160, %c0_63], %102 {strides = array<i32>} : memref<400x256xbf16, #tpu.memory_space<vmem>>, vector<16x256xbf16>,
    %c0_64 = arith.constant 0 : index
    %c127 = arith.constant 127 : index
    %104 = vector.load %arg16[%c0_64, %c127] : memref<16x512xf32, #tpu.memory_space<vmem>>, vector<16x256xf32>
    %c1_65 = arith.constant 1 : index
    %c0_66 = arith.constant 0 : index
    %105 = vector.load %arg14[%c1_65, %c0_66] : memref<5x256xf32, #tpu.memory_space<vmem>>, vector<1x256xf32>
    %106 = vector.broadcast %105 : vector<1x256xf32> to vector<16x256xf32>
    %107 = arith.mulf %104, %106 : vector<16x256xf32>
    %108 = arith.truncf %107 : vector<16x256xf32> to vector<16x256xbf16>
    %c176 = arith.constant 176 : index
    %c0_67 = arith.constant 0 : index
    %109 = vector.load %arg17[%c176, %c0_67] : memref<400x256xbf16, #tpu.memory_space<vmem>>, vector<16x256xbf16>
    tpu.vector_store %arg17[%c176, %c0_67], %108 {strides = array<i32>} : memref<400x256xbf16, #tpu.memory_space<vmem>>, vector<16x256xbf16>,
    %c0_68 = arith.constant 0 : index
    %c128_69 = arith.constant 128 : index
    %110 = vector.load %arg16[%c0_68, %c128_69] : memref<16x512xf32, #tpu.memory_space<vmem>>, vector<16x256xf32>
    %111 = arith.truncf %110 : vector<16x256xf32> to vector<16x256xbf16>
    %c192 = arith.constant 192 : index
    %c0_70 = arith.constant 0 : index
    %112 = vector.load %arg17[%c192, %c0_70] : memref<400x256xbf16, #tpu.memory_space<vmem>>, vector<16x256xbf16>
    tpu.vector_store %arg17[%c192, %c0_70], %111 {strides = array<i32>} : memref<400x256xbf16, #tpu.memory_space<vmem>>, vector<16x256xbf16>,
    %c0_71 = arith.constant 0 : index
    %c129 = arith.constant 129 : index
    %113 = vector.load %arg16[%c0_71, %c129] : memref<16x512xf32, #tpu.memory_space<vmem>>, vector<16x256xf32>
    %c3_72 = arith.constant 3 : index
    %c0_73 = arith.constant 0 : index
    %114 = vector.load %arg14[%c3_72, %c0_73] : memref<5x256xf32, #tpu.memory_space<vmem>>, vector<1x256xf32>
    %115 = vector.broadcast %114 : vector<1x256xf32> to vector<16x256xf32>
    %116 = arith.mulf %113, %115 : vector<16x256xf32>
    %117 = arith.truncf %116 : vector<16x256xf32> to vector<16x256xbf16>
    %c208 = arith.constant 208 : index
    %c0_74 = arith.constant 0 : index
    %118 = vector.load %arg17[%c208, %c0_74] : memref<400x256xbf16, #tpu.memory_space<vmem>>, vector<16x256xbf16>
    tpu.vector_store %arg17[%c208, %c0_74], %117 {strides = array<i32>} : memref<400x256xbf16, #tpu.memory_space<vmem>>, vector<16x256xbf16>,
    %c0_75 = arith.constant 0 : index
    %c130 = arith.constant 130 : index
    %119 = vector.load %arg16[%c0_75, %c130] : memref<16x512xf32, #tpu.memory_space<vmem>>, vector<16x256xf32>
    %c4_76 = arith.constant 4 : index
    %c0_77 = arith.constant 0 : index
    %120 = vector.load %arg14[%c4_76, %c0_77] : memref<5x256xf32, #tpu.memory_space<vmem>>, vector<1x256xf32>
    %121 = vector.broadcast %120 : vector<1x256xf32> to vector<16x256xf32>
    %122 = arith.mulf %119, %121 : vector<16x256xf32>
    %123 = arith.truncf %122 : vector<16x256xf32> to vector<16x256xbf16>
    %c224 = arith.constant 224 : index
    %c0_78 = arith.constant 0 : index
    %124 = vector.load %arg17[%c224, %c0_78] : memref<400x256xbf16, #tpu.memory_space<vmem>>, vector<16x256xbf16>
    tpu.vector_store %arg17[%c224, %c0_78], %123 {strides = array<i32>} : memref<400x256xbf16, #tpu.memory_space<vmem>>, vector<16x256xbf16>,
    %c0_79 = arith.constant 0 : index
    %c142 = arith.constant 142 : index
    %125 = vector.load %arg16[%c0_79, %c142] : memref<16x512xf32, #tpu.memory_space<vmem>>, vector<16x256xf32>
    %c0_80 = arith.constant 0 : index
    %c0_81 = arith.constant 0 : index
    %126 = vector.load %arg14[%c0_80, %c0_81] : memref<5x256xf32, #tpu.memory_space<vmem>>, vector<1x256xf32>
    %127 = vector.broadcast %126 : vector<1x256xf32> to vector<16x256xf32>
    %128 = arith.mulf %125, %127 : vector<16x256xf32>
    %129 = arith.truncf %128 : vector<16x256xf32> to vector<16x256xbf16>
    %c240 = arith.constant 240 : index
    %c0_82 = arith.constant 0 : index
    %130 = vector.load %arg17[%c240, %c0_82] : memref<400x256xbf16, #tpu.memory_space<vmem>>, vector<16x256xbf16>
    tpu.vector_store %arg17[%c240, %c0_82], %129 {strides = array<i32>} : memref<400x256xbf16, #tpu.memory_space<vmem>>, vector<16x256xbf16>,
    %c0_83 = arith.constant 0 : index
    %c143 = arith.constant 143 : index
    %131 = vector.load %arg16[%c0_83, %c143] : memref<16x512xf32, #tpu.memory_space<vmem>>, vector<16x256xf32>
    %c1_84 = arith.constant 1 : index
    %c0_85 = arith.constant 0 : index
    %132 = vector.load %arg14[%c1_84, %c0_85] : memref<5x256xf32, #tpu.memory_space<vmem>>, vector<1x256xf32>
    %133 = vector.broadcast %132 : vector<1x256xf32> to vector<16x256xf32>
    %134 = arith.mulf %131, %133 : vector<16x256xf32>
    %135 = arith.truncf %134 : vector<16x256xf32> to vector<16x256xbf16>
    %c256 = arith.constant 256 : index
    %c0_86 = arith.constant 0 : index
    %136 = vector.load %arg17[%c256, %c0_86] : memref<400x256xbf16, #tpu.memory_space<vmem>>, vector<16x256xbf16>
    tpu.vector_store %arg17[%c256, %c0_86], %135 {strides = array<i32>} : memref<400x256xbf16, #tpu.memory_space<vmem>>, vector<16x256xbf16>,
    %c0_87 = arith.constant 0 : index
    %c144_88 = arith.constant 144 : index
    %137 = vector.load %arg16[%c0_87, %c144_88] : memref<16x512xf32, #tpu.memory_space<vmem>>, vector<16x256xf32>
    %138 = arith.truncf %137 : vector<16x256xf32> to vector<16x256xbf16>
    %c272 = arith.constant 272 : index
    %c0_89 = arith.constant 0 : index
    %139 = vector.load %arg17[%c272, %c0_89] : memref<400x256xbf16, #tpu.memory_space<vmem>>, vector<16x256xbf16>
    tpu.vector_store %arg17[%c272, %c0_89], %138 {strides = array<i32>} : memref<400x256xbf16, #tpu.memory_space<vmem>>, vector<16x256xbf16>,
    %c0_90 = arith.constant 0 : index
    %c145 = arith.constant 145 : index
    %140 = vector.load %arg16[%c0_90, %c145] : memref<16x512xf32, #tpu.memory_space<vmem>>, vector<16x256xf32>
    %c3_91 = arith.constant 3 : index
    %c0_92 = arith.constant 0 : index
    %141 = vector.load %arg14[%c3_91, %c0_92] : memref<5x256xf32, #tpu.memory_space<vmem>>, vector<1x256xf32>
    %142 = vector.broadcast %141 : vector<1x256xf32> to vector<16x256xf32>
    %143 = arith.mulf %140, %142 : vector<16x256xf32>
    %144 = arith.truncf %143 : vector<16x256xf32> to vector<16x256xbf16>
    %c288 = arith.constant 288 : index
    %c0_93 = arith.constant 0 : index
    %145 = vector.load %arg17[%c288, %c0_93] : memref<400x256xbf16, #tpu.memory_space<vmem>>, vector<16x256xbf16>
    tpu.vector_store %arg17[%c288, %c0_93], %144 {strides = array<i32>} : memref<400x256xbf16, #tpu.memory_space<vmem>>, vector<16x256xbf16>,
    %c0_94 = arith.constant 0 : index
    %c146 = arith.constant 146 : index
    %146 = vector.load %arg16[%c0_94, %c146] : memref<16x512xf32, #tpu.memory_space<vmem>>, vector<16x256xf32>
    %c4_95 = arith.constant 4 : index
    %c0_96 = arith.constant 0 : index
    %147 = vector.load %arg14[%c4_95, %c0_96] : memref<5x256xf32, #tpu.memory_space<vmem>>, vector<1x256xf32>
    %148 = vector.broadcast %147 : vector<1x256xf32> to vector<16x256xf32>
    %149 = arith.mulf %146, %148 : vector<16x256xf32>
    %150 = arith.truncf %149 : vector<16x256xf32> to vector<16x256xbf16>
    %c304 = arith.constant 304 : index
    %c0_97 = arith.constant 0 : index
    %151 = vector.load %arg17[%c304, %c0_97] : memref<400x256xbf16, #tpu.memory_space<vmem>>, vector<16x256xbf16>
    tpu.vector_store %arg17[%c304, %c0_97], %150 {strides = array<i32>} : memref<400x256xbf16, #tpu.memory_space<vmem>>, vector<16x256xbf16>,
    %c0_98 = arith.constant 0 : index
    %c158 = arith.constant 158 : index
    %152 = vector.load %arg16[%c0_98, %c158] : memref<16x512xf32, #tpu.memory_space<vmem>>, vector<16x256xf32>
    %c0_99 = arith.constant 0 : index
    %c0_100 = arith.constant 0 : index
    %153 = vector.load %arg14[%c0_99, %c0_100] : memref<5x256xf32, #tpu.memory_space<vmem>>, vector<1x256xf32>
    %154 = vector.broadcast %153 : vector<1x256xf32> to vector<16x256xf32>
    %155 = arith.mulf %152, %154 : vector<16x256xf32>
    %156 = arith.truncf %155 : vector<16x256xf32> to vector<16x256xbf16>
    %c320 = arith.constant 320 : index
    %c0_101 = arith.constant 0 : index
    %157 = vector.load %arg17[%c320, %c0_101] : memref<400x256xbf16, #tpu.memory_space<vmem>>, vector<16x256xbf16>
    tpu.vector_store %arg17[%c320, %c0_101], %156 {strides = array<i32>} : memref<400x256xbf16, #tpu.memory_space<vmem>>, vector<16x256xbf16>,
    %c0_102 = arith.constant 0 : index
    %c159 = arith.constant 159 : index
    %158 = vector.load %arg16[%c0_102, %c159] : memref<16x512xf32, #tpu.memory_space<vmem>>, vector<16x256xf32>
    %c1_103 = arith.constant 1 : index
    %c0_104 = arith.constant 0 : index
    %159 = vector.load %arg14[%c1_103, %c0_104] : memref<5x256xf32, #tpu.memory_space<vmem>>, vector<1x256xf32>
    %160 = vector.broadcast %159 : vector<1x256xf32> to vector<16x256xf32>
    %161 = arith.mulf %158, %160 : vector<16x256xf32>
    %162 = arith.truncf %161 : vector<16x256xf32> to vector<16x256xbf16>
    %c336 = arith.constant 336 : index
    %c0_105 = arith.constant 0 : index
    %163 = vector.load %arg17[%c336, %c0_105] : memref<400x256xbf16, #tpu.memory_space<vmem>>, vector<16x256xbf16>
    tpu.vector_store %arg17[%c336, %c0_105], %162 {strides = array<i32>} : memref<400x256xbf16, #tpu.memory_space<vmem>>, vector<16x256xbf16>,
    %c0_106 = arith.constant 0 : index
    %c160_107 = arith.constant 160 : index
    %164 = vector.load %arg16[%c0_106, %c160_107] : memref<16x512xf32, #tpu.memory_space<vmem>>, vector<16x256xf32>
    %165 = arith.truncf %164 : vector<16x256xf32> to vector<16x256xbf16>
    %c352 = arith.constant 352 : index
    %c0_108 = arith.constant 0 : index
    %166 = vector.load %arg17[%c352, %c0_108] : memref<400x256xbf16, #tpu.memory_space<vmem>>, vector<16x256xbf16>
    tpu.vector_store %arg17[%c352, %c0_108], %165 {strides = array<i32>} : memref<400x256xbf16, #tpu.memory_space<vmem>>, vector<16x256xbf16>,
    %c0_109 = arith.constant 0 : index
    %c161 = arith.constant 161 : index
    %167 = vector.load %arg16[%c0_109, %c161] : memref<16x512xf32, #tpu.memory_space<vmem>>, vector<16x256xf32>
    %c3_110 = arith.constant 3 : index
    %c0_111 = arith.constant 0 : index
    %168 = vector.load %arg14[%c3_110, %c0_111] : memref<5x256xf32, #tpu.memory_space<vmem>>, vector<1x256xf32>
    %169 = vector.broadcast %168 : vector<1x256xf32> to vector<16x256xf32>
    %170 = arith.mulf %167, %169 : vector<16x256xf32>
    %171 = arith.truncf %170 : vector<16x256xf32> to vector<16x256xbf16>
    %c368 = arith.constant 368 : index
    %c0_112 = arith.constant 0 : index
    %172 = vector.load %arg17[%c368, %c0_112] : memref<400x256xbf16, #tpu.memory_space<vmem>>, vector<16x256xbf16>
    tpu.vector_store %arg17[%c368, %c0_112], %171 {strides = array<i32>} : memref<400x256xbf16, #tpu.memory_space<vmem>>, vector<16x256xbf16>,
    %c0_113 = arith.constant 0 : index
    %c162 = arith.constant 162 : index
    %173 = vector.load %arg16[%c0_113, %c162] : memref<16x512xf32, #tpu.memory_space<vmem>>, vector<16x256xf32>
    %c4_114 = arith.constant 4 : index
    %c0_115 = arith.constant 0 : index
    %174 = vector.load %arg14[%c4_114, %c0_115] : memref<5x256xf32, #tpu.memory_space<vmem>>, vector<1x256xf32>
    %175 = vector.broadcast %174 : vector<1x256xf32> to vector<16x256xf32>
    %176 = arith.mulf %173, %175 : vector<16x256xf32>
    %177 = arith.truncf %176 : vector<16x256xf32> to vector<16x256xbf16>
    %c384_116 = arith.constant 384 : index
    %c0_117 = arith.constant 0 : index
    %178 = vector.load %arg17[%c384_116, %c0_117] : memref<400x256xbf16, #tpu.memory_space<vmem>>, vector<16x256xbf16>
    tpu.vector_store %arg17[%c384_116, %c0_117], %177 {strides = array<i32>} : memref<400x256xbf16, #tpu.memory_space<vmem>>, vector<16x256xbf16>,
    %c0_118 = arith.constant 0 : index
    %c0_119 = arith.constant 0 : index
    %179 = vector.load %arg4[%c0_118, %c0_119] : memref<16x400xf32, #tpu.memory_space<vmem>>, vector<16x400xf32>
    %c0_120 = arith.constant 0 : index
    %c0_121 = arith.constant 0 : index
    %180 = vector.load %arg17[%c0_120, %c0_121] : memref<400x256xbf16, #tpu.memory_space<vmem>>, vector<400x256xbf16>
    %181 = arith.truncf %179 : vector<16x400xf32> to vector<16x400xbf16>
    %cst_122 = arith.constant dense<0.000000e+00> : vector<16x256xf32>
    %182 = tpu.matmul %181, %180, %cst_122 {dimension_numbers = #tpu.dot_dimension_numbers<[1], [0], [0], [1], [0, 0, 1, 1], [], []>} : vector<16x400xbf16>, vector<400x256xbf16>, vector<16x256xf32> -> vector<16x256xf32>
    %c0_123 = arith.constant 0 : index
    %c7 = arith.constant 7 : index
    %183 = vector.load %arg13[%c0_123, %c7] : memref<16x8xf32, #tpu.memory_space<vmem>>, vector<16x1xf32>
    %184 = vector.broadcast %183 : vector<16x1xf32> to vector<16x256xf32>
    %185 = arith.addf %182, %184 : vector<16x256xf32>
    %c0_124 = arith.constant 0 : index
    %c128_125 = arith.constant 128 : index
    %186 = vector.load %arg16[%c0_124, %c128_125] : memref<16x512xf32, #tpu.memory_space<vmem>>, vector<16x256xf32>
    tpu.vector_store %arg16[%c0_124, %c128_125], %27 {strides = array<i32>} : memref<16x512xf32, #tpu.memory_space<vmem>>, vector<16x256xf32>,
    %c0_126 = arith.constant 0 : index
    %c9 = arith.constant 9 : index
    %187 = vector.load %arg5[%c0_126, %c9] : memref<16x10xf32, #tpu.memory_space<vmem>>, vector<16x1xf32>
    %c0_127 = arith.constant 0 : index
    %c111_128 = arith.constant 111 : index
    %188 = vector.load %arg16[%c0_127, %c111_128] : memref<16x512xf32, #tpu.memory_space<vmem>>, vector<16x256xf32>
    %c1_129 = arith.constant 1 : index
    %c0_130 = arith.constant 0 : index
    %189 = vector.load %arg14[%c1_129, %c0_130] : memref<5x256xf32, #tpu.memory_space<vmem>>, vector<1x256xf32>
    %190 = vector.broadcast %189 : vector<1x256xf32> to vector<16x256xf32>
    %191 = arith.mulf %188, %190 : vector<16x256xf32>
    %c0_131 = arith.constant 0 : index
    %c0_132 = arith.constant 0 : index
    %192 = vector.load %arg5[%c0_131, %c0_132] : memref<16x10xf32, #tpu.memory_space<vmem>>, vector<16x1xf32>
    %193 = vector.broadcast %192 : vector<16x1xf32> to vector<16x256xf32>
    %194 = arith.mulf %191, %193 : vector<16x256xf32>
    %195 = vector.broadcast %187 : vector<16x1xf32> to vector<16x256xf32>
    %196 = arith.addf %195, %194 : vector<16x256xf32>
    %c0_133 = arith.constant 0 : index
    %c112_134 = arith.constant 112 : index
    %197 = vector.load %arg16[%c0_133, %c112_134] : memref<16x512xf32, #tpu.memory_space<vmem>>, vector<16x256xf32>
    %c0_135 = arith.constant 0 : index
    %c1_136 = arith.constant 1 : index
    %198 = vector.load %arg5[%c0_135, %c1_136] : memref<16x10xf32, #tpu.memory_space<vmem>>, vector<16x1xf32>
    %199 = vector.broadcast %198 : vector<16x1xf32> to vector<16x256xf32>
    %200 = arith.mulf %197, %199 : vector<16x256xf32>
    %201 = arith.addf %196, %200 : vector<16x256xf32>
    %c0_137 = arith.constant 0 : index
    %c113_138 = arith.constant 113 : index
    %202 = vector.load %arg16[%c0_137, %c113_138] : memref<16x512xf32, #tpu.memory_space<vmem>>, vector<16x256xf32>
    %c3_139 = arith.constant 3 : index
    %c0_140 = arith.constant 0 : index
    %203 = vector.load %arg14[%c3_139, %c0_140] : memref<5x256xf32, #tpu.memory_space<vmem>>, vector<1x256xf32>
    %204 = vector.broadcast %203 : vector<1x256xf32> to vector<16x256xf32>
    %205 = arith.mulf %202, %204 : vector<16x256xf32>
    %c0_141 = arith.constant 0 : index
    %c2 = arith.constant 2 : index
    %206 = vector.load %arg5[%c0_141, %c2] : memref<16x10xf32, #tpu.memory_space<vmem>>, vector<16x1xf32>
    %207 = vector.broadcast %206 : vector<16x1xf32> to vector<16x256xf32>
    %208 = arith.mulf %205, %207 : vector<16x256xf32>
    %209 = arith.addf %201, %208 : vector<16x256xf32>
    %c0_142 = arith.constant 0 : index
    %c127_143 = arith.constant 127 : index
    %210 = vector.load %arg16[%c0_142, %c127_143] : memref<16x512xf32, #tpu.memory_space<vmem>>, vector<16x256xf32>
    %c1_144 = arith.constant 1 : index
    %c0_145 = arith.constant 0 : index
    %211 = vector.load %arg14[%c1_144, %c0_145] : memref<5x256xf32, #tpu.memory_space<vmem>>, vector<1x256xf32>
    %212 = vector.broadcast %211 : vector<1x256xf32> to vector<16x256xf32>
    %213 = arith.mulf %210, %212 : vector<16x256xf32>
    %c0_146 = arith.constant 0 : index
    %c3_147 = arith.constant 3 : index
    %214 = vector.load %arg5[%c0_146, %c3_147] : memref<16x10xf32, #tpu.memory_space<vmem>>, vector<16x1xf32>
    %215 = vector.broadcast %214 : vector<16x1xf32> to vector<16x256xf32>
    %216 = arith.mulf %213, %215 : vector<16x256xf32>
    %217 = arith.addf %209, %216 : vector<16x256xf32>
    %c0_148 = arith.constant 0 : index
    %c128_149 = arith.constant 128 : index
    %218 = vector.load %arg16[%c0_148, %c128_149] : memref<16x512xf32, #tpu.memory_space<vmem>>, vector<16x256xf32>
    %c0_150 = arith.constant 0 : index
    %c4_151 = arith.constant 4 : index
    %219 = vector.load %arg5[%c0_150, %c4_151] : memref<16x10xf32, #tpu.memory_space<vmem>>, vector<16x1xf32>
    %220 = vector.broadcast %219 : vector<16x1xf32> to vector<16x256xf32>
    %221 = arith.mulf %218, %220 : vector<16x256xf32>
    %222 = arith.addf %217, %221 : vector<16x256xf32>
    %c0_152 = arith.constant 0 : index
    %c129_153 = arith.constant 129 : index
    %223 = vector.load %arg16[%c0_152, %c129_153] : memref<16x512xf32, #tpu.memory_space<vmem>>, vector<16x256xf32>
    %c3_154 = arith.constant 3 : index
    %c0_155 = arith.constant 0 : index
    %224 = vector.load %arg14[%c3_154, %c0_155] : memref<5x256xf32, #tpu.memory_space<vmem>>, vector<1x256xf32>
    %225 = vector.broadcast %224 : vector<1x256xf32> to vector<16x256xf32>
    %226 = arith.mulf %223, %225 : vector<16x256xf32>
    %c0_156 = arith.constant 0 : index
    %c5 = arith.constant 5 : index
    %227 = vector.load %arg5[%c0_156, %c5] : memref<16x10xf32, #tpu.memory_space<vmem>>, vector<16x1xf32>
    %228 = vector.broadcast %227 : vector<16x1xf32> to vector<16x256xf32>
    %229 = arith.mulf %226, %228 : vector<16x256xf32>
    %230 = arith.addf %222, %229 : vector<16x256xf32>
    %c0_157 = arith.constant 0 : index
    %c143_158 = arith.constant 143 : index
    %231 = vector.load %arg16[%c0_157, %c143_158] : memref<16x512xf32, #tpu.memory_space<vmem>>, vector<16x256xf32>
    %c1_159 = arith.constant 1 : index
    %c0_160 = arith.constant 0 : index
    %232 = vector.load %arg14[%c1_159, %c0_160] : memref<5x256xf32, #tpu.memory_space<vmem>>, vector<1x256xf32>
    %233 = vector.broadcast %232 : vector<1x256xf32> to vector<16x256xf32>
    %234 = arith.mulf %231, %233 : vector<16x256xf32>
    %c0_161 = arith.constant 0 : index
    %c6 = arith.constant 6 : index
    %235 = vector.load %arg5[%c0_161, %c6] : memref<16x10xf32, #tpu.memory_space<vmem>>, vector<16x1xf32>
    %236 = vector.broadcast %235 : vector<16x1xf32> to vector<16x256xf32>
    %237 = arith.mulf %234, %236 : vector<16x256xf32>
    %238 = arith.addf %230, %237 : vector<16x256xf32>
    %c0_162 = arith.constant 0 : index
    %c144_163 = arith.constant 144 : index
    %239 = vector.load %arg16[%c0_162, %c144_163] : memref<16x512xf32, #tpu.memory_space<vmem>>, vector<16x256xf32>
    %c0_164 = arith.constant 0 : index
    %c7_165 = arith.constant 7 : index
    %240 = vector.load %arg5[%c0_164, %c7_165] : memref<16x10xf32, #tpu.memory_space<vmem>>, vector<16x1xf32>
    %241 = vector.broadcast %240 : vector<16x1xf32> to vector<16x256xf32>
    %242 = arith.mulf %239, %241 : vector<16x256xf32>
    %243 = arith.addf %238, %242 : vector<16x256xf32>
    %c0_166 = arith.constant 0 : index
    %c145_167 = arith.constant 145 : index
    %244 = vector.load %arg16[%c0_166, %c145_167] : memref<16x512xf32, #tpu.memory_space<vmem>>, vector<16x256xf32>
    %c3_168 = arith.constant 3 : index
    %c0_169 = arith.constant 0 : index
    %245 = vector.load %arg14[%c3_168, %c0_169] : memref<5x256xf32, #tpu.memory_space<vmem>>, vector<1x256xf32>
    %246 = vector.broadcast %245 : vector<1x256xf32> to vector<16x256xf32>
    %247 = arith.mulf %244, %246 : vector<16x256xf32>
    %c0_170 = arith.constant 0 : index
    %c8 = arith.constant 8 : index
    %248 = vector.load %arg5[%c0_170, %c8] : memref<16x10xf32, #tpu.memory_space<vmem>>, vector<16x1xf32>
    %249 = vector.broadcast %248 : vector<16x1xf32> to vector<16x256xf32>
    %250 = arith.mulf %247, %249 : vector<16x256xf32>
    %251 = arith.addf %243, %250 : vector<16x256xf32>
    %252 = vector.extract_strided_slice %251 {offsets = [0, 0], sizes = [8, 256], strides = [1, 1]} : vector<16x256xf32> to vector<8x256xf32>
    %253 = vector.extract_strided_slice %251 {offsets = [8, 0], sizes = [8, 256], strides = [1, 1]} : vector<16x256xf32> to vector<8x256xf32>
    %254 = arith.mulf %252, %253 : vector<8x256xf32>
    %c0_171 = arith.constant 0 : index
    %c0_172 = arith.constant 0 : index
    %255 = vector.load %arg7[%c0_171, %c0_172] : memref<32x8xf32, #tpu.memory_space<vmem>>, vector<32x8xf32>
    %256 = arith.truncf %255 : vector<32x8xf32> to vector<32x8xbf16>
    %257 = arith.truncf %254 : vector<8x256xf32> to vector<8x256xbf16>
    %cst_173 = arith.constant dense<0.000000e+00> : vector<32x256xf32>
    %258 = tpu.matmul %256, %257, %cst_173 {dimension_numbers = #tpu.dot_dimension_numbers<[1], [0], [0], [1], [0, 0, 1, 1], [], []>} : vector<32x8xbf16>, vector<8x256xbf16>, vector<32x256xf32> -> vector<32x256xf32>
    %c0_174 = arith.constant 0 : index
    %c1_175 = arith.constant 1 : index
    %259 = vector.load %arg8[%c0_174, %c1_175] : memref<32x2xf32, #tpu.memory_space<vmem>>, vector<32x1xf32>
    %260 = vector.broadcast %259 : vector<32x1xf32> to vector<32x256xf32>
    %261 = arith.addf %258, %260 : vector<32x256xf32>
    %c0_176 = arith.constant 0 : index
    %c0_177 = arith.constant 0 : index
    %262 = vector.load %arg8[%c0_176, %c0_177] : memref<32x2xf32, #tpu.memory_space<vmem>>, vector<32x1xf32>
    %263 = vector.broadcast %262 : vector<32x1xf32> to vector<32x256xf32>
    %264 = arith.mulf %261, %263 : vector<32x256xf32>
    %265 = arith.addf %264, %42 : vector<32x256xf32>
    %c0_178 = arith.constant 0 : index
    %c128_179 = arith.constant 128 : index
    %266 = vector.load %arg16[%c0_178, %c128_179] : memref<16x512xf32, #tpu.memory_space<vmem>>, vector<16x256xf32>
    tpu.vector_store %arg16[%c0_178, %c128_179], %36 {strides = array<i32>} : memref<16x512xf32, #tpu.memory_space<vmem>>, vector<16x256xf32>,
    %c0_180 = arith.constant 0 : index
    %c9_181 = arith.constant 9 : index
    %267 = vector.load %arg6[%c0_180, %c9_181] : memref<16x10xf32, #tpu.memory_space<vmem>>, vector<16x1xf32>
    %c0_182 = arith.constant 0 : index
    %c111_183 = arith.constant 111 : index
    %268 = vector.load %arg16[%c0_182, %c111_183] : memref<16x512xf32, #tpu.memory_space<vmem>>, vector<16x256xf32>
    %c1_184 = arith.constant 1 : index
    %c0_185 = arith.constant 0 : index
    %269 = vector.load %arg14[%c1_184, %c0_185] : memref<5x256xf32, #tpu.memory_space<vmem>>, vector<1x256xf32>
    %270 = vector.broadcast %269 : vector<1x256xf32> to vector<16x256xf32>
    %271 = arith.mulf %268, %270 : vector<16x256xf32>
    %c0_186 = arith.constant 0 : index
    %c0_187 = arith.constant 0 : index
    %272 = vector.load %arg6[%c0_186, %c0_187] : memref<16x10xf32, #tpu.memory_space<vmem>>, vector<16x1xf32>
    %273 = vector.broadcast %272 : vector<16x1xf32> to vector<16x256xf32>
    %274 = arith.mulf %271, %273 : vector<16x256xf32>
    %275 = vector.broadcast %267 : vector<16x1xf32> to vector<16x256xf32>
    %276 = arith.addf %275, %274 : vector<16x256xf32>
    %c0_188 = arith.constant 0 : index
    %c112_189 = arith.constant 112 : index
    %277 = vector.load %arg16[%c0_188, %c112_189] : memref<16x512xf32, #tpu.memory_space<vmem>>, vector<16x256xf32>
    %c0_190 = arith.constant 0 : index
    %c1_191 = arith.constant 1 : index
    %278 = vector.load %arg6[%c0_190, %c1_191] : memref<16x10xf32, #tpu.memory_space<vmem>>, vector<16x1xf32>
    %279 = vector.broadcast %278 : vector<16x1xf32> to vector<16x256xf32>
    %280 = arith.mulf %277, %279 : vector<16x256xf32>
    %281 = arith.addf %276, %280 : vector<16x256xf32>
    %c0_192 = arith.constant 0 : index
    %c113_193 = arith.constant 113 : index
    %282 = vector.load %arg16[%c0_192, %c113_193] : memref<16x512xf32, #tpu.memory_space<vmem>>, vector<16x256xf32>
    %c3_194 = arith.constant 3 : index
    %c0_195 = arith.constant 0 : index
    %283 = vector.load %arg14[%c3_194, %c0_195] : memref<5x256xf32, #tpu.memory_space<vmem>>, vector<1x256xf32>
    %284 = vector.broadcast %283 : vector<1x256xf32> to vector<16x256xf32>
    %285 = arith.mulf %282, %284 : vector<16x256xf32>
    %c0_196 = arith.constant 0 : index
    %c2_197 = arith.constant 2 : index
    %286 = vector.load %arg6[%c0_196, %c2_197] : memref<16x10xf32, #tpu.memory_space<vmem>>, vector<16x1xf32>
    %287 = vector.broadcast %286 : vector<16x1xf32> to vector<16x256xf32>
    %288 = arith.mulf %285, %287 : vector<16x256xf32>
    %289 = arith.addf %281, %288 : vector<16x256xf32>
    %c0_198 = arith.constant 0 : index
    %c127_199 = arith.constant 127 : index
    %290 = vector.load %arg16[%c0_198, %c127_199] : memref<16x512xf32, #tpu.memory_space<vmem>>, vector<16x256xf32>
    %c1_200 = arith.constant 1 : index
    %c0_201 = arith.constant 0 : index
    %291 = vector.load %arg14[%c1_200, %c0_201] : memref<5x256xf32, #tpu.memory_space<vmem>>, vector<1x256xf32>
    %292 = vector.broadcast %291 : vector<1x256xf32> to vector<16x256xf32>
    %293 = arith.mulf %290, %292 : vector<16x256xf32>
    %c0_202 = arith.constant 0 : index
    %c3_203 = arith.constant 3 : index
    %294 = vector.load %arg6[%c0_202, %c3_203] : memref<16x10xf32, #tpu.memory_space<vmem>>, vector<16x1xf32>
    %295 = vector.broadcast %294 : vector<16x1xf32> to vector<16x256xf32>
    %296 = arith.mulf %293, %295 : vector<16x256xf32>
    %297 = arith.addf %289, %296 : vector<16x256xf32>
    %c0_204 = arith.constant 0 : index
    %c128_205 = arith.constant 128 : index
    %298 = vector.load %arg16[%c0_204, %c128_205] : memref<16x512xf32, #tpu.memory_space<vmem>>, vector<16x256xf32>
    %c0_206 = arith.constant 0 : index
    %c4_207 = arith.constant 4 : index
    %299 = vector.load %arg6[%c0_206, %c4_207] : memref<16x10xf32, #tpu.memory_space<vmem>>, vector<16x1xf32>
    %300 = vector.broadcast %299 : vector<16x1xf32> to vector<16x256xf32>
    %301 = arith.mulf %298, %300 : vector<16x256xf32>
    %302 = arith.addf %297, %301 : vector<16x256xf32>
    %c0_208 = arith.constant 0 : index
    %c129_209 = arith.constant 129 : index
    %303 = vector.load %arg16[%c0_208, %c129_209] : memref<16x512xf32, #tpu.memory_space<vmem>>, vector<16x256xf32>
    %c3_210 = arith.constant 3 : index
    %c0_211 = arith.constant 0 : index
    %304 = vector.load %arg14[%c3_210, %c0_211] : memref<5x256xf32, #tpu.memory_space<vmem>>, vector<1x256xf32>
    %305 = vector.broadcast %304 : vector<1x256xf32> to vector<16x256xf32>
    %306 = arith.mulf %303, %305 : vector<16x256xf32>
    %c0_212 = arith.constant 0 : index
    %c5_213 = arith.constant 5 : index
    %307 = vector.load %arg6[%c0_212, %c5_213] : memref<16x10xf32, #tpu.memory_space<vmem>>, vector<16x1xf32>
    %308 = vector.broadcast %307 : vector<16x1xf32> to vector<16x256xf32>
    %309 = arith.mulf %306, %308 : vector<16x256xf32>
    %310 = arith.addf %302, %309 : vector<16x256xf32>
    %c0_214 = arith.constant 0 : index
    %c143_215 = arith.constant 143 : index
    %311 = vector.load %arg16[%c0_214, %c143_215] : memref<16x512xf32, #tpu.memory_space<vmem>>, vector<16x256xf32>
    %c1_216 = arith.constant 1 : index
    %c0_217 = arith.constant 0 : index
    %312 = vector.load %arg14[%c1_216, %c0_217] : memref<5x256xf32, #tpu.memory_space<vmem>>, vector<1x256xf32>
    %313 = vector.broadcast %312 : vector<1x256xf32> to vector<16x256xf32>
    %314 = arith.mulf %311, %313 : vector<16x256xf32>
    %c0_218 = arith.constant 0 : index
    %c6_219 = arith.constant 6 : index
    %315 = vector.load %arg6[%c0_218, %c6_219] : memref<16x10xf32, #tpu.memory_space<vmem>>, vector<16x1xf32>
    %316 = vector.broadcast %315 : vector<16x1xf32> to vector<16x256xf32>
    %317 = arith.mulf %314, %316 : vector<16x256xf32>
    %318 = arith.addf %310, %317 : vector<16x256xf32>
    %c0_220 = arith.constant 0 : index
    %c144_221 = arith.constant 144 : index
    %319 = vector.load %arg16[%c0_220, %c144_221] : memref<16x512xf32, #tpu.memory_space<vmem>>, vector<16x256xf32>
    %c0_222 = arith.constant 0 : index
    %c7_223 = arith.constant 7 : index
    %320 = vector.load %arg6[%c0_222, %c7_223] : memref<16x10xf32, #tpu.memory_space<vmem>>, vector<16x1xf32>
    %321 = vector.broadcast %320 : vector<16x1xf32> to vector<16x256xf32>
    %322 = arith.mulf %319, %321 : vector<16x256xf32>
    %323 = arith.addf %318, %322 : vector<16x256xf32>
    %c0_224 = arith.constant 0 : index
    %c145_225 = arith.constant 145 : index
    %324 = vector.load %arg16[%c0_224, %c145_225] : memref<16x512xf32, #tpu.memory_space<vmem>>, vector<16x256xf32>
    %c3_226 = arith.constant 3 : index
    %c0_227 = arith.constant 0 : index
    %325 = vector.load %arg14[%c3_226, %c0_227] : memref<5x256xf32, #tpu.memory_space<vmem>>, vector<1x256xf32>
    %326 = vector.broadcast %325 : vector<1x256xf32> to vector<16x256xf32>
    %327 = arith.mulf %324, %326 : vector<16x256xf32>
    %c0_228 = arith.constant 0 : index
    %c8_229 = arith.constant 8 : index
    %328 = vector.load %arg6[%c0_228, %c8_229] : memref<16x10xf32, #tpu.memory_space<vmem>>, vector<16x1xf32>
    %329 = vector.broadcast %328 : vector<16x1xf32> to vector<16x256xf32>
    %330 = arith.mulf %327, %329 : vector<16x256xf32>
    %331 = arith.addf %323, %330 : vector<16x256xf32>
    %c0_230 = arith.constant 0 : index
    %c128_231 = arith.constant 128 : index
    %332 = vector.load %arg16[%c0_230, %c128_231] : memref<16x512xf32, #tpu.memory_space<vmem>>, vector<16x256xf32>
    tpu.vector_store %arg16[%c0_230, %c128_231], %331 {strides = array<i32>} : memref<16x512xf32, #tpu.memory_space<vmem>>, vector<16x256xf32>,
    %c0_232 = arith.constant 0 : index
    %c111_233 = arith.constant 111 : index
    %333 = vector.load %arg16[%c0_232, %c111_233] : memref<16x512xf32, #tpu.memory_space<vmem>>, vector<16x256xf32>
    %c1_234 = arith.constant 1 : index
    %c0_235 = arith.constant 0 : index
    %334 = vector.load %arg14[%c1_234, %c0_235] : memref<5x256xf32, #tpu.memory_space<vmem>>, vector<1x256xf32>
    %335 = vector.broadcast %334 : vector<1x256xf32> to vector<16x256xf32>
    %336 = arith.mulf %333, %335 : vector<16x256xf32>
    %337 = arith.truncf %336 : vector<16x256xf32> to vector<16x256xbf16>
    %c0_236 = arith.constant 0 : index
    %c0_237 = arith.constant 0 : index
    %338 = vector.load %arg18[%c0_236, %c0_237] : memref<144x256xbf16, #tpu.memory_space<vmem>>, vector<16x256xbf16>
    tpu.vector_store %arg18[%c0_236, %c0_237], %337 {strides = array<i32>} : memref<144x256xbf16, #tpu.memory_space<vmem>>, vector<16x256xbf16>,
    %c0_238 = arith.constant 0 : index
    %c112_239 = arith.constant 112 : index
    %339 = vector.load %arg16[%c0_238, %c112_239] : memref<16x512xf32, #tpu.memory_space<vmem>>, vector<16x256xf32>
    %340 = arith.truncf %339 : vector<16x256xf32> to vector<16x256xbf16>
    %c16_240 = arith.constant 16 : index
    %c0_241 = arith.constant 0 : index
    %341 = vector.load %arg18[%c16_240, %c0_241] : memref<144x256xbf16, #tpu.memory_space<vmem>>, vector<16x256xbf16>
    tpu.vector_store %arg18[%c16_240, %c0_241], %340 {strides = array<i32>} : memref<144x256xbf16, #tpu.memory_space<vmem>>, vector<16x256xbf16>,
    %c0_242 = arith.constant 0 : index
    %c113_243 = arith.constant 113 : index
    %342 = vector.load %arg16[%c0_242, %c113_243] : memref<16x512xf32, #tpu.memory_space<vmem>>, vector<16x256xf32>
    %c3_244 = arith.constant 3 : index
    %c0_245 = arith.constant 0 : index
    %343 = vector.load %arg14[%c3_244, %c0_245] : memref<5x256xf32, #tpu.memory_space<vmem>>, vector<1x256xf32>
    %344 = vector.broadcast %343 : vector<1x256xf32> to vector<16x256xf32>
    %345 = arith.mulf %342, %344 : vector<16x256xf32>
    %346 = arith.truncf %345 : vector<16x256xf32> to vector<16x256xbf16>
    %c32_246 = arith.constant 32 : index
    %c0_247 = arith.constant 0 : index
    %347 = vector.load %arg18[%c32_246, %c0_247] : memref<144x256xbf16, #tpu.memory_space<vmem>>, vector<16x256xbf16>
    tpu.vector_store %arg18[%c32_246, %c0_247], %346 {strides = array<i32>} : memref<144x256xbf16, #tpu.memory_space<vmem>>, vector<16x256xbf16>,
    %c0_248 = arith.constant 0 : index
    %c127_249 = arith.constant 127 : index
    %348 = vector.load %arg16[%c0_248, %c127_249] : memref<16x512xf32, #tpu.memory_space<vmem>>, vector<16x256xf32>
    %c1_250 = arith.constant 1 : index
    %c0_251 = arith.constant 0 : index
    %349 = vector.load %arg14[%c1_250, %c0_251] : memref<5x256xf32, #tpu.memory_space<vmem>>, vector<1x256xf32>
    %350 = vector.broadcast %349 : vector<1x256xf32> to vector<16x256xf32>
    %351 = arith.mulf %348, %350 : vector<16x256xf32>
    %352 = arith.truncf %351 : vector<16x256xf32> to vector<16x256xbf16>
    %c48_252 = arith.constant 48 : index
    %c0_253 = arith.constant 0 : index
    %353 = vector.load %arg18[%c48_252, %c0_253] : memref<144x256xbf16, #tpu.memory_space<vmem>>, vector<16x256xbf16>
    tpu.vector_store %arg18[%c48_252, %c0_253], %352 {strides = array<i32>} : memref<144x256xbf16, #tpu.memory_space<vmem>>, vector<16x256xbf16>,
    %c0_254 = arith.constant 0 : index
    %c128_255 = arith.constant 128 : index
    %354 = vector.load %arg16[%c0_254, %c128_255] : memref<16x512xf32, #tpu.memory_space<vmem>>, vector<16x256xf32>
    %355 = arith.truncf %354 : vector<16x256xf32> to vector<16x256xbf16>
    %c64_256 = arith.constant 64 : index
    %c0_257 = arith.constant 0 : index
    %356 = vector.load %arg18[%c64_256, %c0_257] : memref<144x256xbf16, #tpu.memory_space<vmem>>, vector<16x256xbf16>
    tpu.vector_store %arg18[%c64_256, %c0_257], %355 {strides = array<i32>} : memref<144x256xbf16, #tpu.memory_space<vmem>>, vector<16x256xbf16>,
    %c0_258 = arith.constant 0 : index
    %c129_259 = arith.constant 129 : index
    %357 = vector.load %arg16[%c0_258, %c129_259] : memref<16x512xf32, #tpu.memory_space<vmem>>, vector<16x256xf32>
    %c3_260 = arith.constant 3 : index
    %c0_261 = arith.constant 0 : index
    %358 = vector.load %arg14[%c3_260, %c0_261] : memref<5x256xf32, #tpu.memory_space<vmem>>, vector<1x256xf32>
    %359 = vector.broadcast %358 : vector<1x256xf32> to vector<16x256xf32>
    %360 = arith.mulf %357, %359 : vector<16x256xf32>
    %361 = arith.truncf %360 : vector<16x256xf32> to vector<16x256xbf16>
    %c80_262 = arith.constant 80 : index
    %c0_263 = arith.constant 0 : index
    %362 = vector.load %arg18[%c80_262, %c0_263] : memref<144x256xbf16, #tpu.memory_space<vmem>>, vector<16x256xbf16>
    tpu.vector_store %arg18[%c80_262, %c0_263], %361 {strides = array<i32>} : memref<144x256xbf16, #tpu.memory_space<vmem>>, vector<16x256xbf16>,
    %c0_264 = arith.constant 0 : index
    %c143_265 = arith.constant 143 : index
    %363 = vector.load %arg16[%c0_264, %c143_265] : memref<16x512xf32, #tpu.memory_space<vmem>>, vector<16x256xf32>
    %c1_266 = arith.constant 1 : index
    %c0_267 = arith.constant 0 : index
    %364 = vector.load %arg14[%c1_266, %c0_267] : memref<5x256xf32, #tpu.memory_space<vmem>>, vector<1x256xf32>
    %365 = vector.broadcast %364 : vector<1x256xf32> to vector<16x256xf32>
    %366 = arith.mulf %363, %365 : vector<16x256xf32>
    %367 = arith.truncf %366 : vector<16x256xf32> to vector<16x256xbf16>
    %c96_268 = arith.constant 96 : index
    %c0_269 = arith.constant 0 : index
    %368 = vector.load %arg18[%c96_268, %c0_269] : memref<144x256xbf16, #tpu.memory_space<vmem>>, vector<16x256xbf16>
    tpu.vector_store %arg18[%c96_268, %c0_269], %367 {strides = array<i32>} : memref<144x256xbf16, #tpu.memory_space<vmem>>, vector<16x256xbf16>,
    %c0_270 = arith.constant 0 : index
    %c144_271 = arith.constant 144 : index
    %369 = vector.load %arg16[%c0_270, %c144_271] : memref<16x512xf32, #tpu.memory_space<vmem>>, vector<16x256xf32>
    %370 = arith.truncf %369 : vector<16x256xf32> to vector<16x256xbf16>
    %c112_272 = arith.constant 112 : index
    %c0_273 = arith.constant 0 : index
    %371 = vector.load %arg18[%c112_272, %c0_273] : memref<144x256xbf16, #tpu.memory_space<vmem>>, vector<16x256xbf16>
    tpu.vector_store %arg18[%c112_272, %c0_273], %370 {strides = array<i32>} : memref<144x256xbf16, #tpu.memory_space<vmem>>, vector<16x256xbf16>,
    %c0_274 = arith.constant 0 : index
    %c145_275 = arith.constant 145 : index
    %372 = vector.load %arg16[%c0_274, %c145_275] : memref<16x512xf32, #tpu.memory_space<vmem>>, vector<16x256xf32>
    %c3_276 = arith.constant 3 : index
    %c0_277 = arith.constant 0 : index
    %373 = vector.load %arg14[%c3_276, %c0_277] : memref<5x256xf32, #tpu.memory_space<vmem>>, vector<1x256xf32>
    %374 = vector.broadcast %373 : vector<1x256xf32> to vector<16x256xf32>
    %375 = arith.mulf %372, %374 : vector<16x256xf32>
    %376 = arith.truncf %375 : vector<16x256xf32> to vector<16x256xbf16>
    %c128_278 = arith.constant 128 : index
    %c0_279 = arith.constant 0 : index
    %377 = vector.load %arg18[%c128_278, %c0_279] : memref<144x256xbf16, #tpu.memory_space<vmem>>, vector<16x256xbf16>
    tpu.vector_store %arg18[%c128_278, %c0_279], %376 {strides = array<i32>} : memref<144x256xbf16, #tpu.memory_space<vmem>>, vector<16x256xbf16>,
    %c0_280 = arith.constant 0 : index
    %c0_281 = arith.constant 0 : index
    %378 = vector.load %arg11[%c0_280, %c0_281] : memref<592x32xf32, #tpu.memory_space<vmem>>, vector<592x32xf32>
    %379 = arith.truncf %378 : vector<592x32xf32> to vector<592x32xbf16>
    %380 = arith.truncf %265 : vector<32x256xf32> to vector<32x256xbf16>
    %cst_282 = arith.constant dense<0.000000e+00> : vector<592x256xf32>
    %381 = tpu.matmul %379, %380, %cst_282 {dimension_numbers = #tpu.dot_dimension_numbers<[1], [0], [0], [1], [0, 0, 1, 1], [], []>} : vector<592x32xbf16>, vector<32x256xbf16>, vector<592x256xf32> -> vector<592x256xf32>
    %c0_283 = arith.constant 0 : index
    %c0_284 = arith.constant 0 : index
    %382 = vector.load %arg12[%c0_283, %c0_284] : memref<576x144xf32, #tpu.memory_space<vmem>>, vector<576x144xf32>
    %c0_285 = arith.constant 0 : index
    %c0_286 = arith.constant 0 : index
    %383 = vector.load %arg18[%c0_285, %c0_286] : memref<144x256xbf16, #tpu.memory_space<vmem>>, vector<144x256xbf16>
    %384 = arith.truncf %382 : vector<576x144xf32> to vector<576x144xbf16>
    %cst_287 = arith.constant dense<0.000000e+00> : vector<576x256xf32>
    %385 = tpu.matmul %384, %383, %cst_287 {dimension_numbers = #tpu.dot_dimension_numbers<[1], [0], [0], [1], [0, 0, 1, 1], [], []>} : vector<576x144xbf16>, vector<144x256xbf16>, vector<576x256xf32> -> vector<576x256xf32>
    %386 = vector.extract_strided_slice %381 {offsets = [576, 0], sizes = [16, 256], strides = [1, 1]} : vector<592x256xf32> to vector<16x256xf32>
    %387 = vector.extract_strided_slice %381 {offsets = [0, 0], sizes = [16, 256], strides = [1, 1]} : vector<592x256xf32> to vector<16x256xf32>
    %388 = vector.extract_strided_slice %385 {offsets = [0, 0], sizes = [16, 256], strides = [1, 1]} : vector<576x256xf32> to vector<16x256xf32>
    %389 = arith.mulf %387, %388 : vector<16x256xf32>
    %390 = arith.addf %386, %389 : vector<16x256xf32>
    %391 = vector.extract_strided_slice %381 {offsets = [16, 0], sizes = [16, 256], strides = [1, 1]} : vector<592x256xf32> to vector<16x256xf32>
    %392 = vector.extract_strided_slice %385 {offsets = [16, 0], sizes = [16, 256], strides = [1, 1]} : vector<576x256xf32> to vector<16x256xf32>
    %393 = arith.mulf %391, %392 : vector<16x256xf32>
    %394 = arith.addf %390, %393 : vector<16x256xf32>
    %395 = vector.extract_strided_slice %381 {offsets = [32, 0], sizes = [16, 256], strides = [1, 1]} : vector<592x256xf32> to vector<16x256xf32>
    %396 = vector.extract_strided_slice %385 {offsets = [32, 0], sizes = [16, 256], strides = [1, 1]} : vector<576x256xf32> to vector<16x256xf32>
    %397 = arith.mulf %395, %396 : vector<16x256xf32>
    %398 = arith.addf %394, %397 : vector<16x256xf32>
    %399 = vector.extract_strided_slice %381 {offsets = [48, 0], sizes = [16, 256], strides = [1, 1]} : vector<592x256xf32> to vector<16x256xf32>
    %400 = vector.extract_strided_slice %385 {offsets = [48, 0], sizes = [16, 256], strides = [1, 1]} : vector<576x256xf32> to vector<16x256xf32>
    %401 = arith.mulf %399, %400 : vector<16x256xf32>
    %402 = arith.addf %398, %401 : vector<16x256xf32>
    %403 = vector.extract_strided_slice %381 {offsets = [64, 0], sizes = [16, 256], strides = [1, 1]} : vector<592x256xf32> to vector<16x256xf32>
    %404 = vector.extract_strided_slice %385 {offsets = [64, 0], sizes = [16, 256], strides = [1, 1]} : vector<576x256xf32> to vector<16x256xf32>
    %405 = arith.mulf %403, %404 : vector<16x256xf32>
    %406 = arith.addf %402, %405 : vector<16x256xf32>
    %407 = vector.extract_strided_slice %381 {offsets = [80, 0], sizes = [16, 256], strides = [1, 1]} : vector<592x256xf32> to vector<16x256xf32>
    %408 = vector.extract_strided_slice %385 {offsets = [80, 0], sizes = [16, 256], strides = [1, 1]} : vector<576x256xf32> to vector<16x256xf32>
    %409 = arith.mulf %407, %408 : vector<16x256xf32>
    %410 = arith.addf %406, %409 : vector<16x256xf32>
    %411 = vector.extract_strided_slice %381 {offsets = [96, 0], sizes = [16, 256], strides = [1, 1]} : vector<592x256xf32> to vector<16x256xf32>
    %412 = vector.extract_strided_slice %385 {offsets = [96, 0], sizes = [16, 256], strides = [1, 1]} : vector<576x256xf32> to vector<16x256xf32>
    %413 = arith.mulf %411, %412 : vector<16x256xf32>
    %414 = arith.addf %410, %413 : vector<16x256xf32>
    %415 = vector.extract_strided_slice %381 {offsets = [112, 0], sizes = [16, 256], strides = [1, 1]} : vector<592x256xf32> to vector<16x256xf32>
    %416 = vector.extract_strided_slice %385 {offsets = [112, 0], sizes = [16, 256], strides = [1, 1]} : vector<576x256xf32> to vector<16x256xf32>
    %417 = arith.mulf %415, %416 : vector<16x256xf32>
    %418 = arith.addf %414, %417 : vector<16x256xf32>
    %419 = vector.extract_strided_slice %381 {offsets = [128, 0], sizes = [16, 256], strides = [1, 1]} : vector<592x256xf32> to vector<16x256xf32>
    %420 = vector.extract_strided_slice %385 {offsets = [128, 0], sizes = [16, 256], strides = [1, 1]} : vector<576x256xf32> to vector<16x256xf32>
    %421 = arith.mulf %419, %420 : vector<16x256xf32>
    %422 = arith.addf %418, %421 : vector<16x256xf32>
    %423 = vector.extract_strided_slice %381 {offsets = [144, 0], sizes = [16, 256], strides = [1, 1]} : vector<592x256xf32> to vector<16x256xf32>
    %424 = vector.extract_strided_slice %385 {offsets = [144, 0], sizes = [16, 256], strides = [1, 1]} : vector<576x256xf32> to vector<16x256xf32>
    %425 = arith.mulf %423, %424 : vector<16x256xf32>
    %426 = arith.addf %422, %425 : vector<16x256xf32>
    %427 = vector.extract_strided_slice %381 {offsets = [160, 0], sizes = [16, 256], strides = [1, 1]} : vector<592x256xf32> to vector<16x256xf32>
    %428 = vector.extract_strided_slice %385 {offsets = [160, 0], sizes = [16, 256], strides = [1, 1]} : vector<576x256xf32> to vector<16x256xf32>
    %429 = arith.mulf %427, %428 : vector<16x256xf32>
    %430 = arith.addf %426, %429 : vector<16x256xf32>
    %431 = vector.extract_strided_slice %381 {offsets = [176, 0], sizes = [16, 256], strides = [1, 1]} : vector<592x256xf32> to vector<16x256xf32>
    %432 = vector.extract_strided_slice %385 {offsets = [176, 0], sizes = [16, 256], strides = [1, 1]} : vector<576x256xf32> to vector<16x256xf32>
    %433 = arith.mulf %431, %432 : vector<16x256xf32>
    %434 = arith.addf %430, %433 : vector<16x256xf32>
    %435 = vector.extract_strided_slice %381 {offsets = [192, 0], sizes = [16, 256], strides = [1, 1]} : vector<592x256xf32> to vector<16x256xf32>
    %436 = vector.extract_strided_slice %385 {offsets = [192, 0], sizes = [16, 256], strides = [1, 1]} : vector<576x256xf32> to vector<16x256xf32>
    %437 = arith.mulf %435, %436 : vector<16x256xf32>
    %438 = arith.addf %434, %437 : vector<16x256xf32>
    %439 = vector.extract_strided_slice %381 {offsets = [208, 0], sizes = [16, 256], strides = [1, 1]} : vector<592x256xf32> to vector<16x256xf32>
    %440 = vector.extract_strided_slice %385 {offsets = [208, 0], sizes = [16, 256], strides = [1, 1]} : vector<576x256xf32> to vector<16x256xf32>
    %441 = arith.mulf %439, %440 : vector<16x256xf32>
    %442 = arith.addf %438, %441 : vector<16x256xf32>
    %443 = vector.extract_strided_slice %381 {offsets = [224, 0], sizes = [16, 256], strides = [1, 1]} : vector<592x256xf32> to vector<16x256xf32>
    %444 = vector.extract_strided_slice %385 {offsets = [224, 0], sizes = [16, 256], strides = [1, 1]} : vector<576x256xf32> to vector<16x256xf32>
    %445 = arith.mulf %443, %444 : vector<16x256xf32>
    %446 = arith.addf %442, %445 : vector<16x256xf32>
    %447 = vector.extract_strided_slice %381 {offsets = [240, 0], sizes = [16, 256], strides = [1, 1]} : vector<592x256xf32> to vector<16x256xf32>
    %448 = vector.extract_strided_slice %385 {offsets = [240, 0], sizes = [16, 256], strides = [1, 1]} : vector<576x256xf32> to vector<16x256xf32>
    %449 = arith.mulf %447, %448 : vector<16x256xf32>
    %450 = arith.addf %446, %449 : vector<16x256xf32>
    %451 = vector.extract_strided_slice %381 {offsets = [256, 0], sizes = [16, 256], strides = [1, 1]} : vector<592x256xf32> to vector<16x256xf32>
    %452 = vector.extract_strided_slice %385 {offsets = [256, 0], sizes = [16, 256], strides = [1, 1]} : vector<576x256xf32> to vector<16x256xf32>
    %453 = arith.mulf %451, %452 : vector<16x256xf32>
    %454 = arith.addf %450, %453 : vector<16x256xf32>
    %455 = vector.extract_strided_slice %381 {offsets = [272, 0], sizes = [16, 256], strides = [1, 1]} : vector<592x256xf32> to vector<16x256xf32>
    %456 = vector.extract_strided_slice %385 {offsets = [272, 0], sizes = [16, 256], strides = [1, 1]} : vector<576x256xf32> to vector<16x256xf32>
    %457 = arith.mulf %455, %456 : vector<16x256xf32>
    %458 = arith.addf %454, %457 : vector<16x256xf32>
    %459 = vector.extract_strided_slice %381 {offsets = [288, 0], sizes = [16, 256], strides = [1, 1]} : vector<592x256xf32> to vector<16x256xf32>
    %460 = vector.extract_strided_slice %385 {offsets = [288, 0], sizes = [16, 256], strides = [1, 1]} : vector<576x256xf32> to vector<16x256xf32>
    %461 = arith.mulf %459, %460 : vector<16x256xf32>
    %462 = arith.addf %458, %461 : vector<16x256xf32>
    %463 = vector.extract_strided_slice %381 {offsets = [304, 0], sizes = [16, 256], strides = [1, 1]} : vector<592x256xf32> to vector<16x256xf32>
    %464 = vector.extract_strided_slice %385 {offsets = [304, 0], sizes = [16, 256], strides = [1, 1]} : vector<576x256xf32> to vector<16x256xf32>
    %465 = arith.mulf %463, %464 : vector<16x256xf32>
    %466 = arith.addf %462, %465 : vector<16x256xf32>
    %467 = vector.extract_strided_slice %381 {offsets = [320, 0], sizes = [16, 256], strides = [1, 1]} : vector<592x256xf32> to vector<16x256xf32>
    %468 = vector.extract_strided_slice %385 {offsets = [320, 0], sizes = [16, 256], strides = [1, 1]} : vector<576x256xf32> to vector<16x256xf32>
    %469 = arith.mulf %467, %468 : vector<16x256xf32>
    %470 = arith.addf %466, %469 : vector<16x256xf32>
    %471 = vector.extract_strided_slice %381 {offsets = [336, 0], sizes = [16, 256], strides = [1, 1]} : vector<592x256xf32> to vector<16x256xf32>
    %472 = vector.extract_strided_slice %385 {offsets = [336, 0], sizes = [16, 256], strides = [1, 1]} : vector<576x256xf32> to vector<16x256xf32>
    %473 = arith.mulf %471, %472 : vector<16x256xf32>
    %474 = arith.addf %470, %473 : vector<16x256xf32>
    %475 = vector.extract_strided_slice %381 {offsets = [352, 0], sizes = [16, 256], strides = [1, 1]} : vector<592x256xf32> to vector<16x256xf32>
    %476 = vector.extract_strided_slice %385 {offsets = [352, 0], sizes = [16, 256], strides = [1, 1]} : vector<576x256xf32> to vector<16x256xf32>
    %477 = arith.mulf %475, %476 : vector<16x256xf32>
    %478 = arith.addf %474, %477 : vector<16x256xf32>
    %479 = vector.extract_strided_slice %381 {offsets = [368, 0], sizes = [16, 256], strides = [1, 1]} : vector<592x256xf32> to vector<16x256xf32>
    %480 = vector.extract_strided_slice %385 {offsets = [368, 0], sizes = [16, 256], strides = [1, 1]} : vector<576x256xf32> to vector<16x256xf32>
    %481 = arith.mulf %479, %480 : vector<16x256xf32>
    %482 = arith.addf %478, %481 : vector<16x256xf32>
    %483 = vector.extract_strided_slice %381 {offsets = [384, 0], sizes = [16, 256], strides = [1, 1]} : vector<592x256xf32> to vector<16x256xf32>
    %484 = vector.extract_strided_slice %385 {offsets = [384, 0], sizes = [16, 256], strides = [1, 1]} : vector<576x256xf32> to vector<16x256xf32>
    %485 = arith.mulf %483, %484 : vector<16x256xf32>
    %486 = arith.addf %482, %485 : vector<16x256xf32>
    %487 = vector.extract_strided_slice %381 {offsets = [400, 0], sizes = [16, 256], strides = [1, 1]} : vector<592x256xf32> to vector<16x256xf32>
    %488 = vector.extract_strided_slice %385 {offsets = [400, 0], sizes = [16, 256], strides = [1, 1]} : vector<576x256xf32> to vector<16x256xf32>
    %489 = arith.mulf %487, %488 : vector<16x256xf32>
    %490 = arith.addf %486, %489 : vector<16x256xf32>
    %491 = vector.extract_strided_slice %381 {offsets = [416, 0], sizes = [16, 256], strides = [1, 1]} : vector<592x256xf32> to vector<16x256xf32>
    %492 = vector.extract_strided_slice %385 {offsets = [416, 0], sizes = [16, 256], strides = [1, 1]} : vector<576x256xf32> to vector<16x256xf32>
    %493 = arith.mulf %491, %492 : vector<16x256xf32>
    %494 = arith.addf %490, %493 : vector<16x256xf32>
    %495 = vector.extract_strided_slice %381 {offsets = [432, 0], sizes = [16, 256], strides = [1, 1]} : vector<592x256xf32> to vector<16x256xf32>
    %496 = vector.extract_strided_slice %385 {offsets = [432, 0], sizes = [16, 256], strides = [1, 1]} : vector<576x256xf32> to vector<16x256xf32>
    %497 = arith.mulf %495, %496 : vector<16x256xf32>
    %498 = arith.addf %494, %497 : vector<16x256xf32>
    %499 = vector.extract_strided_slice %381 {offsets = [448, 0], sizes = [16, 256], strides = [1, 1]} : vector<592x256xf32> to vector<16x256xf32>
    %500 = vector.extract_strided_slice %385 {offsets = [448, 0], sizes = [16, 256], strides = [1, 1]} : vector<576x256xf32> to vector<16x256xf32>
    %501 = arith.mulf %499, %500 : vector<16x256xf32>
    %502 = arith.addf %498, %501 : vector<16x256xf32>
    %503 = vector.extract_strided_slice %381 {offsets = [464, 0], sizes = [16, 256], strides = [1, 1]} : vector<592x256xf32> to vector<16x256xf32>
    %504 = vector.extract_strided_slice %385 {offsets = [464, 0], sizes = [16, 256], strides = [1, 1]} : vector<576x256xf32> to vector<16x256xf32>
    %505 = arith.mulf %503, %504 : vector<16x256xf32>
    %506 = arith.addf %502, %505 : vector<16x256xf32>
    %507 = vector.extract_strided_slice %381 {offsets = [480, 0], sizes = [16, 256], strides = [1, 1]} : vector<592x256xf32> to vector<16x256xf32>
    %508 = vector.extract_strided_slice %385 {offsets = [480, 0], sizes = [16, 256], strides = [1, 1]} : vector<576x256xf32> to vector<16x256xf32>
    %509 = arith.mulf %507, %508 : vector<16x256xf32>
    %510 = arith.addf %506, %509 : vector<16x256xf32>
    %511 = vector.extract_strided_slice %381 {offsets = [496, 0], sizes = [16, 256], strides = [1, 1]} : vector<592x256xf32> to vector<16x256xf32>
    %512 = vector.extract_strided_slice %385 {offsets = [496, 0], sizes = [16, 256], strides = [1, 1]} : vector<576x256xf32> to vector<16x256xf32>
    %513 = arith.mulf %511, %512 : vector<16x256xf32>
    %514 = arith.addf %510, %513 : vector<16x256xf32>
    %515 = vector.extract_strided_slice %381 {offsets = [512, 0], sizes = [16, 256], strides = [1, 1]} : vector<592x256xf32> to vector<16x256xf32>
    %516 = vector.extract_strided_slice %385 {offsets = [512, 0], sizes = [16, 256], strides = [1, 1]} : vector<576x256xf32> to vector<16x256xf32>
    %517 = arith.mulf %515, %516 : vector<16x256xf32>
    %518 = arith.addf %514, %517 : vector<16x256xf32>
    %519 = vector.extract_strided_slice %381 {offsets = [528, 0], sizes = [16, 256], strides = [1, 1]} : vector<592x256xf32> to vector<16x256xf32>
    %520 = vector.extract_strided_slice %385 {offsets = [528, 0], sizes = [16, 256], strides = [1, 1]} : vector<576x256xf32> to vector<16x256xf32>
    %521 = arith.mulf %519, %520 : vector<16x256xf32>
    %522 = arith.addf %518, %521 : vector<16x256xf32>
    %523 = vector.extract_strided_slice %381 {offsets = [544, 0], sizes = [16, 256], strides = [1, 1]} : vector<592x256xf32> to vector<16x256xf32>
    %524 = vector.extract_strided_slice %385 {offsets = [544, 0], sizes = [16, 256], strides = [1, 1]} : vector<576x256xf32> to vector<16x256xf32>
    %525 = arith.mulf %523, %524 : vector<16x256xf32>
    %526 = arith.addf %522, %525 : vector<16x256xf32>
    %527 = vector.extract_strided_slice %381 {offsets = [560, 0], sizes = [16, 256], strides = [1, 1]} : vector<592x256xf32> to vector<16x256xf32>
    %528 = vector.extract_strided_slice %385 {offsets = [560, 0], sizes = [16, 256], strides = [1, 1]} : vector<576x256xf32> to vector<16x256xf32>
    %529 = arith.mulf %527, %528 : vector<16x256xf32>
    %530 = arith.addf %526, %529 : vector<16x256xf32>
    %c0_288 = arith.constant 0 : index
    %c4_289 = arith.constant 4 : index
    %531 = vector.load %arg13[%c0_288, %c4_289] : memref<16x8xf32, #tpu.memory_space<vmem>>, vector<16x1xf32>
    %532 = vector.broadcast %531 : vector<16x1xf32> to vector<16x256xf32>
    %533 = arith.mulf %530, %532 : vector<16x256xf32>
    %534 = arith.addf %533, %331 : vector<16x256xf32>
    %535 = arith.mulf %534, %185 : vector<16x256xf32>
    %536 = vector.broadcast %41 : vector<16x1xf32> to vector<16x256xf32>
    %537 = arith.mulf %535, %536 : vector<16x256xf32>
    %c0_290 = arith.constant 0 : index
    %c0_291 = arith.constant 0 : index
    %538 = vector.load %arg9[%c0_290, %c0_291] : memref<64x16xf32, #tpu.memory_space<vmem>>, vector<16x16xf32>
    %539 = arith.truncf %538 : vector<16x16xf32> to vector<16x16xbf16>
    %540 = arith.truncf %537 : vector<16x256xf32> to vector<16x256xbf16>
    %cst_292 = arith.constant dense<0.000000e+00> : vector<16x256xf32>
    %541 = tpu.matmul %539, %540, %cst_292 {dimension_numbers = #tpu.dot_dimension_numbers<[1], [0], [0], [1], [0, 0, 1, 1], [], []>} : vector<16x16xbf16>, vector<16x256xbf16>, vector<16x256xf32> -> vector<16x256xf32>
    %c0_293 = arith.constant 0 : index
    %c0_294 = arith.constant 0 : index
    %542 = vector.load %arg10[%c0_293, %c0_294] : memref<64x1xf32, #tpu.memory_space<vmem>>, vector<16x1xf32>
    %543 = vector.broadcast %542 : vector<16x1xf32> to vector<16x256xf32>
    %544 = arith.addf %541, %543 : vector<16x256xf32>
    %c0_295 = arith.constant 0 : index
    %c5_296 = arith.constant 5 : index
    %545 = vector.load %arg13[%c0_295, %c5_296] : memref<16x8xf32, #tpu.memory_space<vmem>>, vector<16x1xf32>
    %546 = vector.broadcast %545 : vector<16x1xf32> to vector<16x256xf32>
    %547 = arith.mulf %544, %546 : vector<16x256xf32>
    %548 = arith.addf %1, %547 : vector<16x256xf32>
    %c0_297 = arith.constant 0 : index
    %c2_298 = arith.constant 2 : index
    %549 = vector.load %arg13[%c0_297, %c2_298] : memref<16x8xf32, #tpu.memory_space<vmem>>, vector<16x1xf32>
    %c0_299 = arith.constant 0 : index
    %c3_300 = arith.constant 3 : index
    %550 = vector.load %arg13[%c0_299, %c3_300] : memref<16x8xf32, #tpu.memory_space<vmem>>, vector<16x1xf32>
    %cst_301 = arith.constant dense<0.000000e+00> : vector<256xf32>
    %551 = vector.multi_reduction <add>, %548, %cst_301 [0] : vector<16x256xf32> to vector<256xf32>
    %552 = vector.shape_cast %551 : vector<256xf32> to vector<1x256xf32>
    %cst_302 = arith.constant 1.600000e+01 : f32
    %553 = vector.broadcast %cst_302 : f32 to vector<1x256xf32>
    %554 = arith.divf %552, %553 : vector<1x256xf32>
    %555 = vector.broadcast %554 : vector<1x256xf32> to vector<16x256xf32>
    %556 = arith.subf %548, %555 : vector<16x256xf32>
    %557 = arith.mulf %556, %556 : vector<16x256xf32>
    %cst_303 = arith.constant dense<0.000000e+00> : vector<256xf32>
    %558 = vector.multi_reduction <add>, %557, %cst_303 [0] : vector<16x256xf32> to vector<256xf32>
    %559 = vector.shape_cast %558 : vector<256xf32> to vector<1x256xf32>
    %cst_304 = arith.constant 1.600000e+01 : f32
    %560 = vector.broadcast %cst_304 : f32 to vector<1x256xf32>
    %561 = arith.divf %559, %560 : vector<1x256xf32>
    %cst_305 = arith.constant 9.99999997E-7 : f32
    %562 = vector.broadcast %cst_305 : f32 to vector<1x256xf32>
    %563 = arith.addf %561, %562 : vector<1x256xf32>
    %564 = math.rsqrt %563 : vector<1x256xf32>
    %565 = vector.broadcast %564 : vector<1x256xf32> to vector<16x256xf32>
    %566 = arith.mulf %556, %565 : vector<16x256xf32>
    %567 = vector.broadcast %549 : vector<16x1xf32> to vector<16x256xf32>
    %568 = arith.mulf %566, %567 : vector<16x256xf32>
    %569 = vector.broadcast %550 : vector<16x1xf32> to vector<16x256xf32>
    %570 = arith.addf %568, %569 : vector<16x256xf32>
    %c16_306 = arith.constant 16 : index
    %c0_307 = arith.constant 0 : index
    %571 = vector.load %arg9[%c16_306, %c0_307] : memref<64x16xf32, #tpu.memory_space<vmem>>, vector<32x16xf32>
    %572 = arith.truncf %571 : vector<32x16xf32> to vector<32x16xbf16>
    %573 = arith.truncf %570 : vector<16x256xf32> to vector<16x256xbf16>
    %cst_308 = arith.constant dense<0.000000e+00> : vector<32x256xf32>
    %574 = tpu.matmul %572, %573, %cst_308 {dimension_numbers = #tpu.dot_dimension_numbers<[1], [0], [0], [1], [0, 0, 1, 1], [], []>} : vector<32x16xbf16>, vector<16x256xbf16>, vector<32x256xf32> -> vector<32x256xf32>
    %c16_309 = arith.constant 16 : index
    %c0_310 = arith.constant 0 : index
    %575 = vector.load %arg10[%c16_309, %c0_310] : memref<64x1xf32, #tpu.memory_space<vmem>>, vector<32x1xf32>
    %576 = vector.broadcast %575 : vector<32x1xf32> to vector<32x256xf32>
    %577 = arith.addf %574, %576 : vector<32x256xf32>
    %578 = vector.extract_strided_slice %577 {offsets = [0, 0], sizes = [16, 256], strides = [1, 1]} : vector<32x256xf32> to vector<16x256xf32>
    %579 = vector.extract_strided_slice %577 {offsets = [16, 0], sizes = [16, 256], strides = [1, 1]} : vector<32x256xf32> to vector<16x256xf32>
    %580 = arith.mulf %578, %579 : vector<16x256xf32>
    %c48_311 = arith.constant 48 : index
    %c0_312 = arith.constant 0 : index
    %581 = vector.load %arg9[%c48_311, %c0_312] : memref<64x16xf32, #tpu.memory_space<vmem>>, vector<16x16xf32>
    %582 = arith.truncf %581 : vector<16x16xf32> to vector<16x16xbf16>
    %583 = arith.truncf %580 : vector<16x256xf32> to vector<16x256xbf16>
    %cst_313 = arith.constant dense<0.000000e+00> : vector<16x256xf32>
    %584 = tpu.matmul %582, %583, %cst_313 {dimension_numbers = #tpu.dot_dimension_numbers<[1], [0], [0], [1], [0, 0, 1, 1], [], []>} : vector<16x16xbf16>, vector<16x256xbf16>, vector<16x256xf32> -> vector<16x256xf32>
    %c48_314 = arith.constant 48 : index
    %c0_315 = arith.constant 0 : index
    %585 = vector.load %arg10[%c48_314, %c0_315] : memref<64x1xf32, #tpu.memory_space<vmem>>, vector<16x1xf32>
    %586 = vector.broadcast %585 : vector<16x1xf32> to vector<16x256xf32>
    %587 = arith.addf %584, %586 : vector<16x256xf32>
    %c0_316 = arith.constant 0 : index
    %c6_317 = arith.constant 6 : index
    %588 = vector.load %arg13[%c0_316, %c6_317] : memref<16x8xf32, #tpu.memory_space<vmem>>, vector<16x1xf32>
    %589 = vector.broadcast %588 : vector<16x1xf32> to vector<16x256xf32>
    %590 = arith.mulf %587, %589 : vector<16x256xf32>
    %591 = arith.addf %548, %590 : vector<16x256xf32>
    %c0_318 = arith.constant 0 : index
    %c0_319 = arith.constant 0 : index
    %c0_320 = arith.constant 0 : index
    %592 = vector.load %arg15[%c0_318, %c0_319, %c0_320] : memref<1x16x256xf32, #tpu.memory_space<vmem>>, vector<1x16x256xf32>
    %593 = vector.shape_cast %592 : vector<1x16x256xf32> to vector<16x256xf32>
    %594 = vector.shape_cast %591 : vector<16x256xf32> to vector<1x16x256xf32>
    tpu.vector_store %arg15[%c0_318, %c0_319, %c0_320], %594 {strides = array<i32>} : memref<1x16x256xf32, #tpu.memory_space<vmem>>, vector<1x16x256xf32>,
    return
  }
  func.func @transform_0(%arg0: i32) -> (i32, i32, i32) {
    %c0_i32 = arith.constant 0 : i32
    %c0_i32_0 = arith.constant 0 : i32
    %c0_i32_1 = arith.constant 0 : i32
    return %arg0, %c0_i32, %c0_i32_0 : i32, i32, i32
  }
  func.func @transform_1(%arg0: i32) -> (i32, i32) {
    %c0_i32 = arith.constant 0 : i32
    %c0_i32_0 = arith.constant 0 : i32
    %c0_i32_1 = arith.constant 0 : i32
    return %c0_i32, %c0_i32_0 : i32, i32
  }
  func.func @transform_2(%arg0: i32) -> (i32, i32) {
    %c0_i32 = arith.constant 0 : i32
    %c0_i32_0 = arith.constant 0 : i32
    %c0_i32_1 = arith.constant 0 : i32
    return %c0_i32, %c0_i32_0 : i32, i32
  }
  func.func @transform_3(%arg0: i32) -> (i32, i32) {
    %c0_i32 = arith.constant 0 : i32
    %c0_i32_0 = arith.constant 0 : i32
    %c0_i32_1 = arith.constant 0 : i32
    return %c0_i32, %c0_i32_0 : i32, i32
  }
  func.func @transform_4(%arg0: i32) -> (i32, i32) {
    %c0_i32 = arith.constant 0 : i32
    %c0_i32_0 = arith.constant 0 : i32
    %c0_i32_1 = arith.constant 0 : i32
    return %c0_i32, %c0_i32_0 : i32, i32
  }
  func.func @transform_5(%arg0: i32) -> (i32, i32) {
    %c0_i32 = arith.constant 0 : i32
    %c0_i32_0 = arith.constant 0 : i32
    %c0_i32_1 = arith.constant 0 : i32
    return %c0_i32, %c0_i32_0 : i32, i32
  }
  func.func @transform_6(%arg0: i32) -> (i32, i32) {
    %c0_i32 = arith.constant 0 : i32
    %c0_i32_0 = arith.constant 0 : i32
    %c0_i32_1 = arith.constant 0 : i32
    return %c0_i32, %c0_i32_0 : i32, i32
  }
  func.func @transform_7(%arg0: i32) -> (i32, i32) {
    %c0_i32 = arith.constant 0 : i32
    %c0_i32_0 = arith.constant 0 : i32
    %c0_i32_1 = arith.constant 0 : i32
    return %c0_i32, %c0_i32_0 : i32, i32
  }
  func.func @transform_8(%arg0: i32) -> (i32, i32) {
    %c0_i32 = arith.constant 0 : i32
    %c0_i32_0 = arith.constant 0 : i32
    %c0_i32_1 = arith.constant 0 : i32
    return %c0_i32, %c0_i32_0 : i32, i32
  }
  func.func @transform_9(%arg0: i32) -> (i32, i32) {
    %c0_i32 = arith.constant 0 : i32
    %c0_i32_0 = arith.constant 0 : i32
    %c0_i32_1 = arith.constant 0 : i32
    return %c0_i32, %c0_i32_0 : i32, i32
  }
  func.func @transform_10(%arg0: i32) -> (i32, i32) {
    %c0_i32 = arith.constant 0 : i32
    %c0_i32_0 = arith.constant 0 : i32
    %c0_i32_1 = arith.constant 0 : i32
    return %c0_i32, %c0_i32_0 : i32, i32
  }
  func.func @transform_11(%arg0: i32) -> (i32, i32) {
    %c0_i32 = arith.constant 0 : i32
    %c0_i32_0 = arith.constant 0 : i32
    %c0_i32_1 = arith.constant 0 : i32
    return %c0_i32, %c0_i32_0 : i32, i32
  }
  func.func @transform_12(%arg0: i32) -> (i32, i32) {
    %c0_i32 = arith.constant 0 : i32
    %c0_i32_0 = arith.constant 0 : i32
    %c0_i32_1 = arith.constant 0 : i32
    return %c0_i32, %c0_i32_0 : i32, i32
  }
  func.func @transform_13(%arg0: i32) -> (i32, i32) {
    %c0_i32 = arith.constant 0 : i32
    %c0_i32_0 = arith.constant 0 : i32
    %c0_i32_1 = arith.constant 0 : i32
    return %c0_i32, %c0_i32_0 : i32, i32
  }
  func.func @transform_14(%arg0: i32) -> (i32, i32, i32) {
    %c0_i32 = arith.constant 0 : i32
    %c0_i32_0 = arith.constant 0 : i32
    %c0_i32_1 = arith.constant 0 : i32
    return %arg0, %c0_i32, %c0_i32_0 : i32, i32, i32
  }
}

</mosaic_0001>

<llo_original>
// kernel: kbblock_forward.1
$region0: #{kbblock_forward.1}
  #allocation0 [shape = 'u32[]', space=smem, size = 0x4, offset = 0x4, fixed_abs, tag = 'smem constant byte address 0x4 - core index']
  #allocation1 [shape = 'u32[144,128]{1,0:T(1,128)}', space=vmem, size = 0x12000, scoped, tag = 'internal scratch']
  #allocation2 [shape = 'f32[16,512]{1,0:T(8,128)}', space=vmem, size = 0x8000, scoped, tag = 'scratch operand']
  #allocation3 [shape = 'bf16[400,256]{1,0:T(16,128)(2,1)}', space=vmem, size = 0x32000, scoped, tag = 'scratch operand']
  #allocation4 [shape = 'bf16[144,256]{1,0:T(16,128)(2,1)}', space=vmem, size = 0x12000, scoped, tag = 'scratch operand']
  %s0 = inlined_call_operand.vmem [shape: f32[2,16,256], index: 0, kind: input, shape index: {}]
  %s1 = inlined_call_operand.vmem [shape: f32[80,16], index: 1, kind: input, shape index: {}]
  %s2 = inlined_call_operand.vmem [shape: f32[80,1], index: 2, kind: input, shape index: {}]
  %s3 = inlined_call_operand.vmem [shape: f32[16,400], index: 3, kind: input, shape index: {}]
  %s4 = inlined_call_operand.vmem [shape: f32[16,10], index: 4, kind: input, shape index: {}]
  %s5 = inlined_call_operand.vmem [shape: f32[16,10], index: 5, kind: input, shape index: {}]
  %s6 = inlined_call_operand.vmem [shape: f32[32,8], index: 6, kind: input, shape index: {}]
  %s7 = inlined_call_operand.vmem [shape: f32[32,2], index: 7, kind: input, shape index: {}]
  %s8 = inlined_call_operand.vmem [shape: f32[64,16], index: 8, kind: input, shape index: {}]
  %s9 = inlined_call_operand.vmem [shape: f32[64,1], index: 9, kind: input, shape index: {}]
  %s10 = inlined_call_operand.vmem [shape: f32[592,32], index: 10, kind: input, shape index: {}]
  %s11 = inlined_call_operand.vmem [shape: f32[576,144], index: 11, kind: input, shape index: {}]
  %s12 = inlined_call_operand.vmem [shape: f32[16,8], index: 12, kind: input, shape index: {}]
  %s13 = inlined_call_operand.vmem [shape: f32[5,256], index: 13, kind: input, shape index: {}]
  %s14 = inlined_call_operand.vmem [shape: f32[2,16,256], index: 14, kind: output, shape index: {}]
  %s15 = sld [smem:[#allocation0]]
  $region89: #{kbblock_forward.1} parent=0
    _
  %s17 = ssub.s32 1, %s15
  %s18 = scalar_select 0, %s17, %s15
  loop: start=0, step=1, limit=4
  $region2: #{kbblock_forward.1} parent=0 // loop_pre_header
    _
  $region3: #{kbblock_forward.1} parent=0 // loop_header
    %s20 = sphi 0, %s24
    %p21 = scmp.ge.s32.totalorder %s20, 4
    %s30 = sphi 0, %s32
    %s33 = sphi 0, %s30
    %s34 = sphi 0, %s33
    %s50 = sphi 0, %s34
    %s54 = sphi 0, %s54
    %s56 = sphi 0, %s54
    %s57 = sphi 0, %s56
    %s71 = sphi 0, %s57
    %s75 = sphi 0, %s75
    %s77 = sphi 0, %s75
    %s78 = sphi 0, %s77
    %s92 = sphi 0, %s78
    %s96 = sphi 0, %s96
    %s98 = sphi 0, %s96
    %s99 = sphi 0, %s98
    %s113 = sphi 0, %s99
    %s117 = sphi 0, %s117
    %s119 = sphi 0, %s117
    %s120 = sphi 0, %s119
    %s134 = sphi 0, %s120
    %s138 = sphi 0, %s138
    %s140 = sphi 0, %s138
    %s141 = sphi 0, %s140
    %s155 = sphi 0, %s141
    %s159 = sphi 0, %s159
    %s161 = sphi 0, %s159
    %s162 = sphi 0, %s161
    %s176 = sphi 0, %s162
    %s180 = sphi 0, %s180
    %s182 = sphi 0, %s180
    %s183 = sphi 0, %s182
    %s197 = sphi 0, %s183
    %s201 = sphi 0, %s201
    %s203 = sphi 0, %s201
    %s204 = sphi 0, %s203
    %s218 = sphi 0, %s204
    %s222 = sphi 0, %s222
    %s224 = sphi 0, %s222
    %s225 = sphi 0, %s224
    %s239 = sphi 0, %s225
    %s243 = sphi 0, %s243
    %s245 = sphi 0, %s243
    %s246 = sphi 0, %s245
    %s260 = sphi 0, %s246
    %s264 = sphi 0, %s264
    %s266 = sphi 0, %s264
    %s267 = sphi 0, %s266
    %s281 = sphi 0, %s267
    %s285 = sphi 0, %s285
    %s287 = sphi 0, %s285
    %s288 = sphi 0, %s287
    %s302 = sphi 0, %s288
    %s306 = sphi 0, %s306
    %s308 = sphi 0, %s306
    %s309 = sphi 0, %s308
    %s323 = sphi 0, %s309
    %s329 = sphi 0, %s331
    %s332 = sphi 0, %s329
    %s333 = sphi 0, %s332
    %s349 = sphi 0, %s333
  $region4: #{kbblock_forward.1} parent=0 // loop_header_branch
    %23 = sbr.rel (%p21) target = $region8
  $region5: #{kbblock_forward.1} parent=0 // loop_body
    %s25 = ssub.s32 %s20, 1
    %s26 = ssub.s32 %s20, 2
    %s27 = sadd.s32 %s20, 1
    %s28 = ssub.s32 %s20, %s27
    %p29 = scmp.eq.s32.totalorder %s28, 0
    %s31 = sadd.s32 %s30, 1
    %s32 = scalar_select %p29, %s30, %s31
    %p35 = pneg %p29
    %p36 = scmp.eq.s32.totalorder %s20, 1
    %p37 = por %p35, %p36
    %p38 = scmp.ne.s32.totalorder %s30, %s33
    %p39 = scmp.eq.s32.totalorder %s20, 0
    %p40 = por %p38, %p39
    %p41 = scmp.ne.s32.totalorder %s30, %s33
    %p42 = scmp.eq.s32.totalorder %s25, 1
    %p43 = por %p41, %p42
    %p44 = scmp.ne.s32.totalorder %s33, %s34
    %p45 = scmp.eq.s32.totalorder %s25, 0
    %p46 = por %p44, %p45
    %p47 = scmp.ne.s32.totalorder %s33, %s34
    %p48 = scmp.eq.s32.totalorder %s26, 1
    %p49 = por %p47, %p48
    %p51 = scmp.ne.s32.totalorder %s34, %s50
    %p52 = scmp.eq.s32.totalorder %s26, 0
    %p53 = por %p51, %p52
    %s55 = sadd.s32 %s54, 1
    %p58 = scmp.eq.s32.totalorder %s20, 1
    %p59 = scmp.ne.s32.totalorder %s54, %s56
    %p60 = scmp.eq.s32.totalorder %s20, 0
    %p61 = por %p59, %p60
    %p62 = scmp.ne.s32.totalorder %s54, %s56
    %p63 = scmp.eq.s32.totalorder %s25, 1
    %p64 = por %p62, %p63
    %p65 = scmp.ne.s32.totalorder %s56, %s57
    %p66 = scmp.eq.s32.totalorder %s25, 0
    %p67 = por %p65, %p66
    %p68 = scmp.ne.s32.totalorder %s56, %s57
    %p69 = scmp.eq.s32.totalorder %s26, 1
    %p70 = por %p68, %p69
    %p72 = scmp.ne.s32.totalorder %s57, %s71
    %p73 = scmp.eq.s32.totalorder %s26, 0
    %p74 = por %p72, %p73
    %s76 = sadd.s32 %s75, 1
    %p79 = scmp.eq.s32.totalorder %s20, 1
    %p80 = scmp.ne.s32.totalorder %s75, %s77
    %p81 = scmp.eq.s32.totalorder %s20, 0
    %p82 = por %p80, %p81
    %p83 = scmp.ne.s32.totalorder %s75, %s77
    %p84 = scmp.eq.s32.totalorder %s25, 1
    %p85 = por %p83, %p84
    %p86 = scmp.ne.s32.totalorder %s77, %s78
    %p87 = scmp.eq.s32.totalorder %s25, 0
    %p88 = por %p86, %p87
    %p89 = scmp.ne.s32.totalorder %s77, %s78
    %p90 = scmp.eq.s32.totalorder %s26, 1
    %p91 = por %p89, %p90
    %p93 = scmp.ne.s32.totalorder %s78, %s92
    %p94 = scmp.eq.s32.totalorder %s26, 0
    %p95 = por %p93, %p94
    %s97 = sadd.s32 %s96, 1
    %p100 = scmp.eq.s32.totalorder %s20, 1
    %p101 = scmp.ne.s32.totalorder %s96, %s98
    %p102 = scmp.eq.s32.totalorder %s20, 0
    %p103 = por %p101, %p102
    %p104 = scmp.ne.s32.totalorder %s96, %s98
    %p105 = scmp.eq.s32.totalorder %s25, 1
    %p106 = por %p104, %p105
    %p107 = scmp.ne.s32.totalorder %s98, %s99
    %p108 = scmp.eq.s32.totalorder %s25, 0
    %p109 = por %p107, %p108
    %p110 = scmp.ne.s32.totalorder %s98, %s99
    %p111 = scmp.eq.s32.totalorder %s26, 1
    %p112 = por %p110, %p111
    %p114 = scmp.ne.s32.totalorder %s99, %s113
    %p115 = scmp.eq.s32.totalorder %s26, 0
    %p116 = por %p114, %p115
    %s118 = sadd.s32 %s117, 1
    %p121 = scmp.eq.s32.totalorder %s20, 1
    %p122 = scmp.ne.s32.totalorder %s117, %s119
    %p123 = scmp.eq.s32.totalorder %s20, 0
    %p124 = por %p122, %p123
    %p125 = scmp.ne.s32.totalorder %s117, %s119
    %p126 = scmp.eq.s32.totalorder %s25, 1
    %p127 = por %p125, %p126
    %p128 = scmp.ne.s32.totalorder %s119, %s120
    %p129 = scmp.eq.s32.totalorder %s25, 0
    %p130 = por %p128, %p129
    %p131 = scmp.ne.s32.totalorder %s119, %s120
    %p132 = scmp.eq.s32.totalorder %s26, 1
    %p133 = por %p131, %p132
    %p135 = scmp.ne.s32.totalorder %s120, %s134
    %p136 = scmp.eq.s32.totalorder %s26, 0
    %p137 = por %p135, %p136
    %s139 = sadd.s32 %s138, 1
    %p142 = scmp.eq.s32.totalorder %s20, 1
    %p143 = scmp.ne.s32.totalorder %s138, %s140
    %p144 = scmp.eq.s32.totalorder %s20, 0
    %p145 = por %p143, %p144
    %p146 = scmp.ne.s32.totalorder %s138, %s140
    %p147 = scmp.eq.s32.totalorder %s25, 1
    %p148 = por %p146, %p147
    %p149 = scmp.ne.s32.totalorder %s140, %s141
    %p150 = scmp.eq.s32.totalorder %s25, 0
    %p151 = por %p149, %p150
    %p152 = scmp.ne.s32.totalorder %s140, %s141
    %p153 = scmp.eq.s32.totalorder %s26, 1
    %p154 = por %p152, %p153
    %p156 = scmp.ne.s32.totalorder %s141, %s155
    %p157 = scmp.eq.s32.totalorder %s26, 0
    %p158 = por %p156, %p157
    %s160 = sadd.s32 %s159, 1
    %p163 = scmp.eq.s32.totalorder %s20, 1
    %p164 = scmp.ne.s32.totalorder %s159, %s161
    %p165 = scmp.eq.s32.totalorder %s20, 0
    %p166 = por %p164, %p165
    %p167 = scmp.ne.s32.totalorder %s159, %s161
    %p168 = scmp.eq.s32.totalorder %s25, 1
    %p169 = por %p167, %p168
    %p170 = scmp.ne.s32.totalorder %s161, %s162
    %p171 = scmp.eq.s32.totalorder %s25, 0
    %p172 = por %p170, %p171
    %p173 = scmp.ne.s32.totalorder %s161, %s162
    %p174 = scmp.eq.s32.totalorder %s26, 1
    %p175 = por %p173, %p174
    %p177 = scmp.ne.s32.totalorder %s162, %s176
    %p178 = scmp.eq.s32.totalorder %s26, 0
    %p179 = por %p177, %p178
    %s181 = sadd.s32 %s180, 1
    %p184 = scmp.eq.s32.totalorder %s20, 1
    %p185 = scmp.ne.s32.totalorder %s180, %s182
    %p186 = scmp.eq.s32.totalorder %s20, 0
    %p187 = por %p185, %p186
    %p188 = scmp.ne.s32.totalorder %s180, %s182
    %p189 = scmp.eq.s32.totalorder %s25, 1
    %p190 = por %p188, %p189
    %p191 = scmp.ne.s32.totalorder %s182, %s183
    %p192 = scmp.eq.s32.totalorder %s25, 0
    %p193 = por %p191, %p192
    %p194 = scmp.ne.s32.totalorder %s182, %s183
    %p195 = scmp.eq.s32.totalorder %s26, 1
    %p196 = por %p194, %p195
    %p198 = scmp.ne.s32.totalorder %s183, %s197
    %p199 = scmp.eq.s32.totalorder %s26, 0
    %p200 = por %p198, %p199
    %s202 = sadd.s32 %s201, 1
    %p205 = scmp.eq.s32.totalorder %s20, 1
    %p206 = scmp.ne.s32.totalorder %s201, %s203
    %p207 = scmp.eq.s32.totalorder %s20, 0
    %p208 = por %p206, %p207
    %p209 = scmp.ne.s32.totalorder %s201, %s203
    %p210 = scmp.eq.s32.totalorder %s25, 1
    %p211 = por %p209, %p210
    %p212 = scmp.ne.s32.totalorder %s203, %s204
    %p213 = scmp.eq.s32.totalorder %s25, 0
    %p214 = por %p212, %p213
    %p215 = scmp.ne.s32.totalorder %s203, %s204
    %p216 = scmp.eq.s32.totalorder %s26, 1
    %p217 = por %p215, %p216
    %p219 = scmp.ne.s32.totalorder %s204, %s218
    %p220 = scmp.eq.s32.totalorder %s26, 0
    %p221 = por %p219, %p220
    %s223 = sadd.s32 %s222, 1
    %p226 = scmp.eq.s32.totalorder %s20, 1
    %p227 = scmp.ne.s32.totalorder %s222, %s224
    %p228 = scmp.eq.s32.totalorder %s20, 0
    %p229 = por %p227, %p228
    %p230 = scmp.ne.s32.totalorder %s222, %s224
    %p231 = scmp.eq.s32.totalorder %s25, 1
    %p232 = por %p230, %p231
    %p233 = scmp.ne.s32.totalorder %s224, %s225
    %p234 = scmp.eq.s32.totalorder %s25, 0
    %p235 = por %p233, %p234
    %p236 = scmp.ne.s32.totalorder %s224, %s225
    %p237 = scmp.eq.s32.totalorder %s26, 1
    %p238 = por %p236, %p237
    %p240 = scmp.ne.s32.totalorder %s225, %s239
    %p241 = scmp.eq.s32.totalorder %s26, 0
    %p242 = por %p240, %p241
    %s244 = sadd.s32 %s243, 1
    %p247 = scmp.eq.s32.totalorder %s20, 1
    %p248 = scmp.ne.s32.totalorder %s243, %s245
    %p249 = scmp.eq.s32.totalorder %s20, 0
    %p250 = por %p248, %p249
    %p251 = scmp.ne.s32.totalorder %s243, %s245
    %p252 = scmp.eq.s32.totalorder %s25, 1
    %p253 = por %p251, %p252
    %p254 = scmp.ne.s32.totalorder %s245, %s246
    %p255 = scmp.eq.s32.totalorder %s25, 0
    %p256 = por %p254, %p255
    %p257 = scmp.ne.s32.totalorder %s245, %s246
    %p258 = scmp.eq.s32.totalorder %s26, 1
    %p259 = por %p257, %p258
    %p261 = scmp.ne.s32.totalorder %s246, %s260
    %p262 = scmp.eq.s32.totalorder %s26, 0
    %p263 = por %p261, %p262
    %s265 = sadd.s32 %s264, 1
    %p268 = scmp.eq.s32.totalorder %s20, 1
    %p269 = scmp.ne.s32.totalorder %s264, %s266
    %p270 = scmp.eq.s32.totalorder %s20, 0
    %p271 = por %p269, %p270
    %p272 = scmp.ne.s32.totalorder %s264, %s266
    %p273 = scmp.eq.s32.totalorder %s25, 1
    %p274 = por %p272, %p273
    %p275 = scmp.ne.s32.totalorder %s266, %s267
    %p276 = scmp.eq.s32.totalorder %s25, 0
    %p277 = por %p275, %p276
    %p278 = scmp.ne.s32.totalorder %s266, %s267
    %p279 = scmp.eq.s32.totalorder %s26, 1
    %p280 = por %p278, %p279
    %p282 = scmp.ne.s32.totalorder %s267, %s281
    %p283 = scmp.eq.s32.totalorder %s26, 0
    %p284 = por %p282, %p283
    %s286 = sadd.s32 %s285, 1
    %p289 = scmp.eq.s32.totalorder %s20, 1
    %p290 = scmp.ne.s32.totalorder %s285, %s287
    %p291 = scmp.eq.s32.totalorder %s20, 0
    %p292 = por %p290, %p291
    %p293 = scmp.ne.s32.totalorder %s285, %s287
    %p294 = scmp.eq.s32.totalorder %s25, 1
    %p295 = por %p293, %p294
    %p296 = scmp.ne.s32.totalorder %s287, %s288
    %p297 = scmp.eq.s32.totalorder %s25, 0
    %p298 = por %p296, %p297
    %p299 = scmp.ne.s32.totalorder %s287, %s288
    %p300 = scmp.eq.s32.totalorder %s26, 1
    %p301 = por %p299, %p300
    %p303 = scmp.ne.s32.totalorder %s288, %s302
    %p304 = scmp.eq.s32.totalorder %s26, 0
    %p305 = por %p303, %p304
    %s307 = sadd.s32 %s306, 1
    %p310 = scmp.eq.s32.totalorder %s20, 1
    %p311 = scmp.ne.s32.totalorder %s306, %s308
    %p312 = scmp.eq.s32.totalorder %s20, 0
    %p313 = por %p311, %p312
    %p314 = scmp.ne.s32.totalorder %s306, %s308
    %p315 = scmp.eq.s32.totalorder %s25, 1
    %p316 = por %p314, %p315
    %p317 = scmp.ne.s32.totalorder %s308, %s309
    %p318 = scmp.eq.s32.totalorder %s25, 0
    %p319 = por %p317, %p318
    %p320 = scmp.ne.s32.totalorder %s308, %s309
    %p321 = scmp.eq.s32.totalorder %s26, 1
    %p322 = por %p320, %p321
    %p324 = scmp.ne.s32.totalorder %s309, %s323
    %p325 = scmp.eq.s32.totalorder %s26, 0
    %p326 = por %p324, %p325
    %s327 = ssub.s32 %s20, %s27
    %p328 = scmp.eq.s32.totalorder %s327, 0
    %s330 = sadd.s32 %s329, 1
    %s331 = scalar_select %p328, %s329, %s330
    %p334 = pneg %p328
    %p335 = scmp.eq.s32.totalorder %s20, 1
    %p336 = por %p334, %p335
    %p337 = scmp.ne.s32.totalorder %s329, %s332
    %p338 = scmp.eq.s32.totalorder %s20, 0
    %p339 = por %p337, %p338
    %p340 = scmp.ne.s32.totalorder %s329, %s332
    %p341 = scmp.eq.s32.totalorder %s25, 1
    %p342 = por %p340, %p341
    %p343 = scmp.ne.s32.totalorder %s332, %s333
    %p344 = scmp.eq.s32.totalorder %s25, 0
    %p345 = por %p343, %p344
    %p346 = scmp.ne.s32.totalorder %s332, %s333
    %p347 = scmp.eq.s32.totalorder %s26, 1
    %p348 = por %p346, %p347
    %p350 = scmp.ne.s32.totalorder %s333, %s349
    %p351 = scmp.eq.s32.totalorder %s26, 0
    %p352 = por %p350, %p351
    %p353 = scmp.le.s32.totalorder 1, %s20
    %p354 = scmp.lt.s32.totalorder %s20, 3
    %p355 = pnand %p353, %p354
    %p356 = pneg %p355
    // Predicated region
    $region9: #{kbblock_forward.1} parent=5 // pred_check
      _
    $region10: #{kbblock_forward.1} parent=5 // pred_check_branch
      %358 = sbr.rel (%p355) target = $region12
    $region11: #{kbblock_forward.1} parent=5 // pred_region
      %s359 = ssub.s32 %s20, 1
      // Predicated region
      $region13: #{kbblock_forward.1} parent=11 // pred_check
        %p360 = pneg %p67
      $region14: #{kbblock_forward.1} parent=11 // pred_check_branch
        %362 = sbr.rel (%p360) target = $region16
      $region15: #{kbblock_forward.1} parent=11 // pred_region
        _
      $region16: #{kbblock_forward.1} parent=11 // pred_fallthru
        _
      // Predicated region
      $region17: #{kbblock_forward.1} parent=11 // pred_check
        %p363 = pneg %p88
      $region18: #{kbblock_forward.1} parent=11 // pred_check_branch
        %365 = sbr.rel (%p363) target = $region20
      $region19: #{kbblock_forward.1} parent=11 // pred_region
        _
      $region20: #{kbblock_forward.1} parent=11 // pred_fallthru
        _
      // Predicated region
      $region21: #{kbblock_forward.1} parent=11 // pred_check
        %p366 = pneg %p109
      $region22: #{kbblock_forward.1} parent=11 // pred_check_branch
        %368 = sbr.rel (%p366) target = $region24
      $region23: #{kbblock_forward.1} parent=11 // pred_region
        _
      $region24: #{kbblock_forward.1} parent=11 // pred_fallthru
        _
      // Predicated region
      $region25: #{kbblock_forward.1} parent=11 // pred_check
        %p369 = pneg %p130
      $region26: #{kbblock_forward.1} parent=11 // pred_check_branch
        %371 = sbr.rel (%p369) target = $region28
      $region27: #{kbblock_forward.1} parent=11 // pred_region
        _
      $region28: #{kbblock_forward.1} parent=11 // pred_fallthru
        _
      // Predicated region
      $region29: #{kbblock_forward.1} parent=11 // pred_check
        %p372 = pneg %p151
      $region30: #{kbblock_forward.1} parent=11 // pred_check_branch
        %374 = sbr.rel (%p372) target = $region32
      $region31: #{kbblock_forward.1} parent=11 // pred_region
        _
      $region32: #{kbblock_forward.1} parent=11 // pred_fallthru
        _
      // Predicated region
      $region33: #{kbblock_forward.1} parent=11 // pred_check
        %p375 = pneg %p172
      $region34: #{kbblock_forward.1} parent=11 // pred_check_branch
        %377 = sbr.rel (%p375) target = $region36
      $region35: #{kbblock_forward.1} parent=11 // pred_region
        _
      $region36: #{kbblock_forward.1} parent=11 // pred_fallthru
        _
      // Predicated region
      $region37: #{kbblock_forward.1} parent=11 // pred_check
        %p378 = pneg %p193
      $region38: #{kbblock_forward.1} parent=11 // pred_check_branch
        %380 = sbr.rel (%p378) target = $region40
      $region39: #{kbblock_forward.1} parent=11 // pred_region
        _
      $region40: #{kbblock_forward.1} parent=11 // pred_fallthru
        _
      // Predicated region
      $region41: #{kbblock_forward.1} parent=11 // pred_check
        %p381 = pneg %p214
      $region42: #{kbblock_forward.1} parent=11 // pred_check_branch
        %383 = sbr.rel (%p381) target = $region44
      $region43: #{kbblock_forward.1} parent=11 // pred_region
        _
      $region44: #{kbblock_forward.1} parent=11 // pred_fallthru
        _
      // Predicated region
      $region45: #{kbblock_forward.1} parent=11 // pred_check
        %p384 = pneg %p235
      $region46: #{kbblock_forward.1} parent=11 // pred_check_branch
        %386 = sbr.rel (%p384) target = $region48
      $region47: #{kbblock_forward.1} parent=11 // pred_region
        _
      $region48: #{kbblock_forward.1} parent=11 // pred_fallthru
        _
      // Predicated region
      $region49: #{kbblock_forward.1} parent=11 // pred_check
        %p387 = pneg %p256
      $region50: #{kbblock_forward.1} parent=11 // pred_check_branch
        %389 = sbr.rel (%p387) target = $region52
      $region51: #{kbblock_forward.1} parent=11 // pred_region
        _
      $region52: #{kbblock_forward.1} parent=11 // pred_fallthru
        _
      // Predicated region
      $region53: #{kbblock_forward.1} parent=11 // pred_check
        %p390 = pneg %p277
      $region54: #{kbblock_forward.1} parent=11 // pred_check_branch
        %392 = sbr.rel (%p390) target = $region56
      $region55: #{kbblock_forward.1} parent=11 // pred_region
        _
      $region56: #{kbblock_forward.1} parent=11 // pred_fallthru
        _
      // Predicated region
      $region57: #{kbblock_forward.1} parent=11 // pred_check
        %p393 = pneg %p298
      $region58: #{kbblock_forward.1} parent=11 // pred_check_branch
        %395 = sbr.rel (%p393) target = $region60
      $region59: #{kbblock_forward.1} parent=11 // pred_region
        _
      $region60: #{kbblock_forward.1} parent=11 // pred_fallthru
        _
      // Predicated region
      $region61: #{kbblock_forward.1} parent=11 // pred_check
        %p396 = pneg %p319
      $region62: #{kbblock_forward.1} parent=11 // pred_check_branch
        %398 = sbr.rel (%p396) target = $region64
      $region63: #{kbblock_forward.1} parent=11 // pred_region
        _
      $region64: #{kbblock_forward.1} parent=11 // pred_fallthru
        _
    $region12: #{kbblock_forward.1} parent=5 // pred_fallthru
      _
    %p399 = scmp.lt.s32.totalorder %s20, 2
    // Predicated region
    $region65: #{kbblock_forward.1} parent=5 // pred_check
      %p400 = pneg %p399
    $region66: #{kbblock_forward.1} parent=5 // pred_check_branch
      %402 = sbr.rel (%p400) target = $region68
    $region67: #{kbblock_forward.1} parent=5 // pred_region
      // Predicated region
      $region69: #{kbblock_forward.1} parent=67 // pred_check
        %p403 = pneg %p40
      $region70: #{kbblock_forward.1} parent=67 // pred_check_branch
        %405 = sbr.rel (%p403) target = $region72
      $region71: #{kbblock_forward.1} parent=67 // pred_region
        %p406 = scmp.lt.s32.totalorder %s20, 1
        %s407 = scalar_select %p406, %s20, 1
        %s408 = smul.addr %s407, 4
        %s409 = smul.addr %s408, 8
        %s410 = scalar_lea.vmem %s0, %s409
      $region72: #{kbblock_forward.1} parent=67 // pred_fallthru
        _
    $region68: #{kbblock_forward.1} parent=5 // pred_fallthru
      _
    %p411 = scmp.le.s32.totalorder 1, %s20
    %p412 = scmp.lt.s32.totalorder %s20, 3
    %p413 = pnand %p411, %p412
    %p414 = pneg %p413
    // Predicated region
    $region73: #{kbblock_forward.1} parent=5 // pred_check
      _
    $region74: #{kbblock_forward.1} parent=5 // pred_check_branch
      %416 = sbr.rel (%p413) target = $region76
    $region75: #{kbblock_forward.1} parent=5 // pred_region
      %s417 = ssub.s32 %s20, 1
      %p418 = scmp.lt.s32.totalorder %s25, 1
      %s419 = scalar_select %p418, %s25, 1
      %s420 = smul.addr %s419, 4
      %s421 = smul.addr %s420, 8
      %s422 = scalar_lea.vmem %s0, %s421
      %p423 = pneg %p46
      %p424 = pneg %p43
      %p425 = pneg %p67
      %p426 = pneg %p64
      %p427 = pneg %p88
      %p428 = pneg %p85
      %p429 = pneg %p109
      %p430 = pneg %p106
      %p431 = pneg %p130
      %p432 = pneg %p127
      %p433 = pneg %p151
      %p434 = pneg %p148
      %p435 = pneg %p172
      %p436 = pneg %p169
      %p437 = pneg %p193
      %p438 = pneg %p190
      %p439 = pneg %p214
      %p440 = pneg %p211
      %p441 = pneg %p235
      %p442 = pneg %p232
      %p443 = pneg %p256
      %p444 = pneg %p253
      %p445 = pneg %p277
      %p446 = pneg %p274
      %p447 = pneg %p298
      %p448 = pneg %p295
      %p449 = pneg %p319
      %p450 = pneg %p316
      %p451 = pneg %p345
      %p452 = pneg %p342
      %p453 = scmp.lt.s32.totalorder %s25, 1
      %s454 = scalar_select %p453, %s25, 1
      %s455 = smul.addr %s454, 4
      %s456 = smul.addr %s455, 8
      %s457 = scalar_lea.vmem %s14, %s456
      %p458 = scmp.lt.s32.totalorder %s25, 1
      %s459 = scalar_select %p458, %s25, 1
      %s460 = smul.addr %s459, 4
      %s461 = smul.addr %s460, 8
      %s462 = scalar_lea.vmem %s0, %s461
      %p463 = scmp.lt.s32.totalorder %s25, 1
      %s464 = scalar_select %p463, %s25, 1
      %s465 = smul.addr %s464, 4
      %s466 = smul.addr %s465, 8
      %s467 = scalar_lea.vmem %s14, %s466
      %v469 = vld [vmem:[%s462] sm:$0xff]
      %v470 = vld [vmem:[%s462 + $0x8] sm:$0xff]
      %v471 = vld [vmem:[%s462 + $0x10] sm:$0xff]
      %v472 = vld [vmem:[%s462 + $0x18] sm:$0xff]
      %473 = vst [vmem:[#allocation2] sm:$0xff] 0.0
      %474 = vst [vmem:[#allocation2 + $0x20] sm:$0xff] 0.0
      %475 = vst [vmem:[#allocation2 + $0x18] sm:$0xff] 0.0
      %476 = vst [vmem:[#allocation2 + $0x38] sm:$0xff] 0.0
      %v477 = vld [vmem:[%s12] sm:$0xff]
      %v478 = vld [vmem:[%s12 + $0x8] sm:$0xff]
      %v479 = vadd.f32 %v469, %v471
      %v480 = vrot.slane %v479, 4
      %v481 = vadd.f32 %v479, %v480
      %v482 = vrot.slane %v481, 2
      %v483 = vadd.f32 %v481, %v482
      %v484 = vrot.slane %v483, 1
      %v485 = vadd.f32 %v483, %v484
      %v486 = vadd.f32 %v470, %v472
      %v487 = vrot.slane %v486, 4
      %v488 = vadd.f32 %v486, %v487
      %v489 = vrot.slane %v488, 2
      %v490 = vadd.f32 %v488, %v489
      %v491 = vrot.slane %v490, 1
      %v492 = vadd.f32 %v490, %v491
      %v493 = vrcp.pop 16.0
      %v494 = vmul.f32 %v485, %v493
      %v495 = vmul.f32 %v492, %v493
      %v496 = vsub.f32 %v469, %v494
      %v497 = vsub.f32 %v470, %v495
      %v498 = vsub.f32 %v471, %v494
      %v499 = vsub.f32 %v472, %v495
      %v500 = vmul.f32 %v496, %v496
      %v501 = vmul.f32 %v497, %v497
      %v502 = vmul.f32 %v498, %v498
      %v503 = vmul.f32 %v499, %v499
      %v504 = vadd.f32 %v500, %v502
      %v505 = vrot.slane %v504, 4
      %v506 = vadd.f32 %v504, %v505
      %v507 = vrot.slane %v506, 2
      %v508 = vadd.f32 %v506, %v507
      %v509 = vrot.slane %v508, 1
      %v510 = vadd.f32 %v508, %v509
      %v511 = vadd.f32 %v501, %v503
      %v512 = vrot.slane %v511, 4
      %v513 = vadd.f32 %v511, %v512
      %v514 = vrot.slane %v513, 2
      %v515 = vadd.f32 %v513, %v514
      %v516 = vrot.slane %v515, 1
      %v517 = vadd.f32 %v515, %v516
      %v518 = vmul.f32 %v510, %v493
      %v519 = vmul.f32 %v517, %v493
      %v520 = vadd.f32 %v518, 1e-06
      %v521 = vadd.f32 %v519, 1e-06
      %v522 = vrsqrt.pop %v520
      %v523 = vrsqrt.pop %v521
      %v524 = vmul.f32 %v496, %v522
      %v525 = vmul.f32 %v497, %v523
      %v526 = vmul.f32 %v498, %v522
      %v527 = vmul.f32 %v499, %v523
      %529 = vset.pattern.permute.xlu0 0
      %530 = vperm.xlu0 %529, %v477
      %v531 = vpop.permute.xlu0 %530
      %534 = vset.pattern.permute.xlu0 0
      %535 = vperm.xlu0 %534, %v478
      %v536 = vpop.permute.xlu0 %535
      %v538 = vmul.f32 %v524, %v531
      %v539 = vmul.f32 %v525, %v531
      %v540 = vmul.f32 %v526, %v536
      %v541 = vmul.f32 %v527, %v536
      %542 = vset.pattern.permute.xlu0 1
      %543 = vperm.xlu0 %542, %v477
      %v544 = vpop.permute.xlu0 %543
      %546 = vset.pattern.permute.xlu0 1
      %547 = vperm.xlu0 %546, %v478
      %v548 = vpop.permute.xlu0 %547
      %v550 = vadd.f32 %v538, %v544
      %v551 = vadd.f32 %v539, %v544
      %v552 = vadd.f32 %v540, %v548
      %v553 = vadd.f32 %v541, %v548
      %v554 = vld [vmem:[%s1] sm:$0xff]
      %v555 = vld [vmem:[%s1 + $0x8] sm:$0xff]
      %v556 = vld [vmem:[%s1 + $0x10] sm:$0xff]
      %v557 = vld [vmem:[%s1 + $0x18] sm:$0xff]
      %v558 = vld [vmem:[%s1 + $0x20] sm:$0xff]
      %v559 = vld [vmem:[%s1 + $0x28] sm:$0xff]
      %v560 = vld [vmem:[%s1 + $0x30] sm:$0xff]
      %v561 = vld [vmem:[%s1 + $0x38] sm:$0xff]
      %v562 = vld [vmem:[%s1 + $0x40] sm:$0xff]
      %v563 = vld [vmem:[%s1 + $0x48] sm:$0xff]
      %v564 = vpack.c.bf16 %v555, %v554
      %v565 = vpack.c.bf16 %v557, %v556
      %v566 = vpack.c.bf16 %v559, %v558
      %v567 = vpack.c.bf16 %v561, %v560
      %v568 = vpack.c.bf16 %v563, %v562
      %v569 = vpack.c.bf16 %v552, %v550
      %v570 = vpack.c.bf16 %v553, %v551
      %v571 = vld [vmem:[%s2] sm:$0xff]
      %v572 = vld [vmem:[%s2 + $0x8] sm:$0xff]
      %v573 = vld [vmem:[%s2 + $0x10] sm:$0xff]
      %v574 = vld [vmem:[%s2 + $0x18] sm:$0xff]
      %v575 = vld [vmem:[%s2 + $0x20] sm:$0xff]
      %v576 = vld [vmem:[%s2 + $0x28] sm:$0xff]
      %v577 = vld [vmem:[%s2 + $0x30] sm:$0xff]
      %v578 = vld [vmem:[%s2 + $0x38] sm:$0xff]
      %v579 = vld [vmem:[%s2 + $0x40] sm:$0xff]
      %v580 = vld [vmem:[%s2 + $0x48] sm:$0xff]
      %582 = vset.pattern.permute.xlu0 0
      %583 = vperm.xlu0 %582, %v571
      %v584 = vpop.permute.xlu0 %583
      %587 = vset.pattern.permute.xlu0 0
      %588 = vperm.xlu0 %587, %v572
      %v589 = vpop.permute.xlu0 %588
      %592 = vset.pattern.permute.xlu0 0
      %593 = vperm.xlu0 %592, %v573
      %v594 = vpop.permute.xlu0 %593
      %597 = vset.pattern.permute.xlu0 0
      %598 = vperm.xlu0 %597, %v574
      %v599 = vpop.permute.xlu0 %598
      %602 = vset.pattern.permute.xlu0 0
      %603 = vperm.xlu0 %602, %v575
      %v604 = vpop.permute.xlu0 %603
      %607 = vset.pattern.permute.xlu0 0
      %608 = vperm.xlu0 %607, %v576
      %v609 = vpop.permute.xlu0 %608
      %612 = vset.pattern.permute.xlu0 0
      %613 = vperm.xlu0 %612, %v577
      %v614 = vpop.permute.xlu0 %613
      %617 = vset.pattern.permute.xlu0 0
      %618 = vperm.xlu0 %617, %v578
      %v619 = vpop.permute.xlu0 %618
      %622 = vset.pattern.permute.xlu0 0
      %623 = vperm.xlu0 %622, %v579
      %v624 = vpop.permute.xlu0 %623
      %627 = vset.pattern.permute.xlu0 0
      %628 = vperm.xlu0 %627, %v580
      %v629 = vpop.permute.xlu0 %628
      %vm631 = vcmask 130048
      %v633 = vsel %vm631, %v564, 0
      %v636 = vsel %vm631, %v565, 0
      %v639 = vsel %vm631, %v566, 0
      %v642 = vsel %vm631, %v567, 0
      %v645 = vsel %vm631, %v568, 0
      %647 = vmatprep.subr.bf16.mxu0 %v570
      %648 = vmatpush1.bf16.msra.mxu0 %v569
      %649 = vmatprep.subr.bf16.mxu0 0
      %650 = vmatpush1.bf16.msra.mxu0 0
      %651 = vmatprep.subr.bf16.mxu0 0
      %652 = vmatpush1.bf16.msra.mxu0 0
      %653 = vmatprep.subr.bf16.mxu0 0
      %654 = vmatpush1.bf16.msra.mxu0 0
      %655 = vmatprep.subr.bf16.mxu0 0
      %656 = vmatpush1.bf16.msra.mxu0 0
      %657 = vmatprep.subr.bf16.mxu0 0
      %658 = vmatpush1.bf16.msra.mxu0 0
      %659 = vmatprep.subr.bf16.mxu0 0
      %660 = vmatpush1.bf16.msra.mxu0 0
      %661 = vmatprep.subr.bf16.mxu0 0
      %662 = vmatpush1.bf16.msra.mxu0 0
      %663 = vmatprep.subr.bf16.mxu0 0
      %664 = vmatpush1.bf16.msra.mxu0 0
      %665 = vmatprep.subr.bf16.mxu0 0
      %666 = vmatpush1.bf16.msra.mxu0 0
      %667 = vmatprep.subr.bf16.mxu0 0
      %668 = vmatpush1.bf16.msra.mxu0 0
      %669 = vmatprep.subr.bf16.mxu0 0
      %670 = vmatpush1.bf16.msra.mxu0 0
      %671 = vmatprep.subr.bf16.mxu0 0
      %672 = vmatpush1.bf16.msra.mxu0 0
      %673 = vmatprep.subr.bf16.mxu0 0
      %674 = vmatpush1.bf16.msra.mxu0 0
      %675 = vmatprep.subr.bf16.mxu0 0
      %676 = vmatpush1.bf16.msra.mxu0 0
      %677 = vmatprep.subr.bf16.mxu0 0
      %678 = vmatpush1.bf16.msra.mxu0 0
      %679 = vmatprep.mubr.bf16.mxu0 0
      %680 = vmatmul.mubr.bf16.gmra.mrb[0].mxu0 %v633
      %v681 = vpop.f32.mrb[0].mxu0
      %v682 = vadd.f32 %v584, %v681
      %v683 = vpop.f32.mrb[0].mxu0
      %v684 = vadd.f32 %v584, %v683
      %v685 = vpop.f32.mrb[0].mxu0
      %v686 = vadd.f32 %v589, %v685
      %v687 = vpop.f32.mrb[0].mxu0
      %v688 = vadd.f32 %v589, %v687
      %689 = vmatprep.mubr.bf16.mxu0 0
      %690 = vmatmul.mubr.bf16.gmra.mrb[0].mxu0 %v636
      %v691 = vpop.f32.mrb[0].mxu0
      %v692 = vadd.f32 %v594, %v691
      %v693 = vpop.f32.mrb[0].mxu0
      %v694 = vadd.f32 %v594, %v693
      %v695 = vpop.f32.mrb[0].mxu0
      %v696 = vadd.f32 %v599, %v695
      %v697 = vpop.f32.mrb[0].mxu0
      %v698 = vadd.f32 %v599, %v697
      %699 = vmatprep.mubr.bf16.mxu0 0
      %700 = vmatmul.mubr.bf16.gmra.mrb[0].mxu0 %v639
      %v701 = vpop.f32.mrb[0].mxu0
      %v702 = vadd.f32 %v604, %v701
      %v703 = vpop.f32.mrb[0].mxu0
      %v704 = vadd.f32 %v604, %v703
      %v705 = vpop.f32.mrb[0].mxu0
      %v706 = vadd.f32 %v609, %v705
      %v707 = vpop.f32.mrb[0].mxu0
      %v708 = vadd.f32 %v609, %v707
      %709 = vmatprep.mubr.bf16.mxu0 0
      %710 = vmatmul.mubr.bf16.gmra.mrb[0].mxu0 %v642
      %v711 = vpop.f32.mrb[0].mxu0
      %v712 = vadd.f32 %v614, %v711
      %v713 = vpop.f32.mrb[0].mxu0
      %v714 = vadd.f32 %v614, %v713
      %v715 = vpop.f32.mrb[0].mxu0
      %v716 = vadd.f32 %v619, %v715
      %v717 = vpop.f32.mrb[0].mxu0
      %v718 = vadd.f32 %v619, %v717
      %719 = vmatprep.mubr.bf16.mxu0 0
      %720 = vmatmul.mubr.bf16.gmra.mrb[0].mxu0 %v645
      %v721 = vpop.f32.mrb[0].mxu0
      %v722 = vadd.f32 %v624, %v721
      %v723 = vpop.f32.mrb[0].mxu0
      %v724 = vadd.f32 %v624, %v723
      %v725 = vpop.f32.mrb[0].mxu0
      %v726 = vadd.f32 %v629, %v725
      %v727 = vpop.f32.mrb[0].mxu0
      %v728 = vadd.f32 %v629, %v727
      %729 = vdwg.mxu0
      %v730 = vadd.f32 %v702, %v704
      %731 = vadd.xlane.f32.xlu0 %v730
      %v732 = vpop.xlane.xlu0 %731
      %v733 = vadd.f32 %v706, %v708
      %734 = vadd.xlane.f32.xlu0 %v733
      %v735 = vpop.xlane.xlu0 %734
      %v736 = vrcp.pop 256.0
      %v737 = vmul.f32 %v732, %v736
      %v738 = vmul.f32 %v735, %v736
      %739 = vst [vmem:[#allocation2 + $0x8] sm:$0xff] %v682
      %740 = vst [vmem:[#allocation2 + $0x10] sm:$0xff] %v684
      %741 = vst [vmem:[#allocation2 + $0x28] sm:$0xff] %v686
      %742 = vst [vmem:[#allocation2 + $0x30] sm:$0xff] %v688
      %v743 = vld [vmem:[#allocation2] sm:$0xff]
      %v744 = vld [vmem:[#allocation2 + $0x8] sm:$0xff]
      %v745 = vld [vmem:[#allocation2 + $0x10] sm:$0xff]
      %v746 = vld [vmem:[#allocation2 + $0x20] sm:$0xff]
      %v747 = vld [vmem:[#allocation2 + $0x28] sm:$0xff]
      %v748 = vld [vmem:[#allocation2 + $0x30] sm:$0xff]
      %v749 = vld [vmem:[%s13] ss:$8 sm:$0x3]
      %v751 = vlaneseq
      %v752 = vshrl.u32 %v751, 7
      %v753 = vsub.s32 0, %v752
      %v754 = vrot.slane %v749, %v753
      %v755 = vlaneseq
      %v756 = vshrl.u32 %v755, 7
      %v757 = vsub.s32 1, %v756
      %v758 = vrot.slane %v749, %v757
      %759 = vrot.lane.b32.xlu0 %v754, 94
      %v760 = vpop.permute.xlu0 %759
      %761 = vrot.lane.b32.xlu0 %v758, 94
      %v762 = vpop.permute.xlu0 %761
      %vm763 = vcmask 769024
      %v764 = vsel %vm763, %v760, %v762
      %v768 = vmul.f32 %v743, %v760
      %v769 = vmul.f32 %v744, %v764
      %v770 = vmul.f32 %v745, %v762
      %v771 = vmul.f32 %v746, %v760
      %v772 = vmul.f32 %v747, %v764
      %v773 = vmul.f32 %v748, %v762
      %v774 = vpack.c.bf16 %v771, %v768
      %v775 = vpack.c.bf16 %v772, %v769
      %v776 = vpack.c.bf16 %v773, %v770
      %780 = vrot.lane.b32.xlu0 %v774, 34
      %v781 = vpop.permute.xlu0 %780
      %782 = vrot.lane.b32.xlu0 %v775, 34
      %v783 = vpop.permute.xlu0 %782
      %784 = vrot.lane.b32.xlu0 %v776, 34
      %v785 = vpop.permute.xlu0 %784
      %vm786 = vcmask 277504
      %v787 = vsel %vm786, %v781, %v783
      %v788 = vsel %vm786, %v783, %v785
      %791 = vst [vmem:[#allocation3] sm:$0xff] %v787
      %792 = vst [vmem:[#allocation3 + $0x8] sm:$0xff] %v788
      %v793 = vld [vmem:[#allocation2] sm:$0xff]
      %v794 = vld [vmem:[#allocation2 + $0x8] sm:$0xff]
      %v795 = vld [vmem:[#allocation2 + $0x10] sm:$0xff]
      %v796 = vld [vmem:[#allocation2 + $0x20] sm:$0xff]
      %v797 = vld [vmem:[#allocation2 + $0x28] sm:$0xff]
      %v798 = vld [vmem:[#allocation2 + $0x30] sm:$0xff]
      %s799 = scalar_lea.vmem %s13, 1
      %v800 = vld [vmem:[%s799] ss:$8 sm:$0x3]
      %v802 = vlaneseq
      %v803 = vshrl.u32 %v802, 7
      %v804 = vsub.s32 0, %v803
      %v805 = vrot.slane %v800, %v804
      %v806 = vlaneseq
      %v807 = vshrl.u32 %v806, 7
      %v808 = vsub.s32 1, %v807
      %v809 = vrot.slane %v800, %v808
      %810 = vrot.lane.b32.xlu0 %v805, 95
      %v811 = vpop.permute.xlu0 %810
      %812 = vrot.lane.b32.xlu0 %v809, 95
      %v813 = vpop.permute.xlu0 %812
      %vm814 = vcmask 777216
      %v815 = vsel %vm814, %v811, %v813
      %v819 = vmul.f32 %v793, %v811
      %v820 = vmul.f32 %v794, %v815
      %v821 = vmul.f32 %v795, %v813
      %v822 = vmul.f32 %v796, %v811
      %v823 = vmul.f32 %v797, %v815
      %v824 = vmul.f32 %v798, %v813
      %v825 = vpack.c.bf16 %v822, %v819
      %v826 = vpack.c.bf16 %v823, %v820
      %v827 = vpack.c.bf16 %v824, %v821
      %831 = vrot.lane.b32.xlu0 %v825, 33
      %v832 = vpop.permute.xlu0 %831
      %833 = vrot.lane.b32.xlu0 %v826, 33
      %v834 = vpop.permute.xlu0 %833
      %835 = vrot.lane.b32.xlu0 %v827, 33
      %v836 = vpop.permute.xlu0 %835
      %vm837 = vcmask 269312
      %v838 = vsel %vm837, %v832, %v834
      %v839 = vsel %vm837, %v834, %v836
      %842 = vst [vmem:[#allocation3 + $0x10] sm:$0xff] %v838
      %843 = vst [vmem:[#allocation3 + $0x18] sm:$0xff] %v839
      %v844 = vld [vmem:[#allocation2] sm:$0xff]
      %v845 = vld [vmem:[#allocation2 + $0x8] sm:$0xff]
      %v846 = vld [vmem:[#allocation2 + $0x10] sm:$0xff]
      %v847 = vld [vmem:[#allocation2 + $0x20] sm:$0xff]
      %v848 = vld [vmem:[#allocation2 + $0x28] sm:$0xff]
      %v849 = vld [vmem:[#allocation2 + $0x30] sm:$0xff]
      %v850 = vpack.c.bf16 %v847, %v844
      %v851 = vpack.c.bf16 %v848, %v845
      %v852 = vpack.c.bf16 %v849, %v846
      %856 = vrot.lane.b32.xlu0 %v850, 32
      %v857 = vpop.permute.xlu0 %856
      %858 = vrot.lane.b32.xlu0 %v851, 32
      %v859 = vpop.permute.xlu0 %858
      %860 = vrot.lane.b32.xlu0 %v852, 32
      %v861 = vpop.permute.xlu0 %860
      %vm862 = vcmask 261120
      %v863 = vsel %vm862, %v857, %v859
      %v864 = vsel %vm862, %v859, %v861
      %867 = vst [vmem:[#allocation3 + $0x20] sm:$0xff] %v863
      %868 = vst [vmem:[#allocation3 + $0x28] sm:$0xff] %v864
      %v869 = vld [vmem:[#allocation2] sm:$0xff]
      %v870 = vld [vmem:[#allocation2 + $0x8] sm:$0xff]
      %v871 = vld [vmem:[#allocation2 + $0x10] sm:$0xff]
      %v872 = vld [vmem:[#allocation2 + $0x20] sm:$0xff]
      %v873 = vld [vmem:[#allocation2 + $0x28] sm:$0xff]
      %v874 = vld [vmem:[#allocation2 + $0x30] sm:$0xff]
      %s875 = scalar_lea.vmem %s13, 3
      %v876 = vld [vmem:[%s875] ss:$8 sm:$0x3]
      %v878 = vlaneseq
      %v879 = vshrl.u32 %v878, 7
      %v880 = vsub.s32 0, %v879
      %v881 = vrot.slane %v876, %v880
      %v882 = vlaneseq
      %v883 = vshrl.u32 %v882, 7
      %v884 = vsub.s32 1, %v883
      %v885 = vrot.slane %v876, %v884
      %886 = vrot.lane.b32.xlu0 %v881, 97
      %v887 = vpop.permute.xlu0 %886
      %888 = vrot.lane.b32.xlu0 %v885, 97
      %v889 = vpop.permute.xlu0 %888
      %vm890 = vcmask 793600
      %v891 = vsel %vm890, %v887, %v889
      %v895 = vmul.f32 %v869, %v887
      %v896 = vmul.f32 %v870, %v891
      %v897 = vmul.f32 %v871, %v889
      %v898 = vmul.f32 %v872, %v887
      %v899 = vmul.f32 %v873, %v891
      %v900 = vmul.f32 %v874, %v889
      %v901 = vpack.c.bf16 %v898, %v895
      %v902 = vpack.c.bf16 %v899, %v896
      %v903 = vpack.c.bf16 %v900, %v897
      %907 = vrot.lane.b32.xlu0 %v901, 31
      %v908 = vpop.permute.xlu0 %907
      %909 = vrot.lane.b32.xlu0 %v902, 31
      %v910 = vpop.permute.xlu0 %909
      %911 = vrot.lane.b32.xlu0 %v903, 31
      %v912 = vpop.permute.xlu0 %911
      %vm913 = vcmask 252928
      %v914 = vsel %vm913, %v908, %v910
      %v915 = vsel %vm913, %v910, %v912
      %918 = vst [vmem:[#allocation3 + $0x30] sm:$0xff] %v914
      %919 = vst [vmem:[#allocation3 + $0x38] sm:$0xff] %v915
      %v920 = vld [vmem:[#allocation2] sm:$0xff]
      %v921 = vld [vmem:[#allocation2 + $0x8] sm:$0xff]
      %v922 = vld [vmem:[#allocation2 + $0x10] sm:$0xff]
      %v923 = vld [vmem:[#allocation2 + $0x20] sm:$0xff]
      %v924 = vld [vmem:[#allocation2 + $0x28] sm:$0xff]
      %v925 = vld [vmem:[#allocation2 + $0x30] sm:$0xff]
      %s926 = scalar_lea.vmem %s13, 4
      %v927 = vld [vmem:[%s926] ss:$8 sm:$0x3]
      %v929 = vlaneseq
      %v930 = vshrl.u32 %v929, 7
      %v931 = vsub.s32 0, %v930
      %v932 = vrot.slane %v927, %v931
      %v933 = vlaneseq
      %v934 = vshrl.u32 %v933, 7
      %v935 = vsub.s32 1, %v934
      %v936 = vrot.slane %v927, %v935
      %937 = vrot.lane.b32.xlu0 %v932, 98
      %v938 = vpop.permute.xlu0 %937
      %939 = vrot.lane.b32.xlu0 %v936, 98
      %v940 = vpop.permute.xlu0 %939
      %vm941 = vcmask 801792
      %v942 = vsel %vm941, %v938, %v940
      %v946 = vmul.f32 %v920, %v938
      %v947 = vmul.f32 %v921, %v942
      %v948 = vmul.f32 %v922, %v940
      %v949 = vmul.f32 %v923, %v938
      %v950 = vmul.f32 %v924, %v942
      %v951 = vmul.f32 %v925, %v940
      %v952 = vpack.c.bf16 %v949, %v946
      %v953 = vpack.c.bf16 %v950, %v947
      %v954 = vpack.c.bf16 %v951, %v948
      %958 = vrot.lane.b32.xlu0 %v952, 30
      %v959 = vpop.permute.xlu0 %958
      %960 = vrot.lane.b32.xlu0 %v953, 30
      %v961 = vpop.permute.xlu0 %960
      %962 = vrot.lane.b32.xlu0 %v954, 30
      %v963 = vpop.permute.xlu0 %962
      %vm964 = vcmask 244736
      %v965 = vsel %vm964, %v959, %v961
      %v966 = vsel %vm964, %v961, %v963
      %969 = vst [vmem:[#allocation3 + $0x40] sm:$0xff] %v965
      %970 = vst [vmem:[#allocation3 + $0x48] sm:$0xff] %v966
      %v971 = vld [vmem:[#allocation2] sm:$0xff]
      %v972 = vld [vmem:[#allocation2 + $0x8] sm:$0xff]
      %v973 = vld [vmem:[#allocation2 + $0x10] sm:$0xff]
      %v974 = vld [vmem:[#allocation2 + $0x20] sm:$0xff]
      %v975 = vld [vmem:[#allocation2 + $0x28] sm:$0xff]
      %v976 = vld [vmem:[#allocation2 + $0x30] sm:$0xff]
      %v977 = vld [vmem:[%s13] ss:$8 sm:$0x3]
      %v979 = vlaneseq
      %v980 = vshrl.u32 %v979, 7
      %v981 = vsub.s32 0, %v980
      %v982 = vrot.slane %v977, %v981
      %v983 = vlaneseq
      %v984 = vshrl.u32 %v983, 7
      %v985 = vsub.s32 1, %v984
      %v986 = vrot.slane %v977, %v985
      %987 = vrot.lane.b32.xlu0 %v982, 110
      %v988 = vpop.permute.xlu0 %987
      %989 = vrot.lane.b32.xlu0 %v986, 110
      %v990 = vpop.permute.xlu0 %989
      %vm991 = vcmask 900096
      %v992 = vsel %vm991, %v988, %v990
      %v996 = vmul.f32 %v971, %v988
      %v997 = vmul.f32 %v972, %v992
      %v998 = vmul.f32 %v973, %v990
      %v999 = vmul.f32 %v974, %v988
      %v1000 = vmul.f32 %v975, %v992
      %v1001 = vmul.f32 %v976, %v990
      %v1002 = vpack.c.bf16 %v999, %v996
      %v1003 = vpack.c.bf16 %v1000, %v997
      %v1004 = vpack.c.bf16 %v1001, %v998
      %1008 = vrot.lane.b32.xlu0 %v1002, 18
      %v1009 = vpop.permute.xlu0 %1008
      %1010 = vrot.lane.b32.xlu0 %v1003, 18
      %v1011 = vpop.permute.xlu0 %1010
      %1012 = vrot.lane.b32.xlu0 %v1004, 18
      %v1013 = vpop.permute.xlu0 %1012
      %vm1014 = vcmask 146432
      %v1015 = vsel %vm1014, %v1009, %v1011
      %v1016 = vsel %vm1014, %v1011, %v1013
      %1019 = vst [vmem:[#allocation3 + $0x50] sm:$0xff] %v1015
      %1020 = vst [vmem:[#allocation3 + $0x58] sm:$0xff] %v1016
      %v1021 = vld [vmem:[#allocation2] sm:$0xff]
      %v1022 = vld [vmem:[#allocation2 + $0x8] sm:$0xff]
      %v1023 = vld [vmem:[#allocation2 + $0x10] sm:$0xff]
      %v1024 = vld [vmem:[#allocation2 + $0x20] sm:$0xff]
      %v1025 = vld [vmem:[#allocation2 + $0x28] sm:$0xff]
      %v1026 = vld [vmem:[#allocation2 + $0x30] sm:$0xff]
      %v1027 = vld [vmem:[%s799] ss:$8 sm:$0x3]
      %v1029 = vlaneseq
      %v1030 = vshrl.u32 %v1029, 7
      %v1031 = vsub.s32 0, %v1030
      %v1032 = vrot.slane %v1027, %v1031
      %v1033 = vlaneseq
      %v1034 = vshrl.u32 %v1033, 7
      %v1035 = vsub.s32 1, %v1034
      %v1036 = vrot.slane %v1027, %v1035
      %1037 = vrot.lane.b32.xlu0 %v1032, 111
      %v1038 = vpop.permute.xlu0 %1037
      %1039 = vrot.lane.b32.xlu0 %v1036, 111
      %v1040 = vpop.permute.xlu0 %1039
      %vm1041 = vcmask 908288
      %v1042 = vsel %vm1041, %v1038, %v1040
      %v1046 = vmul.f32 %v1021, %v1038
      %v1047 = vmul.f32 %v1022, %v1042
      %v1048 = vmul.f32 %v1023, %v1040
      %v1049 = vmul.f32 %v1024, %v1038
      %v1050 = vmul.f32 %v1025, %v1042
      %v1051 = vmul.f32 %v1026, %v1040
      %v1052 = vpack.c.bf16 %v1049, %v1046
      %v1053 = vpack.c.bf16 %v1050, %v1047
      %v1054 = vpack.c.bf16 %v1051, %v1048
      %1058 = vrot.lane.b32.xlu0 %v1052, 17
      %v1059 = vpop.permute.xlu0 %1058
      %1060 = vrot.lane.b32.xlu0 %v1053, 17
      %v1061 = vpop.permute.xlu0 %1060
      %1062 = vrot.lane.b32.xlu0 %v1054, 17
      %v1063 = vpop.permute.xlu0 %1062
      %vm1064 = vcmask 138240
      %v1065 = vsel %vm1064, %v1059, %v1061
      %v1066 = vsel %vm1064, %v1061, %v1063
      %1069 = vst [vmem:[#allocation3 + $0x60] sm:$0xff] %v1065
      %1070 = vst [vmem:[#allocation3 + $0x68] sm:$0xff] %v1066
      %v1071 = vld [vmem:[#allocation2] sm:$0xff]
      %v1072 = vld [vmem:[#allocation2 + $0x8] sm:$0xff]
      %v1073 = vld [vmem:[#allocation2 + $0x10] sm:$0xff]
      %v1074 = vld [vmem:[#allocation2 + $0x20] sm:$0xff]
      %v1075 = vld [vmem:[#allocation2 + $0x28] sm:$0xff]
      %v1076 = vld [vmem:[#allocation2 + $0x30] sm:$0xff]
      %v1077 = vpack.c.bf16 %v1074, %v1071
      %v1078 = vpack.c.bf16 %v1075, %v1072
      %v1079 = vpack.c.bf16 %v1076, %v1073
      %1083 = vrot.lane.b32.xlu0 %v1077, 16
      %v1084 = vpop.permute.xlu0 %1083
      %1085 = vrot.lane.b32.xlu0 %v1078, 16
      %v1086 = vpop.permute.xlu0 %1085
      %1087 = vrot.lane.b32.xlu0 %v1079, 16
      %v1088 = vpop.permute.xlu0 %1087
      %vm1089 = vcmask 130048
      %v1090 = vsel %vm1089, %v1084, %v1086
      %v1091 = vsel %vm1089, %v1086, %v1088
      %1094 = vst [vmem:[#allocation3 + $0x70] sm:$0xff] %v1090
      %1095 = vst [vmem:[#allocation3 + $0x78] sm:$0xff] %v1091
      %v1096 = vld [vmem:[#allocation2] sm:$0xff]
      %v1097 = vld [vmem:[#allocation2 + $0x8] sm:$0xff]
      %v1098 = vld [vmem:[#allocation2 + $0x10] sm:$0xff]
      %v1099 = vld [vmem:[#allocation2 + $0x20] sm:$0xff]
      %v1100 = vld [vmem:[#allocation2 + $0x28] sm:$0xff]
      %v1101 = vld [vmem:[#allocation2 + $0x30] sm:$0xff]
      %v1102 = vld [vmem:[%s875] ss:$8 sm:$0x3]
      %v1104 = vlaneseq
      %v1105 = vshrl.u32 %v1104, 7
      %v1106 = vsub.s32 0, %v1105
      %v1107 = vrot.slane %v1102, %v1106
      %v1108 = vlaneseq
      %v1109 = vshrl.u32 %v1108, 7
      %v1110 = vsub.s32 1, %v1109
      %v1111 = vrot.slane %v1102, %v1110
      %1112 = vrot.lane.b32.xlu0 %v1107, 113
      %v1113 = vpop.permute.xlu0 %1112
      %1114 = vrot.lane.b32.xlu0 %v1111, 113
      %v1115 = vpop.permute.xlu0 %1114
      %vm1116 = vcmask 924672
      %v1117 = vsel %vm1116, %v1113, %v1115
      %v1121 = vmul.f32 %v1096, %v1113
      %v1122 = vmul.f32 %v1097, %v1117
      %v1123 = vmul.f32 %v1098, %v1115
      %v1124 = vmul.f32 %v1099, %v1113
      %v1125 = vmul.f32 %v1100, %v1117
      %v1126 = vmul.f32 %v1101, %v1115
      %v1127 = vpack.c.bf16 %v1124, %v1121
      %v1128 = vpack.c.bf16 %v1125, %v1122
      %v1129 = vpack.c.bf16 %v1126, %v1123
      %1133 = vrot.lane.b32.xlu0 %v1127, 15
      %v1134 = vpop.permute.xlu0 %1133
      %1135 = vrot.lane.b32.xlu0 %v1128, 15
      %v1136 = vpop.permute.xlu0 %1135
      %1137 = vrot.lane.b32.xlu0 %v1129, 15
      %v1138 = vpop.permute.xlu0 %1137
      %vm1139 = vcmask 121856
      %v1140 = vsel %vm1139, %v1134, %v1136
      %v1141 = vsel %vm1139, %v1136, %v1138
      %1144 = vst [vmem:[#allocation3 + $0x80] sm:$0xff] %v1140
      %1145 = vst [vmem:[#allocation3 + $0x88] sm:$0xff] %v1141
      %v1146 = vld [vmem:[#allocation2] sm:$0xff]
      %v1147 = vld [vmem:[#allocation2 + $0x8] sm:$0xff]
      %v1148 = vld [vmem:[#allocation2 + $0x10] sm:$0xff]
      %v1149 = vld [vmem:[#allocation2 + $0x20] sm:$0xff]
      %v1150 = vld [vmem:[#allocation2 + $0x28] sm:$0xff]
      %v1151 = vld [vmem:[#allocation2 + $0x30] sm:$0xff]
      %v1152 = vld [vmem:[%s926] ss:$8 sm:$0x3]
      %v1154 = vlaneseq
      %v1155 = vshrl.u32 %v1154, 7
      %v1156 = vsub.s32 0, %v1155
      %v1157 = vrot.slane %v1152, %v1156
      %v1158 = vlaneseq
      %v1159 = vshrl.u32 %v1158, 7
      %v1160 = vsub.s32 1, %v1159
      %v1161 = vrot.slane %v1152, %v1160
      %1162 = vrot.lane.b32.xlu0 %v1157, 114
      %v1163 = vpop.permute.xlu0 %1162
      %1164 = vrot.lane.b32.xlu0 %v1161, 114
      %v1165 = vpop.permute.xlu0 %1164
      %vm1166 = vcmask 932864
      %v1167 = vsel %vm1166, %v1163, %v1165
      %v1171 = vmul.f32 %v1146, %v1163
      %v1172 = vmul.f32 %v1147, %v1167
      %v1173 = vmul.f32 %v1148, %v1165
      %v1174 = vmul.f32 %v1149, %v1163
      %v1175 = vmul.f32 %v1150, %v1167
      %v1176 = vmul.f32 %v1151, %v1165
      %v1177 = vpack.c.bf16 %v1174, %v1171
      %v1178 = vpack.c.bf16 %v1175, %v1172
      %v1179 = vpack.c.bf16 %v1176, %v1173
      %1183 = vrot.lane.b32.xlu0 %v1177, 14
      %v1184 = vpop.permute.xlu0 %1183
      %1185 = vrot.lane.b32.xlu0 %v1178, 14
      %v1186 = vpop.permute.xlu0 %1185
      %1187 = vrot.lane.b32.xlu0 %v1179, 14
      %v1188 = vpop.permute.xlu0 %1187
      %vm1189 = vcmask 113664
      %v1190 = vsel %vm1189, %v1184, %v1186
      %v1191 = vsel %vm1189, %v1186, %v1188
      %1194 = vst [vmem:[#allocation3 + $0x90] sm:$0xff] %v1190
      %1195 = vst [vmem:[#allocation3 + $0x98] sm:$0xff] %v1191
      %v1196 = vld [vmem:[#allocation2] sm:$0xff]
      %v1197 = vld [vmem:[#allocation2 + $0x8] sm:$0xff]
      %v1198 = vld [vmem:[#allocation2 + $0x10] sm:$0xff]
      %v1199 = vld [vmem:[#allocation2 + $0x20] sm:$0xff]
      %v1200 = vld [vmem:[#allocation2 + $0x28] sm:$0xff]
      %v1201 = vld [vmem:[#allocation2 + $0x30] sm:$0xff]
      %v1202 = vld [vmem:[%s13] ss:$8 sm:$0x3]
      %v1204 = vlaneseq
      %v1205 = vshrl.u32 %v1204, 7
      %v1206 = vsub.s32 0, %v1205
      %v1207 = vrot.slane %v1202, %v1206
      %v1208 = vlaneseq
      %v1209 = vshrl.u32 %v1208, 7
      %v1210 = vsub.s32 1, %v1209
      %v1211 = vrot.slane %v1202, %v1210
      %1212 = vrot.lane.b32.xlu0 %v1207, 126
      %v1213 = vpop.permute.xlu0 %1212
      %1214 = vrot.lane.b32.xlu0 %v1211, 126
      %v1215 = vpop.permute.xlu0 %1214
      %vm1216 = vcmask 1031168
      %v1217 = vsel %vm1216, %v1213, %v1215
      %v1221 = vmul.f32 %v1196, %v1213
      %v1222 = vmul.f32 %v1197, %v1217
      %v1223 = vmul.f32 %v1198, %v1215
      %v1224 = vmul.f32 %v1199, %v1213
      %v1225 = vmul.f32 %v1200, %v1217
      %v1226 = vmul.f32 %v1201, %v1215
      %v1227 = vpack.c.bf16 %v1224, %v1221
      %v1228 = vpack.c.bf16 %v1225, %v1222
      %v1229 = vpack.c.bf16 %v1226, %v1223
      %1233 = vrot.lane.b32.xlu0 %v1227, 2
      %v1234 = vpop.permute.xlu0 %1233
      %1235 = vrot.lane.b32.xlu0 %v1228, 2
      %v1236 = vpop.permute.xlu0 %1235
      %1237 = vrot.lane.b32.xlu0 %v1229, 2
      %v1238 = vpop.permute.xlu0 %1237
      %vm1239 = vcmask 15360
      %v1240 = vsel %vm1239, %v1234, %v1236
      %v1241 = vsel %vm1239, %v1236, %v1238
      %1244 = vst [vmem:[#allocation3 + $0xa0] sm:$0xff] %v1240
      %1245 = vst [vmem:[#allocation3 + $0xa8] sm:$0xff] %v1241
      %v1246 = vld [vmem:[#allocation2] sm:$0xff]
      %v1247 = vld [vmem:[#allocation2 + $0x8] sm:$0xff]
      %v1248 = vld [vmem:[#allocation2 + $0x10] sm:$0xff]
      %v1249 = vld [vmem:[#allocation2 + $0x20] sm:$0xff]
      %v1250 = vld [vmem:[#allocation2 + $0x28] sm:$0xff]
      %v1251 = vld [vmem:[#allocation2 + $0x30] sm:$0xff]
      %v1252 = vld [vmem:[%s799] ss:$8 sm:$0x3]
      %v1254 = vlaneseq
      %v1255 = vshrl.u32 %v1254, 7
      %v1256 = vsub.s32 0, %v1255
      %v1257 = vrot.slane %v1252, %v1256
      %v1258 = vlaneseq
      %v1259 = vshrl.u32 %v1258, 7
      %v1260 = vsub.s32 1, %v1259
      %v1261 = vrot.slane %v1252, %v1260
      %1262 = vrot.lane.b32.xlu0 %v1257, 127
      %v1263 = vpop.permute.xlu0 %1262
      %1264 = vrot.lane.b32.xlu0 %v1261, 127
      %v1265 = vpop.permute.xlu0 %1264
      %vm1266 = vcmask 1039360
      %v1267 = vsel %vm1266, %v1263, %v1265
      %v1271 = vmul.f32 %v1246, %v1263
      %v1272 = vmul.f32 %v1247, %v1267
      %v1273 = vmul.f32 %v1248, %v1265
      %v1274 = vmul.f32 %v1249, %v1263
      %v1275 = vmul.f32 %v1250, %v1267
      %v1276 = vmul.f32 %v1251, %v1265
      %v1277 = vpack.c.bf16 %v1274, %v1271
      %v1278 = vpack.c.bf16 %v1275, %v1272
      %v1279 = vpack.c.bf16 %v1276, %v1273
      %1283 = vrot.lane.b32.xlu0 %v1277, 1
      %v1284 = vpop.permute.xlu0 %1283
      %1285 = vrot.lane.b32.xlu0 %v1278, 1
      %v1286 = vpop.permute.xlu0 %1285
      %1287 = vrot.lane.b32.xlu0 %v1279, 1
      %v1288 = vpop.permute.xlu0 %1287
      %vm1289 = vcmask 7168
      %v1290 = vsel %vm1289, %v1284, %v1286
      %v1291 = vsel %vm1289, %v1286, %v1288
      %1294 = vst [vmem:[#allocation3 + $0xb0] sm:$0xff] %v1290
      %1295 = vst [vmem:[#allocation3 + $0xb8] sm:$0xff] %v1291
      %v1296 = vld [vmem:[#allocation2 + $0x8] sm:$0xff]
      %v1297 = vld [vmem:[#allocation2 + $0x10] sm:$0xff]
      %v1298 = vld [vmem:[#allocation2 + $0x28] sm:$0xff]
      %v1299 = vld [vmem:[#allocation2 + $0x30] sm:$0xff]
      %v1300 = vpack.c.bf16 %v1298, %v1296
      %v1301 = vpack.c.bf16 %v1299, %v1297
      %1302 = vst [vmem:[#allocation3 + $0xc0] sm:$0xff] %v1300
      %1303 = vst [vmem:[#allocation3 + $0xc8] sm:$0xff] %v1301
      %v1304 = vld [vmem:[#allocation2 + $0x8] sm:$0xff]
      %v1305 = vld [vmem:[#allocation2 + $0x10] sm:$0xff]
      %v1306 = vld [vmem:[#allocation2 + $0x18] sm:$0xff]
      %v1307 = vld [vmem:[#allocation2 + $0x28] sm:$0xff]
      %v1308 = vld [vmem:[#allocation2 + $0x30] sm:$0xff]
      %v1309 = vld [vmem:[#allocation2 + $0x38] sm:$0xff]
      %v1310 = vld [vmem:[%s875] ss:$8 sm:$0x3]
      %v1312 = vlaneseq
      %v1313 = vshrl.u32 %v1312, 7
      %v1314 = vsub.s32 0, %v1313
      %v1315 = vrot.slane %v1310, %v1314
      %v1316 = vlaneseq
      %v1317 = vshrl.u32 %v1316, 7
      %v1318 = vsub.s32 1, %v1317
      %v1319 = vrot.slane %v1310, %v1318
      %1320 = vrot.lane.b32.xlu0 %v1315, 1
      %v1321 = vpop.permute.xlu0 %1320
      %1322 = vrot.lane.b32.xlu0 %v1319, 1
      %v1323 = vpop.permute.xlu0 %1322
      %vm1324 = vcmask 7168
      %v1325 = vsel %vm1324, %v1321, %v1323
      %v1329 = vmul.f32 %v1304, %v1321
      %v1330 = vmul.f32 %v1305, %v1325
      %v1331 = vmul.f32 %v1306, %v1323
      %v1332 = vmul.f32 %v1307, %v1321
      %v1333 = vmul.f32 %v1308, %v1325
      %v1334 = vmul.f32 %v1309, %v1323
      %v1335 = vpack.c.bf16 %v1332, %v1329
      %v1336 = vpack.c.bf16 %v1333, %v1330
      %v1337 = vpack.c.bf16 %v1334, %v1331
      %1341 = vrot.lane.b32.xlu0 %v1335, 127
      %v1342 = vpop.permute.xlu0 %1341
      %1343 = vrot.lane.b32.xlu0 %v1336, 127
      %v1344 = vpop.permute.xlu0 %1343
      %1345 = vrot.lane.b32.xlu0 %v1337, 127
      %v1346 = vpop.permute.xlu0 %1345
      %vm1347 = vcmask 1039360
      %v1348 = vsel %vm1347, %v1342, %v1344
      %v1349 = vsel %vm1347, %v1344, %v1346
      %1352 = vst [vmem:[#allocation3 + $0xd0] sm:$0xff] %v1348
      %1353 = vst [vmem:[#allocation3 + $0xd8] sm:$0xff] %v1349
      %v1354 = vld [vmem:[#allocation2 + $0x8] sm:$0xff]
      %v1355 = vld [vmem:[#allocation2 + $0x10] sm:$0xff]
      %v1356 = vld [vmem:[#allocation2 + $0x18] sm:$0xff]
      %v1357 = vld [vmem:[#allocation2 + $0x28] sm:$0xff]
      %v1358 = vld [vmem:[#allocation2 + $0x30] sm:$0xff]
      %v1359 = vld [vmem:[#allocation2 + $0x38] sm:$0xff]
      %v1360 = vld [vmem:[%s926] ss:$8 sm:$0x3]
      %v1362 = vlaneseq
      %v1363 = vshrl.u32 %v1362, 7
      %v1364 = vsub.s32 0, %v1363
      %v1365 = vrot.slane %v1360, %v1364
      %v1366 = vlaneseq
      %v1367 = vshrl.u32 %v1366, 7
      %v1368 = vsub.s32 1, %v1367
      %v1369 = vrot.slane %v1360, %v1368
      %1370 = vrot.lane.b32.xlu0 %v1365, 2
      %v1371 = vpop.permute.xlu0 %1370
      %1372 = vrot.lane.b32.xlu0 %v1369, 2
      %v1373 = vpop.permute.xlu0 %1372
      %vm1374 = vcmask 15360
      %v1375 = vsel %vm1374, %v1371, %v1373
      %v1379 = vmul.f32 %v1354, %v1371
      %v1380 = vmul.f32 %v1355, %v1375
      %v1381 = vmul.f32 %v1356, %v1373
      %v1382 = vmul.f32 %v1357, %v1371
      %v1383 = vmul.f32 %v1358, %v1375
      %v1384 = vmul.f32 %v1359, %v1373
      %v1385 = vpack.c.bf16 %v1382, %v1379
      %v1386 = vpack.c.bf16 %v1383, %v1380
      %v1387 = vpack.c.bf16 %v1384, %v1381
      %1391 = vrot.lane.b32.xlu0 %v1385, 126
      %v1392 = vpop.permute.xlu0 %1391
      %1393 = vrot.lane.b32.xlu0 %v1386, 126
      %v1394 = vpop.permute.xlu0 %1393
      %1395 = vrot.lane.b32.xlu0 %v1387, 126
      %v1396 = vpop.permute.xlu0 %1395
      %vm1397 = vcmask 1031168
      %v1398 = vsel %vm1397, %v1392, %v1394
      %v1399 = vsel %vm1397, %v1394, %v1396
      %1402 = vst [vmem:[#allocation3 + $0xe0] sm:$0xff] %v1398
      %1403 = vst [vmem:[#allocation3 + $0xe8] sm:$0xff] %v1399
      %v1404 = vld [vmem:[#allocation2 + $0x8] sm:$0xff]
      %v1405 = vld [vmem:[#allocation2 + $0x10] sm:$0xff]
      %v1406 = vld [vmem:[#allocation2 + $0x18] sm:$0xff]
      %v1407 = vld [vmem:[#allocation2 + $0x28] sm:$0xff]
      %v1408 = vld [vmem:[#allocation2 + $0x30] sm:$0xff]
      %v1409 = vld [vmem:[#allocation2 + $0x38] sm:$0xff]
      %v1410 = vld [vmem:[%s13] ss:$8 sm:$0x3]
      %v1412 = vlaneseq
      %v1413 = vshrl.u32 %v1412, 7
      %v1414 = vsub.s32 0, %v1413
      %v1415 = vrot.slane %v1410, %v1414
      %v1416 = vlaneseq
      %v1417 = vshrl.u32 %v1416, 7
      %v1418 = vsub.s32 1, %v1417
      %v1419 = vrot.slane %v1410, %v1418
      %1420 = vrot.lane.b32.xlu0 %v1415, 14
      %v1421 = vpop.permute.xlu0 %1420
      %1422 = vrot.lane.b32.xlu0 %v1419, 14
      %v1423 = vpop.permute.xlu0 %1422
      %vm1424 = vcmask 113664
      %v1425 = vsel %vm1424, %v1421, %v1423
      %v1429 = vmul.f32 %v1404, %v1421
      %v1430 = vmul.f32 %v1405, %v1425
      %v1431 = vmul.f32 %v1406, %v1423
      %v1432 = vmul.f32 %v1407, %v1421
      %v1433 = vmul.f32 %v1408, %v1425
      %v1434 = vmul.f32 %v1409, %v1423
      %v1435 = vpack.c.bf16 %v1432, %v1429
      %v1436 = vpack.c.bf16 %v1433, %v1430
      %v1437 = vpack.c.bf16 %v1434, %v1431
      %1441 = vrot.lane.b32.xlu0 %v1435, 114
      %v1442 = vpop.permute.xlu0 %1441
      %1443 = vrot.lane.b32.xlu0 %v1436, 114
      %v1444 = vpop.permute.xlu0 %1443
      %1445 = vrot.lane.b32.xlu0 %v1437, 114
      %v1446 = vpop.permute.xlu0 %1445
      %vm1447 = vcmask 932864
      %v1448 = vsel %vm1447, %v1442, %v1444
      %v1449 = vsel %vm1447, %v1444, %v1446
      %1452 = vst [vmem:[#allocation3 + $0xf0] sm:$0xff] %v1448
      %1453 = vst [vmem:[#allocation3 + $0xf8] sm:$0xff] %v1449
      %v1454 = vld [vmem:[#allocation2 + $0x8] sm:$0xff]
      %v1455 = vld [vmem:[#allocation2 + $0x10] sm:$0xff]
      %v1456 = vld [vmem:[#allocation2 + $0x18] sm:$0xff]
      %v1457 = vld [vmem:[#allocation2 + $0x28] sm:$0xff]
      %v1458 = vld [vmem:[#allocation2 + $0x30] sm:$0xff]
      %v1459 = vld [vmem:[#allocation2 + $0x38] sm:$0xff]
      %v1460 = vld [vmem:[%s799] ss:$8 sm:$0x3]
      %v1462 = vlaneseq
      %v1463 = vshrl.u32 %v1462, 7
      %v1464 = vsub.s32 0, %v1463
      %v1465 = vrot.slane %v1460, %v1464
      %v1466 = vlaneseq
      %v1467 = vshrl.u32 %v1466, 7
      %v1468 = vsub.s32 1, %v1467
      %v1469 = vrot.slane %v1460, %v1468
      %1470 = vrot.lane.b32.xlu0 %v1465, 15
      %v1471 = vpop.permute.xlu0 %1470
      %1472 = vrot.lane.b32.xlu0 %v1469, 15
      %v1473 = vpop.permute.xlu0 %1472
      %vm1474 = vcmask 121856
      %v1475 = vsel %vm1474, %v1471, %v1473
      %v1479 = vmul.f32 %v1454, %v1471
      %v1480 = vmul.f32 %v1455, %v1475
      %v1481 = vmul.f32 %v1456, %v1473
      %v1482 = vmul.f32 %v1457, %v1471
      %v1483 = vmul.f32 %v1458, %v1475
      %v1484 = vmul.f32 %v1459, %v1473
      %v1485 = vpack.c.bf16 %v1482, %v1479
      %v1486 = vpack.c.bf16 %v1483, %v1480
      %v1487 = vpack.c.bf16 %v1484, %v1481
      %1491 = vrot.lane.b32.xlu0 %v1485, 113
      %v1492 = vpop.permute.xlu0 %1491
      %1493 = vrot.lane.b32.xlu0 %v1486, 113
      %v1494 = vpop.permute.xlu0 %1493
      %1495 = vrot.lane.b32.xlu0 %v1487, 113
      %v1496 = vpop.permute.xlu0 %1495
      %vm1497 = vcmask 924672
      %v1498 = vsel %vm1497, %v1492, %v1494
      %v1499 = vsel %vm1497, %v1494, %v1496
      %1502 = vst [vmem:[#allocation3 + $0x100] sm:$0xff] %v1498
      %1503 = vst [vmem:[#allocation3 + $0x108] sm:$0xff] %v1499
      %v1504 = vld [vmem:[#allocation2 + $0x8] sm:$0xff]
      %v1505 = vld [vmem:[#allocation2 + $0x10] sm:$0xff]
      %v1506 = vld [vmem:[#allocation2 + $0x18] sm:$0xff]
      %v1507 = vld [vmem:[#allocation2 + $0x28] sm:$0xff]
      %v1508 = vld [vmem:[#allocation2 + $0x30] sm:$0xff]
      %v1509 = vld [vmem:[#allocation2 + $0x38] sm:$0xff]
      %v1510 = vpack.c.bf16 %v1507, %v1504
      %v1511 = vpack.c.bf16 %v1508, %v1505
      %v1512 = vpack.c.bf16 %v1509, %v1506
      %1516 = vrot.lane.b32.xlu0 %v1510, 112
      %v1517 = vpop.permute.xlu0 %1516
      %1518 = vrot.lane.b32.xlu0 %v1511, 112
      %v1519 = vpop.permute.xlu0 %1518
      %1520 = vrot.lane.b32.xlu0 %v1512, 112
      %v1521 = vpop.permute.xlu0 %1520
      %vm1522 = vcmask 916480
      %v1523 = vsel %vm1522, %v1517, %v1519
      %v1524 = vsel %vm1522, %v1519, %v1521
      %1527 = vst [vmem:[#allocation3 + $0x110] sm:$0xff] %v1523
      %1528 = vst [vmem:[#allocation3 + $0x118] sm:$0xff] %v1524
      %v1529 = vld [vmem:[#allocation2 + $0x8] sm:$0xff]
      %v1530 = vld [vmem:[#allocation2 + $0x10] sm:$0xff]
      %v1531 = vld [vmem:[#allocation2 + $0x18] sm:$0xff]
      %v1532 = vld [vmem:[#allocation2 + $0x28] sm:$0xff]
      %v1533 = vld [vmem:[#allocation2 + $0x30] sm:$0xff]
      %v1534 = vld [vmem:[#allocation2 + $0x38] sm:$0xff]
      %v1535 = vld [vmem:[%s875] ss:$8 sm:$0x3]
      %v1537 = vlaneseq
      %v1538 = vshrl.u32 %v1537, 7
      %v1539 = vsub.s32 0, %v1538
      %v1540 = vrot.slane %v1535, %v1539
      %v1541 = vlaneseq
      %v1542 = vshrl.u32 %v1541, 7
      %v1543 = vsub.s32 1, %v1542
      %v1544 = vrot.slane %v1535, %v1543
      %1545 = vrot.lane.b32.xlu0 %v1540, 17
      %v1546 = vpop.permute.xlu0 %1545
      %1547 = vrot.lane.b32.xlu0 %v1544, 17
      %v1548 = vpop.permute.xlu0 %1547
      %vm1549 = vcmask 138240
      %v1550 = vsel %vm1549, %v1546, %v1548
      %v1554 = vmul.f32 %v1529, %v1546
      %v1555 = vmul.f32 %v1530, %v1550
      %v1556 = vmul.f32 %v1531, %v1548
      %v1557 = vmul.f32 %v1532, %v1546
      %v1558 = vmul.f32 %v1533, %v1550
      %v1559 = vmul.f32 %v1534, %v1548
      %v1560 = vpack.c.bf16 %v1557, %v1554
      %v1561 = vpack.c.bf16 %v1558, %v1555
      %v1562 = vpack.c.bf16 %v1559, %v1556
      %1566 = vrot.lane.b32.xlu0 %v1560, 111
      %v1567 = vpop.permute.xlu0 %1566
      %1568 = vrot.lane.b32.xlu0 %v1561, 111
      %v1569 = vpop.permute.xlu0 %1568
      %1570 = vrot.lane.b32.xlu0 %v1562, 111
      %v1571 = vpop.permute.xlu0 %1570
      %vm1572 = vcmask 908288
      %v1573 = vsel %vm1572, %v1567, %v1569
      %v1574 = vsel %vm1572, %v1569, %v1571
      %1577 = vst [vmem:[#allocation3 + $0x120] sm:$0xff] %v1573
      %1578 = vst [vmem:[#allocation3 + $0x128] sm:$0xff] %v1574
      %v1579 = vld [vmem:[#allocation2 + $0x8] sm:$0xff]
      %v1580 = vld [vmem:[#allocation2 + $0x10] sm:$0xff]
      %v1581 = vld [vmem:[#allocation2 + $0x18] sm:$0xff]
      %v1582 = vld [vmem:[#allocation2 + $0x28] sm:$0xff]
      %v1583 = vld [vmem:[#allocation2 + $0x30] sm:$0xff]
      %v1584 = vld [vmem:[#allocation2 + $0x38] sm:$0xff]
      %v1585 = vld [vmem:[%s926] ss:$8 sm:$0x3]
      %v1587 = vlaneseq
      %v1588 = vshrl.u32 %v1587, 7
      %v1589 = vsub.s32 0, %v1588
      %v1590 = vrot.slane %v1585, %v1589
      %v1591 = vlaneseq
      %v1592 = vshrl.u32 %v1591, 7
      %v1593 = vsub.s32 1, %v1592
      %v1594 = vrot.slane %v1585, %v1593
      %1595 = vrot.lane.b32.xlu0 %v1590, 18
      %v1596 = vpop.permute.xlu0 %1595
      %1597 = vrot.lane.b32.xlu0 %v1594, 18
      %v1598 = vpop.permute.xlu0 %1597
      %vm1599 = vcmask 146432
      %v1600 = vsel %vm1599, %v1596, %v1598
      %v1604 = vmul.f32 %v1579, %v1596
      %v1605 = vmul.f32 %v1580, %v1600
      %v1606 = vmul.f32 %v1581, %v1598
      %v1607 = vmul.f32 %v1582, %v1596
      %v1608 = vmul.f32 %v1583, %v1600
      %v1609 = vmul.f32 %v1584, %v1598
      %v1610 = vpack.c.bf16 %v1607, %v1604
      %v1611 = vpack.c.bf16 %v1608, %v1605
      %v1612 = vpack.c.bf16 %v1609, %v1606
      %1616 = vrot.lane.b32.xlu0 %v1610, 110
      %v1617 = vpop.permute.xlu0 %1616
      %1618 = vrot.lane.b32.xlu0 %v1611, 110
      %v1619 = vpop.permute.xlu0 %1618
      %1620 = vrot.lane.b32.xlu0 %v1612, 110
      %v1621 = vpop.permute.xlu0 %1620
      %vm1622 = vcmask 900096
      %v1623 = vsel %vm1622, %v1617, %v1619
      %v1624 = vsel %vm1622, %v1619, %v1621
      %1627 = vst [vmem:[#allocation3 + $0x130] sm:$0xff] %v1623
      %1628 = vst [vmem:[#allocation3 + $0x138] sm:$0xff] %v1624
      %v1629 = vld [vmem:[#allocation2 + $0x8] sm:$0xff]
      %v1630 = vld [vmem:[#allocation2 + $0x10] sm:$0xff]
      %v1631 = vld [vmem:[#allocation2 + $0x18] sm:$0xff]
      %v1632 = vld [vmem:[#allocation2 + $0x28] sm:$0xff]
      %v1633 = vld [vmem:[#allocation2 + $0x30] sm:$0xff]
      %v1634 = vld [vmem:[#allocation2 + $0x38] sm:$0xff]
      %v1635 = vld [vmem:[%s13] ss:$8 sm:$0x3]
      %v1637 = vlaneseq
      %v1638 = vshrl.u32 %v1637, 7
      %v1639 = vsub.s32 0, %v1638
      %v1640 = vrot.slane %v1635, %v1639
      %v1641 = vlaneseq
      %v1642 = vshrl.u32 %v1641, 7
      %v1643 = vsub.s32 1, %v1642
      %v1644 = vrot.slane %v1635, %v1643
      %1645 = vrot.lane.b32.xlu0 %v1640, 30
      %v1646 = vpop.permute.xlu0 %1645
      %1647 = vrot.lane.b32.xlu0 %v1644, 30
      %v1648 = vpop.permute.xlu0 %1647
      %vm1649 = vcmask 244736
      %v1650 = vsel %vm1649, %v1646, %v1648
      %v1654 = vmul.f32 %v1629, %v1646
      %v1655 = vmul.f32 %v1630, %v1650
      %v1656 = vmul.f32 %v1631, %v1648
      %v1657 = vmul.f32 %v1632, %v1646
      %v1658 = vmul.f32 %v1633, %v1650
      %v1659 = vmul.f32 %v1634, %v1648
      %v1660 = vpack.c.bf16 %v1657, %v1654
      %v1661 = vpack.c.bf16 %v1658, %v1655
      %v1662 = vpack.c.bf16 %v1659, %v1656
      %1666 = vrot.lane.b32.xlu0 %v1660, 98
      %v1667 = vpop.permute.xlu0 %1666
      %1668 = vrot.lane.b32.xlu0 %v1661, 98
      %v1669 = vpop.permute.xlu0 %1668
      %1670 = vrot.lane.b32.xlu0 %v1662, 98
      %v1671 = vpop.permute.xlu0 %1670
      %vm1672 = vcmask 801792
      %v1673 = vsel %vm1672, %v1667, %v1669
      %v1674 = vsel %vm1672, %v1669, %v1671
      %1677 = vst [vmem:[#allocation3 + $0x140] sm:$0xff] %v1673
      %1678 = vst [vmem:[#allocation3 + $0x148] sm:$0xff] %v1674
      %v1679 = vld [vmem:[#allocation2 + $0x8] sm:$0xff]
      %v1680 = vld [vmem:[#allocation2 + $0x10] sm:$0xff]
      %v1681 = vld [vmem:[#allocation2 + $0x18] sm:$0xff]
      %v1682 = vld [vmem:[#allocation2 + $0x28] sm:$0xff]
      %v1683 = vld [vmem:[#allocation2 + $0x30] sm:$0xff]
      %v1684 = vld [vmem:[#allocation2 + $0x38] sm:$0xff]
      %v1685 = vld [vmem:[%s799] ss:$8 sm:$0x3]
      %v1687 = vlaneseq
      %v1688 = vshrl.u32 %v1687, 7
      %v1689 = vsub.s32 0, %v1688
      %v1690 = vrot.slane %v1685, %v1689
      %v1691 = vlaneseq
      %v1692 = vshrl.u32 %v1691, 7
      %v1693 = vsub.s32 1, %v1692
      %v1694 = vrot.slane %v1685, %v1693
      %1695 = vrot.lane.b32.xlu0 %v1690, 31
      %v1696 = vpop.permute.xlu0 %1695
      %1697 = vrot.lane.b32.xlu0 %v1694, 31
      %v1698 = vpop.permute.xlu0 %1697
      %vm1699 = vcmask 252928
      %v1700 = vsel %vm1699, %v1696, %v1698
      %v1704 = vmul.f32 %v1679, %v1696
      %v1705 = vmul.f32 %v1680, %v1700
      %v1706 = vmul.f32 %v1681, %v1698
      %v1707 = vmul.f32 %v1682, %v1696
      %v1708 = vmul.f32 %v1683, %v1700
      %v1709 = vmul.f32 %v1684, %v1698
      %v1710 = vpack.c.bf16 %v1707, %v1704
      %v1711 = vpack.c.bf16 %v1708, %v1705
      %v1712 = vpack.c.bf16 %v1709, %v1706
      %1716 = vrot.lane.b32.xlu0 %v1710, 97
      %v1717 = vpop.permute.xlu0 %1716
      %1718 = vrot.lane.b32.xlu0 %v1711, 97
      %v1719 = vpop.permute.xlu0 %1718
      %1720 = vrot.lane.b32.xlu0 %v1712, 97
      %v1721 = vpop.permute.xlu0 %1720
      %vm1722 = vcmask 793600
      %v1723 = vsel %vm1722, %v1717, %v1719
      %v1724 = vsel %vm1722, %v1719, %v1721
      %1727 = vst [vmem:[#allocation3 + $0x150] sm:$0xff] %v1723
      %1728 = vst [vmem:[#allocation3 + $0x158] sm:$0xff] %v1724
      %v1729 = vld [vmem:[#allocation2 + $0x8] sm:$0xff]
      %v1730 = vld [vmem:[#allocation2 + $0x10] sm:$0xff]
      %v1731 = vld [vmem:[#allocation2 + $0x18] sm:$0xff]
      %v1732 = vld [vmem:[#allocation2 + $0x28] sm:$0xff]
      %v1733 = vld [vmem:[#allocation2 + $0x30] sm:$0xff]
      %v1734 = vld [vmem:[#allocation2 + $0x38] sm:$0xff]
      %v1735 = vpack.c.bf16 %v1732, %v1729
      %v1736 = vpack.c.bf16 %v1733, %v1730
      %v1737 = vpack.c.bf16 %v1734, %v1731
      %1741 = vrot.lane.b32.xlu0 %v1735, 96
      %v1742 = vpop.permute.xlu0 %1741
      %1743 = vrot.lane.b32.xlu0 %v1736, 96
      %v1744 = vpop.permute.xlu0 %1743
      %1745 = vrot.lane.b32.xlu0 %v1737, 96
      %v1746 = vpop.permute.xlu0 %1745
      %vm1747 = vcmask 785408
      %v1748 = vsel %vm1747, %v1742, %v1744
      %v1749 = vsel %vm1747, %v1744, %v1746
      %1752 = vst [vmem:[#allocation3 + $0x160] sm:$0xff] %v1748
      %1753 = vst [vmem:[#allocation3 + $0x168] sm:$0xff] %v1749
      %v1754 = vld [vmem:[#allocation2 + $0x8] sm:$0xff]
      %v1755 = vld [vmem:[#allocation2 + $0x10] sm:$0xff]
      %v1756 = vld [vmem:[#allocation2 + $0x18] sm:$0xff]
      %v1757 = vld [vmem:[#allocation2 + $0x28] sm:$0xff]
      %v1758 = vld [vmem:[#allocation2 + $0x30] sm:$0xff]
      %v1759 = vld [vmem:[#allocation2 + $0x38] sm:$0xff]
      %v1760 = vld [vmem:[%s875] ss:$8 sm:$0x3]
      %v1762 = vlaneseq
      %v1763 = vshrl.u32 %v1762, 7
      %v1764 = vsub.s32 0, %v1763
      %v1765 = vrot.slane %v1760, %v1764
      %v1766 = vlaneseq
      %v1767 = vshrl.u32 %v1766, 7
      %v1768 = vsub.s32 1, %v1767
      %v1769 = vrot.slane %v1760, %v1768
      %1770 = vrot.lane.b32.xlu0 %v1765, 33
      %v1771 = vpop.permute.xlu0 %1770
      %1772 = vrot.lane.b32.xlu0 %v1769, 33
      %v1773 = vpop.permute.xlu0 %1772
      %vm1774 = vcmask 269312
      %v1775 = vsel %vm1774, %v1771, %v1773
      %v1779 = vmul.f32 %v1754, %v1771
      %v1780 = vmul.f32 %v1755, %v1775
      %v1781 = vmul.f32 %v1756, %v1773
      %v1782 = vmul.f32 %v1757, %v1771
      %v1783 = vmul.f32 %v1758, %v1775
      %v1784 = vmul.f32 %v1759, %v1773
      %v1785 = vpack.c.bf16 %v1782, %v1779
      %v1786 = vpack.c.bf16 %v1783, %v1780
      %v1787 = vpack.c.bf16 %v1784, %v1781
      %1791 = vrot.lane.b32.xlu0 %v1785, 95
      %v1792 = vpop.permute.xlu0 %1791
      %1793 = vrot.lane.b32.xlu0 %v1786, 95
      %v1794 = vpop.permute.xlu0 %1793
      %1795 = vrot.lane.b32.xlu0 %v1787, 95
      %v1796 = vpop.permute.xlu0 %1795
      %vm1797 = vcmask 777216
      %v1798 = vsel %vm1797, %v1792, %v1794
      %v1799 = vsel %vm1797, %v1794, %v1796
      %1802 = vst [vmem:[#allocation3 + $0x170] sm:$0xff] %v1798
      %1803 = vst [vmem:[#allocation3 + $0x178] sm:$0xff] %v1799
      %v1804 = vld [vmem:[#allocation2 + $0x8] sm:$0xff]
      %v1805 = vld [vmem:[#allocation2 + $0x10] sm:$0xff]
      %v1806 = vld [vmem:[#allocation2 + $0x18] sm:$0xff]
      %v1807 = vld [vmem:[#allocation2 + $0x28] sm:$0xff]
      %v1808 = vld [vmem:[#allocation2 + $0x30] sm:$0xff]
      %v1809 = vld [vmem:[#allocation2 + $0x38] sm:$0xff]
      %v1810 = vld [vmem:[%s926] ss:$8 sm:$0x3]
      %v1812 = vlaneseq
      %v1813 = vshrl.u32 %v1812, 7
      %v1814 = vsub.s32 0, %v1813
      %v1815 = vrot.slane %v1810, %v1814
      %v1816 = vlaneseq
      %v1817 = vshrl.u32 %v1816, 7
      %v1818 = vsub.s32 1, %v1817
      %v1819 = vrot.slane %v1810, %v1818
      %1820 = vrot.lane.b32.xlu0 %v1815, 34
      %v1821 = vpop.permute.xlu0 %1820
      %1822 = vrot.lane.b32.xlu0 %v1819, 34
      %v1823 = vpop.permute.xlu0 %1822
      %vm1824 = vcmask 277504
      %v1825 = vsel %vm1824, %v1821, %v1823
      %v1829 = vmul.f32 %v1804, %v1821
      %v1830 = vmul.f32 %v1805, %v1825
      %v1831 = vmul.f32 %v1806, %v1823
      %v1832 = vmul.f32 %v1807, %v1821
      %v1833 = vmul.f32 %v1808, %v1825
      %v1834 = vmul.f32 %v1809, %v1823
      %v1835 = vpack.c.bf16 %v1832, %v1829
      %v1836 = vpack.c.bf16 %v1833, %v1830
      %v1837 = vpack.c.bf16 %v1834, %v1831
      %1841 = vrot.lane.b32.xlu0 %v1835, 94
      %v1842 = vpop.permute.xlu0 %1841
      %1843 = vrot.lane.b32.xlu0 %v1836, 94
      %v1844 = vpop.permute.xlu0 %1843
      %1845 = vrot.lane.b32.xlu0 %v1837, 94
      %v1846 = vpop.permute.xlu0 %1845
      %vm1847 = vcmask 769024
      %v1848 = vsel %vm1847, %v1842, %v1844
      %v1849 = vsel %vm1847, %v1844, %v1846
      %1852 = vst [vmem:[#allocation3 + $0x180] sm:$0xff] %v1848
      %1853 = vst [vmem:[#allocation3 + $0x188] sm:$0xff] %v1849
      %v1854 = vld [vmem:[%s3] sm:$0xff]
      %v1855 = vld [vmem:[%s3 + $0x8] sm:$0xff]
      %v1856 = vld [vmem:[%s3 + $0x10] sm:$0xff]
      %v1857 = vld [vmem:[%s3 + $0x18] sm:$0xff]
      %v1858 = vld [vmem:[%s3 + $0x20] sm:$0xff]
      %v1859 = vld [vmem:[%s3 + $0x28] sm:$0xff]
      %v1860 = vld [vmem:[%s3 + $0x30] sm:$0xff]
      %v1861 = vld [vmem:[%s3 + $0x38] sm:$0xff]
      %v1862 = vld [vmem:[#allocation3] sm:$0xff]
      %v1863 = vld [vmem:[#allocation3 + $0x8] sm:$0xff]
      %v1864 = vld [vmem:[#allocation3 + $0x10] sm:$0xff]
      %v1865 = vld [vmem:[#allocation3 + $0x18] sm:$0xff]
      %v1866 = vld [vmem:[#allocation3 + $0x20] sm:$0xff]
      %v1867 = vld [vmem:[#allocation3 + $0x28] sm:$0xff]
      %v1868 = vld [vmem:[#allocation3 + $0x30] sm:$0xff]
      %v1869 = vld [vmem:[#allocation3 + $0x38] sm:$0xff]
      %v1870 = vld [vmem:[#allocation3 + $0x40] sm:$0xff]
      %v1871 = vld [vmem:[#allocation3 + $0x48] sm:$0xff]
      %v1872 = vld [vmem:[#allocation3 + $0x50] sm:$0xff]
      %v1873 = vld [vmem:[#allocation3 + $0x58] sm:$0xff]
      %v1874 = vld [vmem:[#allocation3 + $0x60] sm:$0xff]
      %v1875 = vld [vmem:[#allocation3 + $0x68] sm:$0xff]
      %v1876 = vld [vmem:[#allocation3 + $0x70] sm:$0xff]
      %v1877 = vld [vmem:[#allocation3 + $0x78] sm:$0xff]
      %v1878 = vld [vmem:[#allocation3 + $0x80] sm:$0xff]
      %v1879 = vld [vmem:[#allocation3 + $0x88] sm:$0xff]
      %v1880 = vld [vmem:[#allocation3 + $0x90] sm:$0xff]
      %v1881 = vld [vmem:[#allocation3 + $0x98] sm:$0xff]
      %v1882 = vld [vmem:[#allocation3 + $0xa0] sm:$0xff]
      %v1883 = vld [vmem:[#allocation3 + $0xa8] sm:$0xff]
      %v1884 = vld [vmem:[#allocation3 + $0xb0] sm:$0xff]
      %v1885 = vld [vmem:[#allocation3 + $0xb8] sm:$0xff]
      %v1886 = vld [vmem:[#allocation3 + $0xc0] sm:$0xff]
      %v1887 = vld [vmem:[#allocation3 + $0xc8] sm:$0xff]
      %v1888 = vld [vmem:[#allocation3 + $0xd0] sm:$0xff]
      %v1889 = vld [vmem:[#allocation3 + $0xd8] sm:$0xff]
      %v1890 = vld [vmem:[#allocation3 + $0xe0] sm:$0xff]
      %v1891 = vld [vmem:[#allocation3 + $0xe8] sm:$0xff]
      %v1892 = vld [vmem:[#allocation3 + $0xf0] sm:$0xff]
      %v1893 = vld [vmem:[#allocation3 + $0xf8] sm:$0xff]
      %v1894 = vld [vmem:[#allocation3 + $0x100] sm:$0xff]
      %v1895 = vld [vmem:[#allocation3 + $0x108] sm:$0xff]
      %v1896 = vld [vmem:[#allocation3 + $0x110] sm:$0xff]
      %v1897 = vld [vmem:[#allocation3 + $0x118] sm:$0xff]
      %v1898 = vld [vmem:[#allocation3 + $0x120] sm:$0xff]
      %v1899 = vld [vmem:[#allocation3 + $0x128] sm:$0xff]
      %v1900 = vld [vmem:[#allocation3 + $0x130] sm:$0xff]
      %v1901 = vld [vmem:[#allocation3 + $0x138] sm:$0xff]
      %v1902 = vld [vmem:[#allocation3 + $0x140] sm:$0xff]
      %v1903 = vld [vmem:[#allocation3 + $0x148] sm:$0xff]
      %v1904 = vld [vmem:[#allocation3 + $0x150] sm:$0xff]
      %v1905 = vld [vmem:[#allocation3 + $0x158] sm:$0xff]
      %v1906 = vld [vmem:[#allocation3 + $0x160] sm:$0xff]
      %v1907 = vld [vmem:[#allocation3 + $0x168] sm:$0xff]
      %v1908 = vld [vmem:[#allocation3 + $0x170] sm:$0xff]
      %v1909 = vld [vmem:[#allocation3 + $0x178] sm:$0xff]
      %v1910 = vld [vmem:[#allocation3 + $0x180] sm:$0xff]
      %v1911 = vld [vmem:[#allocation3 + $0x188] sm:$0xff]
      %v1912 = vpack.c.bf16 %v1858, %v1854
      %v1913 = vpack.c.bf16 %v1859, %v1855
      %v1914 = vpack.c.bf16 %v1860, %v1856
      %v1915 = vpack.c.bf16 %v1861, %v1857
      %v1916 = vld [vmem:[%s12] sm:$0xff]
      %v1917 = vld [vmem:[%s12 + $0x8] sm:$0xff]
      %1919 = vset.pattern.permute.xlu0 7
      %1920 = vperm.xlu0 %1919, %v1916
      %v1921 = vpop.permute.xlu0 %1920
      %1924 = vset.pattern.permute.xlu0 7
      %1925 = vperm.xlu0 %1924, %v1917
      %v1926 = vpop.permute.xlu0 %1925
      %v1929 = vsel %vm631, %v1915, 0
      %1931 = vmatprep.subr.bf16.mxu0 %v1863
      %1932 = vmatpush1.bf16.msra.mxu0 %v1862
      %1933 = vmatprep.subr.bf16.mxu0 %v1865
      %1934 = vmatpush1.bf16.msra.mxu0 %v1864
      %1935 = vmatprep.subr.bf16.mxu0 %v1867
      %1936 = vmatpush1.bf16.msra.mxu0 %v1866
      %1937 = vmatprep.subr.bf16.mxu0 %v1869
      %1938 = vmatpush1.bf16.msra.mxu0 %v1868
      %1939 = vmatprep.subr.bf16.mxu0 %v1871
      %1940 = vmatpush1.bf16.msra.mxu0 %v1870
      %1941 = vmatprep.subr.bf16.mxu0 %v1873
      %1942 = vmatpush1.bf16.msra.mxu0 %v1872
      %1943 = vmatprep.subr.bf16.mxu0 %v1875
      %1944 = vmatpush1.bf16.msra.mxu0 %v1874
      %1945 = vmatprep.subr.bf16.mxu0 %v1877
      %1946 = vmatpush1.bf16.msra.mxu0 %v1876
      %1947 = vmatprep.subr.bf16.mxu0 %v1879
      %1948 = vmatpush1.bf16.msra.mxu0 %v1878
      %1949 = vmatprep.subr.bf16.mxu0 %v1881
      %1950 = vmatpush1.bf16.msra.mxu0 %v1880
      %1951 = vmatprep.subr.bf16.mxu0 %v1883
      %1952 = vmatpush1.bf16.msra.mxu0 %v1882
      %1953 = vmatprep.subr.bf16.mxu0 %v1885
      %1954 = vmatpush1.bf16.msra.mxu0 %v1884
      %1955 = vmatprep.subr.bf16.mxu0 %v1887
      %1956 = vmatpush1.bf16.msra.mxu0 %v1886
      %1957 = vmatprep.subr.bf16.mxu0 %v1889
      %1958 = vmatpush1.bf16.msra.mxu0 %v1888
      %1959 = vmatprep.subr.bf16.mxu0 %v1891
      %1960 = vmatpush1.bf16.msra.mxu0 %v1890
      %1961 = vmatprep.subr.bf16.mxu0 %v1893
      %1962 = vmatpush1.bf16.msra.mxu0 %v1892
      %1963 = vmatprep.mubr.bf16.mxu0 %v1913
      %1964 = vmatmul.mubr.bf16.gmra.mrb[0].mxu0 %v1912
      %v1965 = vpop.f32.mrb[0].mxu0
      %v1966 = vadd.f32 %v1921, %v1965
      %v1967 = vpop.f32.mrb[0].mxu0
      %v1968 = vadd.f32 %v1921, %v1967
      %v1969 = vpop.f32.mrb[0].mxu0
      %v1970 = vadd.f32 %v1926, %v1969
      %v1971 = vpop.f32.mrb[0].mxu0
      %v1972 = vadd.f32 %v1926, %v1971
      %1973 = vdwg.mxu0
      %1974 = vmatprep.subr.bf16.mxu0 %v1895
      %1975 = vmatpush1.bf16.msra.mxu0 %v1894
      %1976 = vmatprep.subr.bf16.mxu0 %v1897
      %1977 = vmatpush1.bf16.msra.mxu0 %v1896
      %1978 = vmatprep.subr.bf16.mxu0 %v1899
      %1979 = vmatpush1.bf16.msra.mxu0 %v1898
      %1980 = vmatprep.subr.bf16.mxu0 %v1901
      %1981 = vmatpush1.bf16.msra.mxu0 %v1900
      %1982 = vmatprep.subr.bf16.mxu0 %v1903
      %1983 = vmatpush1.bf16.msra.mxu0 %v1902
      %1984 = vmatprep.subr.bf16.mxu0 %v1905
      %1985 = vmatpush1.bf16.msra.mxu0 %v1904
      %1986 = vmatprep.subr.bf16.mxu0 %v1907
      %1987 = vmatpush1.bf16.msra.mxu0 %v1906
      %1988 = vmatprep.subr.bf16.mxu0 %v1909
      %1989 = vmatpush1.bf16.msra.mxu0 %v1908
      %1990 = vmatprep.subr.bf16.mxu0 %v1911
      %1991 = vmatpush1.bf16.msra.mxu0 %v1910
      %1992 = vmatprep.subr.bf16.mxu0 0
      %1993 = vmatpush1.bf16.msra.mxu0 0
      %1994 = vmatprep.subr.bf16.mxu0 0
      %1995 = vmatpush1.bf16.msra.mxu0 0
      %1996 = vmatprep.subr.bf16.mxu0 0
      %1997 = vmatpush1.bf16.msra.mxu0 0
      %1998 = vmatprep.subr.bf16.mxu0 0
      %1999 = vmatpush1.bf16.msra.mxu0 0
      %2000 = vmatprep.subr.bf16.mxu0 0
      %2001 = vmatpush1.bf16.msra.mxu0 0
      %2002 = vmatprep.subr.bf16.mxu0 0
      %2003 = vmatpush1.bf16.msra.mxu0 0
      %2004 = vmatprep.subr.bf16.mxu0 0
      %2005 = vmatpush1.bf16.msra.mxu0 0
      %2006 = vmatprep.mubr.bf16.mxu0 %v1929
      %2007 = vmatmul.mubr.bf16.gmra.mrb[0].mxu0 %v1914
      %v2008 = vpop.f32.mrb[0].mxu0
      %v2009 = vadd.f32 %v1966, %v2008
      %v2010 = vpop.f32.mrb[0].mxu0
      %v2011 = vadd.f32 %v1968, %v2010
      %v2012 = vpop.f32.mrb[0].mxu0
      %v2013 = vadd.f32 %v1970, %v2012
      %v2014 = vpop.f32.mrb[0].mxu0
      %v2015 = vadd.f32 %v1972, %v2014
      %2016 = vdwg.mxu0
      %2017 = vst [vmem:[#allocation2 + $0x8] sm:$0xff] %v550
      %2018 = vst [vmem:[#allocation2 + $0x10] sm:$0xff] %v551
      %2019 = vst [vmem:[#allocation2 + $0x28] sm:$0xff] %v552
      %2020 = vst [vmem:[#allocation2 + $0x30] sm:$0xff] %v553
      %v2021 = vld [vmem:[%s4] sm:$0xff]
      %v2022 = vld [vmem:[%s4 + $0x8] sm:$0xff]
      %v2023 = vld [vmem:[#allocation2] sm:$0xff]
      %v2024 = vld [vmem:[#allocation2 + $0x8] sm:$0xff]
      %v2025 = vld [vmem:[#allocation2 + $0x10] sm:$0xff]
      %v2026 = vld [vmem:[#allocation2 + $0x20] sm:$0xff]
      %v2027 = vld [vmem:[#allocation2 + $0x28] sm:$0xff]
      %v2028 = vld [vmem:[#allocation2 + $0x30] sm:$0xff]
      %v2029 = vld [vmem:[%s799] ss:$8 sm:$0x3]
      %v2031 = vlaneseq
      %v2032 = vshrl.u32 %v2031, 7
      %v2033 = vsub.s32 0, %v2032
      %v2034 = vrot.slane %v2029, %v2033
      %v2035 = vlaneseq
      %v2036 = vshrl.u32 %v2035, 7
      %v2037 = vsub.s32 1, %v2036
      %v2038 = vrot.slane %v2029, %v2037
      %2039 = vrot.lane.b32.xlu0 %v2034, 111
      %v2040 = vpop.permute.xlu0 %2039
      %2041 = vrot.lane.b32.xlu0 %v2038, 111
      %v2042 = vpop.permute.xlu0 %2041
      %v2043 = vsel %vm1041, %v2040, %v2042
      %v2047 = vmul.f32 %v2023, %v2040
      %v2048 = vmul.f32 %v2024, %v2043
      %v2049 = vmul.f32 %v2025, %v2042
      %v2050 = vmul.f32 %v2026, %v2040
      %v2051 = vmul.f32 %v2027, %v2043
      %v2052 = vmul.f32 %v2028, %v2042
      %2054 = vset.pattern.permute.xlu0 0
      %2055 = vperm.xlu0 %2054, %v2021
      %v2056 = vpop.permute.xlu0 %2055
      %2059 = vset.pattern.permute.xlu0 0
      %2060 = vperm.xlu0 %2059, %v2022
      %v2061 = vpop.permute.xlu0 %2060
      %v2063 = vmul.f32 %v2047, %v2056
      %v2064 = vmul.f32 %v2048, %v2056
      %v2065 = vmul.f32 %v2049, %v2056
      %v2066 = vmul.f32 %v2050, %v2061
      %v2067 = vmul.f32 %v2051, %v2061
      %v2068 = vmul.f32 %v2052, %v2061
      %2069 = vset.pattern.permute.xlu0 9
      %2070 = vperm.xlu0 %2069, %v2021
      %v2071 = vpop.permute.xlu0 %2070
      %2073 = vset.pattern.permute.xlu0 9
      %2074 = vperm.xlu0 %2073, %v2022
      %v2075 = vpop.permute.xlu0 %2074
      %v2077 = vadd.f32 %v2071, %v2063
      %v2078 = vadd.f32 %v2071, %v2064
      %v2079 = vadd.f32 %v2071, %v2065
      %v2080 = vadd.f32 %v2075, %v2066
      %v2081 = vadd.f32 %v2075, %v2067
      %v2082 = vadd.f32 %v2075, %v2068
      %2083 = vset.pattern.permute.xlu0 1
      %2084 = vperm.xlu0 %2083, %v2021
      %v2085 = vpop.permute.xlu0 %2084
      %2087 = vset.pattern.permute.xlu0 1
      %2088 = vperm.xlu0 %2087, %v2022
      %v2089 = vpop.permute.xlu0 %2088
      %v2091 = vmul.f32 %v2023, %v2085
      %v2092 = vmul.f32 %v2024, %v2085
      %v2093 = vmul.f32 %v2025, %v2085
      %v2094 = vmul.f32 %v2026, %v2089
      %v2095 = vmul.f32 %v2027, %v2089
      %v2096 = vmul.f32 %v2028, %v2089
      %2103 = vrot.lane.b32.xlu0 %v2091, 127
      %v2104 = vpop.permute.xlu0 %2103
      %2105 = vrot.lane.b32.xlu0 %v2092, 127
      %v2106 = vpop.permute.xlu0 %2105
      %2107 = vrot.lane.b32.xlu0 %v2093, 127
      %v2108 = vpop.permute.xlu0 %2107
      %2109 = vrot.lane.b32.xlu0 %v2094, 127
      %v2110 = vpop.permute.xlu0 %2109
      %2111 = vrot.lane.b32.xlu0 %v2095, 127
      %v2112 = vpop.permute.xlu0 %2111
      %2113 = vrot.lane.b32.xlu0 %v2096, 127
      %v2114 = vpop.permute.xlu0 %2113
      %v2115 = vsel %vm1266, %v2104, %v2106
      %v2116 = vsel %vm1266, %v2106, %v2108
      %v2117 = vsel %vm1266, %v2110, %v2112
      %v2118 = vsel %vm1266, %v2112, %v2114
      %v2125 = vadd.f32 %v2077, %v2115
      %v2126 = vadd.f32 %v2078, %v2116
      %v2127 = vadd.f32 %v2079, %v2108
      %v2128 = vadd.f32 %v2080, %v2117
      %v2129 = vadd.f32 %v2081, %v2118
      %v2130 = vadd.f32 %v2082, %v2114
      %v2131 = vld [vmem:[%s875] ss:$8 sm:$0x3]
      %v2133 = vlaneseq
      %v2134 = vshrl.u32 %v2133, 7
      %v2135 = vsub.s32 0, %v2134
      %v2136 = vrot.slane %v2131, %v2135
      %v2137 = vlaneseq
      %v2138 = vshrl.u32 %v2137, 7
      %v2139 = vsub.s32 1, %v2138
      %v2140 = vrot.slane %v2131, %v2139
      %2141 = vrot.lane.b32.xlu0 %v2136, 113
      %v2142 = vpop.permute.xlu0 %2141
      %2143 = vrot.lane.b32.xlu0 %v2140, 113
      %v2144 = vpop.permute.xlu0 %2143
      %v2145 = vsel %vm1116, %v2142, %v2144
      %v2149 = vmul.f32 %v2023, %v2142
      %v2150 = vmul.f32 %v2024, %v2145
      %v2151 = vmul.f32 %v2025, %v2144
      %v2152 = vmul.f32 %v2026, %v2142
      %v2153 = vmul.f32 %v2027, %v2145
      %v2154 = vmul.f32 %v2028, %v2144
      %2155 = vset.pattern.permute.xlu0 2
      %2156 = vperm.xlu0 %2155, %v2021
      %v2157 = vpop.permute.xlu0 %2156
      %2159 = vset.pattern.permute.xlu0 2
      %2160 = vperm.xlu0 %2159, %v2022
      %v2161 = vpop.permute.xlu0 %2160
      %v2163 = vmul.f32 %v2149, %v2157
      %v2164 = vmul.f32 %v2150, %v2157
      %v2165 = vmul.f32 %v2151, %v2157
      %v2166 = vmul.f32 %v2152, %v2161
      %v2167 = vmul.f32 %v2153, %v2161
      %v2168 = vmul.f32 %v2154, %v2161
      %2175 = vrot.lane.b32.xlu0 %v2163, 126
      %v2176 = vpop.permute.xlu0 %2175
      %2177 = vrot.lane.b32.xlu0 %v2164, 126
      %v2178 = vpop.permute.xlu0 %2177
      %2179 = vrot.lane.b32.xlu0 %v2165, 126
      %v2180 = vpop.permute.xlu0 %2179
      %2181 = vrot.lane.b32.xlu0 %v2166, 126
      %v2182 = vpop.permute.xlu0 %2181
      %2183 = vrot.lane.b32.xlu0 %v2167, 126
      %v2184 = vpop.permute.xlu0 %2183
      %2185 = vrot.lane.b32.xlu0 %v2168, 126
      %v2186 = vpop.permute.xlu0 %2185
      %v2187 = vsel %vm1216, %v2176, %v2178
      %v2188 = vsel %vm1216, %v2178, %v2180
      %v2189 = vsel %vm1216, %v2182, %v2184
      %v2190 = vsel %vm1216, %v2184, %v2186
      %v2197 = vadd.f32 %v2125, %v2187
      %v2198 = vadd.f32 %v2126, %v2188
      %v2199 = vadd.f32 %v2127, %v2180
      %v2200 = vadd.f32 %v2128, %v2189
      %v2201 = vadd.f32 %v2129, %v2190
      %v2202 = vadd.f32 %v2130, %v2186
      %2203 = vrot.lane.b32.xlu0 %v2034, 127
      %v2204 = vpop.permute.xlu0 %2203
      %2205 = vrot.lane.b32.xlu0 %v2038, 127
      %v2206 = vpop.permute.xlu0 %2205
      %v2207 = vsel %vm1266, %v2204, %v2206
      %v2211 = vmul.f32 %v2023, %v2204
      %v2212 = vmul.f32 %v2024, %v2207
      %v2213 = vmul.f32 %v2025, %v2206
      %v2214 = vmul.f32 %v2026, %v2204
      %v2215 = vmul.f32 %v2027, %v2207
      %v2216 = vmul.f32 %v2028, %v2206
      %2217 = vset.pattern.permute.xlu0 3
      %2218 = vperm.xlu0 %2217, %v2021
      %v2219 = vpop.permute.xlu0 %2218
      %2221 = vset.pattern.permute.xlu0 3
      %2222 = vperm.xlu0 %2221, %v2022
      %v2223 = vpop.permute.xlu0 %2222
      %v2225 = vmul.f32 %v2211, %v2219
      %v2226 = vmul.f32 %v2212, %v2219
      %v2227 = vmul.f32 %v2213, %v2219
      %v2228 = vmul.f32 %v2214, %v2223
      %v2229 = vmul.f32 %v2215, %v2223
      %v2230 = vmul.f32 %v2216, %v2223
      %2237 = vrot.lane.b32.xlu0 %v2225, 112
      %v2238 = vpop.permute.xlu0 %2237
      %2239 = vrot.lane.b32.xlu0 %v2226, 112
      %v2240 = vpop.permute.xlu0 %2239
      %2241 = vrot.lane.b32.xlu0 %v2227, 112
      %v2242 = vpop.permute.xlu0 %2241
      %2243 = vrot.lane.b32.xlu0 %v2228, 112
      %v2244 = vpop.permute.xlu0 %2243
      %2245 = vrot.lane.b32.xlu0 %v2229, 112
      %v2246 = vpop.permute.xlu0 %2245
      %2247 = vrot.lane.b32.xlu0 %v2230, 112
      %v2248 = vpop.permute.xlu0 %2247
      %vm2249 = vcmask 916480
      %v2250 = vsel %vm2249, %v2238, %v2240
      %v2251 = vsel %vm2249, %v2240, %v2242
      %v2252 = vsel %vm2249, %v2244, %v2246
      %v2253 = vsel %vm2249, %v2246, %v2248
      %v2260 = vadd.f32 %v2197, %v2250
      %v2261 = vadd.f32 %v2198, %v2251
      %v2262 = vadd.f32 %v2199, %v2242
      %v2263 = vadd.f32 %v2200, %v2252
      %v2264 = vadd.f32 %v2201, %v2253
      %v2265 = vadd.f32 %v2202, %v2248
      %2266 = vset.pattern.permute.xlu0 4
      %2267 = vperm.xlu0 %2266, %v2021
      %v2268 = vpop.permute.xlu0 %2267
      %2270 = vset.pattern.permute.xlu0 4
      %2271 = vperm.xlu0 %2270, %v2022
      %v2272 = vpop.permute.xlu0 %2271
      %v2274 = vmul.f32 %v2024, %v2268
      %v2275 = vmul.f32 %v2025, %v2268
      %v2276 = vmul.f32 %v2027, %v2272
      %v2277 = vmul.f32 %v2028, %v2272
      %2282 = vrot.lane.b32.xlu0 %v2274, 111
      %v2283 = vpop.permute.xlu0 %2282
      %2284 = vrot.lane.b32.xlu0 %v2275, 111
      %v2285 = vpop.permute.xlu0 %2284
      %2286 = vrot.lane.b32.xlu0 %v2276, 111
      %v2287 = vpop.permute.xlu0 %2286
      %2288 = vrot.lane.b32.xlu0 %v2277, 111
      %v2289 = vpop.permute.xlu0 %2288
      %v2290 = vsel %vm1041, %v2283, %v2285
      %v2291 = vsel %vm1041, %v2287, %v2289
      %v2298 = vadd.f32 %v2260, %v2283
      %v2299 = vadd.f32 %v2261, %v2290
      %v2300 = vadd.f32 %v2262, %v2285
      %v2301 = vadd.f32 %v2263, %v2287
      %v2302 = vadd.f32 %v2264, %v2291
      %v2303 = vadd.f32 %v2265, %v2289
      %v2304 = vld [vmem:[#allocation2 + $0x8] sm:$0xff]
      %v2305 = vld [vmem:[#allocation2 + $0x10] sm:$0xff]
      %v2306 = vld [vmem:[#allocation2 + $0x18] sm:$0xff]
      %v2307 = vld [vmem:[#allocation2 + $0x28] sm:$0xff]
      %v2308 = vld [vmem:[#allocation2 + $0x30] sm:$0xff]
      %v2309 = vld [vmem:[#allocation2 + $0x38] sm:$0xff]
      %2310 = vrot.lane.b32.xlu0 %v2136, 1
      %v2311 = vpop.permute.xlu0 %2310
      %2312 = vrot.lane.b32.xlu0 %v2140, 1
      %v2313 = vpop.permute.xlu0 %2312
      %v2314 = vsel %vm1324, %v2311, %v2313
      %v2318 = vmul.f32 %v2304, %v2311
      %v2319 = vmul.f32 %v2305, %v2314
      %v2320 = vmul.f32 %v2306, %v2313
      %v2321 = vmul.f32 %v2307, %v2311
      %v2322 = vmul.f32 %v2308, %v2314
      %v2323 = vmul.f32 %v2309, %v2313
      %2324 = vset.pattern.permute.xlu0 5
      %2325 = vperm.xlu0 %2324, %v2021
      %v2326 = vpop.permute.xlu0 %2325
      %2328 = vset.pattern.permute.xlu0 5
      %2329 = vperm.xlu0 %2328, %v2022
      %v2330 = vpop.permute.xlu0 %2329
      %v2332 = vmul.f32 %v2318, %v2326
      %v2333 = vmul.f32 %v2319, %v2326
      %v2334 = vmul.f32 %v2320, %v2326
      %v2335 = vmul.f32 %v2321, %v2330
      %v2336 = vmul.f32 %v2322, %v2330
      %v2337 = vmul.f32 %v2323, %v2330
      %2344 = vrot.lane.b32.xlu0 %v2332, 110
      %v2345 = vpop.permute.xlu0 %2344
      %2346 = vrot.lane.b32.xlu0 %v2333, 110
      %v2347 = vpop.permute.xlu0 %2346
      %2348 = vrot.lane.b32.xlu0 %v2334, 110
      %v2349 = vpop.permute.xlu0 %2348
      %2350 = vrot.lane.b32.xlu0 %v2335, 110
      %v2351 = vpop.permute.xlu0 %2350
      %2352 = vrot.lane.b32.xlu0 %v2336, 110
      %v2353 = vpop.permute.xlu0 %2352
      %2354 = vrot.lane.b32.xlu0 %v2337, 110
      %v2355 = vpop.permute.xlu0 %2354
      %v2356 = vsel %vm991, %v2345, %v2347
      %v2357 = vsel %vm991, %v2347, %v2349
      %v2358 = vsel %vm991, %v2351, %v2353
      %v2359 = vsel %vm991, %v2353, %v2355
      %v2366 = vadd.f32 %v2298, %v2345
      %v2367 = vadd.f32 %v2299, %v2356
      %v2368 = vadd.f32 %v2300, %v2357
      %v2369 = vadd.f32 %v2301, %v2351
      %v2370 = vadd.f32 %v2302, %v2358
      %v2371 = vadd.f32 %v2303, %v2359
      %2372 = vrot.lane.b32.xlu0 %v2034, 15
      %v2373 = vpop.permute.xlu0 %2372
      %2374 = vrot.lane.b32.xlu0 %v2038, 15
      %v2375 = vpop.permute.xlu0 %2374
      %v2376 = vsel %vm1474, %v2373, %v2375
      %v2380 = vmul.f32 %v2304, %v2373
      %v2381 = vmul.f32 %v2305, %v2376
      %v2382 = vmul.f32 %v2306, %v2375
      %v2383 = vmul.f32 %v2307, %v2373
      %v2384 = vmul.f32 %v2308, %v2376
      %v2385 = vmul.f32 %v2309, %v2375
      %2386 = vset.pattern.permute.xlu0 6
      %2387 = vperm.xlu0 %2386, %v2021
      %v2388 = vpop.permute.xlu0 %2387
      %2390 = vset.pattern.permute.xlu0 6
      %2391 = vperm.xlu0 %2390, %v2022
      %v2392 = vpop.permute.xlu0 %2391
      %v2394 = vmul.f32 %v2380, %v2388
      %v2395 = vmul.f32 %v2381, %v2388
      %v2396 = vmul.f32 %v2382, %v2388
      %v2397 = vmul.f32 %v2383, %v2392
      %v2398 = vmul.f32 %v2384, %v2392
      %v2399 = vmul.f32 %v2385, %v2392
      %2406 = vrot.lane.b32.xlu0 %v2394, 96
      %v2407 = vpop.permute.xlu0 %2406
      %2408 = vrot.lane.b32.xlu0 %v2395, 96
      %v2409 = vpop.permute.xlu0 %2408
      %2410 = vrot.lane.b32.xlu0 %v2396, 96
      %v2411 = vpop.permute.xlu0 %2410
      %2412 = vrot.lane.b32.xlu0 %v2397, 96
      %v2413 = vpop.permute.xlu0 %2412
      %2414 = vrot.lane.b32.xlu0 %v2398, 96
      %v2415 = vpop.permute.xlu0 %2414
      %2416 = vrot.lane.b32.xlu0 %v2399, 96
      %v2417 = vpop.permute.xlu0 %2416
      %vm2418 = vcmask 785408
      %v2419 = vsel %vm2418, %v2407, %v2409
      %v2420 = vsel %vm2418, %v2409, %v2411
      %v2421 = vsel %vm2418, %v2413, %v2415
      %v2422 = vsel %vm2418, %v2415, %v2417
      %v2429 = vadd.f32 %v2366, %v2407
      %v2430 = vadd.f32 %v2367, %v2419
      %v2431 = vadd.f32 %v2368, %v2420
      %v2432 = vadd.f32 %v2369, %v2413
      %v2433 = vadd.f32 %v2370, %v2421
      %v2434 = vadd.f32 %v2371, %v2422
      %2435 = vset.pattern.permute.xlu0 7
      %2436 = vperm.xlu0 %2435, %v2021
      %v2437 = vpop.permute.xlu0 %2436
      %2439 = vset.pattern.permute.xlu0 7
      %2440 = vperm.xlu0 %2439, %v2022
      %v2441 = vpop.permute.xlu0 %2440
      %v2443 = vmul.f32 %v2304, %v2437
      %v2444 = vmul.f32 %v2305, %v2437
      %v2445 = vmul.f32 %v2306, %v2437
      %v2446 = vmul.f32 %v2307, %v2441
      %v2447 = vmul.f32 %v2308, %v2441
      %v2448 = vmul.f32 %v2309, %v2441
      %2455 = vrot.lane.b32.xlu0 %v2443, 95
      %v2456 = vpop.permute.xlu0 %2455
      %2457 = vrot.lane.b32.xlu0 %v2444, 95
      %v2458 = vpop.permute.xlu0 %2457
      %2459 = vrot.lane.b32.xlu0 %v2445, 95
      %v2460 = vpop.permute.xlu0 %2459
      %2461 = vrot.lane.b32.xlu0 %v2446, 95
      %v2462 = vpop.permute.xlu0 %2461
      %2463 = vrot.lane.b32.xlu0 %v2447, 95
      %v2464 = vpop.permute.xlu0 %2463
      %2465 = vrot.lane.b32.xlu0 %v2448, 95
      %v2466 = vpop.permute.xlu0 %2465
      %v2467 = vsel %vm814, %v2456, %v2458
      %v2468 = vsel %vm814, %v2458, %v2460
      %v2469 = vsel %vm814, %v2462, %v2464
      %v2470 = vsel %vm814, %v2464, %v2466
      %v2477 = vadd.f32 %v2429, %v2456
      %v2478 = vadd.f32 %v2430, %v2467
      %v2479 = vadd.f32 %v2431, %v2468
      %v2480 = vadd.f32 %v2432, %v2462
      %v2481 = vadd.f32 %v2433, %v2469
      %v2482 = vadd.f32 %v2434, %v2470
      %2483 = vrot.lane.b32.xlu0 %v2136, 17
      %v2484 = vpop.permute.xlu0 %2483
      %2485 = vrot.lane.b32.xlu0 %v2140, 17
      %v2486 = vpop.permute.xlu0 %2485
      %v2487 = vsel %vm1549, %v2484, %v2486
      %v2491 = vmul.f32 %v2304, %v2484
      %v2492 = vmul.f32 %v2305, %v2487
      %v2493 = vmul.f32 %v2306, %v2486
      %v2494 = vmul.f32 %v2307, %v2484
      %v2495 = vmul.f32 %v2308, %v2487
      %v2496 = vmul.f32 %v2309, %v2486
      %2497 = vset.pattern.permute.xlu0 8
      %2498 = vperm.xlu0 %2497, %v2021
      %v2499 = vpop.permute.xlu0 %2498
      %2501 = vset.pattern.permute.xlu0 8
      %2502 = vperm.xlu0 %2501, %v2022
      %v2503 = vpop.permute.xlu0 %2502
      %v2505 = vmul.f32 %v2491, %v2499
      %v2506 = vmul.f32 %v2492, %v2499
      %v2507 = vmul.f32 %v2493, %v2499
      %v2508 = vmul.f32 %v2494, %v2503
      %v2509 = vmul.f32 %v2495, %v2503
      %v2510 = vmul.f32 %v2496, %v2503
      %2517 = vrot.lane.b32.xlu0 %v2505, 94
      %v2518 = vpop.permute.xlu0 %2517
      %2519 = vrot.lane.b32.xlu0 %v2506, 94
      %v2520 = vpop.permute.xlu0 %2519
      %2521 = vrot.lane.b32.xlu0 %v2507, 94
      %v2522 = vpop.permute.xlu0 %2521
      %2523 = vrot.lane.b32.xlu0 %v2508, 94
      %v2524 = vpop.permute.xlu0 %2523
      %2525 = vrot.lane.b32.xlu0 %v2509, 94
      %v2526 = vpop.permute.xlu0 %2525
      %2527 = vrot.lane.b32.xlu0 %v2510, 94
      %v2528 = vpop.permute.xlu0 %2527
      %v2529 = vsel %vm763, %v2518, %v2520
      %v2530 = vsel %vm763, %v2520, %v2522
      %v2531 = vsel %vm763, %v2524, %v2526
      %v2532 = vsel %vm763, %v2526, %v2528
      %v2539 = vadd.f32 %v2477, %v2518
      %v2540 = vadd.f32 %v2478, %v2529
      %v2541 = vadd.f32 %v2479, %v2530
      %v2542 = vadd.f32 %v2480, %v2524
      %v2543 = vadd.f32 %v2481, %v2531
      %v2544 = vadd.f32 %v2482, %v2532
      %v2545 = vmul.f32 %v2539, %v2542
      %v2546 = vmul.f32 %v2540, %v2543
      %v2547 = vmul.f32 %v2541, %v2544
      %v2548 = vld [vmem:[%s6] sm:$0xff]
      %v2549 = vld [vmem:[%s6 + $0x8] sm:$0xff]
      %v2550 = vld [vmem:[%s6 + $0x10] sm:$0xff]
      %v2551 = vld [vmem:[%s6 + $0x18] sm:$0xff]
      %v2552 = vpack.c.bf16 %v2549, %v2548
      %v2553 = vpack.c.bf16 %v2551, %v2550
      %v2554 = vpack.c.bf16 %v2545, %v2545
      %v2555 = vpack.c.bf16 %v2546, %v2546
      %v2556 = vpack.c.bf16 %v2547, %v2547
      %v2557 = vld [vmem:[%s7] sm:$0xff]
      %v2558 = vld [vmem:[%s7 + $0x8] sm:$0xff]
      %v2559 = vld [vmem:[%s7 + $0x10] sm:$0xff]
      %v2560 = vld [vmem:[%s7 + $0x18] sm:$0xff]
      %2562 = vset.pattern.permute.xlu0 1
      %2563 = vperm.xlu0 %2562, %v2557
      %v2564 = vpop.permute.xlu0 %2563
      %2567 = vset.pattern.permute.xlu0 1
      %2568 = vperm.xlu0 %2567, %v2558
      %v2569 = vpop.permute.xlu0 %2568
      %2572 = vset.pattern.permute.xlu0 1
      %2573 = vperm.xlu0 %2572, %v2559
      %v2574 = vpop.permute.xlu0 %2573
      %2577 = vset.pattern.permute.xlu0 1
      %2578 = vperm.xlu0 %2577, %v2560
      %v2579 = vpop.permute.xlu0 %2578
      %2584 = vrot.lane.b32.xlu0 %v2554, 17
      %v2585 = vpop.permute.xlu0 %2584
      %2586 = vrot.lane.b32.xlu0 %v2555, 17
      %v2587 = vpop.permute.xlu0 %2586
      %2588 = vrot.lane.b32.xlu0 %v2556, 17
      %v2589 = vpop.permute.xlu0 %2588
      %v2590 = vsel %vm1064, %v2585, %v2587
      %v2591 = vsel %vm1064, %v2587, %v2589
      %vm2592 = vcmask 64512
      %v2594 = vsel %vm2592, %v2552, 0
      %v2597 = vsel %vm2592, %v2553, 0
      %vm2599 = vcmask 1043456
      %v2601 = vsel %vm2599, %v2590, 0
      %v2604 = vsel %vm2599, %v2591, 0
      %2606 = vmatprep.subr.bf16.mxu0 %v2604
      %2607 = vmatpush1.bf16.msra.mxu0 %v2601
      %2608 = vmatprep.subr.bf16.mxu0 0
      %2609 = vmatpush1.bf16.msra.mxu0 0
      %2610 = vmatprep.subr.bf16.mxu0 0
      %2611 = vmatpush1.bf16.msra.mxu0 0
      %2612 = vmatprep.subr.bf16.mxu0 0
      %2613 = vmatpush1.bf16.msra.mxu0 0
      %2614 = vmatprep.subr.bf16.mxu0 0
      %2615 = vmatpush1.bf16.msra.mxu0 0
      %2616 = vmatprep.subr.bf16.mxu0 0
      %2617 = vmatpush1.bf16.msra.mxu0 0
      %2618 = vmatprep.subr.bf16.mxu0 0
      %2619 = vmatpush1.bf16.msra.mxu0 0
      %2620 = vmatprep.subr.bf16.mxu0 0
      %2621 = vmatpush1.bf16.msra.mxu0 0
      %2622 = vmatprep.subr.bf16.mxu0 0
      %2623 = vmatpush1.bf16.msra.mxu0 0
      %2624 = vmatprep.subr.bf16.mxu0 0
      %2625 = vmatpush1.bf16.msra.mxu0 0
      %2626 = vmatprep.subr.bf16.mxu0 0
      %2627 = vmatpush1.bf16.msra.mxu0 0
      %2628 = vmatprep.subr.bf16.mxu0 0
      %2629 = vmatpush1.bf16.msra.mxu0 0
      %2630 = vmatprep.subr.bf16.mxu0 0
      %2631 = vmatpush1.bf16.msra.mxu0 0
      %2632 = vmatprep.subr.bf16.mxu0 0
      %2633 = vmatpush1.bf16.msra.mxu0 0
      %2634 = vmatprep.subr.bf16.mxu0 0
      %2635 = vmatpush1.bf16.msra.mxu0 0
      %2636 = vmatprep.subr.bf16.mxu0 0
      %2637 = vmatpush1.bf16.msra.mxu0 0
      %2638 = vmatprep.mubr.bf16.mxu0 0
      %2639 = vmatmul.mubr.bf16.gmra.mrb[0].mxu0 %v2594
      %v2640 = vpop.f32.mrb[0].mxu0
      %v2641 = vadd.f32 %v2564, %v2640
      %v2642 = vpop.f32.mrb[0].mxu0
      %v2643 = vadd.f32 %v2564, %v2642
      %v2644 = vpop.f32.mrb[0].mxu0
      %v2645 = vadd.f32 %v2569, %v2644
      %v2646 = vpop.f32.mrb[0].mxu0
      %v2647 = vadd.f32 %v2569, %v2646
      %2648 = vmatprep.mubr.bf16.mxu0 0
      %2649 = vmatmul.mubr.bf16.gmra.mrb[0].mxu0 %v2597
      %v2650 = vpop.f32.mrb[0].mxu0
      %v2651 = vadd.f32 %v2574, %v2650
      %v2652 = vpop.f32.mrb[0].mxu0
      %v2653 = vadd.f32 %v2574, %v2652
      %v2654 = vpop.f32.mrb[0].mxu0
      %v2655 = vadd.f32 %v2579, %v2654
      %v2656 = vpop.f32.mrb[0].mxu0
      %v2657 = vadd.f32 %v2579, %v2656
      %2658 = vdwg.mxu0
      %2659 = vset.pattern.permute.xlu0 0
      %2660 = vperm.xlu0 %2659, %v2557
      %v2661 = vpop.permute.xlu0 %2660
      %2663 = vset.pattern.permute.xlu0 0
      %2664 = vperm.xlu0 %2663, %v2558
      %v2665 = vpop.permute.xlu0 %2664
      %2667 = vset.pattern.permute.xlu0 0
      %2668 = vperm.xlu0 %2667, %v2559
      %v2669 = vpop.permute.xlu0 %2668
      %2671 = vset.pattern.permute.xlu0 0
      %2672 = vperm.xlu0 %2671, %v2560
      %v2673 = vpop.permute.xlu0 %2672
      %v2675 = vmul.f32 %v2641, %v2661
      %v2676 = vmul.f32 %v2643, %v2661
      %v2677 = vmul.f32 %v2645, %v2665
      %v2678 = vmul.f32 %v2647, %v2665
      %v2679 = vmul.f32 %v2651, %v2669
      %v2680 = vmul.f32 %v2653, %v2669
      %v2681 = vmul.f32 %v2655, %v2673
      %v2682 = vmul.f32 %v2657, %v2673
      %v2683 = vadd.f32 %v2675, %v712
      %v2684 = vadd.f32 %v2676, %v714
      %v2685 = vadd.f32 %v2677, %v716
      %v2686 = vadd.f32 %v2678, %v718
      %v2687 = vadd.f32 %v2679, %v722
      %v2688 = vadd.f32 %v2680, %v724
      %v2689 = vadd.f32 %v2681, %v726
      %v2690 = vadd.f32 %v2682, %v728
      %2691 = vst [vmem:[#allocation2 + $0x8] sm:$0xff] %v692
      %2692 = vst [vmem:[#allocation2 + $0x10] sm:$0xff] %v694
      %2693 = vst [vmem:[#allocation2 + $0x28] sm:$0xff] %v696
      %2694 = vst [vmem:[#allocation2 + $0x30] sm:$0xff] %v698
      %v2695 = vld [vmem:[%s5] sm:$0xff]
      %v2696 = vld [vmem:[%s5 + $0x8] sm:$0xff]
      %v2697 = vld [vmem:[#allocation2] sm:$0xff]
      %v2698 = vld [vmem:[#allocation2 + $0x8] sm:$0xff]
      %v2699 = vld [vmem:[#allocation2 + $0x10] sm:$0xff]
      %v2700 = vld [vmem:[#allocation2 + $0x20] sm:$0xff]
      %v2701 = vld [vmem:[#allocation2 + $0x28] sm:$0xff]
      %v2702 = vld [vmem:[#allocation2 + $0x30] sm:$0xff]
      %v2703 = vld [vmem:[%s799] ss:$8 sm:$0x3]
      %v2705 = vlaneseq
      %v2706 = vshrl.u32 %v2705, 7
      %v2707 = vsub.s32 0, %v2706
      %v2708 = vrot.slane %v2703, %v2707
      %v2709 = vlaneseq
      %v2710 = vshrl.u32 %v2709, 7
      %v2711 = vsub.s32 1, %v2710
      %v2712 = vrot.slane %v2703, %v2711
      %2713 = vrot.lane.b32.xlu0 %v2708, 111
      %v2714 = vpop.permute.xlu0 %2713
      %2715 = vrot.lane.b32.xlu0 %v2712, 111
      %v2716 = vpop.permute.xlu0 %2715
      %v2717 = vsel %vm1041, %v2714, %v2716
      %v2721 = vmul.f32 %v2697, %v2714
      %v2722 = vmul.f32 %v2698, %v2717
      %v2723 = vmul.f32 %v2699, %v2716
      %v2724 = vmul.f32 %v2700, %v2714
      %v2725 = vmul.f32 %v2701, %v2717
      %v2726 = vmul.f32 %v2702, %v2716
      %2728 = vset.pattern.permute.xlu0 0
      %2729 = vperm.xlu0 %2728, %v2695
      %v2730 = vpop.permute.xlu0 %2729
      %2733 = vset.pattern.permute.xlu0 0
      %2734 = vperm.xlu0 %2733, %v2696
      %v2735 = vpop.permute.xlu0 %2734
      %v2737 = vmul.f32 %v2721, %v2730
      %v2738 = vmul.f32 %v2722, %v2730
      %v2739 = vmul.f32 %v2723, %v2730
      %v2740 = vmul.f32 %v2724, %v2735
      %v2741 = vmul.f32 %v2725, %v2735
      %v2742 = vmul.f32 %v2726, %v2735
      %2743 = vset.pattern.permute.xlu0 9
      %2744 = vperm.xlu0 %2743, %v2695
      %v2745 = vpop.permute.xlu0 %2744
      %2747 = vset.pattern.permute.xlu0 9
      %2748 = vperm.xlu0 %2747, %v2696
      %v2749 = vpop.permute.xlu0 %2748
      %v2751 = vadd.f32 %v2745, %v2737
      %v2752 = vadd.f32 %v2745, %v2738
      %v2753 = vadd.f32 %v2745, %v2739
      %v2754 = vadd.f32 %v2749, %v2740
      %v2755 = vadd.f32 %v2749, %v2741
      %v2756 = vadd.f32 %v2749, %v2742
      %2757 = vset.pattern.permute.xlu0 1
      %2758 = vperm.xlu0 %2757, %v2695
      %v2759 = vpop.permute.xlu0 %2758
      %2761 = vset.pattern.permute.xlu0 1
      %2762 = vperm.xlu0 %2761, %v2696
      %v2763 = vpop.permute.xlu0 %2762
      %v2765 = vmul.f32 %v2697, %v2759
      %v2766 = vmul.f32 %v2698, %v2759
      %v2767 = vmul.f32 %v2699, %v2759
      %v2768 = vmul.f32 %v2700, %v2763
      %v2769 = vmul.f32 %v2701, %v2763
      %v2770 = vmul.f32 %v2702, %v2763
      %2777 = vrot.lane.b32.xlu0 %v2765, 127
      %v2778 = vpop.permute.xlu0 %2777
      %2779 = vrot.lane.b32.xlu0 %v2766, 127
      %v2780 = vpop.permute.xlu0 %2779
      %2781 = vrot.lane.b32.xlu0 %v2767, 127
      %v2782 = vpop.permute.xlu0 %2781
      %2783 = vrot.lane.b32.xlu0 %v2768, 127
      %v2784 = vpop.permute.xlu0 %2783
      %2785 = vrot.lane.b32.xlu0 %v2769, 127
      %v2786 = vpop.permute.xlu0 %2785
      %2787 = vrot.lane.b32.xlu0 %v2770, 127
      %v2788 = vpop.permute.xlu0 %2787
      %v2789 = vsel %vm1266, %v2778, %v2780
      %v2790 = vsel %vm1266, %v2780, %v2782
      %v2791 = vsel %vm1266, %v2784, %v2786
      %v2792 = vsel %vm1266, %v2786, %v2788
      %v2799 = vadd.f32 %v2751, %v2789
      %v2800 = vadd.f32 %v2752, %v2790
      %v2801 = vadd.f32 %v2753, %v2782
      %v2802 = vadd.f32 %v2754, %v2791
      %v2803 = vadd.f32 %v2755, %v2792
      %v2804 = vadd.f32 %v2756, %v2788
      %v2805 = vld [vmem:[%s875] ss:$8 sm:$0x3]
      %v2807 = vlaneseq
      %v2808 = vshrl.u32 %v2807, 7
      %v2809 = vsub.s32 0, %v2808
      %v2810 = vrot.slane %v2805, %v2809
      %v2811 = vlaneseq
      %v2812 = vshrl.u32 %v2811, 7
      %v2813 = vsub.s32 1, %v2812
      %v2814 = vrot.slane %v2805, %v2813
      %2815 = vrot.lane.b32.xlu0 %v2810, 113
      %v2816 = vpop.permute.xlu0 %2815
      %2817 = vrot.lane.b32.xlu0 %v2814, 113
      %v2818 = vpop.permute.xlu0 %2817
      %v2819 = vsel %vm1116, %v2816, %v2818
      %v2823 = vmul.f32 %v2697, %v2816
      %v2824 = vmul.f32 %v2698, %v2819
      %v2825 = vmul.f32 %v2699, %v2818
      %v2826 = vmul.f32 %v2700, %v2816
      %v2827 = vmul.f32 %v2701, %v2819
      %v2828 = vmul.f32 %v2702, %v2818
      %2829 = vset.pattern.permute.xlu0 2
      %2830 = vperm.xlu0 %2829, %v2695
      %v2831 = vpop.permute.xlu0 %2830
      %2833 = vset.pattern.permute.xlu0 2
      %2834 = vperm.xlu0 %2833, %v2696
      %v2835 = vpop.permute.xlu0 %2834
      %v2837 = vmul.f32 %v2823, %v2831
      %v2838 = vmul.f32 %v2824, %v2831
      %v2839 = vmul.f32 %v2825, %v2831
      %v2840 = vmul.f32 %v2826, %v2835
      %v2841 = vmul.f32 %v2827, %v2835
      %v2842 = vmul.f32 %v2828, %v2835
      %2849 = vrot.lane.b32.xlu0 %v2837, 126
      %v2850 = vpop.permute.xlu0 %2849
      %2851 = vrot.lane.b32.xlu0 %v2838, 126
      %v2852 = vpop.permute.xlu0 %2851
      %2853 = vrot.lane.b32.xlu0 %v2839, 126
      %v2854 = vpop.permute.xlu0 %2853
      %2855 = vrot.lane.b32.xlu0 %v2840, 126
      %v2856 = vpop.permute.xlu0 %2855
      %2857 = vrot.lane.b32.xlu0 %v2841, 126
      %v2858 = vpop.permute.xlu0 %2857
      %2859 = vrot.lane.b32.xlu0 %v2842, 126
      %v2860 = vpop.permute.xlu0 %2859
      %v2861 = vsel %vm1216, %v2850, %v2852
      %v2862 = vsel %vm1216, %v2852, %v2854
      %v2863 = vsel %vm1216, %v2856, %v2858
      %v2864 = vsel %vm1216, %v2858, %v2860
      %v2871 = vadd.f32 %v2799, %v2861
      %v2872 = vadd.f32 %v2800, %v2862
      %v2873 = vadd.f32 %v2801, %v2854
      %v2874 = vadd.f32 %v2802, %v2863
      %v2875 = vadd.f32 %v2803, %v2864
      %v2876 = vadd.f32 %v2804, %v2860
      %2877 = vrot.lane.b32.xlu0 %v2708, 127
      %v2878 = vpop.permute.xlu0 %2877
      %2879 = vrot.lane.b32.xlu0 %v2712, 127
      %v2880 = vpop.permute.xlu0 %2879
      %v2881 = vsel %vm1266, %v2878, %v2880
      %v2885 = vmul.f32 %v2697, %v2878
      %v2886 = vmul.f32 %v2698, %v2881
      %v2887 = vmul.f32 %v2699, %v2880
      %v2888 = vmul.f32 %v2700, %v2878
      %v2889 = vmul.f32 %v2701, %v2881
      %v2890 = vmul.f32 %v2702, %v2880
      %2891 = vset.pattern.permute.xlu0 3
      %2892 = vperm.xlu0 %2891, %v2695
      %v2893 = vpop.permute.xlu0 %2892
      %2895 = vset.pattern.permute.xlu0 3
      %2896 = vperm.xlu0 %2895, %v2696
      %v2897 = vpop.permute.xlu0 %2896
      %v2899 = vmul.f32 %v2885, %v2893
      %v2900 = vmul.f32 %v2886, %v2893
      %v2901 = vmul.f32 %v2887, %v2893
      %v2902 = vmul.f32 %v2888, %v2897
      %v2903 = vmul.f32 %v2889, %v2897
      %v2904 = vmul.f32 %v2890, %v2897
      %2911 = vrot.lane.b32.xlu0 %v2899, 112
      %v2912 = vpop.permute.xlu0 %2911
      %2913 = vrot.lane.b32.xlu0 %v2900, 112
      %v2914 = vpop.permute.xlu0 %2913
      %2915 = vrot.lane.b32.xlu0 %v2901, 112
      %v2916 = vpop.permute.xlu0 %2915
      %2917 = vrot.lane.b32.xlu0 %v2902, 112
      %v2918 = vpop.permute.xlu0 %2917
      %2919 = vrot.lane.b32.xlu0 %v2903, 112
      %v2920 = vpop.permute.xlu0 %2919
      %2921 = vrot.lane.b32.xlu0 %v2904, 112
      %v2922 = vpop.permute.xlu0 %2921
      %v2923 = vsel %vm2249, %v2912, %v2914
      %v2924 = vsel %vm2249, %v2914, %v2916
      %v2925 = vsel %vm2249, %v2918, %v2920
      %v2926 = vsel %vm2249, %v2920, %v2922
      %v2933 = vadd.f32 %v2871, %v2923
      %v2934 = vadd.f32 %v2872, %v2924
      %v2935 = vadd.f32 %v2873, %v2916
      %v2936 = vadd.f32 %v2874, %v2925
      %v2937 = vadd.f32 %v2875, %v2926
      %v2938 = vadd.f32 %v2876, %v2922
      %2939 = vset.pattern.permute.xlu0 4
      %2940 = vperm.xlu0 %2939, %v2695
      %v2941 = vpop.permute.xlu0 %2940
      %2943 = vset.pattern.permute.xlu0 4
      %2944 = vperm.xlu0 %2943, %v2696
      %v2945 = vpop.permute.xlu0 %2944
      %v2947 = vmul.f32 %v2698, %v2941
      %v2948 = vmul.f32 %v2699, %v2941
      %v2949 = vmul.f32 %v2701, %v2945
      %v2950 = vmul.f32 %v2702, %v2945
      %2955 = vrot.lane.b32.xlu0 %v2947, 111
      %v2956 = vpop.permute.xlu0 %2955
      %2957 = vrot.lane.b32.xlu0 %v2948, 111
      %v2958 = vpop.permute.xlu0 %2957
      %2959 = vrot.lane.b32.xlu0 %v2949, 111
      %v2960 = vpop.permute.xlu0 %2959
      %2961 = vrot.lane.b32.xlu0 %v2950, 111
      %v2962 = vpop.permute.xlu0 %2961
      %v2963 = vsel %vm1041, %v2956, %v2958
      %v2964 = vsel %vm1041, %v2960, %v2962
      %v2971 = vadd.f32 %v2933, %v2956
      %v2972 = vadd.f32 %v2934, %v2963
      %v2973 = vadd.f32 %v2935, %v2958
      %v2974 = vadd.f32 %v2936, %v2960
      %v2975 = vadd.f32 %v2937, %v2964
      %v2976 = vadd.f32 %v2938, %v2962
      %v2977 = vld [vmem:[#allocation2 + $0x8] sm:$0xff]
      %v2978 = vld [vmem:[#allocation2 + $0x10] sm:$0xff]
      %v2979 = vld [vmem:[#allocation2 + $0x18] sm:$0xff]
      %v2980 = vld [vmem:[#allocation2 + $0x28] sm:$0xff]
      %v2981 = vld [vmem:[#allocation2 + $0x30] sm:$0xff]
      %v2982 = vld [vmem:[#allocation2 + $0x38] sm:$0xff]
      %2983 = vrot.lane.b32.xlu0 %v2810, 1
      %v2984 = vpop.permute.xlu0 %2983
      %2985 = vrot.lane.b32.xlu0 %v2814, 1
      %v2986 = vpop.permute.xlu0 %2985
      %v2987 = vsel %vm1324, %v2984, %v2986
      %v2991 = vmul.f32 %v2977, %v2984
      %v2992 = vmul.f32 %v2978, %v2987
      %v2993 = vmul.f32 %v2979, %v2986
      %v2994 = vmul.f32 %v2980, %v2984
      %v2995 = vmul.f32 %v2981, %v2987
      %v2996 = vmul.f32 %v2982, %v2986
      %2997 = vset.pattern.permute.xlu0 5
      %2998 = vperm.xlu0 %2997, %v2695
      %v2999 = vpop.permute.xlu0 %2998
      %3001 = vset.pattern.permute.xlu0 5
      %3002 = vperm.xlu0 %3001, %v2696
      %v3003 = vpop.permute.xlu0 %3002
      %v3005 = vmul.f32 %v2991, %v2999
      %v3006 = vmul.f32 %v2992, %v2999
      %v3007 = vmul.f32 %v2993, %v2999
      %v3008 = vmul.f32 %v2994, %v3003
      %v3009 = vmul.f32 %v2995, %v3003
      %v3010 = vmul.f32 %v2996, %v3003
      %3017 = vrot.lane.b32.xlu0 %v3005, 110
      %v3018 = vpop.permute.xlu0 %3017
      %3019 = vrot.lane.b32.xlu0 %v3006, 110
      %v3020 = vpop.permute.xlu0 %3019
      %3021 = vrot.lane.b32.xlu0 %v3007, 110
      %v3022 = vpop.permute.xlu0 %3021
      %3023 = vrot.lane.b32.xlu0 %v3008, 110
      %v3024 = vpop.permute.xlu0 %3023
      %3025 = vrot.lane.b32.xlu0 %v3009, 110
      %v3026 = vpop.permute.xlu0 %3025
      %3027 = vrot.lane.b32.xlu0 %v3010, 110
      %v3028 = vpop.permute.xlu0 %3027
      %v3029 = vsel %vm991, %v3018, %v3020
      %v3030 = vsel %vm991, %v3020, %v3022
      %v3031 = vsel %vm991, %v3024, %v3026
      %v3032 = vsel %vm991, %v3026, %v3028
      %v3039 = vadd.f32 %v2971, %v3018
      %v3040 = vadd.f32 %v2972, %v3029
      %v3041 = vadd.f32 %v2973, %v3030
      %v3042 = vadd.f32 %v2974, %v3024
      %v3043 = vadd.f32 %v2975, %v3031
      %v3044 = vadd.f32 %v2976, %v3032
      %3045 = vrot.lane.b32.xlu0 %v2708, 15
      %v3046 = vpop.permute.xlu0 %3045
      %3047 = vrot.lane.b32.xlu0 %v2712, 15
      %v3048 = vpop.permute.xlu0 %3047
      %v3049 = vsel %vm1474, %v3046, %v3048
      %v3053 = vmul.f32 %v2977, %v3046
      %v3054 = vmul.f32 %v2978, %v3049
      %v3055 = vmul.f32 %v2979, %v3048
      %v3056 = vmul.f32 %v2980, %v3046
      %v3057 = vmul.f32 %v2981, %v3049
      %v3058 = vmul.f32 %v2982, %v3048
      %3059 = vset.pattern.permute.xlu0 6
      %3060 = vperm.xlu0 %3059, %v2695
      %v3061 = vpop.permute.xlu0 %3060
      %3063 = vset.pattern.permute.xlu0 6
      %3064 = vperm.xlu0 %3063, %v2696
      %v3065 = vpop.permute.xlu0 %3064
      %v3067 = vmul.f32 %v3053, %v3061
      %v3068 = vmul.f32 %v3054, %v3061
      %v3069 = vmul.f32 %v3055, %v3061
      %v3070 = vmul.f32 %v3056, %v3065
      %v3071 = vmul.f32 %v3057, %v3065
      %v3072 = vmul.f32 %v3058, %v3065
      %3079 = vrot.lane.b32.xlu0 %v3067, 96
      %v3080 = vpop.permute.xlu0 %3079
      %3081 = vrot.lane.b32.xlu0 %v3068, 96
      %v3082 = vpop.permute.xlu0 %3081
      %3083 = vrot.lane.b32.xlu0 %v3069, 96
      %v3084 = vpop.permute.xlu0 %3083
      %3085 = vrot.lane.b32.xlu0 %v3070, 96
      %v3086 = vpop.permute.xlu0 %3085
      %3087 = vrot.lane.b32.xlu0 %v3071, 96
      %v3088 = vpop.permute.xlu0 %3087
      %3089 = vrot.lane.b32.xlu0 %v3072, 96
      %v3090 = vpop.permute.xlu0 %3089
      %v3091 = vsel %vm2418, %v3080, %v3082
      %v3092 = vsel %vm2418, %v3082, %v3084
      %v3093 = vsel %vm2418, %v3086, %v3088
      %v3094 = vsel %vm2418, %v3088, %v3090
      %v3101 = vadd.f32 %v3039, %v3080
      %v3102 = vadd.f32 %v3040, %v3091
      %v3103 = vadd.f32 %v3041, %v3092
      %v3104 = vadd.f32 %v3042, %v3086
      %v3105 = vadd.f32 %v3043, %v3093
      %v3106 = vadd.f32 %v3044, %v3094
      %3107 = vset.pattern.permute.xlu0 7
      %3108 = vperm.xlu0 %3107, %v2695
      %v3109 = vpop.permute.xlu0 %3108
      %3111 = vset.pattern.permute.xlu0 7
      %3112 = vperm.xlu0 %3111, %v2696
      %v3113 = vpop.permute.xlu0 %3112
      %v3115 = vmul.f32 %v2977, %v3109
      %v3116 = vmul.f32 %v2978, %v3109
      %v3117 = vmul.f32 %v2979, %v3109
      %v3118 = vmul.f32 %v2980, %v3113
      %v3119 = vmul.f32 %v2981, %v3113
      %v3120 = vmul.f32 %v2982, %v3113
      %3127 = vrot.lane.b32.xlu0 %v3115, 95
      %v3128 = vpop.permute.xlu0 %3127
      %3129 = vrot.lane.b32.xlu0 %v3116, 95
      %v3130 = vpop.permute.xlu0 %3129
      %3131 = vrot.lane.b32.xlu0 %v3117, 95
      %v3132 = vpop.permute.xlu0 %3131
      %3133 = vrot.lane.b32.xlu0 %v3118, 95
      %v3134 = vpop.permute.xlu0 %3133
      %3135 = vrot.lane.b32.xlu0 %v3119, 95
      %v3136 = vpop.permute.xlu0 %3135
      %3137 = vrot.lane.b32.xlu0 %v3120, 95
      %v3138 = vpop.permute.xlu0 %3137
      %v3139 = vsel %vm814, %v3128, %v3130
      %v3140 = vsel %vm814, %v3130, %v3132
      %v3141 = vsel %vm814, %v3134, %v3136
      %v3142 = vsel %vm814, %v3136, %v3138
      %v3149 = vadd.f32 %v3101, %v3128
      %v3150 = vadd.f32 %v3102, %v3139
      %v3151 = vadd.f32 %v3103, %v3140
      %v3152 = vadd.f32 %v3104, %v3134
      %v3153 = vadd.f32 %v3105, %v3141
      %v3154 = vadd.f32 %v3106, %v3142
      %3155 = vrot.lane.b32.xlu0 %v2810, 17
      %v3156 = vpop.permute.xlu0 %3155
      %3157 = vrot.lane.b32.xlu0 %v2814, 17
      %v3158 = vpop.permute.xlu0 %3157
      %v3159 = vsel %vm1549, %v3156, %v3158
      %v3163 = vmul.f32 %v2977, %v3156
      %v3164 = vmul.f32 %v2978, %v3159
      %v3165 = vmul.f32 %v2979, %v3158
      %v3166 = vmul.f32 %v2980, %v3156
      %v3167 = vmul.f32 %v2981, %v3159
      %v3168 = vmul.f32 %v2982, %v3158
      %3169 = vset.pattern.permute.xlu0 8
      %3170 = vperm.xlu0 %3169, %v2695
      %v3171 = vpop.permute.xlu0 %3170
      %3173 = vset.pattern.permute.xlu0 8
      %3174 = vperm.xlu0 %3173, %v2696
      %v3175 = vpop.permute.xlu0 %3174
      %v3177 = vmul.f32 %v3163, %v3171
      %v3178 = vmul.f32 %v3164, %v3171
      %v3179 = vmul.f32 %v3165, %v3171
      %v3180 = vmul.f32 %v3166, %v3175
      %v3181 = vmul.f32 %v3167, %v3175
      %v3182 = vmul.f32 %v3168, %v3175
      %3189 = vrot.lane.b32.xlu0 %v3177, 94
      %v3190 = vpop.permute.xlu0 %3189
      %3191 = vrot.lane.b32.xlu0 %v3178, 94
      %v3192 = vpop.permute.xlu0 %3191
      %3193 = vrot.lane.b32.xlu0 %v3179, 94
      %v3194 = vpop.permute.xlu0 %3193
      %3195 = vrot.lane.b32.xlu0 %v3180, 94
      %v3196 = vpop.permute.xlu0 %3195
      %3197 = vrot.lane.b32.xlu0 %v3181, 94
      %v3198 = vpop.permute.xlu0 %3197
      %3199 = vrot.lane.b32.xlu0 %v3182, 94
      %v3200 = vpop.permute.xlu0 %3199
      %v3201 = vsel %vm763, %v3190, %v3192
      %v3202 = vsel %vm763, %v3192, %v3194
      %v3203 = vsel %vm763, %v3196, %v3198
      %v3204 = vsel %vm763, %v3198, %v3200
      %v3211 = vadd.f32 %v3149, %v3190
      %v3212 = vadd.f32 %v3150, %v3201
      %v3213 = vadd.f32 %v3151, %v3202
      %v3214 = vadd.f32 %v3152, %v3196
      %v3215 = vadd.f32 %v3153, %v3203
      %v3216 = vadd.f32 %v3154, %v3204
      %3223 = vrot.lane.b32.xlu0 %v3211, 17
      %v3224 = vpop.permute.xlu0 %3223
      %3225 = vrot.lane.b32.xlu0 %v3212, 17
      %v3226 = vpop.permute.xlu0 %3225
      %3227 = vrot.lane.b32.xlu0 %v3213, 17
      %v3228 = vpop.permute.xlu0 %3227
      %3229 = vrot.lane.b32.xlu0 %v3214, 17
      %v3230 = vpop.permute.xlu0 %3229
      %3231 = vrot.lane.b32.xlu0 %v3215, 17
      %v3232 = vpop.permute.xlu0 %3231
      %3233 = vrot.lane.b32.xlu0 %v3216, 17
      %v3234 = vpop.permute.xlu0 %3233
      %v3235 = vsel %vm1549, %v3224, %v3226
      %v3236 = vsel %vm1549, %v3226, %v3228
      %v3237 = vsel %vm1549, %v3230, %v3232
      %v3238 = vsel %vm1549, %v3232, %v3234
      %3243 = vst [vmem:[#allocation2 + $0x8] sm:$0xff] %v3235
      %3244 = vst [vmem:[#allocation2 + $0x10] sm:$0xff] %v3236
      %3245 = vst [vmem:[#allocation2 + $0x28] sm:$0xff] %v3237
      %3246 = vst [vmem:[#allocation2 + $0x30] sm:$0xff] %v3238
      %v3247 = vld [vmem:[#allocation2] sm:$0xff]
      %v3248 = vld [vmem:[#allocation2 + $0x8] sm:$0xff]
      %v3249 = vld [vmem:[#allocation2 + $0x10] sm:$0xff]
      %v3250 = vld [vmem:[#allocation2 + $0x20] sm:$0xff]
      %v3251 = vld [vmem:[#allocation2 + $0x28] sm:$0xff]
      %v3252 = vld [vmem:[#allocation2 + $0x30] sm:$0xff]
      %v3253 = vld [vmem:[%s799] ss:$8 sm:$0x3]
      %v3255 = vlaneseq
      %v3256 = vshrl.u32 %v3255, 7
      %v3257 = vsub.s32 0, %v3256
      %v3258 = vrot.slane %v3253, %v3257
      %v3259 = vlaneseq
      %v3260 = vshrl.u32 %v3259, 7
      %v3261 = vsub.s32 1, %v3260
      %v3262 = vrot.slane %v3253, %v3261
      %3263 = vrot.lane.b32.xlu0 %v3258, 111
      %v3264 = vpop.permute.xlu0 %3263
      %3265 = vrot.lane.b32.xlu0 %v3262, 111
      %v3266 = vpop.permute.xlu0 %3265
      %v3267 = vsel %vm1041, %v3264, %v3266
      %v3271 = vmul.f32 %v3247, %v3264
      %v3272 = vmul.f32 %v3248, %v3267
      %v3273 = vmul.f32 %v3249, %v3266
      %v3274 = vmul.f32 %v3250, %v3264
      %v3275 = vmul.f32 %v3251, %v3267
      %v3276 = vmul.f32 %v3252, %v3266
      %v3277 = vpack.c.bf16 %v3274, %v3271
      %v3278 = vpack.c.bf16 %v3275, %v3272
      %v3279 = vpack.c.bf16 %v3276, %v3273
      %3283 = vrot.lane.b32.xlu0 %v3277, 17
      %v3284 = vpop.permute.xlu0 %3283
      %3285 = vrot.lane.b32.xlu0 %v3278, 17
      %v3286 = vpop.permute.xlu0 %3285
      %3287 = vrot.lane.b32.xlu0 %v3279, 17
      %v3288 = vpop.permute.xlu0 %3287
      %v3289 = vsel %vm1064, %v3284, %v3286
      %v3290 = vsel %vm1064, %v3286, %v3288
      %3293 = vst [vmem:[#allocation4] sm:$0xff] %v3289
      %3294 = vst [vmem:[#allocation4 + $0x8] sm:$0xff] %v3290
      %v3295 = vld [vmem:[#allocation2] sm:$0xff]
      %v3296 = vld [vmem:[#allocation2 + $0x8] sm:$0xff]
      %v3297 = vld [vmem:[#allocation2 + $0x10] sm:$0xff]
      %v3298 = vld [vmem:[#allocation2 + $0x20] sm:$0xff]
      %v3299 = vld [vmem:[#allocation2 + $0x28] sm:$0xff]
      %v3300 = vld [vmem:[#allocation2 + $0x30] sm:$0xff]
      %v3301 = vpack.c.bf16 %v3298, %v3295
      %v3302 = vpack.c.bf16 %v3299, %v3296
      %v3303 = vpack.c.bf16 %v3300, %v3297
      %3307 = vrot.lane.b32.xlu0 %v3301, 16
      %v3308 = vpop.permute.xlu0 %3307
      %3309 = vrot.lane.b32.xlu0 %v3302, 16
      %v3310 = vpop.permute.xlu0 %3309
      %3311 = vrot.lane.b32.xlu0 %v3303, 16
      %v3312 = vpop.permute.xlu0 %3311
      %v3313 = vsel %vm1089, %v3308, %v3310
      %v3314 = vsel %vm1089, %v3310, %v3312
      %3317 = vst [vmem:[#allocation4 + $0x10] sm:$0xff] %v3313
      %3318 = vst [vmem:[#allocation4 + $0x18] sm:$0xff] %v3314
      %v3319 = vld [vmem:[#allocation2] sm:$0xff]
      %v3320 = vld [vmem:[#allocation2 + $0x8] sm:$0xff]
      %v3321 = vld [vmem:[#allocation2 + $0x10] sm:$0xff]
      %v3322 = vld [vmem:[#allocation2 + $0x20] sm:$0xff]
      %v3323 = vld [vmem:[#allocation2 + $0x28] sm:$0xff]
      %v3324 = vld [vmem:[#allocation2 + $0x30] sm:$0xff]
      %v3325 = vld [vmem:[%s875] ss:$8 sm:$0x3]
      %v3327 = vlaneseq
      %v3328 = vshrl.u32 %v3327, 7
      %v3329 = vsub.s32 0, %v3328
      %v3330 = vrot.slane %v3325, %v3329
      %v3331 = vlaneseq
      %v3332 = vshrl.u32 %v3331, 7
      %v3333 = vsub.s32 1, %v3332
      %v3334 = vrot.slane %v3325, %v3333
      %3335 = vrot.lane.b32.xlu0 %v3330, 113
      %v3336 = vpop.permute.xlu0 %3335
      %3337 = vrot.lane.b32.xlu0 %v3334, 113
      %v3338 = vpop.permute.xlu0 %3337
      %v3339 = vsel %vm1116, %v3336, %v3338
      %v3343 = vmul.f32 %v3319, %v3336
      %v3344 = vmul.f32 %v3320, %v3339
      %v3345 = vmul.f32 %v3321, %v3338
      %v3346 = vmul.f32 %v3322, %v3336
      %v3347 = vmul.f32 %v3323, %v3339
      %v3348 = vmul.f32 %v3324, %v3338
      %v3349 = vpack.c.bf16 %v3346, %v3343
      %v3350 = vpack.c.bf16 %v3347, %v3344
      %v3351 = vpack.c.bf16 %v3348, %v3345
      %3355 = vrot.lane.b32.xlu0 %v3349, 15
      %v3356 = vpop.permute.xlu0 %3355
      %3357 = vrot.lane.b32.xlu0 %v3350, 15
      %v3358 = vpop.permute.xlu0 %3357
      %3359 = vrot.lane.b32.xlu0 %v3351, 15
      %v3360 = vpop.permute.xlu0 %3359
      %v3361 = vsel %vm1139, %v3356, %v3358
      %v3362 = vsel %vm1139, %v3358, %v3360
      %3365 = vst [vmem:[#allocation4 + $0x20] sm:$0xff] %v3361
      %3366 = vst [vmem:[#allocation4 + $0x28] sm:$0xff] %v3362
      %v3367 = vld [vmem:[#allocation2] sm:$0xff]
      %v3368 = vld [vmem:[#allocation2 + $0x8] sm:$0xff]
      %v3369 = vld [vmem:[#allocation2 + $0x10] sm:$0xff]
      %v3370 = vld [vmem:[#allocation2 + $0x20] sm:$0xff]
      %v3371 = vld [vmem:[#allocation2 + $0x28] sm:$0xff]
      %v3372 = vld [vmem:[#allocation2 + $0x30] sm:$0xff]
      %v3373 = vld [vmem:[%s799] ss:$8 sm:$0x3]
      %v3375 = vlaneseq
      %v3376 = vshrl.u32 %v3375, 7
      %v3377 = vsub.s32 0, %v3376
      %v3378 = vrot.slane %v3373, %v3377
      %v3379 = vlaneseq
      %v3380 = vshrl.u32 %v3379, 7
      %v3381 = vsub.s32 1, %v3380
      %v3382 = vrot.slane %v3373, %v3381
      %3383 = vrot.lane.b32.xlu0 %v3378, 127
      %v3384 = vpop.permute.xlu0 %3383
      %3385 = vrot.lane.b32.xlu0 %v3382, 127
      %v3386 = vpop.permute.xlu0 %3385
      %v3387 = vsel %vm1266, %v3384, %v3386
      %v3391 = vmul.f32 %v3367, %v3384
      %v3392 = vmul.f32 %v3368, %v3387
      %v3393 = vmul.f32 %v3369, %v3386
      %v3394 = vmul.f32 %v3370, %v3384
      %v3395 = vmul.f32 %v3371, %v3387
      %v3396 = vmul.f32 %v3372, %v3386
      %v3397 = vpack.c.bf16 %v3394, %v3391
      %v3398 = vpack.c.bf16 %v3395, %v3392
      %v3399 = vpack.c.bf16 %v3396, %v3393
      %3403 = vrot.lane.b32.xlu0 %v3397, 1
      %v3404 = vpop.permute.xlu0 %3403
      %3405 = vrot.lane.b32.xlu0 %v3398, 1
      %v3406 = vpop.permute.xlu0 %3405
      %3407 = vrot.lane.b32.xlu0 %v3399, 1
      %v3408 = vpop.permute.xlu0 %3407
      %v3409 = vsel %vm1289, %v3404, %v3406
      %v3410 = vsel %vm1289, %v3406, %v3408
      %3413 = vst [vmem:[#allocation4 + $0x30] sm:$0xff] %v3409
      %3414 = vst [vmem:[#allocation4 + $0x38] sm:$0xff] %v3410
      %v3415 = vld [vmem:[#allocation2 + $0x8] sm:$0xff]
      %v3416 = vld [vmem:[#allocation2 + $0x10] sm:$0xff]
      %v3417 = vld [vmem:[#allocation2 + $0x28] sm:$0xff]
      %v3418 = vld [vmem:[#allocation2 + $0x30] sm:$0xff]
      %v3419 = vpack.c.bf16 %v3417, %v3415
      %v3420 = vpack.c.bf16 %v3418, %v3416
      %3421 = vst [vmem:[#allocation4 + $0x40] sm:$0xff] %v3419
      %3422 = vst [vmem:[#allocation4 + $0x48] sm:$0xff] %v3420
      %v3423 = vld [vmem:[#allocation2 + $0x8] sm:$0xff]
      %v3424 = vld [vmem:[#allocation2 + $0x10] sm:$0xff]
      %v3425 = vld [vmem:[#allocation2 + $0x18] sm:$0xff]
      %v3426 = vld [vmem:[#allocation2 + $0x28] sm:$0xff]
      %v3427 = vld [vmem:[#allocation2 + $0x30] sm:$0xff]
      %v3428 = vld [vmem:[#allocation2 + $0x38] sm:$0xff]
      %v3429 = vld [vmem:[%s875] ss:$8 sm:$0x3]
      %v3431 = vlaneseq
      %v3432 = vshrl.u32 %v3431, 7
      %v3433 = vsub.s32 0, %v3432
      %v3434 = vrot.slane %v3429, %v3433
      %v3435 = vlaneseq
      %v3436 = vshrl.u32 %v3435, 7
      %v3437 = vsub.s32 1, %v3436
      %v3438 = vrot.slane %v3429, %v3437
      %3439 = vrot.lane.b32.xlu0 %v3434, 1
      %v3440 = vpop.permute.xlu0 %3439
      %3441 = vrot.lane.b32.xlu0 %v3438, 1
      %v3442 = vpop.permute.xlu0 %3441
      %v3443 = vsel %vm1324, %v3440, %v3442
      %v3447 = vmul.f32 %v3423, %v3440
      %v3448 = vmul.f32 %v3424, %v3443
      %v3449 = vmul.f32 %v3425, %v3442
      %v3450 = vmul.f32 %v3426, %v3440
      %v3451 = vmul.f32 %v3427, %v3443
      %v3452 = vmul.f32 %v3428, %v3442
      %v3453 = vpack.c.bf16 %v3450, %v3447
      %v3454 = vpack.c.bf16 %v3451, %v3448
      %v3455 = vpack.c.bf16 %v3452, %v3449
      %3459 = vrot.lane.b32.xlu0 %v3453, 127
      %v3460 = vpop.permute.xlu0 %3459
      %3461 = vrot.lane.b32.xlu0 %v3454, 127
      %v3462 = vpop.permute.xlu0 %3461
      %3463 = vrot.lane.b32.xlu0 %v3455, 127
      %v3464 = vpop.permute.xlu0 %3463
      %v3465 = vsel %vm1347, %v3460, %v3462
      %v3466 = vsel %vm1347, %v3462, %v3464
      %3469 = vst [vmem:[#allocation4 + $0x50] sm:$0xff] %v3465
      %3470 = vst [vmem:[#allocation4 + $0x58] sm:$0xff] %v3466
      %v3471 = vld [vmem:[#allocation2 + $0x8] sm:$0xff]
      %v3472 = vld [vmem:[#allocation2 + $0x10] sm:$0xff]
      %v3473 = vld [vmem:[#allocation2 + $0x18] sm:$0xff]
      %v3474 = vld [vmem:[#allocation2 + $0x28] sm:$0xff]
      %v3475 = vld [vmem:[#allocation2 + $0x30] sm:$0xff]
      %v3476 = vld [vmem:[#allocation2 + $0x38] sm:$0xff]
      %v3477 = vld [vmem:[%s799] ss:$8 sm:$0x3]
      %v3479 = vlaneseq
      %v3480 = vshrl.u32 %v3479, 7
      %v3481 = vsub.s32 0, %v3480
      %v3482 = vrot.slane %v3477, %v3481
      %v3483 = vlaneseq
      %v3484 = vshrl.u32 %v3483, 7
      %v3485 = vsub.s32 1, %v3484
      %v3486 = vrot.slane %v3477, %v3485
      %3487 = vrot.lane.b32.xlu0 %v3482, 15
      %v3488 = vpop.permute.xlu0 %3487
      %3489 = vrot.lane.b32.xlu0 %v3486, 15
      %v3490 = vpop.permute.xlu0 %3489
      %v3491 = vsel %vm1474, %v3488, %v3490
      %v3495 = vmul.f32 %v3471, %v3488
      %v3496 = vmul.f32 %v3472, %v3491
      %v3497 = vmul.f32 %v3473, %v3490
      %v3498 = vmul.f32 %v3474, %v3488
      %v3499 = vmul.f32 %v3475, %v3491
      %v3500 = vmul.f32 %v3476, %v3490
      %v3501 = vpack.c.bf16 %v3498, %v3495
      %v3502 = vpack.c.bf16 %v3499, %v3496
      %v3503 = vpack.c.bf16 %v3500, %v3497
      %3507 = vrot.lane.b32.xlu0 %v3501, 113
      %v3508 = vpop.permute.xlu0 %3507
      %3509 = vrot.lane.b32.xlu0 %v3502, 113
      %v3510 = vpop.permute.xlu0 %3509
      %3511 = vrot.lane.b32.xlu0 %v3503, 113
      %v3512 = vpop.permute.xlu0 %3511
      %v3513 = vsel %vm1497, %v3508, %v3510
      %v3514 = vsel %vm1497, %v3510, %v3512
      %3517 = vst [vmem:[#allocation4 + $0x60] sm:$0xff] %v3513
      %3518 = vst [vmem:[#allocation4 + $0x68] sm:$0xff] %v3514
      %v3519 = vld [vmem:[#allocation2 + $0x8] sm:$0xff]
      %v3520 = vld [vmem:[#allocation2 + $0x10] sm:$0xff]
      %v3521 = vld [vmem:[#allocation2 + $0x18] sm:$0xff]
      %v3522 = vld [vmem:[#allocation2 + $0x28] sm:$0xff]
      %v3523 = vld [vmem:[#allocation2 + $0x30] sm:$0xff]
      %v3524 = vld [vmem:[#allocation2 + $0x38] sm:$0xff]
      %v3525 = vpack.c.bf16 %v3522, %v3519
      %v3526 = vpack.c.bf16 %v3523, %v3520
      %v3527 = vpack.c.bf16 %v3524, %v3521
      %3531 = vrot.lane.b32.xlu0 %v3525, 112
      %v3532 = vpop.permute.xlu0 %3531
      %3533 = vrot.lane.b32.xlu0 %v3526, 112
      %v3534 = vpop.permute.xlu0 %3533
      %3535 = vrot.lane.b32.xlu0 %v3527, 112
      %v3536 = vpop.permute.xlu0 %3535
      %v3537 = vsel %vm1522, %v3532, %v3534
      %v3538 = vsel %vm1522, %v3534, %v3536
      %3541 = vst [vmem:[#allocation4 + $0x70] sm:$0xff] %v3537
      %3542 = vst [vmem:[#allocation4 + $0x78] sm:$0xff] %v3538
      %v3543 = vld [vmem:[#allocation2 + $0x8] sm:$0xff]
      %v3544 = vld [vmem:[#allocation2 + $0x10] sm:$0xff]
      %v3545 = vld [vmem:[#allocation2 + $0x18] sm:$0xff]
      %v3546 = vld [vmem:[#allocation2 + $0x28] sm:$0xff]
      %v3547 = vld [vmem:[#allocation2 + $0x30] sm:$0xff]
      %v3548 = vld [vmem:[#allocation2 + $0x38] sm:$0xff]
      %v3549 = vld [vmem:[%s875] ss:$8 sm:$0x3]
      %v3551 = vlaneseq
      %v3552 = vshrl.u32 %v3551, 7
      %v3553 = vsub.s32 0, %v3552
      %v3554 = vrot.slane %v3549, %v3553
      %v3555 = vlaneseq
      %v3556 = vshrl.u32 %v3555, 7
      %v3557 = vsub.s32 1, %v3556
      %v3558 = vrot.slane %v3549, %v3557
      %3559 = vrot.lane.b32.xlu0 %v3554, 17
      %v3560 = vpop.permute.xlu0 %3559
      %3561 = vrot.lane.b32.xlu0 %v3558, 17
      %v3562 = vpop.permute.xlu0 %3561
      %v3563 = vsel %vm1549, %v3560, %v3562
      %v3567 = vmul.f32 %v3543, %v3560
      %v3568 = vmul.f32 %v3544, %v3563
      %v3569 = vmul.f32 %v3545, %v3562
      %v3570 = vmul.f32 %v3546, %v3560
      %v3571 = vmul.f32 %v3547, %v3563
      %v3572 = vmul.f32 %v3548, %v3562
      %v3573 = vpack.c.bf16 %v3570, %v3567
      %v3574 = vpack.c.bf16 %v3571, %v3568
      %v3575 = vpack.c.bf16 %v3572, %v3569
      %3579 = vrot.lane.b32.xlu0 %v3573, 111
      %v3580 = vpop.permute.xlu0 %3579
      %3581 = vrot.lane.b32.xlu0 %v3574, 111
      %v3582 = vpop.permute.xlu0 %3581
      %3583 = vrot.lane.b32.xlu0 %v3575, 111
      %v3584 = vpop.permute.xlu0 %3583
      %v3585 = vsel %vm1572, %v3580, %v3582
      %v3586 = vsel %vm1572, %v3582, %v3584
      %3589 = vst [vmem:[#allocation4 + $0x80] sm:$0xff] %v3585
      %3590 = vst [vmem:[#allocation4 + $0x88] sm:$0xff] %v3586
      %v3591 = vld [vmem:[%s10] sm:$0xff]
      %v3592 = vld [vmem:[%s10 + $0x8] sm:$0xff]
      %v3593 = vld [vmem:[%s10 + $0x10] sm:$0xff]
      %v3594 = vld [vmem:[%s10 + $0x18] sm:$0xff]
      %v3595 = vld [vmem:[%s10 + $0x20] sm:$0xff]
      %v3596 = vld [vmem:[%s10 + $0x28] sm:$0xff]
      %v3597 = vld [vmem:[%s10 + $0x30] sm:$0xff]
      %v3598 = vld [vmem:[%s10 + $0x38] sm:$0xff]
      %v3599 = vld [vmem:[%s10 + $0x40] sm:$0xff]
      %v3600 = vld [vmem:[%s10 + $0x48] sm:$0xff]
      %v3601 = vld [vmem:[%s10 + $0x50] sm:$0xff]
      %v3602 = vld [vmem:[%s10 + $0x58] sm:$0xff]
      %v3603 = vld [vmem:[%s10 + $0x60] sm:$0xff]
      %v3604 = vld [vmem:[%s10 + $0x68] sm:$0xff]
      %v3605 = vld [vmem:[%s10 + $0x70] sm:$0xff]
      %v3606 = vld [vmem:[%s10 + $0x78] sm:$0xff]
      %v3607 = vld [vmem:[%s10 + $0x80] sm:$0xff]
      %v3608 = vld [vmem:[%s10 + $0x88] sm:$0xff]
      %v3609 = vld [vmem:[%s10 + $0x90] sm:$0xff]
      %v3610 = vld [vmem:[%s10 + $0x98] sm:$0xff]
      %v3611 = vld [vmem:[%s10 + $0xa0] sm:$0xff]
      %v3612 = vld [vmem:[%s10 + $0xa8] sm:$0xff]
      %v3613 = vld [vmem:[%s10 + $0xb0] sm:$0xff]
      %v3614 = vld [vmem:[%s10 + $0xb8] sm:$0xff]
      %v3615 = vld [vmem:[%s10 + $0xc0] sm:$0xff]
      %v3616 = vld [vmem:[%s10 + $0xc8] sm:$0xff]
      %v3617 = vld [vmem:[%s10 + $0xd0] sm:$0xff]
      %v3618 = vld [vmem:[%s10 + $0xd8] sm:$0xff]
      %v3619 = vld [vmem:[%s10 + $0xe0] sm:$0xff]
      %v3620 = vld [vmem:[%s10 + $0xe8] sm:$0xff]
      %v3621 = vld [vmem:[%s10 + $0xf0] sm:$0xff]
      %v3622 = vld [vmem:[%s10 + $0xf8] sm:$0xff]
      %v3623 = vld [vmem:[%s10 + $0x100] sm:$0xff]
      %v3624 = vld [vmem:[%s10 + $0x108] sm:$0xff]
      %v3625 = vld [vmem:[%s10 + $0x110] sm:$0xff]
      %v3626 = vld [vmem:[%s10 + $0x118] sm:$0xff]
      %v3627 = vld [vmem:[%s10 + $0x120] sm:$0xff]
      %v3628 = vld [vmem:[%s10 + $0x128] sm:$0xff]
      %v3629 = vld [vmem:[%s10 + $0x130] sm:$0xff]
      %v3630 = vld [vmem:[%s10 + $0x138] sm:$0xff]
      %v3631 = vld [vmem:[%s10 + $0x140] sm:$0xff]
      %v3632 = vld [vmem:[%s10 + $0x148] sm:$0xff]
      %v3633 = vld [vmem:[%s10 + $0x150] sm:$0xff]
      %v3634 = vld [vmem:[%s10 + $0x158] sm:$0xff]
      %v3635 = vld [vmem:[%s10 + $0x160] sm:$0xff]
      %v3636 = vld [vmem:[%s10 + $0x168] sm:$0xff]
      %v3637 = vld [vmem:[%s10 + $0x170] sm:$0xff]
      %v3638 = vld [vmem:[%s10 + $0x178] sm:$0xff]
      %v3639 = vld [vmem:[%s10 + $0x180] sm:$0xff]
      %v3640 = vld [vmem:[%s10 + $0x188] sm:$0xff]
      %v3641 = vld [vmem:[%s10 + $0x190] sm:$0xff]
      %v3642 = vld [vmem:[%s10 + $0x198] sm:$0xff]
      %v3643 = vld [vmem:[%s10 + $0x1a0] sm:$0xff]
      %v3644 = vld [vmem:[%s10 + $0x1a8] sm:$0xff]
      %v3645 = vld [vmem:[%s10 + $0x1b0] sm:$0xff]
      %v3646 = vld [vmem:[%s10 + $0x1b8] sm:$0xff]
      %v3647 = vld [vmem:[%s10 + $0x1c0] sm:$0xff]
      %v3648 = vld [vmem:[%s10 + $0x1c8] sm:$0xff]
      %v3649 = vld [vmem:[%s10 + $0x1d0] sm:$0xff]
      %v3650 = vld [vmem:[%s10 + $0x1d8] sm:$0xff]
      %v3651 = vld [vmem:[%s10 + $0x1e0] sm:$0xff]
      %v3652 = vld [vmem:[%s10 + $0x1e8] sm:$0xff]
      %v3653 = vld [vmem:[%s10 + $0x1f0] sm:$0xff]
      %v3654 = vld [vmem:[%s10 + $0x1f8] sm:$0xff]
      %v3655 = vld [vmem:[%s10 + $0x200] sm:$0xff]
      %v3656 = vld [vmem:[%s10 + $0x208] sm:$0xff]
      %v3657 = vld [vmem:[%s10 + $0x210] sm:$0xff]
      %v3658 = vld [vmem:[%s10 + $0x218] sm:$0xff]
      %v3659 = vld [vmem:[%s10 + $0x220] sm:$0xff]
      %v3660 = vld [vmem:[%s10 + $0x228] sm:$0xff]
      %v3661 = vld [vmem:[%s10 + $0x230] sm:$0xff]
      %v3662 = vld [vmem:[%s10 + $0x238] sm:$0xff]
      %v3663 = vld [vmem:[%s10 + $0x240] sm:$0xff]
      %v3664 = vld [vmem:[%s10 + $0x248] sm:$0xff]
      %v3665 = vpack.c.bf16 %v3592, %v3591
      %v3666 = vpack.c.bf16 %v3594, %v3593
      %v3667 = vpack.c.bf16 %v3596, %v3595
      %v3668 = vpack.c.bf16 %v3598, %v3597
      %v3669 = vpack.c.bf16 %v3600, %v3599
      %v3670 = vpack.c.bf16 %v3602, %v3601
      %v3671 = vpack.c.bf16 %v3604, %v3603
      %v3672 = vpack.c.bf16 %v3606, %v3605
      %v3673 = vpack.c.bf16 %v3608, %v3607
      %v3674 = vpack.c.bf16 %v3610, %v3609
      %v3675 = vpack.c.bf16 %v3612, %v3611
      %v3676 = vpack.c.bf16 %v3614, %v3613
      %v3677 = vpack.c.bf16 %v3616, %v3615
      %v3678 = vpack.c.bf16 %v3618, %v3617
      %v3679 = vpack.c.bf16 %v3620, %v3619
      %v3680 = vpack.c.bf16 %v3622, %v3621
      %v3681 = vpack.c.bf16 %v3624, %v3623
      %v3682 = vpack.c.bf16 %v3626, %v3625
      %v3683 = vpack.c.bf16 %v3628, %v3627
      %v3684 = vpack.c.bf16 %v3630, %v3629
      %v3685 = vpack.c.bf16 %v3632, %v3631
      %v3686 = vpack.c.bf16 %v3634, %v3633
      %v3687 = vpack.c.bf16 %v3636, %v3635
      %v3688 = vpack.c.bf16 %v3638, %v3637
      %v3689 = vpack.c.bf16 %v3640, %v3639
      %v3690 = vpack.c.bf16 %v3642, %v3641
      %v3691 = vpack.c.bf16 %v3644, %v3643
      %v3692 = vpack.c.bf16 %v3646, %v3645
      %v3693 = vpack.c.bf16 %v3648, %v3647
      %v3694 = vpack.c.bf16 %v3650, %v3649
      %v3695 = vpack.c.bf16 %v3652, %v3651
      %v3696 = vpack.c.bf16 %v3654, %v3653
      %v3697 = vpack.c.bf16 %v3656, %v3655
      %v3698 = vpack.c.bf16 %v3658, %v3657
      %v3699 = vpack.c.bf16 %v3660, %v3659
      %v3700 = vpack.c.bf16 %v3662, %v3661
      %v3701 = vpack.c.bf16 %v3664, %v3663
      %v3702 = vpack.c.bf16 %v2685, %v2683
      %v3703 = vpack.c.bf16 %v2686, %v2684
      %v3704 = vpack.c.bf16 %v2689, %v2687
      %v3705 = vpack.c.bf16 %v2690, %v2688
      %vm3706 = vcmask 261120
      %v3708 = vsel %vm3706, %v3665, 0
      %v3711 = vsel %vm3706, %v3666, 0
      %v3714 = vsel %vm3706, %v3667, 0
      %v3717 = vsel %vm3706, %v3668, 0
      %v3720 = vsel %vm3706, %v3669, 0
      %v3723 = vsel %vm3706, %v3670, 0
      %v3726 = vsel %vm3706, %v3671, 0
      %v3729 = vsel %vm3706, %v3672, 0
      %v3732 = vsel %vm3706, %v3673, 0
      %v3735 = vsel %vm3706, %v3674, 0
      %v3738 = vsel %vm3706, %v3675, 0
      %v3741 = vsel %vm3706, %v3676, 0
      %v3744 = vsel %vm3706, %v3677, 0
      %v3747 = vsel %vm3706, %v3678, 0
      %v3750 = vsel %vm3706, %v3679, 0
      %v3753 = vsel %vm3706, %v3680, 0
      %v3756 = vsel %vm3706, %v3681, 0
      %v3759 = vsel %vm3706, %v3682, 0
      %v3762 = vsel %vm3706, %v3683, 0
      %v3765 = vsel %vm3706, %v3684, 0
      %v3768 = vsel %vm3706, %v3685, 0
      %v3771 = vsel %vm3706, %v3686, 0
      %v3774 = vsel %vm3706, %v3687, 0
      %v3777 = vsel %vm3706, %v3688, 0
      %v3780 = vsel %vm3706, %v3689, 0
      %v3783 = vsel %vm3706, %v3690, 0
      %v3786 = vsel %vm3706, %v3691, 0
      %v3789 = vsel %vm3706, %v3692, 0
      %v3792 = vsel %vm3706, %v3693, 0
      %v3795 = vsel %vm3706, %v3694, 0
      %v3798 = vsel %vm3706, %v3695, 0
      %v3801 = vsel %vm3706, %v3696, 0
      %v3804 = vsel %vm3706, %v3697, 0
      %v3807 = vsel %vm3706, %v3698, 0
      %v3810 = vsel %vm3706, %v3699, 0
      %v3813 = vsel %vm3706, %v3700, 0
      %v3816 = vsel %vm3706, %v3701, 0
      %3818 = vmatprep.subr.bf16.mxu0 %v3703
      %3819 = vmatpush1.bf16.msra.mxu0 %v3702
      %3820 = vmatprep.subr.bf16.mxu0 %v3705
      %3821 = vmatpush1.bf16.msra.mxu0 %v3704
      %3822 = vmatprep.subr.bf16.mxu0 0
      %3823 = vmatpush1.bf16.msra.mxu0 0
      %3824 = vmatprep.subr.bf16.mxu0 0
      %3825 = vmatpush1.bf16.msra.mxu0 0
      %3826 = vmatprep.subr.bf16.mxu0 0
      %3827 = vmatpush1.bf16.msra.mxu0 0
      %3828 = vmatprep.subr.bf16.mxu0 0
      %3829 = vmatpush1.bf16.msra.mxu0 0
      %3830 = vmatprep.subr.bf16.mxu0 0
      %3831 = vmatpush1.bf16.msra.mxu0 0
      %3832 = vmatprep.subr.bf16.mxu0 0
      %3833 = vmatpush1.bf16.msra.mxu0 0
      %3834 = vmatprep.subr.bf16.mxu0 0
      %3835 = vmatpush1.bf16.msra.mxu0 0
      %3836 = vmatprep.subr.bf16.mxu0 0
      %3837 = vmatpush1.bf16.msra.mxu0 0
      %3838 = vmatprep.subr.bf16.mxu0 0
      %3839 = vmatpush1.bf16.msra.mxu0 0
      %3840 = vmatprep.subr.bf16.mxu0 0
      %3841 = vmatpush1.bf16.msra.mxu0 0
      %3842 = vmatprep.subr.bf16.mxu0 0
      %3843 = vmatpush1.bf16.msra.mxu0 0
      %3844 = vmatprep.subr.bf16.mxu0 0
      %3845 = vmatpush1.bf16.msra.mxu0 0
      %3846 = vmatprep.subr.bf16.mxu0 0
      %3847 = vmatpush1.bf16.msra.mxu0 0
      %3848 = vmatprep.subr.bf16.mxu0 0
      %3849 = vmatpush1.bf16.msra.mxu0 0
      %3850 = vmatprep.mubr.bf16.mxu0 0
      %3851 = vmatmul.mubr.bf16.gmra.mrb[0].mxu0 %v3708
      %v3852 = vpop.f32.mrb[0].mxu0
      %v3853 = vadd.f32 0.0, %v3852
      %v3854 = vpop.f32.mrb[0].mxu0
      %v3855 = vadd.f32 0.0, %v3854
      %v3856 = vpop.f32.mrb[0].mxu0
      %v3857 = vadd.f32 0.0, %v3856
      %v3858 = vpop.f32.mrb[0].mxu0
      %v3859 = vadd.f32 0.0, %v3858
      %3860 = vmatprep.mubr.bf16.mxu0 0
      %3861 = vmatmul.mubr.bf16.gmra.mrb[0].mxu0 %v3711
      %v3862 = vpop.f32.mrb[0].mxu0
      %v3863 = vadd.f32 0.0, %v3862
      %v3864 = vpop.f32.mrb[0].mxu0
      %v3865 = vadd.f32 0.0, %v3864
      %v3866 = vpop.f32.mrb[0].mxu0
      %v3867 = vadd.f32 0.0, %v3866
      %v3868 = vpop.f32.mrb[0].mxu0
      %v3869 = vadd.f32 0.0, %v3868
      %3870 = vmatprep.mubr.bf16.mxu0 0
      %3871 = vmatmul.mubr.bf16.gmra.mrb[0].mxu0 %v3714
      %v3872 = vpop.f32.mrb[0].mxu0
      %v3873 = vadd.f32 0.0, %v3872
      %v3874 = vpop.f32.mrb[0].mxu0
      %v3875 = vadd.f32 0.0, %v3874
      %v3876 = vpop.f32.mrb[0].mxu0
      %v3877 = vadd.f32 0.0, %v3876
      %v3878 = vpop.f32.mrb[0].mxu0
      %v3879 = vadd.f32 0.0, %v3878
      %3880 = vmatprep.mubr.bf16.mxu0 0
      %3881 = vmatmul.mubr.bf16.gmra.mrb[0].mxu0 %v3717
      %v3882 = vpop.f32.mrb[0].mxu0
      %v3883 = vadd.f32 0.0, %v3882
      %v3884 = vpop.f32.mrb[0].mxu0
      %v3885 = vadd.f32 0.0, %v3884
      %v3886 = vpop.f32.mrb[0].mxu0
      %v3887 = vadd.f32 0.0, %v3886
      %v3888 = vpop.f32.mrb[0].mxu0
      %v3889 = vadd.f32 0.0, %v3888
      %3890 = vmatprep.mubr.bf16.mxu0 0
      %3891 = vmatmul.mubr.bf16.gmra.mrb[0].mxu0 %v3720
      %v3892 = vpop.f32.mrb[0].mxu0
      %v3893 = vadd.f32 0.0, %v3892
      %v3894 = vpop.f32.mrb[0].mxu0
      %v3895 = vadd.f32 0.0, %v3894
      %v3896 = vpop.f32.mrb[0].mxu0
      %v3897 = vadd.f32 0.0, %v3896
      %v3898 = vpop.f32.mrb[0].mxu0
      %v3899 = vadd.f32 0.0, %v3898
      %3900 = vmatprep.mubr.bf16.mxu0 0
      %3901 = vmatmul.mubr.bf16.gmra.mrb[0].mxu0 %v3723
      %v3902 = vpop.f32.mrb[0].mxu0
      %v3903 = vadd.f32 0.0, %v3902
      %v3904 = vpop.f32.mrb[0].mxu0
      %v3905 = vadd.f32 0.0, %v3904
      %v3906 = vpop.f32.mrb[0].mxu0
      %v3907 = vadd.f32 0.0, %v3906
      %v3908 = vpop.f32.mrb[0].mxu0
      %v3909 = vadd.f32 0.0, %v3908
      %3910 = vmatprep.mubr.bf16.mxu0 0
      %3911 = vmatmul.mubr.bf16.gmra.mrb[0].mxu0 %v3726
      %v3912 = vpop.f32.mrb[0].mxu0
      %v3913 = vadd.f32 0.0, %v3912
      %v3914 = vpop.f32.mrb[0].mxu0
      %v3915 = vadd.f32 0.0, %v3914
      %v3916 = vpop.f32.mrb[0].mxu0
      %v3917 = vadd.f32 0.0, %v3916
      %v3918 = vpop.f32.mrb[0].mxu0
      %v3919 = vadd.f32 0.0, %v3918
      %3920 = vmatprep.mubr.bf16.mxu0 0
      %3921 = vmatmul.mubr.bf16.gmra.mrb[0].mxu0 %v3729
      %v3922 = vpop.f32.mrb[0].mxu0
      %v3923 = vadd.f32 0.0, %v3922
      %v3924 = vpop.f32.mrb[0].mxu0
      %v3925 = vadd.f32 0.0, %v3924
      %v3926 = vpop.f32.mrb[0].mxu0
      %v3927 = vadd.f32 0.0, %v3926
      %v3928 = vpop.f32.mrb[0].mxu0
      %v3929 = vadd.f32 0.0, %v3928
      %3930 = vmatprep.mubr.bf16.mxu0 0
      %3931 = vmatmul.mubr.bf16.gmra.mrb[0].mxu0 %v3732
      %v3932 = vpop.f32.mrb[0].mxu0
      %v3933 = vadd.f32 0.0, %v3932
      %v3934 = vpop.f32.mrb[0].mxu0
      %v3935 = vadd.f32 0.0, %v3934
      %v3936 = vpop.f32.mrb[0].mxu0
      %v3937 = vadd.f32 0.0, %v3936
      %v3938 = vpop.f32.mrb[0].mxu0
      %v3939 = vadd.f32 0.0, %v3938
      %3940 = vmatprep.mubr.bf16.mxu0 0
      %3941 = vmatmul.mubr.bf16.gmra.mrb[0].mxu0 %v3735
      %v3942 = vpop.f32.mrb[0].mxu0
      %v3943 = vadd.f32 0.0, %v3942
      %v3944 = vpop.f32.mrb[0].mxu0
      %v3945 = vadd.f32 0.0, %v3944
      %v3946 = vpop.f32.mrb[0].mxu0
      %v3947 = vadd.f32 0.0, %v3946
      %v3948 = vpop.f32.mrb[0].mxu0
      %v3949 = vadd.f32 0.0, %v3948
      %3950 = vmatprep.mubr.bf16.mxu0 0
      %3951 = vmatmul.mubr.bf16.gmra.mrb[0].mxu0 %v3738
      %v3952 = vpop.f32.mrb[0].mxu0
      %v3953 = vadd.f32 0.0, %v3952
      %v3954 = vpop.f32.mrb[0].mxu0
      %v3955 = vadd.f32 0.0, %v3954
      %v3956 = vpop.f32.mrb[0].mxu0
      %v3957 = vadd.f32 0.0, %v3956
      %v3958 = vpop.f32.mrb[0].mxu0
      %v3959 = vadd.f32 0.0, %v3958
      %3960 = vmatprep.mubr.bf16.mxu0 0
      %3961 = vmatmul.mubr.bf16.gmra.mrb[0].mxu0 %v3741
      %v3962 = vpop.f32.mrb[0].mxu0
      %v3963 = vadd.f32 0.0, %v3962
      %v3964 = vpop.f32.mrb[0].mxu0
      %v3965 = vadd.f32 0.0, %v3964
      %v3966 = vpop.f32.mrb[0].mxu0
      %v3967 = vadd.f32 0.0, %v3966
      %v3968 = vpop.f32.mrb[0].mxu0
      %v3969 = vadd.f32 0.0, %v3968
      %3970 = vmatprep.mubr.bf16.mxu0 0
      %3971 = vmatmul.mubr.bf16.gmra.mrb[0].mxu0 %v3744
      %v3972 = vpop.f32.mrb[0].mxu0
      %v3973 = vadd.f32 0.0, %v3972
      %v3974 = vpop.f32.mrb[0].mxu0
      %v3975 = vadd.f32 0.0, %v3974
      %v3976 = vpop.f32.mrb[0].mxu0
      %v3977 = vadd.f32 0.0, %v3976
      %v3978 = vpop.f32.mrb[0].mxu0
      %v3979 = vadd.f32 0.0, %v3978
      %3980 = vmatprep.mubr.bf16.mxu0 0
      %3981 = vmatmul.mubr.bf16.gmra.mrb[0].mxu0 %v3747
      %v3982 = vpop.f32.mrb[0].mxu0
      %v3983 = vadd.f32 0.0, %v3982
      %v3984 = vpop.f32.mrb[0].mxu0
      %v3985 = vadd.f32 0.0, %v3984
      %v3986 = vpop.f32.mrb[0].mxu0
      %v3987 = vadd.f32 0.0, %v3986
      %v3988 = vpop.f32.mrb[0].mxu0
      %v3989 = vadd.f32 0.0, %v3988
      %3990 = vmatprep.mubr.bf16.mxu0 0
      %3991 = vmatmul.mubr.bf16.gmra.mrb[0].mxu0 %v3750
      %v3992 = vpop.f32.mrb[0].mxu0
      %v3993 = vadd.f32 0.0, %v3992
      %v3994 = vpop.f32.mrb[0].mxu0
      %v3995 = vadd.f32 0.0, %v3994
      %v3996 = vpop.f32.mrb[0].mxu0
      %v3997 = vadd.f32 0.0, %v3996
      %v3998 = vpop.f32.mrb[0].mxu0
      %v3999 = vadd.f32 0.0, %v3998
      %4000 = vmatprep.mubr.bf16.mxu0 0
      %4001 = vmatmul.mubr.bf16.gmra.mrb[0].mxu0 %v3753
      %v4002 = vpop.f32.mrb[0].mxu0
      %v4003 = vadd.f32 0.0, %v4002
      %v4004 = vpop.f32.mrb[0].mxu0
      %v4005 = vadd.f32 0.0, %v4004
      %v4006 = vpop.f32.mrb[0].mxu0
      %v4007 = vadd.f32 0.0, %v4006
      %v4008 = vpop.f32.mrb[0].mxu0
      %v4009 = vadd.f32 0.0, %v4008
      %4010 = vmatprep.mubr.bf16.mxu0 0
      %4011 = vmatmul.mubr.bf16.gmra.mrb[0].mxu0 %v3756
      %v4012 = vpop.f32.mrb[0].mxu0
      %v4013 = vadd.f32 0.0, %v4012
      %v4014 = vpop.f32.mrb[0].mxu0
      %v4015 = vadd.f32 0.0, %v4014
      %v4016 = vpop.f32.mrb[0].mxu0
      %v4017 = vadd.f32 0.0, %v4016
      %v4018 = vpop.f32.mrb[0].mxu0
      %v4019 = vadd.f32 0.0, %v4018
      %4020 = vmatprep.mubr.bf16.mxu0 0
      %4021 = vmatmul.mubr.bf16.gmra.mrb[0].mxu0 %v3759
      %v4022 = vpop.f32.mrb[0].mxu0
      %v4023 = vadd.f32 0.0, %v4022
      %v4024 = vpop.f32.mrb[0].mxu0
      %v4025 = vadd.f32 0.0, %v4024
      %v4026 = vpop.f32.mrb[0].mxu0
      %v4027 = vadd.f32 0.0, %v4026
      %v4028 = vpop.f32.mrb[0].mxu0
      %v4029 = vadd.f32 0.0, %v4028
      %4030 = vmatprep.mubr.bf16.mxu0 0
      %4031 = vmatmul.mubr.bf16.gmra.mrb[0].mxu0 %v3762
      %v4032 = vpop.f32.mrb[0].mxu0
      %v4033 = vadd.f32 0.0, %v4032
      %v4034 = vpop.f32.mrb[0].mxu0
      %v4035 = vadd.f32 0.0, %v4034
      %v4036 = vpop.f32.mrb[0].mxu0
      %v4037 = vadd.f32 0.0, %v4036
      %v4038 = vpop.f32.mrb[0].mxu0
      %v4039 = vadd.f32 0.0, %v4038
      %4040 = vmatprep.mubr.bf16.mxu0 0
      %4041 = vmatmul.mubr.bf16.gmra.mrb[0].mxu0 %v3765
      %v4042 = vpop.f32.mrb[0].mxu0
      %v4043 = vadd.f32 0.0, %v4042
      %v4044 = vpop.f32.mrb[0].mxu0
      %v4045 = vadd.f32 0.0, %v4044
      %v4046 = vpop.f32.mrb[0].mxu0
      %v4047 = vadd.f32 0.0, %v4046
      %v4048 = vpop.f32.mrb[0].mxu0
      %v4049 = vadd.f32 0.0, %v4048
      %4050 = vmatprep.mubr.bf16.mxu0 0
      %4051 = vmatmul.mubr.bf16.gmra.mrb[0].mxu0 %v3768
      %v4052 = vpop.f32.mrb[0].mxu0
      %v4053 = vadd.f32 0.0, %v4052
      %v4054 = vpop.f32.mrb[0].mxu0
      %v4055 = vadd.f32 0.0, %v4054
      %v4056 = vpop.f32.mrb[0].mxu0
      %v4057 = vadd.f32 0.0, %v4056
      %v4058 = vpop.f32.mrb[0].mxu0
      %v4059 = vadd.f32 0.0, %v4058
      %4060 = vmatprep.mubr.bf16.mxu0 0
      %4061 = vmatmul.mubr.bf16.gmra.mrb[0].mxu0 %v3771
      %v4062 = vpop.f32.mrb[0].mxu0
      %v4063 = vadd.f32 0.0, %v4062
      %v4064 = vpop.f32.mrb[0].mxu0
      %v4065 = vadd.f32 0.0, %v4064
      %v4066 = vpop.f32.mrb[0].mxu0
      %v4067 = vadd.f32 0.0, %v4066
      %v4068 = vpop.f32.mrb[0].mxu0
      %v4069 = vadd.f32 0.0, %v4068
      %4070 = vmatprep.mubr.bf16.mxu0 0
      %4071 = vmatmul.mubr.bf16.gmra.mrb[0].mxu0 %v3774
      %v4072 = vpop.f32.mrb[0].mxu0
      %v4073 = vadd.f32 0.0, %v4072
      %v4074 = vpop.f32.mrb[0].mxu0
      %v4075 = vadd.f32 0.0, %v4074
      %v4076 = vpop.f32.mrb[0].mxu0
      %v4077 = vadd.f32 0.0, %v4076
      %v4078 = vpop.f32.mrb[0].mxu0
      %v4079 = vadd.f32 0.0, %v4078
      %4080 = vmatprep.mubr.bf16.mxu0 0
      %4081 = vmatmul.mubr.bf16.gmra.mrb[0].mxu0 %v3777
      %v4082 = vpop.f32.mrb[0].mxu0
      %v4083 = vadd.f32 0.0, %v4082
      %v4084 = vpop.f32.mrb[0].mxu0
      %v4085 = vadd.f32 0.0, %v4084
      %v4086 = vpop.f32.mrb[0].mxu0
      %v4087 = vadd.f32 0.0, %v4086
      %v4088 = vpop.f32.mrb[0].mxu0
      %v4089 = vadd.f32 0.0, %v4088
      %4090 = vmatprep.mubr.bf16.mxu0 0
      %4091 = vmatmul.mubr.bf16.gmra.mrb[0].mxu0 %v3780
      %v4092 = vpop.f32.mrb[0].mxu0
      %v4093 = vadd.f32 0.0, %v4092
      %v4094 = vpop.f32.mrb[0].mxu0
      %v4095 = vadd.f32 0.0, %v4094
      %v4096 = vpop.f32.mrb[0].mxu0
      %v4097 = vadd.f32 0.0, %v4096
      %v4098 = vpop.f32.mrb[0].mxu0
      %v4099 = vadd.f32 0.0, %v4098
      %4100 = vmatprep.mubr.bf16.mxu0 0
      %4101 = vmatmul.mubr.bf16.gmra.mrb[0].mxu0 %v3783
      %v4102 = vpop.f32.mrb[0].mxu0
      %v4103 = vadd.f32 0.0, %v4102
      %v4104 = vpop.f32.mrb[0].mxu0
      %v4105 = vadd.f32 0.0, %v4104
      %v4106 = vpop.f32.mrb[0].mxu0
      %v4107 = vadd.f32 0.0, %v4106
      %v4108 = vpop.f32.mrb[0].mxu0
      %v4109 = vadd.f32 0.0, %v4108
      %4110 = vmatprep.mubr.bf16.mxu0 0
      %4111 = vmatmul.mubr.bf16.gmra.mrb[0].mxu0 %v3786
      %v4112 = vpop.f32.mrb[0].mxu0
      %v4113 = vadd.f32 0.0, %v4112
      %v4114 = vpop.f32.mrb[0].mxu0
      %v4115 = vadd.f32 0.0, %v4114
      %v4116 = vpop.f32.mrb[0].mxu0
      %v4117 = vadd.f32 0.0, %v4116
      %v4118 = vpop.f32.mrb[0].mxu0
      %v4119 = vadd.f32 0.0, %v4118
      %4120 = vmatprep.mubr.bf16.mxu0 0
      %4121 = vmatmul.mubr.bf16.gmra.mrb[0].mxu0 %v3789
      %v4122 = vpop.f32.mrb[0].mxu0
      %v4123 = vadd.f32 0.0, %v4122
      %v4124 = vpop.f32.mrb[0].mxu0
      %v4125 = vadd.f32 0.0, %v4124
      %v4126 = vpop.f32.mrb[0].mxu0
      %v4127 = vadd.f32 0.0, %v4126
      %v4128 = vpop.f32.mrb[0].mxu0
      %v4129 = vadd.f32 0.0, %v4128
      %4130 = vmatprep.mubr.bf16.mxu0 0
      %4131 = vmatmul.mubr.bf16.gmra.mrb[0].mxu0 %v3792
      %v4132 = vpop.f32.mrb[0].mxu0
      %v4133 = vadd.f32 0.0, %v4132
      %v4134 = vpop.f32.mrb[0].mxu0
      %v4135 = vadd.f32 0.0, %v4134
      %v4136 = vpop.f32.mrb[0].mxu0
      %v4137 = vadd.f32 0.0, %v4136
      %v4138 = vpop.f32.mrb[0].mxu0
      %v4139 = vadd.f32 0.0, %v4138
      %4140 = vmatprep.mubr.bf16.mxu0 0
      %4141 = vmatmul.mubr.bf16.gmra.mrb[0].mxu0 %v3795
      %v4142 = vpop.f32.mrb[0].mxu0
      %v4143 = vadd.f32 0.0, %v4142
      %v4144 = vpop.f32.mrb[0].mxu0
      %v4145 = vadd.f32 0.0, %v4144
      %v4146 = vpop.f32.mrb[0].mxu0
      %v4147 = vadd.f32 0.0, %v4146
      %v4148 = vpop.f32.mrb[0].mxu0
      %v4149 = vadd.f32 0.0, %v4148
      %4150 = vmatprep.mubr.bf16.mxu0 0
      %4151 = vmatmul.mubr.bf16.gmra.mrb[0].mxu0 %v3798
      %v4152 = vpop.f32.mrb[0].mxu0
      %v4153 = vadd.f32 0.0, %v4152
      %v4154 = vpop.f32.mrb[0].mxu0
      %v4155 = vadd.f32 0.0, %v4154
      %v4156 = vpop.f32.mrb[0].mxu0
      %v4157 = vadd.f32 0.0, %v4156
      %v4158 = vpop.f32.mrb[0].mxu0
      %v4159 = vadd.f32 0.0, %v4158
      %4160 = vmatprep.mubr.bf16.mxu0 0
      %4161 = vmatmul.mubr.bf16.gmra.mrb[0].mxu0 %v3801
      %v4162 = vpop.f32.mrb[0].mxu0
      %v4163 = vadd.f32 0.0, %v4162
      %v4164 = vpop.f32.mrb[0].mxu0
      %v4165 = vadd.f32 0.0, %v4164
      %v4166 = vpop.f32.mrb[0].mxu0
      %v4167 = vadd.f32 0.0, %v4166
      %v4168 = vpop.f32.mrb[0].mxu0
      %v4169 = vadd.f32 0.0, %v4168
      %4170 = vmatprep.mubr.bf16.mxu0 0
      %4171 = vmatmul.mubr.bf16.gmra.mrb[0].mxu0 %v3804
      %v4172 = vpop.f32.mrb[0].mxu0
      %v4173 = vadd.f32 0.0, %v4172
      %v4174 = vpop.f32.mrb[0].mxu0
      %v4175 = vadd.f32 0.0, %v4174
      %v4176 = vpop.f32.mrb[0].mxu0
      %v4177 = vadd.f32 0.0, %v4176
      %v4178 = vpop.f32.mrb[0].mxu0
      %v4179 = vadd.f32 0.0, %v4178
      %4180 = vmatprep.mubr.bf16.mxu0 0
      %4181 = vmatmul.mubr.bf16.gmra.mrb[0].mxu0 %v3807
      %v4182 = vpop.f32.mrb[0].mxu0
      %v4183 = vadd.f32 0.0, %v4182
      %v4184 = vpop.f32.mrb[0].mxu0
      %v4185 = vadd.f32 0.0, %v4184
      %v4186 = vpop.f32.mrb[0].mxu0
      %v4187 = vadd.f32 0.0, %v4186
      %v4188 = vpop.f32.mrb[0].mxu0
      %v4189 = vadd.f32 0.0, %v4188
      %4190 = vmatprep.mubr.bf16.mxu0 0
      %4191 = vmatmul.mubr.bf16.gmra.mrb[0].mxu0 %v3810
      %v4192 = vpop.f32.mrb[0].mxu0
      %v4193 = vadd.f32 0.0, %v4192
      %v4194 = vpop.f32.mrb[0].mxu0
      %v4195 = vadd.f32 0.0, %v4194
      %v4196 = vpop.f32.mrb[0].mxu0
      %v4197 = vadd.f32 0.0, %v4196
      %v4198 = vpop.f32.mrb[0].mxu0
      %v4199 = vadd.f32 0.0, %v4198
      %4200 = vmatprep.mubr.bf16.mxu0 0
      %4201 = vmatmul.mubr.bf16.gmra.mrb[0].mxu0 %v3813
      %v4202 = vpop.f32.mrb[0].mxu0
      %v4203 = vadd.f32 0.0, %v4202
      %v4204 = vpop.f32.mrb[0].mxu0
      %v4205 = vadd.f32 0.0, %v4204
      %v4206 = vpop.f32.mrb[0].mxu0
      %v4207 = vadd.f32 0.0, %v4206
      %v4208 = vpop.f32.mrb[0].mxu0
      %v4209 = vadd.f32 0.0, %v4208
      %4210 = vmatprep.mubr.bf16.mxu0 0
      %4211 = vmatmul.mubr.bf16.gmra.mrb[0].mxu0 %v3816
      %v4212 = vpop.f32.mrb[0].mxu0
      %v4213 = vadd.f32 0.0, %v4212
      %v4214 = vpop.f32.mrb[0].mxu0
      %v4215 = vadd.f32 0.0, %v4214
      %v4216 = vpop.f32.mrb[0].mxu0
      %v4217 = vadd.f32 0.0, %v4216
      %v4218 = vpop.f32.mrb[0].mxu0
      %v4219 = vadd.f32 0.0, %v4218
      %4220 = vdwg.mxu0
      %v4221 = vld [vmem:[%s11] sm:$0xff]
      %v4222 = vld [vmem:[%s11 + $0x8] sm:$0xff]
      %v4223 = vld [vmem:[%s11 + $0x10] sm:$0xff]
      %v4224 = vld [vmem:[%s11 + $0x18] sm:$0xff]
      %v4225 = vld [vmem:[%s11 + $0x20] sm:$0xff]
      %v4226 = vld [vmem:[%s11 + $0x28] sm:$0xff]
      %v4227 = vld [vmem:[%s11 + $0x30] sm:$0xff]
      %v4228 = vld [vmem:[%s11 + $0x38] sm:$0xff]
      %v4229 = vld [vmem:[%s11 + $0x40] sm:$0xff]
      %v4230 = vld [vmem:[%s11 + $0x48] sm:$0xff]
      %v4231 = vld [vmem:[%s11 + $0x50] sm:$0xff]
      %v4232 = vld [vmem:[%s11 + $0x58] sm:$0xff]
      %v4233 = vld [vmem:[%s11 + $0x60] sm:$0xff]
      %v4234 = vld [vmem:[%s11 + $0x68] sm:$0xff]
      %v4235 = vld [vmem:[%s11 + $0x70] sm:$0xff]
      %v4236 = vld [vmem:[%s11 + $0x78] sm:$0xff]
      %v4237 = vld [vmem:[%s11 + $0x80] sm:$0xff]
      %v4238 = vld [vmem:[%s11 + $0x88] sm:$0xff]
      %v4239 = vld [vmem:[%s11 + $0x90] sm:$0xff]
      %v4240 = vld [vmem:[%s11 + $0x98] sm:$0xff]
      %v4241 = vld [vmem:[%s11 + $0xa0] sm:$0xff]
      %v4242 = vld [vmem:[%s11 + $0xa8] sm:$0xff]
      %v4243 = vld [vmem:[%s11 + $0xb0] sm:$0xff]
      %v4244 = vld [vmem:[%s11 + $0xb8] sm:$0xff]
      %v4245 = vld [vmem:[%s11 + $0xc0] sm:$0xff]
      %v4246 = vld [vmem:[%s11 + $0xc8] sm:$0xff]
      %v4247 = vld [vmem:[%s11 + $0xd0] sm:$0xff]
      %v4248 = vld [vmem:[%s11 + $0xd8] sm:$0xff]
      %v4249 = vld [vmem:[%s11 + $0xe0] sm:$0xff]
      %v4250 = vld [vmem:[%s11 + $0xe8] sm:$0xff]
      %v4251 = vld [vmem:[%s11 + $0xf0] sm:$0xff]
      %v4252 = vld [vmem:[%s11 + $0xf8] sm:$0xff]
      %v4253 = vld [vmem:[%s11 + $0x100] sm:$0xff]
      %v4254 = vld [vmem:[%s11 + $0x108] sm:$0xff]
      %v4255 = vld [vmem:[%s11 + $0x110] sm:$0xff]
      %v4256 = vld [vmem:[%s11 + $0x118] sm:$0xff]
      %v4257 = vld [vmem:[%s11 + $0x120] sm:$0xff]
      %v4258 = vld [vmem:[%s11 + $0x128] sm:$0xff]
      %v4259 = vld [vmem:[%s11 + $0x130] sm:$0xff]
      %v4260 = vld [vmem:[%s11 + $0x138] sm:$0xff]
      %v4261 = vld [vmem:[%s11 + $0x140] sm:$0xff]
      %v4262 = vld [vmem:[%s11 + $0x148] sm:$0xff]
      %v4263 = vld [vmem:[%s11 + $0x150] sm:$0xff]
      %v4264 = vld [vmem:[%s11 + $0x158] sm:$0xff]
      %v4265 = vld [vmem:[%s11 + $0x160] sm:$0xff]
      %v4266 = vld [vmem:[%s11 + $0x168] sm:$0xff]
      %v4267 = vld [vmem:[%s11 + $0x170] sm:$0xff]
      %v4268 = vld [vmem:[%s11 + $0x178] sm:$0xff]
      %v4269 = vld [vmem:[%s11 + $0x180] sm:$0xff]
      %v4270 = vld [vmem:[%s11 + $0x188] sm:$0xff]
      %v4271 = vld [vmem:[%s11 + $0x190] sm:$0xff]
      %v4272 = vld [vmem:[%s11 + $0x198] sm:$0xff]
      %v4273 = vld [vmem:[%s11 + $0x1a0] sm:$0xff]
      %v4274 = vld [vmem:[%s11 + $0x1a8] sm:$0xff]
      %v4275 = vld [vmem:[%s11 + $0x1b0] sm:$0xff]
      %v4276 = vld [vmem:[%s11 + $0x1b8] sm:$0xff]
      %v4277 = vld [vmem:[%s11 + $0x1c0] sm:$0xff]
      %v4278 = vld [vmem:[%s11 + $0x1c8] sm:$0xff]
      %v4279 = vld [vmem:[%s11 + $0x1d0] sm:$0xff]
      %v4280 = vld [vmem:[%s11 + $0x1d8] sm:$0xff]
      %v4281 = vld [vmem:[%s11 + $0x1e0] sm:$0xff]
      %v4282 = vld [vmem:[%s11 + $0x1e8] sm:$0xff]
      %v4283 = vld [vmem:[%s11 + $0x1f0] sm:$0xff]
      %v4284 = vld [vmem:[%s11 + $0x1f8] sm:$0xff]
      %v4285 = vld [vmem:[%s11 + $0x200] sm:$0xff]
      %v4286 = vld [vmem:[%s11 + $0x208] sm:$0xff]
      %v4287 = vld [vmem:[%s11 + $0x210] sm:$0xff]
      %v4288 = vld [vmem:[%s11 + $0x218] sm:$0xff]
      %v4289 = vld [vmem:[%s11 + $0x220] sm:$0xff]
      %v4290 = vld [vmem:[%s11 + $0x228] sm:$0xff]
      %v4291 = vld [vmem:[%s11 + $0x230] sm:$0xff]
      %v4292 = vld [vmem:[%s11 + $0x238] sm:$0xff]
      %v4293 = vld [vmem:[%s11 + $0x240] sm:$0xff]
      %v4294 = vld [vmem:[%s11 + $0x248] sm:$0xff]
      %v4295 = vld [vmem:[%s11 + $0x250] sm:$0xff]
      %v4296 = vld [vmem:[%s11 + $0x258] sm:$0xff]
      %v4297 = vld [vmem:[%s11 + $0x260] sm:$0xff]
      %v4298 = vld [vmem:[%s11 + $0x268] sm:$0xff]
      %v4299 = vld [vmem:[%s11 + $0x270] sm:$0xff]
      %v4300 = vld [vmem:[%s11 + $0x278] sm:$0xff]
      %v4301 = vld [vmem:[%s11 + $0x280] sm:$0xff]
      %v4302 = vld [vmem:[%s11 + $0x288] sm:$0xff]
      %v4303 = vld [vmem:[%s11 + $0x290] sm:$0xff]
      %v4304 = vld [vmem:[%s11 + $0x298] sm:$0xff]
      %v4305 = vld [vmem:[%s11 + $0x2a0] sm:$0xff]
      %v4306 = vld [vmem:[%s11 + $0x2a8] sm:$0xff]
      %v4307 = vld [vmem:[%s11 + $0x2b0] sm:$0xff]
      %v4308 = vld [vmem:[%s11 + $0x2b8] sm:$0xff]
      %v4309 = vld [vmem:[%s11 + $0x2c0] sm:$0xff]
      %v4310 = vld [vmem:[%s11 + $0x2c8] sm:$0xff]
      %v4311 = vld [vmem:[%s11 + $0x2d0] sm:$0xff]
      %v4312 = vld [vmem:[%s11 + $0x2d8] sm:$0xff]
      %v4313 = vld [vmem:[%s11 + $0x2e0] sm:$0xff]
      %v4314 = vld [vmem:[%s11 + $0x2e8] sm:$0xff]
      %v4315 = vld [vmem:[%s11 + $0x2f0] sm:$0xff]
      %v4316 = vld [vmem:[%s11 + $0x2f8] sm:$0xff]
      %v4317 = vld [vmem:[%s11 + $0x300] sm:$0xff]
      %v4318 = vld [vmem:[%s11 + $0x308] sm:$0xff]
      %v4319 = vld [vmem:[%s11 + $0x310] sm:$0xff]
      %v4320 = vld [vmem:[%s11 + $0x318] sm:$0xff]
      %v4321 = vld [vmem:[%s11 + $0x320] sm:$0xff]
      %v4322 = vld [vmem:[%s11 + $0x328] sm:$0xff]
      %v4323 = vld [vmem:[%s11 + $0x330] sm:$0xff]
      %v4324 = vld [vmem:[%s11 + $0x338] sm:$0xff]
      %v4325 = vld [vmem:[%s11 + $0x340] sm:$0xff]
      %v4326 = vld [vmem:[%s11 + $0x348] sm:$0xff]
      %v4327 = vld [vmem:[%s11 + $0x350] sm:$0xff]
      %v4328 = vld [vmem:[%s11 + $0x358] sm:$0xff]
      %v4329 = vld [vmem:[%s11 + $0x360] sm:$0xff]
      %v4330 = vld [vmem:[%s11 + $0x368] sm:$0xff]
      %v4331 = vld [vmem:[%s11 + $0x370] sm:$0xff]
      %v4332 = vld [vmem:[%s11 + $0x378] sm:$0xff]
      %v4333 = vld [vmem:[%s11 + $0x380] sm:$0xff]
      %v4334 = vld [vmem:[%s11 + $0x388] sm:$0xff]
      %v4335 = vld [vmem:[%s11 + $0x390] sm:$0xff]
      %v4336 = vld [vmem:[%s11 + $0x398] sm:$0xff]
      %v4337 = vld [vmem:[%s11 + $0x3a0] sm:$0xff]
      %v4338 = vld [vmem:[%s11 + $0x3a8] sm:$0xff]
      %v4339 = vld [vmem:[%s11 + $0x3b0] sm:$0xff]
      %v4340 = vld [vmem:[%s11 + $0x3b8] sm:$0xff]
      %v4341 = vld [vmem:[%s11 + $0x3c0] sm:$0xff]
      %v4342 = vld [vmem:[%s11 + $0x3c8] sm:$0xff]
      %v4343 = vld [vmem:[%s11 + $0x3d0] sm:$0xff]
      %v4344 = vld [vmem:[%s11 + $0x3d8] sm:$0xff]
      %v4345 = vld [vmem:[%s11 + $0x3e0] sm:$0xff]
      %v4346 = vld [vmem:[%s11 + $0x3e8] sm:$0xff]
      %v4347 = vld [vmem:[%s11 + $0x3f0] sm:$0xff]
      %v4348 = vld [vmem:[%s11 + $0x3f8] sm:$0xff]
      %v4349 = vld [vmem:[%s11 + $0x400] sm:$0xff]
      %v4350 = vld [vmem:[%s11 + $0x408] sm:$0xff]
      %v4351 = vld [vmem:[%s11 + $0x410] sm:$0xff]
      %v4352 = vld [vmem:[%s11 + $0x418] sm:$0xff]
      %v4353 = vld [vmem:[%s11 + $0x420] sm:$0xff]
      %v4354 = vld [vmem:[%s11 + $0x428] sm:$0xff]
      %v4355 = vld [vmem:[%s11 + $0x430] sm:$0xff]
      %v4356 = vld [vmem:[%s11 + $0x438] sm:$0xff]
      %v4357 = vld [vmem:[%s11 + $0x440] sm:$0xff]
      %v4358 = vld [vmem:[%s11 + $0x448] sm:$0xff]
      %v4359 = vld [vmem:[%s11 + $0x450] sm:$0xff]
      %v4360 = vld [vmem:[%s11 + $0x458] sm:$0xff]
      %v4361 = vld [vmem:[%s11 + $0x460] sm:$0xff]
      %v4362 = vld [vmem:[%s11 + $0x468] sm:$0xff]
      %v4363 = vld [vmem:[%s11 + $0x470] sm:$0xff]
      %v4364 = vld [vmem:[%s11 + $0x478] sm:$0xff]
      %v4365 = vld [vmem:[#allocation4] sm:$0xff]
      %v4366 = vld [vmem:[#allocation4 + $0x8] sm:$0xff]
      %v4367 = vld [vmem:[#allocation4 + $0x10] sm:$0xff]
      %v4368 = vld [vmem:[#allocation4 + $0x18] sm:$0xff]
      %v4369 = vld [vmem:[#allocation4 + $0x20] sm:$0xff]
      %v4370 = vld [vmem:[#allocation4 + $0x28] sm:$0xff]
      %v4371 = vld [vmem:[#allocation4 + $0x30] sm:$0xff]
      %v4372 = vld [vmem:[#allocation4 + $0x38] sm:$0xff]
      %v4373 = vld [vmem:[#allocation4 + $0x40] sm:$0xff]
      %v4374 = vld [vmem:[#allocation4 + $0x48] sm:$0xff]
      %v4375 = vld [vmem:[#allocation4 + $0x50] sm:$0xff]
      %v4376 = vld [vmem:[#allocation4 + $0x58] sm:$0xff]
      %v4377 = vld [vmem:[#allocation4 + $0x60] sm:$0xff]
      %v4378 = vld [vmem:[#allocation4 + $0x68] sm:$0xff]
      %v4379 = vld [vmem:[#allocation4 + $0x70] sm:$0xff]
      %v4380 = vld [vmem:[#allocation4 + $0x78] sm:$0xff]
      %v4381 = vld [vmem:[#allocation4 + $0x80] sm:$0xff]
      %v4382 = vld [vmem:[#allocation4 + $0x88] sm:$0xff]
      %v4383 = vpack.c.bf16 %v4223, %v4221
      %v4384 = vpack.c.bf16 %v4224, %v4222
      %v4385 = vpack.c.bf16 %v4227, %v4225
      %v4386 = vpack.c.bf16 %v4228, %v4226
      %v4387 = vpack.c.bf16 %v4231, %v4229
      %v4388 = vpack.c.bf16 %v4232, %v4230
      %v4389 = vpack.c.bf16 %v4235, %v4233
      %v4390 = vpack.c.bf16 %v4236, %v4234
      %v4391 = vpack.c.bf16 %v4239, %v4237
      %v4392 = vpack.c.bf16 %v4240, %v4238
      %v4393 = vpack.c.bf16 %v4243, %v4241
      %v4394 = vpack.c.bf16 %v4244, %v4242
      %v4395 = vpack.c.bf16 %v4247, %v4245
      %v4396 = vpack.c.bf16 %v4248, %v4246
      %v4397 = vpack.c.bf16 %v4251, %v4249
      %v4398 = vpack.c.bf16 %v4252, %v4250
      %v4399 = vpack.c.bf16 %v4255, %v4253
      %v4400 = vpack.c.bf16 %v4256, %v4254
      %v4401 = vpack.c.bf16 %v4259, %v4257
      %v4402 = vpack.c.bf16 %v4260, %v4258
      %v4403 = vpack.c.bf16 %v4263, %v4261
      %v4404 = vpack.c.bf16 %v4264, %v4262
      %v4405 = vpack.c.bf16 %v4267, %v4265
      %v4406 = vpack.c.bf16 %v4268, %v4266
      %v4407 = vpack.c.bf16 %v4271, %v4269
      %v4408 = vpack.c.bf16 %v4272, %v4270
      %v4409 = vpack.c.bf16 %v4275, %v4273
      %v4410 = vpack.c.bf16 %v4276, %v4274
      %v4411 = vpack.c.bf16 %v4279, %v4277
      %v4412 = vpack.c.bf16 %v4280, %v4278
      %v4413 = vpack.c.bf16 %v4283, %v4281
      %v4414 = vpack.c.bf16 %v4284, %v4282
      %v4415 = vpack.c.bf16 %v4287, %v4285
      %v4416 = vpack.c.bf16 %v4288, %v4286
      %v4417 = vpack.c.bf16 %v4291, %v4289
      %v4418 = vpack.c.bf16 %v4292, %v4290
      %v4419 = vpack.c.bf16 %v4295, %v4293
      %v4420 = vpack.c.bf16 %v4296, %v4294
      %v4421 = vpack.c.bf16 %v4299, %v4297
      %v4422 = vpack.c.bf16 %v4300, %v4298
      %v4423 = vpack.c.bf16 %v4303, %v4301
      %v4424 = vpack.c.bf16 %v4304, %v4302
      %v4425 = vpack.c.bf16 %v4307, %v4305
      %v4426 = vpack.c.bf16 %v4308, %v4306
      %v4427 = vpack.c.bf16 %v4311, %v4309
      %v4428 = vpack.c.bf16 %v4312, %v4310
      %v4429 = vpack.c.bf16 %v4315, %v4313
      %v4430 = vpack.c.bf16 %v4316, %v4314
      %v4431 = vpack.c.bf16 %v4319, %v4317
      %v4432 = vpack.c.bf16 %v4320, %v4318
      %v4433 = vpack.c.bf16 %v4323, %v4321
      %v4434 = vpack.c.bf16 %v4324, %v4322
      %v4435 = vpack.c.bf16 %v4327, %v4325
      %v4436 = vpack.c.bf16 %v4328, %v4326
      %v4437 = vpack.c.bf16 %v4331, %v4329
      %v4438 = vpack.c.bf16 %v4332, %v4330
      %v4439 = vpack.c.bf16 %v4335, %v4333
      %v4440 = vpack.c.bf16 %v4336, %v4334
      %v4441 = vpack.c.bf16 %v4339, %v4337
      %v4442 = vpack.c.bf16 %v4340, %v4338
      %v4443 = vpack.c.bf16 %v4343, %v4341
      %v4444 = vpack.c.bf16 %v4344, %v4342
      %v4445 = vpack.c.bf16 %v4347, %v4345
      %v4446 = vpack.c.bf16 %v4348, %v4346
      %v4447 = vpack.c.bf16 %v4351, %v4349
      %v4448 = vpack.c.bf16 %v4352, %v4350
      %v4449 = vpack.c.bf16 %v4355, %v4353
      %v4450 = vpack.c.bf16 %v4356, %v4354
      %v4451 = vpack.c.bf16 %v4359, %v4357
      %v4452 = vpack.c.bf16 %v4360, %v4358
      %v4453 = vpack.c.bf16 %v4363, %v4361
      %v4454 = vpack.c.bf16 %v4364, %v4362
      %v4456 = vsel %vm631, %v4384, 0
      %v4459 = vsel %vm631, %v4386, 0
      %v4462 = vsel %vm631, %v4388, 0
      %v4465 = vsel %vm631, %v4390, 0
      %v4468 = vsel %vm631, %v4392, 0
      %v4471 = vsel %vm631, %v4394, 0
      %v4474 = vsel %vm631, %v4396, 0
      %v4477 = vsel %vm631, %v4398, 0
      %v4480 = vsel %vm631, %v4400, 0
      %v4483 = vsel %vm631, %v4402, 0
      %v4486 = vsel %vm631, %v4404, 0
      %v4489 = vsel %vm631, %v4406, 0
      %v4492 = vsel %vm631, %v4408, 0
      %v4495 = vsel %vm631, %v4410, 0
      %v4498 = vsel %vm631, %v4412, 0
      %v4501 = vsel %vm631, %v4414, 0
      %v4504 = vsel %vm631, %v4416, 0
      %v4507 = vsel %vm631, %v4418, 0
      %v4510 = vsel %vm631, %v4420, 0
      %v4513 = vsel %vm631, %v4422, 0
      %v4516 = vsel %vm631, %v4424, 0
      %v4519 = vsel %vm631, %v4426, 0
      %v4522 = vsel %vm631, %v4428, 0
      %v4525 = vsel %vm631, %v4430, 0
      %v4528 = vsel %vm631, %v4432, 0
      %v4531 = vsel %vm631, %v4434, 0
      %v4534 = vsel %vm631, %v4436, 0
      %v4537 = vsel %vm631, %v4438, 0
      %v4540 = vsel %vm631, %v4440, 0
      %v4543 = vsel %vm631, %v4442, 0
      %v4546 = vsel %vm631, %v4444, 0
      %v4549 = vsel %vm631, %v4446, 0
      %v4552 = vsel %vm631, %v4448, 0
      %v4555 = vsel %vm631, %v4450, 0
      %v4558 = vsel %vm631, %v4452, 0
      %v4561 = vsel %vm631, %v4454, 0
      %4563 = vmatprep.subr.bf16.mxu0 %v4366
      %4564 = vmatpush1.bf16.msra.mxu0 %v4365
      %4565 = vmatprep.subr.bf16.mxu0 %v4368
      %4566 = vmatpush1.bf16.msra.mxu0 %v4367
      %4567 = vmatprep.subr.bf16.mxu0 %v4370
      %4568 = vmatpush1.bf16.msra.mxu0 %v4369
      %4569 = vmatprep.subr.bf16.mxu0 %v4372
      %4570 = vmatpush1.bf16.msra.mxu0 %v4371
      %4571 = vmatprep.subr.bf16.mxu0 %v4374
      %4572 = vmatpush1.bf16.msra.mxu0 %v4373
      %4573 = vmatprep.subr.bf16.mxu0 %v4376
      %4574 = vmatpush1.bf16.msra.mxu0 %v4375
      %4575 = vmatprep.subr.bf16.mxu0 %v4378
      %4576 = vmatpush1.bf16.msra.mxu0 %v4377
      %4577 = vmatprep.subr.bf16.mxu0 %v4380
      %4578 = vmatpush1.bf16.msra.mxu0 %v4379
      %4579 = vmatprep.subr.bf16.mxu0 %v4382
      %4580 = vmatpush1.bf16.msra.mxu0 %v4381
      %4581 = vmatprep.subr.bf16.mxu0 0
      %4582 = vmatpush1.bf16.msra.mxu0 0
      %4583 = vmatprep.subr.bf16.mxu0 0
      %4584 = vmatpush1.bf16.msra.mxu0 0
      %4585 = vmatprep.subr.bf16.mxu0 0
      %4586 = vmatpush1.bf16.msra.mxu0 0
      %4587 = vmatprep.subr.bf16.mxu0 0
      %4588 = vmatpush1.bf16.msra.mxu0 0
      %4589 = vmatprep.subr.bf16.mxu0 0
      %4590 = vmatpush1.bf16.msra.mxu0 0
      %4591 = vmatprep.subr.bf16.mxu0 0
      %4592 = vmatpush1.bf16.msra.mxu0 0
      %4593 = vmatprep.subr.bf16.mxu0 0
      %4594 = vmatpush1.bf16.msra.mxu0 0
      %4595 = vmatprep.mubr.bf16.mxu0 %v4456
      %4596 = vmatmul.mubr.bf16.gmra.mrb[0].mxu0 %v4383
      %v4597 = vpop.f32.mrb[0].mxu0
      %v4598 = vadd.f32 0.0, %v4597
      %v4599 = vpop.f32.mrb[0].mxu0
      %v4600 = vadd.f32 0.0, %v4599
      %v4601 = vpop.f32.mrb[0].mxu0
      %v4602 = vadd.f32 0.0, %v4601
      %v4603 = vpop.f32.mrb[0].mxu0
      %v4604 = vadd.f32 0.0, %v4603
      %4605 = vmatprep.mubr.bf16.mxu0 %v4459
      %4606 = vmatmul.mubr.bf16.gmra.mrb[0].mxu0 %v4385
      %v4607 = vpop.f32.mrb[0].mxu0
      %v4608 = vadd.f32 0.0, %v4607
      %v4609 = vpop.f32.mrb[0].mxu0
      %v4610 = vadd.f32 0.0, %v4609
      %v4611 = vpop.f32.mrb[0].mxu0
      %v4612 = vadd.f32 0.0, %v4611
      %v4613 = vpop.f32.mrb[0].mxu0
      %v4614 = vadd.f32 0.0, %v4613
      %4615 = vmatprep.mubr.bf16.mxu0 %v4462
      %4616 = vmatmul.mubr.bf16.gmra.mrb[0].mxu0 %v4387
      %v4617 = vpop.f32.mrb[0].mxu0
      %v4618 = vadd.f32 0.0, %v4617
      %v4619 = vpop.f32.mrb[0].mxu0
      %v4620 = vadd.f32 0.0, %v4619
      %v4621 = vpop.f32.mrb[0].mxu0
      %v4622 = vadd.f32 0.0, %v4621
      %v4623 = vpop.f32.mrb[0].mxu0
      %v4624 = vadd.f32 0.0, %v4623
      %4625 = vmatprep.mubr.bf16.mxu0 %v4465
      %4626 = vmatmul.mubr.bf16.gmra.mrb[0].mxu0 %v4389
      %v4627 = vpop.f32.mrb[0].mxu0
      %v4628 = vadd.f32 0.0, %v4627
      %v4629 = vpop.f32.mrb[0].mxu0
      %v4630 = vadd.f32 0.0, %v4629
      %v4631 = vpop.f32.mrb[0].mxu0
      %v4632 = vadd.f32 0.0, %v4631
      %v4633 = vpop.f32.mrb[0].mxu0
      %v4634 = vadd.f32 0.0, %v4633
      %4635 = vmatprep.mubr.bf16.mxu0 %v4468
      %4636 = vmatmul.mubr.bf16.gmra.mrb[0].mxu0 %v4391
      %v4637 = vpop.f32.mrb[0].mxu0
      %v4638 = vadd.f32 0.0, %v4637
      %v4639 = vpop.f32.mrb[0].mxu0
      %v4640 = vadd.f32 0.0, %v4639
      %v4641 = vpop.f32.mrb[0].mxu0
      %v4642 = vadd.f32 0.0, %v4641
      %v4643 = vpop.f32.mrb[0].mxu0
      %v4644 = vadd.f32 0.0, %v4643
      %4645 = vmatprep.mubr.bf16.mxu0 %v4471
      %4646 = vmatmul.mubr.bf16.gmra.mrb[0].mxu0 %v4393
      %v4647 = vpop.f32.mrb[0].mxu0
      %v4648 = vadd.f32 0.0, %v4647
      %v4649 = vpop.f32.mrb[0].mxu0
      %v4650 = vadd.f32 0.0, %v4649
      %v4651 = vpop.f32.mrb[0].mxu0
      %v4652 = vadd.f32 0.0, %v4651
      %v4653 = vpop.f32.mrb[0].mxu0
      %v4654 = vadd.f32 0.0, %v4653
      %4655 = vmatprep.mubr.bf16.mxu0 %v4474
      %4656 = vmatmul.mubr.bf16.gmra.mrb[0].mxu0 %v4395
      %v4657 = vpop.f32.mrb[0].mxu0
      %v4658 = vadd.f32 0.0, %v4657
      %v4659 = vpop.f32.mrb[0].mxu0
      %v4660 = vadd.f32 0.0, %v4659
      %v4661 = vpop.f32.mrb[0].mxu0
      %v4662 = vadd.f32 0.0, %v4661
      %v4663 = vpop.f32.mrb[0].mxu0
      %v4664 = vadd.f32 0.0, %v4663
      %4665 = vmatprep.mubr.bf16.mxu0 %v4477
      %4666 = vmatmul.mubr.bf16.gmra.mrb[0].mxu0 %v4397
      %v4667 = vpop.f32.mrb[0].mxu0
      %v4668 = vadd.f32 0.0, %v4667
      %v4669 = vpop.f32.mrb[0].mxu0
      %v4670 = vadd.f32 0.0, %v4669
      %v4671 = vpop.f32.mrb[0].mxu0
      %v4672 = vadd.f32 0.0, %v4671
      %v4673 = vpop.f32.mrb[0].mxu0
      %v4674 = vadd.f32 0.0, %v4673
      %4675 = vmatprep.mubr.bf16.mxu0 %v4480
      %4676 = vmatmul.mubr.bf16.gmra.mrb[0].mxu0 %v4399
      %v4677 = vpop.f32.mrb[0].mxu0
      %v4678 = vadd.f32 0.0, %v4677
      %v4679 = vpop.f32.mrb[0].mxu0
      %v4680 = vadd.f32 0.0, %v4679
      %v4681 = vpop.f32.mrb[0].mxu0
      %v4682 = vadd.f32 0.0, %v4681
      %v4683 = vpop.f32.mrb[0].mxu0
      %v4684 = vadd.f32 0.0, %v4683
      %4685 = vmatprep.mubr.bf16.mxu0 %v4483
      %4686 = vmatmul.mubr.bf16.gmra.mrb[0].mxu0 %v4401
      %v4687 = vpop.f32.mrb[0].mxu0
      %v4688 = vadd.f32 0.0, %v4687
      %v4689 = vpop.f32.mrb[0].mxu0
      %v4690 = vadd.f32 0.0, %v4689
      %v4691 = vpop.f32.mrb[0].mxu0
      %v4692 = vadd.f32 0.0, %v4691
      %v4693 = vpop.f32.mrb[0].mxu0
      %v4694 = vadd.f32 0.0, %v4693
      %4695 = vmatprep.mubr.bf16.mxu0 %v4486
      %4696 = vmatmul.mubr.bf16.gmra.mrb[0].mxu0 %v4403
      %v4697 = vpop.f32.mrb[0].mxu0
      %v4698 = vadd.f32 0.0, %v4697
      %v4699 = vpop.f32.mrb[0].mxu0
      %v4700 = vadd.f32 0.0, %v4699
      %v4701 = vpop.f32.mrb[0].mxu0
      %v4702 = vadd.f32 0.0, %v4701
      %v4703 = vpop.f32.mrb[0].mxu0
      %v4704 = vadd.f32 0.0, %v4703
      %4705 = vmatprep.mubr.bf16.mxu0 %v4489
      %4706 = vmatmul.mubr.bf16.gmra.mrb[0].mxu0 %v4405
      %v4707 = vpop.f32.mrb[0].mxu0
      %v4708 = vadd.f32 0.0, %v4707
      %v4709 = vpop.f32.mrb[0].mxu0
      %v4710 = vadd.f32 0.0, %v4709
      %v4711 = vpop.f32.mrb[0].mxu0
      %v4712 = vadd.f32 0.0, %v4711
      %v4713 = vpop.f32.mrb[0].mxu0
      %v4714 = vadd.f32 0.0, %v4713
      %4715 = vmatprep.mubr.bf16.mxu0 %v4492
      %4716 = vmatmul.mubr.bf16.gmra.mrb[0].mxu0 %v4407
      %v4717 = vpop.f32.mrb[0].mxu0
      %v4718 = vadd.f32 0.0, %v4717
      %v4719 = vpop.f32.mrb[0].mxu0
      %v4720 = vadd.f32 0.0, %v4719
      %v4721 = vpop.f32.mrb[0].mxu0
      %v4722 = vadd.f32 0.0, %v4721
      %v4723 = vpop.f32.mrb[0].mxu0
      %v4724 = vadd.f32 0.0, %v4723
      %4725 = vmatprep.mubr.bf16.mxu0 %v4495
      %4726 = vmatmul.mubr.bf16.gmra.mrb[0].mxu0 %v4409
      %v4727 = vpop.f32.mrb[0].mxu0
      %v4728 = vadd.f32 0.0, %v4727
      %v4729 = vpop.f32.mrb[0].mxu0
      %v4730 = vadd.f32 0.0, %v4729
      %v4731 = vpop.f32.mrb[0].mxu0
      %v4732 = vadd.f32 0.0, %v4731
      %v4733 = vpop.f32.mrb[0].mxu0
      %v4734 = vadd.f32 0.0, %v4733
      %4735 = vmatprep.mubr.bf16.mxu0 %v4498
      %4736 = vmatmul.mubr.bf16.gmra.mrb[0].mxu0 %v4411
      %v4737 = vpop.f32.mrb[0].mxu0
      %v4738 = vadd.f32 0.0, %v4737
      %v4739 = vpop.f32.mrb[0].mxu0
      %v4740 = vadd.f32 0.0, %v4739
      %v4741 = vpop.f32.mrb[0].mxu0
      %v4742 = vadd.f32 0.0, %v4741
      %v4743 = vpop.f32.mrb[0].mxu0
      %v4744 = vadd.f32 0.0, %v4743
      %4745 = vmatprep.mubr.bf16.mxu0 %v4501
      %4746 = vmatmul.mubr.bf16.gmra.mrb[0].mxu0 %v4413
      %v4747 = vpop.f32.mrb[0].mxu0
      %v4748 = vadd.f32 0.0, %v4747
      %v4749 = vpop.f32.mrb[0].mxu0
      %v4750 = vadd.f32 0.0, %v4749
      %v4751 = vpop.f32.mrb[0].mxu0
      %v4752 = vadd.f32 0.0, %v4751
      %v4753 = vpop.f32.mrb[0].mxu0
      %v4754 = vadd.f32 0.0, %v4753
      %4755 = vmatprep.mubr.bf16.mxu0 %v4504
      %4756 = vmatmul.mubr.bf16.gmra.mrb[0].mxu0 %v4415
      %v4757 = vpop.f32.mrb[0].mxu0
      %v4758 = vadd.f32 0.0, %v4757
      %v4759 = vpop.f32.mrb[0].mxu0
      %v4760 = vadd.f32 0.0, %v4759
      %v4761 = vpop.f32.mrb[0].mxu0
      %v4762 = vadd.f32 0.0, %v4761
      %v4763 = vpop.f32.mrb[0].mxu0
      %v4764 = vadd.f32 0.0, %v4763
      %4765 = vmatprep.mubr.bf16.mxu0 %v4507
      %4766 = vmatmul.mubr.bf16.gmra.mrb[0].mxu0 %v4417
      %v4767 = vpop.f32.mrb[0].mxu0
      %v4768 = vadd.f32 0.0, %v4767
      %v4769 = vpop.f32.mrb[0].mxu0
      %v4770 = vadd.f32 0.0, %v4769
      %v4771 = vpop.f32.mrb[0].mxu0
      %v4772 = vadd.f32 0.0, %v4771
      %v4773 = vpop.f32.mrb[0].mxu0
      %v4774 = vadd.f32 0.0, %v4773
      %4775 = vmatprep.mubr.bf16.mxu0 %v4510
      %4776 = vmatmul.mubr.bf16.gmra.mrb[0].mxu0 %v4419
      %v4777 = vpop.f32.mrb[0].mxu0
      %v4778 = vadd.f32 0.0, %v4777
      %v4779 = vpop.f32.mrb[0].mxu0
      %v4780 = vadd.f32 0.0, %v4779
      %v4781 = vpop.f32.mrb[0].mxu0
      %v4782 = vadd.f32 0.0, %v4781
      %v4783 = vpop.f32.mrb[0].mxu0
      %v4784 = vadd.f32 0.0, %v4783
      %4785 = vmatprep.mubr.bf16.mxu0 %v4513
      %4786 = vmatmul.mubr.bf16.gmra.mrb[0].mxu0 %v4421
      %v4787 = vpop.f32.mrb[0].mxu0
      %v4788 = vadd.f32 0.0, %v4787
      %v4789 = vpop.f32.mrb[0].mxu0
      %v4790 = vadd.f32 0.0, %v4789
      %v4791 = vpop.f32.mrb[0].mxu0
      %v4792 = vadd.f32 0.0, %v4791
      %v4793 = vpop.f32.mrb[0].mxu0
      %v4794 = vadd.f32 0.0, %v4793
      %4795 = vmatprep.mubr.bf16.mxu0 %v4516
      %4796 = vmatmul.mubr.bf16.gmra.mrb[0].mxu0 %v4423
      %v4797 = vpop.f32.mrb[0].mxu0
      %v4798 = vadd.f32 0.0, %v4797
      %v4799 = vpop.f32.mrb[0].mxu0
      %v4800 = vadd.f32 0.0, %v4799
      %v4801 = vpop.f32.mrb[0].mxu0
      %v4802 = vadd.f32 0.0, %v4801
      %v4803 = vpop.f32.mrb[0].mxu0
      %v4804 = vadd.f32 0.0, %v4803
      %4805 = vmatprep.mubr.bf16.mxu0 %v4519
      %4806 = vmatmul.mubr.bf16.gmra.mrb[0].mxu0 %v4425
      %v4807 = vpop.f32.mrb[0].mxu0
      %v4808 = vadd.f32 0.0, %v4807
      %v4809 = vpop.f32.mrb[0].mxu0
      %v4810 = vadd.f32 0.0, %v4809
      %v4811 = vpop.f32.mrb[0].mxu0
      %v4812 = vadd.f32 0.0, %v4811
      %v4813 = vpop.f32.mrb[0].mxu0
      %v4814 = vadd.f32 0.0, %v4813
      %4815 = vmatprep.mubr.bf16.mxu0 %v4522
      %4816 = vmatmul.mubr.bf16.gmra.mrb[0].mxu0 %v4427
      %v4817 = vpop.f32.mrb[0].mxu0
      %v4818 = vadd.f32 0.0, %v4817
      %v4819 = vpop.f32.mrb[0].mxu0
      %v4820 = vadd.f32 0.0, %v4819
      %v4821 = vpop.f32.mrb[0].mxu0
      %v4822 = vadd.f32 0.0, %v4821
      %v4823 = vpop.f32.mrb[0].mxu0
      %v4824 = vadd.f32 0.0, %v4823
      %4825 = vmatprep.mubr.bf16.mxu0 %v4525
      %4826 = vmatmul.mubr.bf16.gmra.mrb[0].mxu0 %v4429
      %v4827 = vpop.f32.mrb[0].mxu0
      %v4828 = vadd.f32 0.0, %v4827
      %v4829 = vpop.f32.mrb[0].mxu0
      %v4830 = vadd.f32 0.0, %v4829
      %v4831 = vpop.f32.mrb[0].mxu0
      %v4832 = vadd.f32 0.0, %v4831
      %v4833 = vpop.f32.mrb[0].mxu0
      %v4834 = vadd.f32 0.0, %v4833
      %4835 = vmatprep.mubr.bf16.mxu0 %v4528
      %4836 = vmatmul.mubr.bf16.gmra.mrb[0].mxu0 %v4431
      %v4837 = vpop.f32.mrb[0].mxu0
      %v4838 = vadd.f32 0.0, %v4837
      %v4839 = vpop.f32.mrb[0].mxu0
      %v4840 = vadd.f32 0.0, %v4839
      %v4841 = vpop.f32.mrb[0].mxu0
      %v4842 = vadd.f32 0.0, %v4841
      %v4843 = vpop.f32.mrb[0].mxu0
      %v4844 = vadd.f32 0.0, %v4843
      %4845 = vmatprep.mubr.bf16.mxu0 %v4531
      %4846 = vmatmul.mubr.bf16.gmra.mrb[0].mxu0 %v4433
      %v4847 = vpop.f32.mrb[0].mxu0
      %v4848 = vadd.f32 0.0, %v4847
      %v4849 = vpop.f32.mrb[0].mxu0
      %v4850 = vadd.f32 0.0, %v4849
      %v4851 = vpop.f32.mrb[0].mxu0
      %v4852 = vadd.f32 0.0, %v4851
      %v4853 = vpop.f32.mrb[0].mxu0
      %v4854 = vadd.f32 0.0, %v4853
      %4855 = vmatprep.mubr.bf16.mxu0 %v4534
      %4856 = vmatmul.mubr.bf16.gmra.mrb[0].mxu0 %v4435
      %v4857 = vpop.f32.mrb[0].mxu0
      %v4858 = vadd.f32 0.0, %v4857
      %v4859 = vpop.f32.mrb[0].mxu0
      %v4860 = vadd.f32 0.0, %v4859
      %v4861 = vpop.f32.mrb[0].mxu0
      %v4862 = vadd.f32 0.0, %v4861
      %v4863 = vpop.f32.mrb[0].mxu0
      %v4864 = vadd.f32 0.0, %v4863
      %4865 = vmatprep.mubr.bf16.mxu0 %v4537
      %4866 = vmatmul.mubr.bf16.gmra.mrb[0].mxu0 %v4437
      %v4867 = vpop.f32.mrb[0].mxu0
      %v4868 = vadd.f32 0.0, %v4867
      %v4869 = vpop.f32.mrb[0].mxu0
      %v4870 = vadd.f32 0.0, %v4869
      %v4871 = vpop.f32.mrb[0].mxu0
      %v4872 = vadd.f32 0.0, %v4871
      %v4873 = vpop.f32.mrb[0].mxu0
      %v4874 = vadd.f32 0.0, %v4873
      %4875 = vmatprep.mubr.bf16.mxu0 %v4540
      %4876 = vmatmul.mubr.bf16.gmra.mrb[0].mxu0 %v4439
      %v4877 = vpop.f32.mrb[0].mxu0
      %v4878 = vadd.f32 0.0, %v4877
      %v4879 = vpop.f32.mrb[0].mxu0
      %v4880 = vadd.f32 0.0, %v4879
      %v4881 = vpop.f32.mrb[0].mxu0
      %v4882 = vadd.f32 0.0, %v4881
      %v4883 = vpop.f32.mrb[0].mxu0
      %v4884 = vadd.f32 0.0, %v4883
      %4885 = vmatprep.mubr.bf16.mxu0 %v4543
      %4886 = vmatmul.mubr.bf16.gmra.mrb[0].mxu0 %v4441
      %v4887 = vpop.f32.mrb[0].mxu0
      %v4888 = vadd.f32 0.0, %v4887
      %v4889 = vpop.f32.mrb[0].mxu0
      %v4890 = vadd.f32 0.0, %v4889
      %v4891 = vpop.f32.mrb[0].mxu0
      %v4892 = vadd.f32 0.0, %v4891
      %v4893 = vpop.f32.mrb[0].mxu0
      %v4894 = vadd.f32 0.0, %v4893
      %4895 = vmatprep.mubr.bf16.mxu0 %v4546
      %4896 = vmatmul.mubr.bf16.gmra.mrb[0].mxu0 %v4443
      %v4897 = vpop.f32.mrb[0].mxu0
      %v4898 = vadd.f32 0.0, %v4897
      %v4899 = vpop.f32.mrb[0].mxu0
      %v4900 = vadd.f32 0.0, %v4899
      %v4901 = vpop.f32.mrb[0].mxu0
      %v4902 = vadd.f32 0.0, %v4901
      %v4903 = vpop.f32.mrb[0].mxu0
      %v4904 = vadd.f32 0.0, %v4903
      %4905 = vmatprep.mubr.bf16.mxu0 %v4549
      %4906 = vmatmul.mubr.bf16.gmra.mrb[0].mxu0 %v4445
      %v4907 = vpop.f32.mrb[0].mxu0
      %v4908 = vadd.f32 0.0, %v4907
      %v4909 = vpop.f32.mrb[0].mxu0
      %v4910 = vadd.f32 0.0, %v4909
      %v4911 = vpop.f32.mrb[0].mxu0
      %v4912 = vadd.f32 0.0, %v4911
      %v4913 = vpop.f32.mrb[0].mxu0
      %v4914 = vadd.f32 0.0, %v4913
      %4915 = vmatprep.mubr.bf16.mxu0 %v4552
      %4916 = vmatmul.mubr.bf16.gmra.mrb[0].mxu0 %v4447
      %v4917 = vpop.f32.mrb[0].mxu0
      %v4918 = vadd.f32 0.0, %v4917
      %v4919 = vpop.f32.mrb[0].mxu0
      %v4920 = vadd.f32 0.0, %v4919
      %v4921 = vpop.f32.mrb[0].mxu0
      %v4922 = vadd.f32 0.0, %v4921
      %v4923 = vpop.f32.mrb[0].mxu0
      %v4924 = vadd.f32 0.0, %v4923
      %4925 = vmatprep.mubr.bf16.mxu0 %v4555
      %4926 = vmatmul.mubr.bf16.gmra.mrb[0].mxu0 %v4449
      %v4927 = vpop.f32.mrb[0].mxu0
      %v4928 = vadd.f32 0.0, %v4927
      %v4929 = vpop.f32.mrb[0].mxu0
      %v4930 = vadd.f32 0.0, %v4929
      %v4931 = vpop.f32.mrb[0].mxu0
      %v4932 = vadd.f32 0.0, %v4931
      %v4933 = vpop.f32.mrb[0].mxu0
      %v4934 = vadd.f32 0.0, %v4933
      %4935 = vmatprep.mubr.bf16.mxu0 %v4558
      %4936 = vmatmul.mubr.bf16.gmra.mrb[0].mxu0 %v4451
      %v4937 = vpop.f32.mrb[0].mxu0
      %v4938 = vadd.f32 0.0, %v4937
      %v4939 = vpop.f32.mrb[0].mxu0
      %v4940 = vadd.f32 0.0, %v4939
      %v4941 = vpop.f32.mrb[0].mxu0
      %v4942 = vadd.f32 0.0, %v4941
      %v4943 = vpop.f32.mrb[0].mxu0
      %v4944 = vadd.f32 0.0, %v4943
      %4945 = vmatprep.mubr.bf16.mxu0 %v4561
      %4946 = vmatmul.mubr.bf16.gmra.mrb[0].mxu0 %v4453
      %v4947 = vpop.f32.mrb[0].mxu0
      %v4948 = vadd.f32 0.0, %v4947
      %v4949 = vpop.f32.mrb[0].mxu0
      %v4950 = vadd.f32 0.0, %v4949
      %v4951 = vpop.f32.mrb[0].mxu0
      %v4952 = vadd.f32 0.0, %v4951
      %v4953 = vpop.f32.mrb[0].mxu0
      %v4954 = vadd.f32 0.0, %v4953
      %4955 = vdwg.mxu0
      %v4956 = vmul.f32 %v3853, %v4598
      %v4957 = vmul.f32 %v3855, %v4600
      %v4958 = vmul.f32 %v3857, %v4602
      %v4959 = vmul.f32 %v3859, %v4604
      %v4960 = vadd.f32 %v4213, %v4956
      %v4961 = vadd.f32 %v4215, %v4957
      %v4962 = vadd.f32 %v4217, %v4958
      %v4963 = vadd.f32 %v4219, %v4959
      %v4964 = vmul.f32 %v3863, %v4608
      %v4965 = vmul.f32 %v3865, %v4610
      %v4966 = vmul.f32 %v3867, %v4612
      %v4967 = vmul.f32 %v3869, %v4614
      %v4968 = vadd.f32 %v4960, %v4964
      %v4969 = vadd.f32 %v4961, %v4965
      %v4970 = vadd.f32 %v4962, %v4966
      %v4971 = vadd.f32 %v4963, %v4967
      %v4972 = vmul.f32 %v3873, %v4618
      %v4973 = vmul.f32 %v3875, %v4620
      %v4974 = vmul.f32 %v3877, %v4622
      %v4975 = vmul.f32 %v3879, %v4624
      %v4976 = vadd.f32 %v4968, %v4972
      %v4977 = vadd.f32 %v4969, %v4973
      %v4978 = vadd.f32 %v4970, %v4974
      %v4979 = vadd.f32 %v4971, %v4975
      %v4980 = vmul.f32 %v3883, %v4628
      %v4981 = vmul.f32 %v3885, %v4630
      %v4982 = vmul.f32 %v3887, %v4632
      %v4983 = vmul.f32 %v3889, %v4634
      %v4984 = vadd.f32 %v4976, %v4980
      %v4985 = vadd.f32 %v4977, %v4981
      %v4986 = vadd.f32 %v4978, %v4982
      %v4987 = vadd.f32 %v4979, %v4983
      %v4988 = vmul.f32 %v3893, %v4638
      %v4989 = vmul.f32 %v3895, %v4640
      %v4990 = vmul.f32 %v3897, %v4642
      %v4991 = vmul.f32 %v3899, %v4644
      %v4992 = vadd.f32 %v4984, %v4988
      %v4993 = vadd.f32 %v4985, %v4989
      %v4994 = vadd.f32 %v4986, %v4990
      %v4995 = vadd.f32 %v4987, %v4991
      %v4996 = vmul.f32 %v3903, %v4648
      %v4997 = vmul.f32 %v3905, %v4650
      %v4998 = vmul.f32 %v3907, %v4652
      %v4999 = vmul.f32 %v3909, %v4654
      %v5000 = vadd.f32 %v4992, %v4996
      %v5001 = vadd.f32 %v4993, %v4997
      %v5002 = vadd.f32 %v4994, %v4998
      %v5003 = vadd.f32 %v4995, %v4999
      %v5004 = vmul.f32 %v3913, %v4658
      %v5005 = vmul.f32 %v3915, %v4660
      %v5006 = vmul.f32 %v3917, %v4662
      %v5007 = vmul.f32 %v3919, %v4664
      %v5008 = vadd.f32 %v5000, %v5004
      %v5009 = vadd.f32 %v5001, %v5005
      %v5010 = vadd.f32 %v5002, %v5006
      %v5011 = vadd.f32 %v5003, %v5007
      %v5012 = vmul.f32 %v3923, %v4668
      %v5013 = vmul.f32 %v3925, %v4670
      %v5014 = vmul.f32 %v3927, %v4672
      %v5015 = vmul.f32 %v3929, %v4674
      %v5016 = vadd.f32 %v5008, %v5012
      %v5017 = vadd.f32 %v5009, %v5013
      %v5018 = vadd.f32 %v5010, %v5014
      %v5019 = vadd.f32 %v5011, %v5015
      %v5020 = vmul.f32 %v3933, %v4678
      %v5021 = vmul.f32 %v3935, %v4680
      %v5022 = vmul.f32 %v3937, %v4682
      %v5023 = vmul.f32 %v3939, %v4684
      %v5024 = vadd.f32 %v5016, %v5020
      %v5025 = vadd.f32 %v5017, %v5021
      %v5026 = vadd.f32 %v5018, %v5022
      %v5027 = vadd.f32 %v5019, %v5023
      %v5028 = vmul.f32 %v3943, %v4688
      %v5029 = vmul.f32 %v3945, %v4690
      %v5030 = vmul.f32 %v3947, %v4692
      %v5031 = vmul.f32 %v3949, %v4694
      %v5032 = vadd.f32 %v5024, %v5028
      %v5033 = vadd.f32 %v5025, %v5029
      %v5034 = vadd.f32 %v5026, %v5030
      %v5035 = vadd.f32 %v5027, %v5031
      %v5036 = vmul.f32 %v3953, %v4698
      %v5037 = vmul.f32 %v3955, %v4700
      %v5038 = vmul.f32 %v3957, %v4702
      %v5039 = vmul.f32 %v3959, %v4704
      %v5040 = vadd.f32 %v5032, %v5036
      %v5041 = vadd.f32 %v5033, %v5037
      %v5042 = vadd.f32 %v5034, %v5038
      %v5043 = vadd.f32 %v5035, %v5039
      %v5044 = vmul.f32 %v3963, %v4708
      %v5045 = vmul.f32 %v3965, %v4710
      %v5046 = vmul.f32 %v3967, %v4712
      %v5047 = vmul.f32 %v3969, %v4714
      %v5048 = vadd.f32 %v5040, %v5044
      %v5049 = vadd.f32 %v5041, %v5045
      %v5050 = vadd.f32 %v5042, %v5046
      %v5051 = vadd.f32 %v5043, %v5047
      %v5052 = vmul.f32 %v3973, %v4718
      %v5053 = vmul.f32 %v3975, %v4720
      %v5054 = vmul.f32 %v3977, %v4722
      %v5055 = vmul.f32 %v3979, %v4724
      %v5056 = vadd.f32 %v5048, %v5052
      %v5057 = vadd.f32 %v5049, %v5053
      %v5058 = vadd.f32 %v5050, %v5054
      %v5059 = vadd.f32 %v5051, %v5055
      %v5060 = vmul.f32 %v3983, %v4728
      %v5061 = vmul.f32 %v3985, %v4730
      %v5062 = vmul.f32 %v3987, %v4732
      %v5063 = vmul.f32 %v3989, %v4734
      %v5064 = vadd.f32 %v5056, %v5060
      %v5065 = vadd.f32 %v5057, %v5061
      %v5066 = vadd.f32 %v5058, %v5062
      %v5067 = vadd.f32 %v5059, %v5063
      %v5068 = vmul.f32 %v3993, %v4738
      %v5069 = vmul.f32 %v3995, %v4740
      %v5070 = vmul.f32 %v3997, %v4742
      %v5071 = vmul.f32 %v3999, %v4744
      %v5072 = vadd.f32 %v5064, %v5068
      %v5073 = vadd.f32 %v5065, %v5069
      %v5074 = vadd.f32 %v5066, %v5070
      %v5075 = vadd.f32 %v5067, %v5071
      %v5076 = vmul.f32 %v4003, %v4748
      %v5077 = vmul.f32 %v4005, %v4750
      %v5078 = vmul.f32 %v4007, %v4752
      %v5079 = vmul.f32 %v4009, %v4754
      %v5080 = vadd.f32 %v5072, %v5076
      %v5081 = vadd.f32 %v5073, %v5077
      %v5082 = vadd.f32 %v5074, %v5078
      %v5083 = vadd.f32 %v5075, %v5079
      %v5084 = vmul.f32 %v4013, %v4758
      %v5085 = vmul.f32 %v4015, %v4760
      %v5086 = vmul.f32 %v4017, %v4762
      %v5087 = vmul.f32 %v4019, %v4764
      %v5088 = vadd.f32 %v5080, %v5084
      %v5089 = vadd.f32 %v5081, %v5085
      %v5090 = vadd.f32 %v5082, %v5086
      %v5091 = vadd.f32 %v5083, %v5087
      %v5092 = vmul.f32 %v4023, %v4768
      %v5093 = vmul.f32 %v4025, %v4770
      %v5094 = vmul.f32 %v4027, %v4772
      %v5095 = vmul.f32 %v4029, %v4774
      %v5096 = vadd.f32 %v5088, %v5092
      %v5097 = vadd.f32 %v5089, %v5093
      %v5098 = vadd.f32 %v5090, %v5094
      %v5099 = vadd.f32 %v5091, %v5095
      %v5100 = vmul.f32 %v4033, %v4778
      %v5101 = vmul.f32 %v4035, %v4780
      %v5102 = vmul.f32 %v4037, %v4782
      %v5103 = vmul.f32 %v4039, %v4784
      %v5104 = vadd.f32 %v5096, %v5100
      %v5105 = vadd.f32 %v5097, %v5101
      %v5106 = vadd.f32 %v5098, %v5102
      %v5107 = vadd.f32 %v5099, %v5103
      %v5108 = vmul.f32 %v4043, %v4788
      %v5109 = vmul.f32 %v4045, %v4790
      %v5110 = vmul.f32 %v4047, %v4792
      %v5111 = vmul.f32 %v4049, %v4794
      %v5112 = vadd.f32 %v5104, %v5108
      %v5113 = vadd.f32 %v5105, %v5109
      %v5114 = vadd.f32 %v5106, %v5110
      %v5115 = vadd.f32 %v5107, %v5111
      %v5116 = vmul.f32 %v4053, %v4798
      %v5117 = vmul.f32 %v4055, %v4800
      %v5118 = vmul.f32 %v4057, %v4802
      %v5119 = vmul.f32 %v4059, %v4804
      %v5120 = vadd.f32 %v5112, %v5116
      %v5121 = vadd.f32 %v5113, %v5117
      %v5122 = vadd.f32 %v5114, %v5118
      %v5123 = vadd.f32 %v5115, %v5119
      %v5124 = vmul.f32 %v4063, %v4808
      %v5125 = vmul.f32 %v4065, %v4810
      %v5126 = vmul.f32 %v4067, %v4812
      %v5127 = vmul.f32 %v4069, %v4814
      %v5128 = vadd.f32 %v5120, %v5124
      %v5129 = vadd.f32 %v5121, %v5125
      %v5130 = vadd.f32 %v5122, %v5126
      %v5131 = vadd.f32 %v5123, %v5127
      %v5132 = vmul.f32 %v4073, %v4818
      %v5133 = vmul.f32 %v4075, %v4820
      %v5134 = vmul.f32 %v4077, %v4822
      %v5135 = vmul.f32 %v4079, %v4824
      %v5136 = vadd.f32 %v5128, %v5132
      %v5137 = vadd.f32 %v5129, %v5133
      %v5138 = vadd.f32 %v5130, %v5134
      %v5139 = vadd.f32 %v5131, %v5135
      %v5140 = vmul.f32 %v4083, %v4828
      %v5141 = vmul.f32 %v4085, %v4830
      %v5142 = vmul.f32 %v4087, %v4832
      %v5143 = vmul.f32 %v4089, %v4834
      %v5144 = vadd.f32 %v5136, %v5140
      %v5145 = vadd.f32 %v5137, %v5141
      %v5146 = vadd.f32 %v5138, %v5142
      %v5147 = vadd.f32 %v5139, %v5143
      %v5148 = vmul.f32 %v4093, %v4838
      %v5149 = vmul.f32 %v4095, %v4840
      %v5150 = vmul.f32 %v4097, %v4842
      %v5151 = vmul.f32 %v4099, %v4844
      %v5152 = vadd.f32 %v5144, %v5148
      %v5153 = vadd.f32 %v5145, %v5149
      %v5154 = vadd.f32 %v5146, %v5150
      %v5155 = vadd.f32 %v5147, %v5151
      %v5156 = vmul.f32 %v4103, %v4848
      %v5157 = vmul.f32 %v4105, %v4850
      %v5158 = vmul.f32 %v4107, %v4852
      %v5159 = vmul.f32 %v4109, %v4854
      %v5160 = vadd.f32 %v5152, %v5156
      %v5161 = vadd.f32 %v5153, %v5157
      %v5162 = vadd.f32 %v5154, %v5158
      %v5163 = vadd.f32 %v5155, %v5159
      %v5164 = vmul.f32 %v4113, %v4858
      %v5165 = vmul.f32 %v4115, %v4860
      %v5166 = vmul.f32 %v4117, %v4862
      %v5167 = vmul.f32 %v4119, %v4864
      %v5168 = vadd.f32 %v5160, %v5164
      %v5169 = vadd.f32 %v5161, %v5165
      %v5170 = vadd.f32 %v5162, %v5166
      %v5171 = vadd.f32 %v5163, %v5167
      %v5172 = vmul.f32 %v4123, %v4868
      %v5173 = vmul.f32 %v4125, %v4870
      %v5174 = vmul.f32 %v4127, %v4872
      %v5175 = vmul.f32 %v4129, %v4874
      %v5176 = vadd.f32 %v5168, %v5172
      %v5177 = vadd.f32 %v5169, %v5173
      %v5178 = vadd.f32 %v5170, %v5174
      %v5179 = vadd.f32 %v5171, %v5175
      %v5180 = vmul.f32 %v4133, %v4878
      %v5181 = vmul.f32 %v4135, %v4880
      %v5182 = vmul.f32 %v4137, %v4882
      %v5183 = vmul.f32 %v4139, %v4884
      %v5184 = vadd.f32 %v5176, %v5180
      %v5185 = vadd.f32 %v5177, %v5181
      %v5186 = vadd.f32 %v5178, %v5182
      %v5187 = vadd.f32 %v5179, %v5183
      %v5188 = vmul.f32 %v4143, %v4888
      %v5189 = vmul.f32 %v4145, %v4890
      %v5190 = vmul.f32 %v4147, %v4892
      %v5191 = vmul.f32 %v4149, %v4894
      %v5192 = vadd.f32 %v5184, %v5188
      %v5193 = vadd.f32 %v5185, %v5189
      %v5194 = vadd.f32 %v5186, %v5190
      %v5195 = vadd.f32 %v5187, %v5191
      %v5196 = vmul.f32 %v4153, %v4898
      %v5197 = vmul.f32 %v4155, %v4900
      %v5198 = vmul.f32 %v4157, %v4902
      %v5199 = vmul.f32 %v4159, %v4904
      %v5200 = vadd.f32 %v5192, %v5196
      %v5201 = vadd.f32 %v5193, %v5197
      %v5202 = vadd.f32 %v5194, %v5198
      %v5203 = vadd.f32 %v5195, %v5199
      %v5204 = vmul.f32 %v4163, %v4908
      %v5205 = vmul.f32 %v4165, %v4910
      %v5206 = vmul.f32 %v4167, %v4912
      %v5207 = vmul.f32 %v4169, %v4914
      %v5208 = vadd.f32 %v5200, %v5204
      %v5209 = vadd.f32 %v5201, %v5205
      %v5210 = vadd.f32 %v5202, %v5206
      %v5211 = vadd.f32 %v5203, %v5207
      %v5212 = vmul.f32 %v4173, %v4918
      %v5213 = vmul.f32 %v4175, %v4920
      %v5214 = vmul.f32 %v4177, %v4922
      %v5215 = vmul.f32 %v4179, %v4924
      %v5216 = vadd.f32 %v5208, %v5212
      %v5217 = vadd.f32 %v5209, %v5213
      %v5218 = vadd.f32 %v5210, %v5214
      %v5219 = vadd.f32 %v5211, %v5215
      %v5220 = vmul.f32 %v4183, %v4928
      %v5221 = vmul.f32 %v4185, %v4930
      %v5222 = vmul.f32 %v4187, %v4932
      %v5223 = vmul.f32 %v4189, %v4934
      %v5224 = vadd.f32 %v5216, %v5220
      %v5225 = vadd.f32 %v5217, %v5221
      %v5226 = vadd.f32 %v5218, %v5222
      %v5227 = vadd.f32 %v5219, %v5223
      %v5228 = vmul.f32 %v4193, %v4938
      %v5229 = vmul.f32 %v4195, %v4940
      %v5230 = vmul.f32 %v4197, %v4942
      %v5231 = vmul.f32 %v4199, %v4944
      %v5232 = vadd.f32 %v5224, %v5228
      %v5233 = vadd.f32 %v5225, %v5229
      %v5234 = vadd.f32 %v5226, %v5230
      %v5235 = vadd.f32 %v5227, %v5231
      %v5236 = vmul.f32 %v4203, %v4948
      %v5237 = vmul.f32 %v4205, %v4950
      %v5238 = vmul.f32 %v4207, %v4952
      %v5239 = vmul.f32 %v4209, %v4954
      %v5240 = vadd.f32 %v5232, %v5236
      %v5241 = vadd.f32 %v5233, %v5237
      %v5242 = vadd.f32 %v5234, %v5238
      %v5243 = vadd.f32 %v5235, %v5239
      %v5244 = vld [vmem:[%s12] sm:$0xff]
      %v5245 = vld [vmem:[%s12 + $0x8] sm:$0xff]
      %5247 = vset.pattern.permute.xlu0 4
      %5248 = vperm.xlu0 %5247, %v5244
      %v5249 = vpop.permute.xlu0 %5248
      %5252 = vset.pattern.permute.xlu0 4
      %5253 = vperm.xlu0 %5252, %v5245
      %v5254 = vpop.permute.xlu0 %5253
      %v5256 = vmul.f32 %v5240, %v5249
      %v5257 = vmul.f32 %v5241, %v5249
      %v5258 = vmul.f32 %v5242, %v5254
      %v5259 = vmul.f32 %v5243, %v5254
      %v5260 = vadd.f32 %v5256, %v3235
      %v5261 = vadd.f32 %v5257, %v3236
      %v5262 = vadd.f32 %v5258, %v3237
      %v5263 = vadd.f32 %v5259, %v3238
      %v5264 = vmul.f32 %v5260, %v2009
      %v5265 = vmul.f32 %v5261, %v2011
      %v5266 = vmul.f32 %v5262, %v2013
      %v5267 = vmul.f32 %v5263, %v2015
      %v5268 = vmul.f32 %v5264, %v737
      %v5269 = vmul.f32 %v5265, %v737
      %v5270 = vmul.f32 %v5266, %v738
      %v5271 = vmul.f32 %v5267, %v738
      %v5272 = vld [vmem:[%s8] sm:$0xff]
      %v5273 = vld [vmem:[%s8 + $0x8] sm:$0xff]
      %v5274 = vpack.c.bf16 %v5273, %v5272
      %v5275 = vpack.c.bf16 %v5270, %v5268
      %v5276 = vpack.c.bf16 %v5271, %v5269
      %v5277 = vld [vmem:[%s9] sm:$0xff]
      %v5278 = vld [vmem:[%s9 + $0x8] sm:$0xff]
      %5280 = vset.pattern.permute.xlu0 0
      %5281 = vperm.xlu0 %5280, %v5277
      %v5282 = vpop.permute.xlu0 %5281
      %5285 = vset.pattern.permute.xlu0 0
      %5286 = vperm.xlu0 %5285, %v5278
      %v5287 = vpop.permute.xlu0 %5286
      %v5290 = vsel %vm631, %v5274, 0
      %5292 = vmatprep.subr.bf16.mxu0 %v5276
      %5293 = vmatpush1.bf16.msra.mxu0 %v5275
      %5294 = vmatprep.subr.bf16.mxu0 0
      %5295 = vmatpush1.bf16.msra.mxu0 0
      %5296 = vmatprep.subr.bf16.mxu0 0
      %5297 = vmatpush1.bf16.msra.mxu0 0
      %5298 = vmatprep.subr.bf16.mxu0 0
      %5299 = vmatpush1.bf16.msra.mxu0 0
      %5300 = vmatprep.subr.bf16.mxu0 0
      %5301 = vmatpush1.bf16.msra.mxu0 0
      %5302 = vmatprep.subr.bf16.mxu0 0
      %5303 = vmatpush1.bf16.msra.mxu0 0
      %5304 = vmatprep.subr.bf16.mxu0 0
      %5305 = vmatpush1.bf16.msra.mxu0 0
      %5306 = vmatprep.subr.bf16.mxu0 0
      %5307 = vmatpush1.bf16.msra.mxu0 0
      %5308 = vmatprep.subr.bf16.mxu0 0
      %5309 = vmatpush1.bf16.msra.mxu0 0
      %5310 = vmatprep.subr.bf16.mxu0 0
      %5311 = vmatpush1.bf16.msra.mxu0 0
      %5312 = vmatprep.subr.bf16.mxu0 0
      %5313 = vmatpush1.bf16.msra.mxu0 0
      %5314 = vmatprep.subr.bf16.mxu0 0
      %5315 = vmatpush1.bf16.msra.mxu0 0
      %5316 = vmatprep.subr.bf16.mxu0 0
      %5317 = vmatpush1.bf16.msra.mxu0 0
      %5318 = vmatprep.subr.bf16.mxu0 0
      %5319 = vmatpush1.bf16.msra.mxu0 0
      %5320 = vmatprep.subr.bf16.mxu0 0
      %5321 = vmatpush1.bf16.msra.mxu0 0
      %5322 = vmatprep.subr.bf16.mxu0 0
      %5323 = vmatpush1.bf16.msra.mxu0 0
      %5324 = vmatprep.mubr.bf16.mxu0 0
      %5325 = vmatmul.mubr.bf16.gmra.mrb[0].mxu0 %v5290
      %v5326 = vpop.f32.mrb[0].mxu0
      %v5327 = vadd.f32 %v5282, %v5326
      %v5328 = vpop.f32.mrb[0].mxu0
      %v5329 = vadd.f32 %v5282, %v5328
      %v5330 = vpop.f32.mrb[0].mxu0
      %v5331 = vadd.f32 %v5287, %v5330
      %v5332 = vpop.f32.mrb[0].mxu0
      %v5333 = vadd.f32 %v5287, %v5332
      %5334 = vdwg.mxu0
      %5335 = vset.pattern.permute.xlu0 5
      %5336 = vperm.xlu0 %5335, %v5244
      %v5337 = vpop.permute.xlu0 %5336
      %5339 = vset.pattern.permute.xlu0 5
      %5340 = vperm.xlu0 %5339, %v5245
      %v5341 = vpop.permute.xlu0 %5340
      %v5343 = vmul.f32 %v5327, %v5337
      %v5344 = vmul.f32 %v5329, %v5337
      %v5345 = vmul.f32 %v5331, %v5341
      %v5346 = vmul.f32 %v5333, %v5341
      %v5347 = vadd.f32 %v469, %v5343
      %v5348 = vadd.f32 %v470, %v5344
      %v5349 = vadd.f32 %v471, %v5345
      %v5350 = vadd.f32 %v472, %v5346
      %v5351 = vadd.f32 %v5347, %v5349
      %v5352 = vrot.slane %v5351, 4
      %v5353 = vadd.f32 %v5351, %v5352
      %v5354 = vrot.slane %v5353, 2
      %v5355 = vadd.f32 %v5353, %v5354
      %v5356 = vrot.slane %v5355, 1
      %v5357 = vadd.f32 %v5355, %v5356
      %v5358 = vadd.f32 %v5348, %v5350
      %v5359 = vrot.slane %v5358, 4
      %v5360 = vadd.f32 %v5358, %v5359
      %v5361 = vrot.slane %v5360, 2
      %v5362 = vadd.f32 %v5360, %v5361
      %v5363 = vrot.slane %v5362, 1
      %v5364 = vadd.f32 %v5362, %v5363
      %v5365 = vmul.f32 %v5357, %v493
      %v5366 = vmul.f32 %v5364, %v493
      %v5367 = vsub.f32 %v5347, %v5365
      %v5368 = vsub.f32 %v5348, %v5366
      %v5369 = vsub.f32 %v5349, %v5365
      %v5370 = vsub.f32 %v5350, %v5366
      %v5371 = vmul.f32 %v5367, %v5367
      %v5372 = vmul.f32 %v5368, %v5368
      %v5373 = vmul.f32 %v5369, %v5369
      %v5374 = vmul.f32 %v5370, %v5370
      %v5375 = vadd.f32 %v5371, %v5373
      %v5376 = vrot.slane %v5375, 4
      %v5377 = vadd.f32 %v5375, %v5376
      %v5378 = vrot.slane %v5377, 2
      %v5379 = vadd.f32 %v5377, %v5378
      %v5380 = vrot.slane %v5379, 1
      %v5381 = vadd.f32 %v5379, %v5380
      %v5382 = vadd.f32 %v5372, %v5374
      %v5383 = vrot.slane %v5382, 4
      %v5384 = vadd.f32 %v5382, %v5383
      %v5385 = vrot.slane %v5384, 2
      %v5386 = vadd.f32 %v5384, %v5385
      %v5387 = vrot.slane %v5386, 1
      %v5388 = vadd.f32 %v5386, %v5387
      %v5389 = vmul.f32 %v5381, %v493
      %v5390 = vmul.f32 %v5388, %v493
      %v5391 = vadd.f32 %v5389, 1e-06
      %v5392 = vadd.f32 %v5390, 1e-06
      %v5393 = vrsqrt.pop %v5391
      %v5394 = vrsqrt.pop %v5392
      %v5395 = vmul.f32 %v5367, %v5393
      %v5396 = vmul.f32 %v5368, %v5394
      %v5397 = vmul.f32 %v5369, %v5393
      %v5398 = vmul.f32 %v5370, %v5394
      %5399 = vset.pattern.permute.xlu0 2
      %5400 = vperm.xlu0 %5399, %v5244
      %v5401 = vpop.permute.xlu0 %5400
      %5403 = vset.pattern.permute.xlu0 2
      %5404 = vperm.xlu0 %5403, %v5245
      %v5405 = vpop.permute.xlu0 %5404
      %v5407 = vmul.f32 %v5395, %v5401
      %v5408 = vmul.f32 %v5396, %v5401
      %v5409 = vmul.f32 %v5397, %v5405
      %v5410 = vmul.f32 %v5398, %v5405
      %5411 = vset.pattern.permute.xlu0 3
      %5412 = vperm.xlu0 %5411, %v5244
      %v5413 = vpop.permute.xlu0 %5412
      %5415 = vset.pattern.permute.xlu0 3
      %5416 = vperm.xlu0 %5415, %v5245
      %v5417 = vpop.permute.xlu0 %5416
      %v5419 = vadd.f32 %v5407, %v5413
      %v5420 = vadd.f32 %v5408, %v5413
      %v5421 = vadd.f32 %v5409, %v5417
      %v5422 = vadd.f32 %v5410, %v5417
      %v5423 = vld [vmem:[%s8 + $0x10] sm:$0xff]
      %v5424 = vld [vmem:[%s8 + $0x18] sm:$0xff]
      %v5425 = vld [vmem:[%s8 + $0x20] sm:$0xff]
      %v5426 = vld [vmem:[%s8 + $0x28] sm:$0xff]
      %v5427 = vpack.c.bf16 %v5424, %v5423
      %v5428 = vpack.c.bf16 %v5426, %v5425
      %v5429 = vpack.c.bf16 %v5421, %v5419
      %v5430 = vpack.c.bf16 %v5422, %v5420
      %v5431 = vld [vmem:[%s9 + $0x10] sm:$0xff]
      %v5432 = vld [vmem:[%s9 + $0x18] sm:$0xff]
      %v5433 = vld [vmem:[%s9 + $0x20] sm:$0xff]
      %v5434 = vld [vmem:[%s9 + $0x28] sm:$0xff]
      %5436 = vset.pattern.permute.xlu0 0
      %5437 = vperm.xlu0 %5436, %v5431
      %v5438 = vpop.permute.xlu0 %5437
      %5441 = vset.pattern.permute.xlu0 0
      %5442 = vperm.xlu0 %5441, %v5432
      %v5443 = vpop.permute.xlu0 %5442
      %5446 = vset.pattern.permute.xlu0 0
      %5447 = vperm.xlu0 %5446, %v5433
      %v5448 = vpop.permute.xlu0 %5447
      %5451 = vset.pattern.permute.xlu0 0
      %5452 = vperm.xlu0 %5451, %v5434
      %v5453 = vpop.permute.xlu0 %5452
      %v5456 = vsel %vm631, %v5427, 0
      %v5459 = vsel %vm631, %v5428, 0
      %5461 = vmatprep.subr.bf16.mxu0 %v5430
      %5462 = vmatpush1.bf16.msra.mxu0 %v5429
      %5463 = vmatprep.subr.bf16.mxu0 0
      %5464 = vmatpush1.bf16.msra.mxu0 0
      %5465 = vmatprep.subr.bf16.mxu0 0
      %5466 = vmatpush1.bf16.msra.mxu0 0
      %5467 = vmatprep.subr.bf16.mxu0 0
      %5468 = vmatpush1.bf16.msra.mxu0 0
      %5469 = vmatprep.subr.bf16.mxu0 0
      %5470 = vmatpush1.bf16.msra.mxu0 0
      %5471 = vmatprep.subr.bf16.mxu0 0
      %5472 = vmatpush1.bf16.msra.mxu0 0
      %5473 = vmatprep.subr.bf16.mxu0 0
      %5474 = vmatpush1.bf16.msra.mxu0 0
      %5475 = vmatprep.subr.bf16.mxu0 0
      %5476 = vmatpush1.bf16.msra.mxu0 0
      %5477 = vmatprep.subr.bf16.mxu0 0
      %5478 = vmatpush1.bf16.msra.mxu0 0
      %5479 = vmatprep.subr.bf16.mxu0 0
      %5480 = vmatpush1.bf16.msra.mxu0 0
      %5481 = vmatprep.subr.bf16.mxu0 0
      %5482 = vmatpush1.bf16.msra.mxu0 0
      %5483 = vmatprep.subr.bf16.mxu0 0
      %5484 = vmatpush1.bf16.msra.mxu0 0
      %5485 = vmatprep.subr.bf16.mxu0 0
      %5486 = vmatpush1.bf16.msra.mxu0 0
      %5487 = vmatprep.subr.bf16.mxu0 0
      %5488 = vmatpush1.bf16.msra.mxu0 0
      %5489 = vmatprep.subr.bf16.mxu0 0
      %5490 = vmatpush1.bf16.msra.mxu0 0
      %5491 = vmatprep.subr.bf16.mxu0 0
      %5492 = vmatpush1.bf16.msra.mxu0 0
      %5493 = vmatprep.mubr.bf16.mxu0 0
      %5494 = vmatmul.mubr.bf16.gmra.mrb[0].mxu0 %v5456
      %v5495 = vpop.f32.mrb[0].mxu0
      %v5496 = vadd.f32 %v5438, %v5495
      %v5497 = vpop.f32.mrb[0].mxu0
      %v5498 = vadd.f32 %v5438, %v5497
      %v5499 = vpop.f32.mrb[0].mxu0
      %v5500 = vadd.f32 %v5443, %v5499
      %v5501 = vpop.f32.mrb[0].mxu0
      %v5502 = vadd.f32 %v5443, %v5501
      %5503 = vmatprep.mubr.bf16.mxu0 0
      %5504 = vmatmul.mubr.bf16.gmra.mrb[0].mxu0 %v5459
      %v5505 = vpop.f32.mrb[0].mxu0
      %v5506 = vadd.f32 %v5448, %v5505
      %v5507 = vpop.f32.mrb[0].mxu0
      %v5508 = vadd.f32 %v5448, %v5507
      %v5509 = vpop.f32.mrb[0].mxu0
      %v5510 = vadd.f32 %v5453, %v5509
      %v5511 = vpop.f32.mrb[0].mxu0
      %v5512 = vadd.f32 %v5453, %v5511
      %5513 = vdwg.mxu0
      %v5514 = vmul.f32 %v5496, %v5506
      %v5515 = vmul.f32 %v5498, %v5508
      %v5516 = vmul.f32 %v5500, %v5510
      %v5517 = vmul.f32 %v5502, %v5512
      %v5518 = vld [vmem:[%s8 + $0x30] sm:$0xff]
      %v5519 = vld [vmem:[%s8 + $0x38] sm:$0xff]
      %v5520 = vpack.c.bf16 %v5519, %v5518
      %v5521 = vpack.c.bf16 %v5516, %v5514
      %v5522 = vpack.c.bf16 %v5517, %v5515
      %v5523 = vld [vmem:[%s9 + $0x30] sm:$0xff]
      %v5524 = vld [vmem:[%s9 + $0x38] sm:$0xff]
      %5526 = vset.pattern.permute.xlu0 0
      %5527 = vperm.xlu0 %5526, %v5523
      %v5528 = vpop.permute.xlu0 %5527
      %5531 = vset.pattern.permute.xlu0 0
      %5532 = vperm.xlu0 %5531, %v5524
      %v5533 = vpop.permute.xlu0 %5532
      %v5536 = vsel %vm631, %v5520, 0
      %5538 = vmatprep.subr.bf16.mxu0 %v5522
      %5539 = vmatpush1.bf16.msra.mxu0 %v5521
      %5540 = vmatprep.subr.bf16.mxu0 0
      %5541 = vmatpush1.bf16.msra.mxu0 0
      %5542 = vmatprep.subr.bf16.mxu0 0
      %5543 = vmatpush1.bf16.msra.mxu0 0
      %5544 = vmatprep.subr.bf16.mxu0 0
      %5545 = vmatpush1.bf16.msra.mxu0 0
      %5546 = vmatprep.subr.bf16.mxu0 0
      %5547 = vmatpush1.bf16.msra.mxu0 0
      %5548 = vmatprep.subr.bf16.mxu0 0
      %5549 = vmatpush1.bf16.msra.mxu0 0
      %5550 = vmatprep.subr.bf16.mxu0 0
      %5551 = vmatpush1.bf16.msra.mxu0 0
      %5552 = vmatprep.subr.bf16.mxu0 0
      %5553 = vmatpush1.bf16.msra.mxu0 0
      %5554 = vmatprep.subr.bf16.mxu0 0
      %5555 = vmatpush1.bf16.msra.mxu0 0
      %5556 = vmatprep.subr.bf16.mxu0 0
      %5557 = vmatpush1.bf16.msra.mxu0 0
      %5558 = vmatprep.subr.bf16.mxu0 0
      %5559 = vmatpush1.bf16.msra.mxu0 0
      %5560 = vmatprep.subr.bf16.mxu0 0
      %5561 = vmatpush1.bf16.msra.mxu0 0
      %5562 = vmatprep.subr.bf16.mxu0 0
      %5563 = vmatpush1.bf16.msra.mxu0 0
      %5564 = vmatprep.subr.bf16.mxu0 0
      %5565 = vmatpush1.bf16.msra.mxu0 0
      %5566 = vmatprep.subr.bf16.mxu0 0
      %5567 = vmatpush1.bf16.msra.mxu0 0
      %5568 = vmatprep.subr.bf16.mxu0 0
      %5569 = vmatpush1.bf16.msra.mxu0 0
      %5570 = vmatprep.mubr.bf16.mxu0 0
      %5571 = vmatmul.mubr.bf16.gmra.mrb[0].mxu0 %v5536
      %v5572 = vpop.f32.mrb[0].mxu0
      %v5573 = vadd.f32 %v5528, %v5572
      %v5574 = vpop.f32.mrb[0].mxu0
      %v5575 = vadd.f32 %v5528, %v5574
      %v5576 = vpop.f32.mrb[0].mxu0
      %v5577 = vadd.f32 %v5533, %v5576
      %v5578 = vpop.f32.mrb[0].mxu0
      %v5579 = vadd.f32 %v5533, %v5578
      %5580 = vdwg.mxu0
      %5581 = vset.pattern.permute.xlu0 6
      %5582 = vperm.xlu0 %5581, %v5244
      %v5583 = vpop.permute.xlu0 %5582
      %5585 = vset.pattern.permute.xlu0 6
      %5586 = vperm.xlu0 %5585, %v5245
      %v5587 = vpop.permute.xlu0 %5586
      %v5589 = vmul.f32 %v5573, %v5583
      %v5590 = vmul.f32 %v5575, %v5583
      %v5591 = vmul.f32 %v5577, %v5587
      %v5592 = vmul.f32 %v5579, %v5587
      %v5593 = vadd.f32 %v5347, %v5589
      %v5594 = vadd.f32 %v5348, %v5590
      %v5595 = vadd.f32 %v5349, %v5591
      %v5596 = vadd.f32 %v5350, %v5592
      %5597 = vst [vmem:[%s467] sm:$0xff] %v5593
      %5598 = vst [vmem:[%s467 + $0x8] sm:$0xff] %v5594
      %5599 = vst [vmem:[%s467 + $0x10] sm:$0xff] %v5595
      %5600 = vst [vmem:[%s467 + $0x18] sm:$0xff] %v5596
      %p5601 = scmp.lt.s32.totalorder %s25, 1
      %s5602 = scalar_select %p5601, %s25, 1
      %s5603 = smul.addr %s5602, 4
      %s5604 = smul.addr %s5603, 8
      %s5605 = scalar_lea.vmem %s14, %s5604
      // Predicated region
      $region77: #{kbblock_forward.1} parent=75 // pred_check
        %p5606 = pneg %p342
      $region78: #{kbblock_forward.1} parent=75 // pred_check_branch
        %5608 = sbr.rel (%p5606) target = $region80
      $region79: #{kbblock_forward.1} parent=75 // pred_region
        _
      $region80: #{kbblock_forward.1} parent=75 // pred_fallthru
        _
    $region76: #{kbblock_forward.1} parent=5 // pred_fallthru
      _
    %p5609 = scmp.le.s32.totalorder 2, %s20
    // Predicated region
    $region81: #{kbblock_forward.1} parent=5 // pred_check
      %p5610 = pneg %p5609
    $region82: #{kbblock_forward.1} parent=5 // pred_check_branch
      %5612 = sbr.rel (%p5610) target = $region84
    $region83: #{kbblock_forward.1} parent=5 // pred_region
      %s5613 = ssub.s32 %s20, 2
      // Predicated region
      $region85: #{kbblock_forward.1} parent=83 // pred_check
        %p5614 = pneg %p348
      $region86: #{kbblock_forward.1} parent=83 // pred_check_branch
        %5616 = sbr.rel (%p5614) target = $region88
      $region87: #{kbblock_forward.1} parent=83 // pred_region
        %p5617 = scmp.lt.s32.totalorder %s26, 1
        %s5618 = scalar_select %p5617, %s26, 1
        %s5619 = smul.addr %s5618, 4
        %s5620 = smul.addr %s5619, 8
        %s5621 = scalar_lea.vmem %s14, %s5620
      $region88: #{kbblock_forward.1} parent=83 // pred_fallthru
        _
    $region84: #{kbblock_forward.1} parent=5 // pred_fallthru
      _
  $region6: #{kbblock_forward.1} parent=0 // loop_footer
    %s24 = sadd.s32 1, %s20
  $region7: #{kbblock_forward.1} parent=0 // loop_footer_branch
    %19 = sbr.rel target = $region3
  $region8: #{kbblock_forward.1} parent=0 // loop_exit
    _

</llo_original>
